<compile_context>
chip_gen: v5e
topology: v5e:2x2
jax: 0.10.0
libtpu: 0.0.40
codegen_flags: <defaults>
</compile_context>

<pallas_src>
import functools

import jax
import jax.numpy as jnp
from jax.experimental import pallas as pl
from jax.experimental.pallas import tpu as pltpu


# ----------------------------------------------------------------------------- config
CFG = dict(
    vocab_size=128,
    hidden_size=128,
    num_hidden_layers=2,
    num_attention_heads=4,
    num_key_value_heads=2,
    head_dim=32,
    intermediate_size=256,
    moe_intermediate_size=128,
    n_routed_experts=8,
    num_experts_per_tok=2,
    n_group=2,
    topk_group=1,
    n_shared_experts=1,
    norm_topk_prob=True,
    routed_scaling_factor=2.0,
    first_k_dense_replace=1,
    moe_layer_freq=1,
    rms_norm_eps=1e-6,
    rope_theta=10000.0,
    attention_bias=False,
)


def _is_moe_layer(layer_idx, cfg):
    return (cfg["n_routed_experts"] is not None
            and layer_idx >= cfg["first_k_dense_replace"]
            and layer_idx % cfg["moe_layer_freq"] == 0)


def _choose_tile(dim, target):
    """Largest legal tile <= target: full dim if small, else prefer 256-, then
    128-multiple divisors (256x256 MXU on v6e/v7x)."""
    if dim <= target:
        return dim
    for m in (256, 128):
        t = (target // m) * m
        while t >= m:
            if dim % t == 0:
                return t
            t -= m
    return dim


# ----------------------------------------------------------------------------- tiled GEMM
def _linear_kernel(x_ref, w_ref, o_ref, acc_ref):
    @pl.when(pl.program_id(2) == 0)
    def _():
        acc_ref[...] = jnp.zeros_like(acc_ref)

    acc_ref[...] += jnp.dot(x_ref[...], w_ref[...],
                            preferred_element_type=jnp.float32)

    @pl.when(pl.program_id(2) == pl.num_programs(2) - 1)
    def _():
        o_ref[...] = acc_ref[...].astype(o_ref.dtype)


def pallas_linear(x, w, *, out_dtype=jnp.bfloat16, tm=512, tn=256, tk=512):
    """x: (M, K) bf16, w: (K, N) bf16/f32 -> (M, N) out_dtype (fp32 accumulation)."""
    M, K = x.shape
    N = w.shape[1]
    tm = _choose_tile(M, tm)
    tn = _choose_tile(N, tn)
    tk = _choose_tile(K, tk)
    return pl.pallas_call(
        _linear_kernel,
        grid=(M // tm, N // tn, K // tk),
        in_specs=[
            pl.BlockSpec((tm, tk), lambda i, j, k: (i, k)),
            pl.BlockSpec((tk, tn), lambda i, j, k: (k, j)),
        ],
        out_specs=pl.BlockSpec((tm, tn), lambda i, j, k: (i, j)),
        out_shape=jax.ShapeDtypeStruct((M, N), out_dtype),
        scratch_shapes=[pltpu.VMEM((tm, tn), jnp.float32)],
        compiler_params=pltpu.CompilerParams(
            dimension_semantics=("parallel", "parallel", "arbitrary")),
    )(x, w)


# ----------------------------------------------------------------------------- RMSNorm kernels
def _rmsnorm_kernel(x_ref, w_ref, o_ref, *, eps):
    x = x_ref[...].astype(jnp.float32)
    var = jnp.mean(x * x, axis=-1, keepdims=True)
    o_ref[...] = (x * jax.lax.rsqrt(var + eps) * w_ref[...]).astype(o_ref.dtype)


def pallas_rmsnorm(x, w, eps):
    M, D = x.shape
    tm = _choose_tile(M, 256)
    kern = functools.partial(_rmsnorm_kernel, eps=eps)
    return pl.pallas_call(
        kern,
        grid=(M // tm,),
        in_specs=[
            pl.BlockSpec((tm, D), lambda i: (i, 0)),
            pl.BlockSpec((1, D), lambda i: (0, 0)),
        ],
        out_specs=pl.BlockSpec((tm, D), lambda i: (i, 0)),
        out_shape=jax.ShapeDtypeStruct((M, D), jnp.bfloat16),
        compiler_params=pltpu.CompilerParams(dimension_semantics=("parallel",)),
    )(x, w.reshape(1, D))


def _add_rmsnorm_kernel(x_ref, r_ref, w_ref, o_ref, res_ref, *, eps):
    # vLLM fused_add_rms_norm semantics: x += residual; residual = x; out = norm(x)*w
    x = x_ref[...].astype(jnp.float32) + r_ref[...].astype(jnp.float32)
    res_ref[...] = x.astype(res_ref.dtype)
    var = jnp.mean(x * x, axis=-1, keepdims=True)
    o_ref[...] = (x * jax.lax.rsqrt(var + eps) * w_ref[...]).astype(o_ref.dtype)


def pallas_add_rmsnorm(x, residual, w, eps):
    M, D = x.shape
    tm = _choose_tile(M, 256)
    kern = functools.partial(_add_rmsnorm_kernel, eps=eps)
    out, res = pl.pallas_call(
        kern,
        grid=(M // tm,),
        in_specs=[
            pl.BlockSpec((tm, D), lambda i: (i, 0)),
            pl.BlockSpec((tm, D), lambda i: (i, 0)),
            pl.BlockSpec((1, D), lambda i: (0, 0)),
        ],
        out_specs=[
            pl.BlockSpec((tm, D), lambda i: (i, 0)),
            pl.BlockSpec((tm, D), lambda i: (i, 0)),
        ],
        out_shape=[
            jax.ShapeDtypeStruct((M, D), jnp.bfloat16),
            jax.ShapeDtypeStruct((M, D), jnp.bfloat16),
        ],
        input_output_aliases={1: 1},   # residual buffer reused for the new residual
        compiler_params=pltpu.CompilerParams(dimension_semantics=("parallel",)),
    )(x, residual, w.reshape(1, D))
    return out, res


# ----------------------------------------------------------------------------- fused MLP (gate_up + SiLU*mul + down)
def _mlp_kernel(x_ref, wgu_ref, wd_ref, o_ref):
    # TODO(synk): tile the intermediate dimension (grid axis over I) for v7x-scale
    #             weights instead of keeping full (H,2I)/(I,H) slabs resident.
    gu = jnp.dot(x_ref[...], wgu_ref[...], preferred_element_type=jnp.float32)
    inter = wd_ref.shape[0]
    gate = gu[:, :inter]
    up = gu[:, inter:]
    h = gate * jax.nn.sigmoid(gate) * up                          # fp32 SiLU*mul
    o_ref[...] = jnp.dot(h.astype(wd_ref.dtype), wd_ref[...],
                         preferred_element_type=jnp.float32).astype(o_ref.dtype)


def pallas_mlp(x, w_gate_up, w_down):
    M, H = x.shape
    I2 = w_gate_up.shape[1]
    inter = w_down.shape[0]
    tm = _choose_tile(M, 256)
    return pl.pallas_call(
        _mlp_kernel,
        grid=(M // tm,),
        in_specs=[
            pl.BlockSpec((tm, H), lambda i: (i, 0)),
            pl.BlockSpec((H, I2), lambda i: (0, 0)),
            pl.BlockSpec((inter, H), lambda i: (0, 0)),
        ],
        out_specs=pl.BlockSpec((tm, H), lambda i: (i, 0)),
        out_shape=jax.ShapeDtypeStruct((M, H), jnp.bfloat16),
        compiler_params=pltpu.CompilerParams(dimension_semantics=("parallel",)),
    )(x, w_gate_up, w_down)


# ----------------------------------------------------------------------------- fused attention (qk-norm + RoPE + causal GQA + o_proj)
def _attn_kernel(q_ref, k_ref, v_ref, qw_ref, kw_ref, cosq_ref, sinq_ref,
                 cosk_ref, sink_ref, wo_ref, o_ref,
                 *, scale, eps, nkv, hd, tt, group):
    half = hd // 2
    t0 = pl.program_id(0) * tt
    T_kv = k_ref.shape[0]

    cos_q = cosq_ref[...]
    sin_q = sinq_ref[...]
    cos_k = cosk_ref[...]
    sin_k = sink_ref[...]
    qw = qw_ref[...]
    kw = kw_ref[...]

    def norm_rope(x, w, cos, sin):            # x: (rows, hd) bf16 -> f32
        x = x.astype(jnp.float32)
        var = jnp.mean(x * x, axis=-1, keepdims=True)
        xn = x * jax.lax.rsqrt(var + eps) * w
        # rotate-half via static lane slices (sin first half pre-negated)
        x_rot = jnp.concatenate([xn[:, half:], xn[:, :half]], axis=-1)
        return xn * cos + x_rot * sin

    # causal mask for this row tile, replicated over the `group` heads stacked on rows
    row = jax.lax.broadcasted_iota(jnp.int32, (group * tt, T_kv), 0) % tt + t0
    col = jax.lax.broadcasted_iota(jnp.int32, (group * tt, T_kv), 1)
    causal = col <= row

    q_all = q_ref[...]                        # (tt, nh*hd) bf16
    k_all = k_ref[...]                        # (T, nkv*hd) bf16
    v_all = v_ref[...]                        # (T, nkv*hd) bf16
    wo = wo_ref[...]                          # (nh*hd, H) bf16

    acc = jnp.zeros(o_ref.shape, jnp.float32)
    for j in range(nkv):                      # static loop over KV heads
        k_j = norm_rope(k_all[:, j * hd:(j + 1) * hd], kw, cos_k, sin_k
                        ).astype(jnp.bfloat16)                    # (T, hd)
        v_j = v_all[:, j * hd:(j + 1) * hd]                       # (T, hd) bf16

        # batch the group's query heads along rows -> one score / PV GEMM per KV head
        q_list = []
        for g in range(group):
            c = (j * group + g) * hd
            q_list.append(norm_rope(q_all[:, c:c + hd], qw, cos_q, sin_q))
        q_stack = jnp.concatenate(q_list, axis=0).astype(jnp.bfloat16)  # (group*tt, hd)

        s = jax.lax.dot_general(q_stack, k_j, (((1,), (1,)), ((), ())),
                                preferred_element_type=jnp.float32) * scale
        s = jnp.where(causal, s, -1e30)
        m = jnp.max(s, axis=-1, keepdims=True)
        p = jnp.exp(s - m)
        p = p * pl.reciprocal(jnp.sum(p, axis=-1, keepdims=True), approx=True)
        pv = jnp.dot(p.astype(jnp.bfloat16), v_j,
                     preferred_element_type=jnp.float32)          # (group*tt, hd)

        # fold o_proj in: per head, accumulate pv_g @ W_o[rows of this head]
        for g in range(group):
            r = (j * group + g) * hd
            acc = acc + jnp.dot(pv[g * tt:(g + 1) * tt].astype(jnp.bfloat16),
                                wo[r:r + hd, :],
                                preferred_element_type=jnp.float32)

    o_ref[...] = acc.astype(o_ref.dtype)


def pallas_attention(q2d, k2d, v2d, q_norm, k_norm, cos_t, sin_t, wo,
                     *, scale, eps, nh, nkv, hd):
    """q2d: (T, nh*hd) bf16, k2d/v2d: (T, nkv*hd) bf16, wo: (nh*hd, H) bf16 -> (T, H) bf16."""
    # TODO(synk): flash-style KV-tile grid axis with online softmax for long sequences.
    T = q2d.shape[0]
    H = wo.shape[1]
    group = nh // nkv
    tt = _choose_tile(T, 256)
    kern = functools.partial(_attn_kernel, scale=scale, eps=eps,
                             nkv=nkv, hd=hd, tt=tt, group=group)
    return pl.pallas_call(
        kern,
        grid=(T // tt,),
        in_specs=[
            pl.BlockSpec((tt, nh * hd), lambda i: (i, 0)),   # q rows of this tile
            pl.BlockSpec((T, nkv * hd), lambda i: (0, 0)),   # full K (resident)
            pl.BlockSpec((T, nkv * hd), lambda i: (0, 0)),   # full V (resident)
            pl.BlockSpec((1, hd), lambda i: (0, 0)),
            pl.BlockSpec((1, hd), lambda i: (0, 0)),
            pl.BlockSpec((tt, hd), lambda i: (i, 0)),        # cos for q rows
            pl.BlockSpec((tt, hd), lambda i: (i, 0)),        # sin for q rows
            pl.BlockSpec((T, hd), lambda i: (0, 0)),         # cos for all keys
            pl.BlockSpec((T, hd), lambda i: (0, 0)),         # sin for all keys
            pl.BlockSpec((nh * hd, H), lambda i: (0, 0)),
        ],
        out_specs=pl.BlockSpec((tt, H), lambda i: (i, 0)),
        out_shape=jax.ShapeDtypeStruct((T, H), jnp.bfloat16),
        compiler_params=pltpu.CompilerParams(dimension_semantics=("parallel",)),
    )(q2d, k2d, v2d, q_norm, k_norm, cos_t, sin_t, cos_t, sin_t, wo)


# ----------------------------------------------------------------------------- fused MoE (all routed experts, flag-skipped)
def _moe_kernel(flags_ref, x_ref, sh_ref, wgu_ref, wd_ref, wt_ref, o_ref, acc_ref):
    e = pl.program_id(1)

    @pl.when(e == 0)
    def _():
        acc_ref[...] = sh_ref[...].astype(jnp.float32)   # init with shared-expert output

    @pl.when(flags_ref[e] > 0)                           # skip experts with no tokens
    def _():
        gu = jnp.dot(x_ref[...], wgu_ref[0], preferred_element_type=jnp.float32)
        inter = wd_ref.shape[1]
        gate = gu[:, :inter]
        up = gu[:, inter:]
        h = gate * jax.nn.sigmoid(gate) * up
        o_e = jnp.dot(h.astype(wd_ref.dtype), wd_ref[0],
                      preferred_element_type=jnp.float32)
        # per-token routing weight (already includes routed_scaling_factor)
        acc_ref[...] += wt_ref[0] * o_e

    @pl.when(e == pl.num_programs(1) - 1)
    def _():
        o_ref[...] = acc_ref[...].astype(o_ref.dtype)


def pallas_moe(x, shared, w_gate_up, w_down, route_w, flags):
    # TODO(synk): megablox-style token gather/sort dispatch so only routed tokens
    #             hit each expert's GEMMs (flags only skip fully-empty experts).
    T, H = x.shape
    E, _, I2 = w_gate_up.shape
    inter = w_down.shape[1]
    tt = _choose_tile(T, 256)
    grid_spec = pltpu.PrefetchScalarGridSpec(
        num_scalar_prefetch=1,
        grid=(T // tt, E),
        in_specs=[
            pl.BlockSpec((tt, H), lambda t, e, flags: (t, 0)),
            pl.BlockSpec((tt, H), lambda t, e, flags: (t, 0)),
            pl.BlockSpec((1, H, I2), lambda t, e, flags: (e, 0, 0)),
            pl.BlockSpec((1, inter, H), lambda t, e, flags: (e, 0, 0)),
            pl.BlockSpec((1, tt, 1), lambda t, e, flags: (e, t, 0)),
        ],
        out_specs=pl.BlockSpec((tt, H), lambda t, e, flags: (t, 0)),
        scratch_shapes=[pltpu.VMEM((tt, H), jnp.float32)],
    )
    return pl.pallas_call(
        _moe_kernel,
        grid_spec=grid_spec,
        out_shape=jax.ShapeDtypeStruct((T, H), jnp.bfloat16),
        compiler_params=pltpu.CompilerParams(
            dimension_semantics=("parallel", "arbitrary")),
    )(flags, x, shared, w_gate_up, w_down, route_w)


# ----------------------------------------------------------------------------- glue ops
def rope_tables(positions, head_dim, theta):
    """cos/sin expanded to (T, head_dim); sin first half pre-negated (neox rotate-half)."""
    inv_freq = 1.0 / (theta ** (jnp.arange(0, head_dim, 2, dtype=jnp.float32) / head_dim))
    freqs = positions.astype(jnp.float32)[:, None] * inv_freq[None, :]   # (T, half)
    cos = jnp.cos(freqs)
    sin = jnp.sin(freqs)
    cos_full = jnp.concatenate([cos, cos], axis=-1)
    sin_signed = jnp.concatenate([-sin, sin], axis=-1)
    return cos_full, sin_signed


def grouped_topk(router_logits, bias, n_group, topk_group, topk, renormalize):
    """vLLM grouped_topk with sigmoid scoring + noaux_tc e_score_correction_bias."""
    scores = jax.nn.sigmoid(router_logits)
    original_scores = scores
    scores_b = scores + bias[None, :]
    T, E = scores.shape
    per_group = E // n_group
    group_scores = jax.lax.top_k(scores_b.reshape(T, n_group, per_group), 2)[0].sum(-1)
    group_idx = jax.lax.top_k(group_scores, topk_group)[1]
    group_mask = jnp.zeros((T, n_group), dtype=bool).at[
        jnp.arange(T)[:, None], group_idx].set(True)
    score_mask = jnp.repeat(group_mask, per_group, axis=1)
    tmp = jnp.where(score_mask, scores_b, -jnp.inf)
    topk_ids = jax.lax.top_k(tmp, topk)[1]
    topk_w = jnp.take_along_axis(original_scores, topk_ids, axis=1)
    if renormalize:
        topk_w = topk_w / jnp.sum(topk_w, axis=-1, keepdims=True)
    return topk_w, topk_ids


# ----------------------------------------------------------------------------- blocks
def attention_block(ap, h, cos_t, sin_t, cfg):
    nh, nkv, hd = cfg["num_attention_heads"], cfg["num_key_value_heads"], cfg["head_dim"]
    q_size, kv_size = nh * hd, nkv * hd

    qkv = pallas_linear(h, ap["w_qkv"])                   # (T, q+2kv) bf16
    # cheap contiguous column slices (no head transpose / HBM reshuffle)
    q2d = qkv[:, :q_size]
    k2d = qkv[:, q_size:q_size + kv_size]
    v2d = qkv[:, q_size + kv_size:]

    # q/k RMSNorm + RoPE + causal GQA attention + o_proj all fused in one pallas_call.
    return pallas_attention(q2d, k2d, v2d, ap["q_norm"], ap["k_norm"], cos_t, sin_t,
                            ap["w_o"], scale=hd ** -0.5, eps=cfg["rms_norm_eps"],
                            nh=nh, nkv=nkv, hd=hd)


def moe_block(mp, x, cfg):
    # shared experts (Dots1MLP, reduce_results=False) — fused MLP kernel, bf16
    shared = pallas_mlp(x, mp["shared_w_gate_up"], mp["shared_w_down"])

    # router kept in fp32 for routing stability
    router_logits = pallas_linear(x, mp["gate_w"], out_dtype=jnp.float32)
    topk_w, topk_ids = grouped_topk(
        router_logits, mp["e_score_correction_bias"],
        cfg["n_group"], cfg["topk_group"], cfg["num_experts_per_tok"],
        cfg["norm_topk_prob"])

    T, E = router_logits.shape
    # dense per-token/per-expert weights with routed_scaling_factor folded in
    dense_w = jnp.zeros((T, E), jnp.float32).at[
        jnp.arange(T)[:, None], topk_ids].add(topk_w * cfg["routed_scaling_factor"])
    route_w = dense_w.T.reshape(E, T, 1)
    # per-expert "has tokens" flags (scalar-prefetched; empty experts are skipped)
    flags = jnp.zeros((E,), jnp.int32).at[topk_ids.reshape(-1)].add(1)

    return pallas_moe(x, shared, mp["w_gate_up"], mp["w_down"], route_w, flags)


def dots1_forward(params, input_ids, positions, cfg):
    eps = cfg["rms_norm_eps"]
    h = params["embed"][input_ids]                            # (T, H) bf16
    cos_t, sin_t = rope_tables(positions, cfg["head_dim"], cfg["rope_theta"])

    residual = None
    for li, lp in enumerate(params["layers"]):
        if residual is None:                                  # layer 0: no zero-residual add
            residual = h
            h = pallas_rmsnorm(h, lp["input_ln"], eps)
        else:
            h, residual = pallas_add_rmsnorm(h, residual, lp["input_ln"], eps)
        h = attention_block(lp["attn"], h, cos_t, sin_t, cfg)
        h, residual = pallas_add_rmsnorm(h, residual, lp["post_ln"], eps)
        if _is_moe_layer(li, cfg):
            h = moe_block(lp["moe"], h, cfg)
        else:
            h = pallas_mlp(h, lp["mlp"]["w_gate_up"], lp["mlp"]["w_down"])
    h, _ = pallas_add_rmsnorm(h, residual, params["final_norm"], eps)
    return h


# ----------------------------------------------------------------------------- params
def init_params(cfg, seed=0):
    key = jax.random.PRNGKey(seed)
    counter = [0]

    def nxt():
        counter[0] += 1
        return jax.random.fold_in(key, counter[0])

    def dense(fan_in, fan_out, dtype=jnp.bfloat16):
        scale = (1.0 / fan_in) ** 0.5
        w = scale * jax.random.normal(nxt(), (fan_in, fan_out), jnp.float32)
        return w.astype(dtype)

    def norm_w(d):
        return jnp.ones((d,), jnp.float32) + 0.01 * jax.random.normal(nxt(), (d,), jnp.float32)

    H = cfg["hidden_size"]
    nh, nkv, hd = cfg["num_attention_heads"], cfg["num_key_value_heads"], cfg["head_dim"]
    qkv_out = (nh + 2 * nkv) * hd

    layers = []
    for li in range(cfg["num_hidden_layers"]):
        attn = dict(
            w_qkv=dense(H, qkv_out),                             # bf16
            w_o=dense(nh * hd, H),                               # bf16 (head-major rows)
            q_norm=norm_w(hd).reshape(1, hd),
            k_norm=norm_w(hd).reshape(1, hd),
        )
        layer = dict(attn=attn, input_ln=norm_w(H), post_ln=norm_w(H))
        if _is_moe_layer(li, cfg):
            E = cfg["n_routed_experts"]
            Im = cfg["moe_intermediate_size"]
            layer["moe"] = dict(
                gate_w=dense(H, E, dtype=jnp.float32),           # router kept fp32
                e_score_correction_bias=0.1 * jax.random.normal(nxt(), (E,), jnp.float32),
                w_gate_up=jnp.stack([dense(H, 2 * Im) for _ in range(E)]),   # (E,H,2I) bf16
                w_down=jnp.stack([dense(Im, H) for _ in range(E)]),          # (E,I,H) bf16
                shared_w_gate_up=dense(H, 2 * Im * cfg["n_shared_experts"]),
                shared_w_down=dense(Im * cfg["n_shared_experts"], H),
            )
        else:
            layer["mlp"] = dict(
                w_gate_up=dense(H, 2 * cfg["intermediate_size"]),
                w_down=dense(cfg["intermediate_size"], H),
            )
        layers.append(layer)

    return dict(
        embed=(0.02 * jax.random.normal(nxt(), (cfg["vocab_size"], H), jnp.float32)
               ).astype(jnp.bfloat16),
        layers=layers,
        final_norm=norm_w(H),
    )


# ----------------------------------------------------------------------------- main
if __name__ == "__main__":
    T = 8  # sequence length (num tokens)
    params = init_params(CFG, seed=0)

    key = jax.random.PRNGKey(0)
    input_ids = jax.random.randint(key, (T,), 0, CFG["vocab_size"], dtype=jnp.int32)
    positions = jnp.arange(T, dtype=jnp.int32)

    fwd = jax.jit(functools.partial(dots1_forward, cfg=CFG))
    hidden_states = fwd(params, input_ids, positions)
    jax.block_until_ready(hidden_states)
    assert hidden_states.shape == (T, CFG["hidden_size"])
    assert bool(jnp.all(jnp.isfinite(hidden_states.astype(jnp.float32))))
    print("KERNEL_OK")
</pallas_src>

<mosaic_0001>
module attributes {stable_mosaic.version = 11 : i64} {
  func.func @_rmsnorm_kernel(%arg0: i32, %arg1: memref<8x128xbf16, #tpu.memory_space<vmem>>, %arg2: memref<1x128xf32, #tpu.memory_space<vmem>>, %arg3: memref<8x128xbf16, #tpu.memory_space<vmem>>) attributes {dimension_semantics = [#tpu.dimension_semantics<parallel>], iteration_bounds = array<i64: 1>, scalar_prefetch = 0 : i64, scratch_operands = 0 : i64, tpu.core_type = #tpu.core_type<tc>, window_params = [{transform_indices = @transform_0, window_bounds = array<i64: 8, 128>}, {pipeline_mode = #tpu.pipeline_mode<synchronous>, transform_indices = @transform_1, window_bounds = array<i64: 1, 128>}, {transform_indices = @transform_2, window_bounds = array<i64: 8, 128>}]} {
    %c0 = arith.constant 0 : index
    %c0_0 = arith.constant 0 : index
    %0 = vector.load %arg1[%c0, %c0_0] : memref<8x128xbf16, #tpu.memory_space<vmem>>, vector<8x128xbf16>
    %1 = arith.extf %0 : vector<8x128xbf16> to vector<8x128xf32>
    %2 = arith.mulf %1, %1 : vector<8x128xf32>
    %cst = arith.constant dense<0.000000e+00> : vector<8xf32>
    %3 = vector.multi_reduction <add>, %2, %cst [1] : vector<8x128xf32> to vector<8xf32>
    %4 = vector.shape_cast %3 : vector<8xf32> to vector<8x1xf32>
    %cst_1 = arith.constant 1.280000e+02 : f32
    %5 = vector.broadcast %cst_1 : f32 to vector<8x1xf32>
    %6 = arith.divf %4, %5 : vector<8x1xf32>
    %cst_2 = arith.constant 9.99999997E-7 : f32
    %7 = vector.broadcast %cst_2 : f32 to vector<8x1xf32>
    %8 = arith.addf %6, %7 : vector<8x1xf32>
    %9 = math.rsqrt %8 : vector<8x1xf32>
    %10 = vector.broadcast %9 : vector<8x1xf32> to vector<8x128xf32>
    %11 = arith.mulf %1, %10 : vector<8x128xf32>
    %c0_3 = arith.constant 0 : index
    %c0_4 = arith.constant 0 : index
    %12 = vector.load %arg2[%c0_3, %c0_4] : memref<1x128xf32, #tpu.memory_space<vmem>>, vector<1x128xf32>
    %13 = vector.broadcast %12 : vector<1x128xf32> to vector<8x128xf32>
    %14 = arith.mulf %11, %13 : vector<8x128xf32>
    %15 = arith.truncf %14 : vector<8x128xf32> to vector<8x128xbf16>
    %c0_5 = arith.constant 0 : index
    %c0_6 = arith.constant 0 : index
    %16 = vector.load %arg3[%c0_5, %c0_6] : memref<8x128xbf16, #tpu.memory_space<vmem>>, vector<8x128xbf16>
    tpu.vector_store %arg3[%c0_5, %c0_6], %15 {strides = array<i32>} : memref<8x128xbf16, #tpu.memory_space<vmem>>, vector<8x128xbf16>,
    return
  }
  func.func @transform_0(%arg0: i32) -> (i32, i32) {
    %c0_i32 = arith.constant 0 : i32
    %c0_i32_0 = arith.constant 0 : i32
    return %arg0, %c0_i32 : i32, i32
  }
  func.func @transform_1(%arg0: i32) -> (i32, i32) {
    %c0_i32 = arith.constant 0 : i32
    %c0_i32_0 = arith.constant 0 : i32
    %c0_i32_1 = arith.constant 0 : i32
    return %c0_i32, %c0_i32_0 : i32, i32
  }
  func.func @transform_2(%arg0: i32) -> (i32, i32) {
    %c0_i32 = arith.constant 0 : i32
    %c0_i32_0 = arith.constant 0 : i32
    return %arg0, %c0_i32 : i32, i32
  }
}

module attributes {stable_mosaic.version = 11 : i64} {
  func.func @_linear_kernel(%arg0: i32, %arg1: i32, %arg2: i32, %arg3: memref<8x128xbf16, #tpu.memory_space<vmem>>, %arg4: memref<128x256xbf16, #tpu.memory_space<vmem>>, %arg5: memref<8x256xbf16, #tpu.memory_space<vmem>>, %arg6: memref<8x256xf32, #tpu.memory_space<vmem>>) attributes {dimension_semantics = [#tpu.dimension_semantics<parallel>, #tpu.dimension_semantics<parallel>, #tpu.dimension_semantics<arbitrary>], iteration_bounds = array<i64: 1, 1, 1>, scalar_prefetch = 0 : i64, scratch_operands = 1 : i64, tpu.core_type = #tpu.core_type<tc>, window_params = [{transform_indices = @transform_0, window_bounds = array<i64: 8, 128>}, {transform_indices = @transform_1, window_bounds = array<i64: 128, 256>}, {transform_indices = @transform_2, window_bounds = array<i64: 8, 256>}]} {
    %c0_i32 = arith.constant 0 : i32
    %0 = arith.cmpi eq, %arg2, %c0_i32 : i32
    %1 = arith.extui %0 : i1 to i32
    %c0_i32_0 = arith.constant 0 : i32
    %2 = arith.cmpi ne, %1, %c0_i32_0 : i32
    scf.if %2 {
      %cst_10 = arith.constant 0.000000e+00 : f32
      %12 = vector.broadcast %cst_10 : f32 to vector<8x256xf32>
      %c0_11 = arith.constant 0 : index
      %c0_12 = arith.constant 0 : index
      %13 = vector.load %arg6[%c0_11, %c0_12] : memref<8x256xf32, #tpu.memory_space<vmem>>, vector<8x256xf32>
      tpu.vector_store %arg6[%c0_11, %c0_12], %12 {strides = array<i32>} : memref<8x256xf32, #tpu.memory_space<vmem>>, vector<8x256xf32>,
    } else {
    }
    %c0 = arith.constant 0 : index
    %c0_1 = arith.constant 0 : index
    %3 = vector.load %arg6[%c0, %c0_1] : memref<8x256xf32, #tpu.memory_space<vmem>>, vector<8x256xf32>
    %c0_2 = arith.constant 0 : index
    %c0_3 = arith.constant 0 : index
    %4 = vector.load %arg3[%c0_2, %c0_3] : memref<8x128xbf16, #tpu.memory_space<vmem>>, vector<8x128xbf16>
    %c0_4 = arith.constant 0 : index
    %c0_5 = arith.constant 0 : index
    %5 = vector.load %arg4[%c0_4, %c0_5] : memref<128x256xbf16, #tpu.memory_space<vmem>>, vector<128x256xbf16>
    %cst = arith.constant dense<0.000000e+00> : vector<8x256xf32>
    %6 = tpu.matmul %4, %5, %cst {dimension_numbers = #tpu.dot_dimension_numbers<[1], [0], [0], [1], [0, 0, 1, 1], [], []>} : vector<8x128xbf16>, vector<128x256xbf16>, vector<8x256xf32> -> vector<8x256xf32>
    %7 = arith.addf %3, %6 : vector<8x256xf32>
    %c0_6 = arith.constant 0 : index
    %c0_7 = arith.constant 0 : index
    %8 = vector.load %arg6[%c0_6, %c0_7] : memref<8x256xf32, #tpu.memory_space<vmem>>, vector<8x256xf32>
    tpu.vector_store %arg6[%c0_6, %c0_7], %7 {strides = array<i32>} : memref<8x256xf32, #tpu.memory_space<vmem>>, vector<8x256xf32>,
    %c0_i32_8 = arith.constant 0 : i32
    %9 = arith.cmpi eq, %arg2, %c0_i32_8 : i32
    %10 = arith.extui %9 : i1 to i32
    %c0_i32_9 = arith.constant 0 : i32
    %11 = arith.cmpi ne, %10, %c0_i32_9 : i32
    scf.if %11 {
      %c0_10 = arith.constant 0 : index
      %c0_11 = arith.constant 0 : index
      %12 = vector.load %arg6[%c0_10, %c0_11] : memref<8x256xf32, #tpu.memory_space<vmem>>, vector<8x256xf32>
      %13 = arith.truncf %12 : vector<8x256xf32> to vector<8x256xbf16>
      %c0_12 = arith.constant 0 : index
      %c0_13 = arith.constant 0 : index
      %14 = vector.load %arg5[%c0_12, %c0_13] : memref<8x256xbf16, #tpu.memory_space<vmem>>, vector<8x256xbf16>
      tpu.vector_store %arg5[%c0_12, %c0_13], %13 {strides = array<i32>} : memref<8x256xbf16, #tpu.memory_space<vmem>>, vector<8x256xbf16>,
    } else {
    }
    return
  }
  func.func @transform_0(%arg0: i32, %arg1: i32, %arg2: i32) -> (i32, i32) {
    %c0_i32 = arith.constant 0 : i32
    return %arg0, %arg2 : i32, i32
  }
  func.func @transform_1(%arg0: i32, %arg1: i32, %arg2: i32) -> (i32, i32) {
    %c0_i32 = arith.constant 0 : i32
    return %arg2, %arg1 : i32, i32
  }
  func.func @transform_2(%arg0: i32, %arg1: i32, %arg2: i32) -> (i32, i32) {
    %c0_i32 = arith.constant 0 : i32
    return %arg0, %arg1 : i32, i32
  }
}

module attributes {stable_mosaic.version = 11 : i64} {
  func.func @_add_rmsnorm_kernel(%arg0: i32, %arg1: memref<8x128xbf16, #tpu.memory_space<vmem>>, %arg2: memref<8x128xbf16, #tpu.memory_space<vmem>>, %arg3: memref<1x128xf32, #tpu.memory_space<vmem>>, %arg4: memref<8x128xbf16, #tpu.memory_space<vmem>>, %arg5: memref<8x128xbf16, #tpu.memory_space<vmem>>) attributes {dimension_semantics = [#tpu.dimension_semantics<parallel>], iteration_bounds = array<i64: 1>, scalar_prefetch = 0 : i64, scratch_operands = 0 : i64, tpu.core_type = #tpu.core_type<tc>, window_params = [{transform_indices = @transform_0, window_bounds = array<i64: 8, 128>}, {transform_indices = @transform_1, window_bounds = array<i64: 8, 128>}, {pipeline_mode = #tpu.pipeline_mode<synchronous>, transform_indices = @transform_2, window_bounds = array<i64: 1, 128>}, {transform_indices = @transform_3, window_bounds = array<i64: 8, 128>}, {transform_indices = @transform_4, window_bounds = array<i64: 8, 128>}]} {
    %c0 = arith.constant 0 : index
    %c0_0 = arith.constant 0 : index
    %0 = vector.load %arg1[%c0, %c0_0] : memref<8x128xbf16, #tpu.memory_space<vmem>>, vector<8x128xbf16>
    %1 = arith.extf %0 : vector<8x128xbf16> to vector<8x128xf32>
    %c0_1 = arith.constant 0 : index
    %c0_2 = arith.constant 0 : index
    %2 = vector.load %arg2[%c0_1, %c0_2] : memref<8x128xbf16, #tpu.memory_space<vmem>>, vector<8x128xbf16>
    %3 = arith.extf %2 : vector<8x128xbf16> to vector<8x128xf32>
    %4 = arith.addf %1, %3 : vector<8x128xf32>
    %5 = arith.truncf %4 : vector<8x128xf32> to vector<8x128xbf16>
    %c0_3 = arith.constant 0 : index
    %c0_4 = arith.constant 0 : index
    %6 = vector.load %arg5[%c0_3, %c0_4] : memref<8x128xbf16, #tpu.memory_space<vmem>>, vector<8x128xbf16>
    tpu.vector_store %arg5[%c0_3, %c0_4], %5 {strides = array<i32>} : memref<8x128xbf16, #tpu.memory_space<vmem>>, vector<8x128xbf16>,
    %7 = arith.mulf %4, %4 : vector<8x128xf32>
    %cst = arith.constant dense<0.000000e+00> : vector<8xf32>
    %8 = vector.multi_reduction <add>, %7, %cst [1] : vector<8x128xf32> to vector<8xf32>
    %9 = vector.shape_cast %8 : vector<8xf32> to vector<8x1xf32>
    %cst_5 = arith.constant 1.280000e+02 : f32
    %10 = vector.broadcast %cst_5 : f32 to vector<8x1xf32>
    %11 = arith.divf %9, %10 : vector<8x1xf32>
    %cst_6 = arith.constant 9.99999997E-7 : f32
    %12 = vector.broadcast %cst_6 : f32 to vector<8x1xf32>
    %13 = arith.addf %11, %12 : vector<8x1xf32>
    %14 = math.rsqrt %13 : vector<8x1xf32>
    %15 = vector.broadcast %14 : vector<8x1xf32> to vector<8x128xf32>
    %16 = arith.mulf %4, %15 : vector<8x128xf32>
    %c0_7 = arith.constant 0 : index
    %c0_8 = arith.constant 0 : index
    %17 = vector.load %arg3[%c0_7, %c0_8] : memref<1x128xf32, #tpu.memory_space<vmem>>, vector<1x128xf32>
    %18 = vector.broadcast %17 : vector<1x128xf32> to vector<8x128xf32>
    %19 = arith.mulf %16, %18 : vector<8x128xf32>
    %20 = arith.truncf %19 : vector<8x128xf32> to vector<8x128xbf16>
    %c0_9 = arith.constant 0 : index
    %c0_10 = arith.constant 0 : index
    %21 = vector.load %arg4[%c0_9, %c0_10] : memref<8x128xbf16, #tpu.memory_space<vmem>>, vector<8x128xbf16>
    tpu.vector_store %arg4[%c0_9, %c0_10], %20 {strides = array<i32>} : memref<8x128xbf16, #tpu.memory_space<vmem>>, vector<8x128xbf16>,
    return
  }
  func.func @transform_0(%arg0: i32) -> (i32, i32) {
    %c0_i32 = arith.constant 0 : i32
    %c0_i32_0 = arith.constant 0 : i32
    return %arg0, %c0_i32 : i32, i32
  }
  func.func @transform_1(%arg0: i32) -> (i32, i32) {
    %c0_i32 = arith.constant 0 : i32
    %c0_i32_0 = arith.constant 0 : i32
    return %arg0, %c0_i32 : i32, i32
  }
  func.func @transform_2(%arg0: i32) -> (i32, i32) {
    %c0_i32 = arith.constant 0 : i32
    %c0_i32_0 = arith.constant 0 : i32
    %c0_i32_1 = arith.constant 0 : i32
    return %c0_i32, %c0_i32_0 : i32, i32
  }
  func.func @transform_3(%arg0: i32) -> (i32, i32) {
    %c0_i32 = arith.constant 0 : i32
    %c0_i32_0 = arith.constant 0 : i32
    return %arg0, %c0_i32 : i32, i32
  }
  func.func @transform_4(%arg0: i32) -> (i32, i32) {
    %c0_i32 = arith.constant 0 : i32
    %c0_i32_0 = arith.constant 0 : i32
    return %arg0, %c0_i32 : i32, i32
  }
}

module attributes {stable_mosaic.version = 11 : i64} {
  func.func @_attn_kernel(%arg0: i32, %arg1: memref<8x128xbf16, #tpu.memory_space<vmem>>, %arg2: memref<8x64xbf16, #tpu.memory_space<vmem>>, %arg3: memref<8x64xbf16, #tpu.memory_space<vmem>>, %arg4: memref<1x32xf32, #tpu.memory_space<vmem>>, %arg5: memref<1x32xf32, #tpu.memory_space<vmem>>, %arg6: memref<8x32xf32, #tpu.memory_space<vmem>>, %arg7: memref<8x32xf32, #tpu.memory_space<vmem>>, %arg8: memref<8x32xf32, #tpu.memory_space<vmem>>, %arg9: memref<8x32xf32, #tpu.memory_space<vmem>>, %arg10: memref<128x128xbf16, #tpu.memory_space<vmem>>, %arg11: memref<8x128xbf16, #tpu.memory_space<vmem>>) attributes {dimension_semantics = [#tpu.dimension_semantics<parallel>], iteration_bounds = array<i64: 1>, scalar_prefetch = 0 : i64, scratch_operands = 0 : i64, tpu.core_type = #tpu.core_type<tc>, window_params = [{transform_indices = @transform_0, window_bounds = array<i64: 8, 128>}, {pipeline_mode = #tpu.pipeline_mode<synchronous>, transform_indices = @transform_1, window_bounds = array<i64: 8, 64>}, {pipeline_mode = #tpu.pipeline_mode<synchronous>, transform_indices = @transform_2, window_bounds = array<i64: 8, 64>}, {pipeline_mode = #tpu.pipeline_mode<synchronous>, transform_indices = @transform_3, window_bounds = array<i64: 1, 32>}, {pipeline_mode = #tpu.pipeline_mode<synchronous>, transform_indices = @transform_4, window_bounds = array<i64: 1, 32>}, {transform_indices = @transform_5, window_bounds = array<i64: 8, 32>}, {transform_indices = @transform_6, window_bounds = array<i64: 8, 32>}, {pipeline_mode = #tpu.pipeline_mode<synchronous>, transform_indices = @transform_7, window_bounds = array<i64: 8, 32>}, {pipeline_mode = #tpu.pipeline_mode<synchronous>, transform_indices = @transform_8, window_bounds = array<i64: 8, 32>}, {pipeline_mode = #tpu.pipeline_mode<synchronous>, transform_indices = @transform_9, window_bounds = array<i64: 128, 128>}, {transform_indices = @transform_10, window_bounds = array<i64: 8, 128>}]} {
    %c8_i32 = arith.constant 8 : i32
    %0 = arith.muli %arg0, %c8_i32 : i32
    %c0 = arith.constant 0 : index
    %c0_0 = arith.constant 0 : index
    %1 = vector.load %arg6[%c0, %c0_0] : memref<8x32xf32, #tpu.memory_space<vmem>>, vector<8x32xf32>
    %c0_1 = arith.constant 0 : index
    %c0_2 = arith.constant 0 : index
    %2 = vector.load %arg7[%c0_1, %c0_2] : memref<8x32xf32, #tpu.memory_space<vmem>>, vector<8x32xf32>
    %c0_3 = arith.constant 0 : index
    %c0_4 = arith.constant 0 : index
    %3 = vector.load %arg8[%c0_3, %c0_4] : memref<8x32xf32, #tpu.memory_space<vmem>>, vector<8x32xf32>
    %c0_5 = arith.constant 0 : index
    %c0_6 = arith.constant 0 : index
    %4 = vector.load %arg9[%c0_5, %c0_6] : memref<8x32xf32, #tpu.memory_space<vmem>>, vector<8x32xf32>
    %c0_7 = arith.constant 0 : index
    %c0_8 = arith.constant 0 : index
    %5 = vector.load %arg4[%c0_7, %c0_8] : memref<1x32xf32, #tpu.memory_space<vmem>>, vector<1x32xf32>
    %c0_9 = arith.constant 0 : index
    %c0_10 = arith.constant 0 : index
    %6 = vector.load %arg5[%c0_9, %c0_10] : memref<1x32xf32, #tpu.memory_space<vmem>>, vector<1x32xf32>
    %7 = tpu.iota {dimensions = array<i32: 0>} : vector<16x8xi32>
    %c8_i32_11 = arith.constant 8 : i32
    %c0_i32 = arith.constant 0 : i32
    %8 = arith.cmpi eq, %c8_i32_11, %c0_i32 : i32
    %c1_i32 = arith.constant 1 : i32
    %9 = arith.select %8, %c1_i32, %c8_i32_11 : i32
    %10 = vector.broadcast %9 : i32 to vector<16x8xi32>
    %11 = arith.remsi %7, %10 : vector<16x8xi32>
    %c0_i32_12 = arith.constant 0 : i32
    %12 = vector.broadcast %c0_i32_12 : i32 to vector<16x8xi32>
    %13 = arith.cmpi ne, %11, %12 : vector<16x8xi32>
    %c0_i32_13 = arith.constant 0 : i32
    %14 = vector.broadcast %c0_i32_13 : i32 to vector<16x8xi32>
    %15 = arith.cmpi slt, %11, %14 : vector<16x8xi32>
    %c0_i32_14 = arith.constant 0 : i32
    %16 = arith.cmpi slt, %9, %c0_i32_14 : i32
    %17 = vector.broadcast %16 : i1 to vector<16x8xi1>
    %18 = vector.broadcast %17 : vector<16x8xi1> to vector<16x8xi1>
    %19 = arith.xori %15, %18 : vector<16x8xi1>
    %20 = arith.andi %19, %13 : vector<16x8xi1>
    %21 = vector.broadcast %9 : i32 to vector<16x8xi32>
    %22 = arith.addi %11, %21 : vector<16x8xi32>
    %23 = arith.select %20, %22, %11 : vector<16x8xi1>, vector<16x8xi32>
    %24 = vector.broadcast %0 : i32 to vector<16x8xi32>
    %25 = arith.addi %23, %24 : vector<16x8xi32>
    %26 = tpu.iota {dimensions = array<i32: 1>} : vector<16x8xi32>
    %27 = arith.cmpi sle, %26, %25 : vector<16x8xi32>
    %c0_15 = arith.constant 0 : index
    %c0_16 = arith.constant 0 : index
    %28 = vector.load %arg1[%c0_15, %c0_16] : memref<8x128xbf16, #tpu.memory_space<vmem>>, vector<8x128xbf16>
    %c0_17 = arith.constant 0 : index
    %c0_18 = arith.constant 0 : index
    %29 = vector.load %arg2[%c0_17, %c0_18] : memref<8x64xbf16, #tpu.memory_space<vmem>>, vector<8x64xbf16>
    %c0_19 = arith.constant 0 : index
    %c0_20 = arith.constant 0 : index
    %30 = vector.load %arg3[%c0_19, %c0_20] : memref<8x64xbf16, #tpu.memory_space<vmem>>, vector<8x64xbf16>
    %c0_21 = arith.constant 0 : index
    %c0_22 = arith.constant 0 : index
    %31 = vector.load %arg10[%c0_21, %c0_22] : memref<128x128xbf16, #tpu.memory_space<vmem>>, vector<128x128xbf16>
    %cst = arith.constant 0.000000e+00 : f32
    %32 = vector.broadcast %cst : f32 to vector<8x128xf32>
    %33 = vector.extract_strided_slice %29 {offsets = [0, 0], sizes = [8, 32], strides = [1, 1]} : vector<8x64xbf16> to vector<8x32xbf16>
    %34 = arith.extf %33 : vector<8x32xbf16> to vector<8x32xf32>
    %35 = arith.mulf %34, %34 : vector<8x32xf32>
    %cst_23 = arith.constant dense<0.000000e+00> : vector<8xf32>
    %36 = vector.multi_reduction <add>, %35, %cst_23 [1] : vector<8x32xf32> to vector<8xf32>
    %37 = vector.shape_cast %36 : vector<8xf32> to vector<8x1xf32>
    %cst_24 = arith.constant 3.200000e+01 : f32
    %38 = vector.broadcast %cst_24 : f32 to vector<8x1xf32>
    %39 = arith.divf %37, %38 : vector<8x1xf32>
    %cst_25 = arith.constant 9.99999997E-7 : f32
    %40 = vector.broadcast %cst_25 : f32 to vector<8x1xf32>
    %41 = arith.addf %39, %40 : vector<8x1xf32>
    %42 = math.rsqrt %41 : vector<8x1xf32>
    %43 = vector.broadcast %42 : vector<8x1xf32> to vector<8x32xf32>
    %44 = arith.mulf %34, %43 : vector<8x32xf32>
    %45 = vector.broadcast %6 : vector<1x32xf32> to vector<8x32xf32>
    %46 = arith.mulf %44, %45 : vector<8x32xf32>
    %47 = vector.extract_strided_slice %46 {offsets = [0, 16], sizes = [8, 16], strides = [1, 1]} : vector<8x32xf32> to vector<8x16xf32>
    %48 = vector.extract_strided_slice %46 {offsets = [0, 0], sizes = [8, 16], strides = [1, 1]} : vector<8x32xf32> to vector<8x16xf32>
    %49 = tpu.concatenate %47, %48 in 1 : vector<8x16xf32>, vector<8x16xf32> -> vector<8x32xf32>
    %50 = arith.mulf %46, %3 : vector<8x32xf32>
    %51 = arith.mulf %49, %4 : vector<8x32xf32>
    %52 = arith.addf %50, %51 : vector<8x32xf32>
    %53 = arith.truncf %52 : vector<8x32xf32> to vector<8x32xbf16>
    %54 = vector.extract_strided_slice %30 {offsets = [0, 0], sizes = [8, 32], strides = [1, 1]} : vector<8x64xbf16> to vector<8x32xbf16>
    %55 = vector.extract_strided_slice %28 {offsets = [0, 0], sizes = [8, 32], strides = [1, 1]} : vector<8x128xbf16> to vector<8x32xbf16>
    %56 = arith.extf %55 : vector<8x32xbf16> to vector<8x32xf32>
    %57 = arith.mulf %56, %56 : vector<8x32xf32>
    %cst_26 = arith.constant dense<0.000000e+00> : vector<8xf32>
    %58 = vector.multi_reduction <add>, %57, %cst_26 [1] : vector<8x32xf32> to vector<8xf32>
    %59 = vector.shape_cast %58 : vector<8xf32> to vector<8x1xf32>
    %cst_27 = arith.constant 3.200000e+01 : f32
    %60 = vector.broadcast %cst_27 : f32 to vector<8x1xf32>
    %61 = arith.divf %59, %60 : vector<8x1xf32>
    %cst_28 = arith.constant 9.99999997E-7 : f32
    %62 = vector.broadcast %cst_28 : f32 to vector<8x1xf32>
    %63 = arith.addf %61, %62 : vector<8x1xf32>
    %64 = math.rsqrt %63 : vector<8x1xf32>
    %65 = vector.broadcast %64 : vector<8x1xf32> to vector<8x32xf32>
    %66 = arith.mulf %56, %65 : vector<8x32xf32>
    %67 = vector.broadcast %5 : vector<1x32xf32> to vector<8x32xf32>
    %68 = arith.mulf %66, %67 : vector<8x32xf32>
    %69 = vector.extract_strided_slice %68 {offsets = [0, 16], sizes = [8, 16], strides = [1, 1]} : vector<8x32xf32> to vector<8x16xf32>
    %70 = vector.extract_strided_slice %68 {offsets = [0, 0], sizes = [8, 16], strides = [1, 1]} : vector<8x32xf32> to vector<8x16xf32>
    %71 = tpu.concatenate %69, %70 in 1 : vector<8x16xf32>, vector<8x16xf32> -> vector<8x32xf32>
    %72 = arith.mulf %68, %1 : vector<8x32xf32>
    %73 = arith.mulf %71, %2 : vector<8x32xf32>
    %74 = arith.addf %72, %73 : vector<8x32xf32>
    %75 = vector.extract_strided_slice %28 {offsets = [0, 32], sizes = [8, 32], strides = [1, 1]} : vector<8x128xbf16> to vector<8x32xbf16>
    %76 = arith.extf %75 : vector<8x32xbf16> to vector<8x32xf32>
    %77 = arith.mulf %76, %76 : vector<8x32xf32>
    %cst_29 = arith.constant dense<0.000000e+00> : vector<8xf32>
    %78 = vector.multi_reduction <add>, %77, %cst_29 [1] : vector<8x32xf32> to vector<8xf32>
    %79 = vector.shape_cast %78 : vector<8xf32> to vector<8x1xf32>
    %cst_30 = arith.constant 3.200000e+01 : f32
    %80 = vector.broadcast %cst_30 : f32 to vector<8x1xf32>
    %81 = arith.divf %79, %80 : vector<8x1xf32>
    %cst_31 = arith.constant 9.99999997E-7 : f32
    %82 = vector.broadcast %cst_31 : f32 to vector<8x1xf32>
    %83 = arith.addf %81, %82 : vector<8x1xf32>
    %84 = math.rsqrt %83 : vector<8x1xf32>
    %85 = vector.broadcast %84 : vector<8x1xf32> to vector<8x32xf32>
    %86 = arith.mulf %76, %85 : vector<8x32xf32>
    %87 = vector.broadcast %5 : vector<1x32xf32> to vector<8x32xf32>
    %88 = arith.mulf %86, %87 : vector<8x32xf32>
    %89 = vector.extract_strided_slice %88 {offsets = [0, 16], sizes = [8, 16], strides = [1, 1]} : vector<8x32xf32> to vector<8x16xf32>
    %90 = vector.extract_strided_slice %88 {offsets = [0, 0], sizes = [8, 16], strides = [1, 1]} : vector<8x32xf32> to vector<8x16xf32>
    %91 = tpu.concatenate %89, %90 in 1 : vector<8x16xf32>, vector<8x16xf32> -> vector<8x32xf32>
    %92 = arith.mulf %88, %1 : vector<8x32xf32>
    %93 = arith.mulf %91, %2 : vector<8x32xf32>
    %94 = arith.addf %92, %93 : vector<8x32xf32>
    %95 = tpu.concatenate %74, %94 in 0 : vector<8x32xf32>, vector<8x32xf32> -> vector<16x32xf32>
    %96 = arith.truncf %95 : vector<16x32xf32> to vector<16x32xbf16>
    %cst_32 = arith.constant dense<0.000000e+00> : vector<16x8xf32>
    %97 = tpu.matmul %96, %53, %cst_32 {dimension_numbers = #tpu.dot_dimension_numbers<[1], [1], [0], [0], [0, 0, 1, 0], [], []>} : vector<16x32xbf16>, vector<8x32xbf16>, vector<16x8xf32> -> vector<16x8xf32>
    %cst_33 = arith.constant 0.176776692 : f32
    %98 = vector.broadcast %cst_33 : f32 to vector<16x8xf32>
    %99 = arith.mulf %97, %98 : vector<16x8xf32>
    %cst_34 = arith.constant -1.000000e+30 : f32
    %100 = vector.broadcast %cst_34 : f32 to vector<16x8xf32>
    %101 = arith.select %27, %99, %100 : vector<16x8xi1>, vector<16x8xf32>
    %cst_35 = arith.constant dense<0xFF800000> : vector<16xf32>
    %102 = vector.multi_reduction <maximumf>, %101, %cst_35 [1] : vector<16x8xf32> to vector<16xf32>
    %103 = vector.shape_cast %102 : vector<16xf32> to vector<16x1xf32>
    %104 = vector.broadcast %103 : vector<16x1xf32> to vector<16x8xf32>
    %105 = arith.subf %101, %104 : vector<16x8xf32>
    %106 = math.exp %105 : vector<16x8xf32>
    %cst_36 = arith.constant dense<0.000000e+00> : vector<16xf32>
    %107 = vector.multi_reduction <add>, %106, %cst_36 [1] : vector<16x8xf32> to vector<16xf32>
    %108 = vector.shape_cast %107 : vector<16xf32> to vector<16x1xf32>
    %109 = tpu.reciprocal %108 {approx = true} : vector<16x1xf32> -> vector<16x1xf32>
    %110 = vector.broadcast %109 : vector<16x1xf32> to vector<16x8xf32>
    %111 = arith.mulf %106, %110 : vector<16x8xf32>
    %112 = arith.truncf %111 : vector<16x8xf32> to vector<16x8xbf16>
    %cst_37 = arith.constant dense<0.000000e+00> : vector<16x32xf32>
    %113 = tpu.matmul %112, %54, %cst_37 {dimension_numbers = #tpu.dot_dimension_numbers<[1], [0], [0], [1], [0, 0, 1, 1], [], []>} : vector<16x8xbf16>, vector<8x32xbf16>, vector<16x32xf32> -> vector<16x32xf32>
    %114 = vector.extract_strided_slice %113 {offsets = [0, 0], sizes = [8, 32], strides = [1, 1]} : vector<16x32xf32> to vector<8x32xf32>
    %115 = arith.truncf %114 : vector<8x32xf32> to vector<8x32xbf16>
    %116 = vector.extract_strided_slice %31 {offsets = [0, 0], sizes = [32, 128], strides = [1, 1]} : vector<128x128xbf16> to vector<32x128xbf16>
    %cst_38 = arith.constant dense<0.000000e+00> : vector<8x128xf32>
    %117 = tpu.matmul %115, %116, %cst_38 {dimension_numbers = #tpu.dot_dimension_numbers<[1], [0], [0], [1], [0, 0, 1, 1], [], []>} : vector<8x32xbf16>, vector<32x128xbf16>, vector<8x128xf32> -> vector<8x128xf32>
    %118 = arith.addf %32, %117 : vector<8x128xf32>
    %119 = vector.extract_strided_slice %113 {offsets = [8, 0], sizes = [8, 32], strides = [1, 1]} : vector<16x32xf32> to vector<8x32xf32>
    %120 = arith.truncf %119 : vector<8x32xf32> to vector<8x32xbf16>
    %121 = vector.extract_strided_slice %31 {offsets = [32, 0], sizes = [32, 128], strides = [1, 1]} : vector<128x128xbf16> to vector<32x128xbf16>
    %cst_39 = arith.constant dense<0.000000e+00> : vector<8x128xf32>
    %122 = tpu.matmul %120, %121, %cst_39 {dimension_numbers = #tpu.dot_dimension_numbers<[1], [0], [0], [1], [0, 0, 1, 1], [], []>} : vector<8x32xbf16>, vector<32x128xbf16>, vector<8x128xf32> -> vector<8x128xf32>
    %123 = arith.addf %118, %122 : vector<8x128xf32>
    %124 = vector.extract_strided_slice %29 {offsets = [0, 32], sizes = [8, 32], strides = [1, 1]} : vector<8x64xbf16> to vector<8x32xbf16>
    %125 = arith.extf %124 : vector<8x32xbf16> to vector<8x32xf32>
    %126 = arith.mulf %125, %125 : vector<8x32xf32>
    %cst_40 = arith.constant dense<0.000000e+00> : vector<8xf32>
    %127 = vector.multi_reduction <add>, %126, %cst_40 [1] : vector<8x32xf32> to vector<8xf32>
    %128 = vector.shape_cast %127 : vector<8xf32> to vector<8x1xf32>
    %cst_41 = arith.constant 3.200000e+01 : f32
    %129 = vector.broadcast %cst_41 : f32 to vector<8x1xf32>
    %130 = arith.divf %128, %129 : vector<8x1xf32>
    %cst_42 = arith.constant 9.99999997E-7 : f32
    %131 = vector.broadcast %cst_42 : f32 to vector<8x1xf32>
    %132 = arith.addf %130, %131 : vector<8x1xf32>
    %133 = math.rsqrt %132 : vector<8x1xf32>
    %134 = vector.broadcast %133 : vector<8x1xf32> to vector<8x32xf32>
    %135 = arith.mulf %125, %134 : vector<8x32xf32>
    %136 = vector.broadcast %6 : vector<1x32xf32> to vector<8x32xf32>
    %137 = arith.mulf %135, %136 : vector<8x32xf32>
    %138 = vector.extract_strided_slice %137 {offsets = [0, 16], sizes = [8, 16], strides = [1, 1]} : vector<8x32xf32> to vector<8x16xf32>
    %139 = vector.extract_strided_slice %137 {offsets = [0, 0], sizes = [8, 16], strides = [1, 1]} : vector<8x32xf32> to vector<8x16xf32>
    %140 = tpu.concatenate %138, %139 in 1 : vector<8x16xf32>, vector<8x16xf32> -> vector<8x32xf32>
    %141 = arith.mulf %137, %3 : vector<8x32xf32>
    %142 = arith.mulf %140, %4 : vector<8x32xf32>
    %143 = arith.addf %141, %142 : vector<8x32xf32>
    %144 = arith.truncf %143 : vector<8x32xf32> to vector<8x32xbf16>
    %145 = vector.extract_strided_slice %30 {offsets = [0, 32], sizes = [8, 32], strides = [1, 1]} : vector<8x64xbf16> to vector<8x32xbf16>
    %146 = vector.extract_strided_slice %28 {offsets = [0, 64], sizes = [8, 32], strides = [1, 1]} : vector<8x128xbf16> to vector<8x32xbf16>
    %147 = arith.extf %146 : vector<8x32xbf16> to vector<8x32xf32>
    %148 = arith.mulf %147, %147 : vector<8x32xf32>
    %cst_43 = arith.constant dense<0.000000e+00> : vector<8xf32>
    %149 = vector.multi_reduction <add>, %148, %cst_43 [1] : vector<8x32xf32> to vector<8xf32>
    %150 = vector.shape_cast %149 : vector<8xf32> to vector<8x1xf32>
    %cst_44 = arith.constant 3.200000e+01 : f32
    %151 = vector.broadcast %cst_44 : f32 to vector<8x1xf32>
    %152 = arith.divf %150, %151 : vector<8x1xf32>
    %cst_45 = arith.constant 9.99999997E-7 : f32
    %153 = vector.broadcast %cst_45 : f32 to vector<8x1xf32>
    %154 = arith.addf %152, %153 : vector<8x1xf32>
    %155 = math.rsqrt %154 : vector<8x1xf32>
    %156 = vector.broadcast %155 : vector<8x1xf32> to vector<8x32xf32>
    %157 = arith.mulf %147, %156 : vector<8x32xf32>
    %158 = vector.broadcast %5 : vector<1x32xf32> to vector<8x32xf32>
    %159 = arith.mulf %157, %158 : vector<8x32xf32>
    %160 = vector.extract_strided_slice %159 {offsets = [0, 16], sizes = [8, 16], strides = [1, 1]} : vector<8x32xf32> to vector<8x16xf32>
    %161 = vector.extract_strided_slice %159 {offsets = [0, 0], sizes = [8, 16], strides = [1, 1]} : vector<8x32xf32> to vector<8x16xf32>
    %162 = tpu.concatenate %160, %161 in 1 : vector<8x16xf32>, vector<8x16xf32> -> vector<8x32xf32>
    %163 = arith.mulf %159, %1 : vector<8x32xf32>
    %164 = arith.mulf %162, %2 : vector<8x32xf32>
    %165 = arith.addf %163, %164 : vector<8x32xf32>
    %166 = vector.extract_strided_slice %28 {offsets = [0, 96], sizes = [8, 32], strides = [1, 1]} : vector<8x128xbf16> to vector<8x32xbf16>
    %167 = arith.extf %166 : vector<8x32xbf16> to vector<8x32xf32>
    %168 = arith.mulf %167, %167 : vector<8x32xf32>
    %cst_46 = arith.constant dense<0.000000e+00> : vector<8xf32>
    %169 = vector.multi_reduction <add>, %168, %cst_46 [1] : vector<8x32xf32> to vector<8xf32>
    %170 = vector.shape_cast %169 : vector<8xf32> to vector<8x1xf32>
    %cst_47 = arith.constant 3.200000e+01 : f32
    %171 = vector.broadcast %cst_47 : f32 to vector<8x1xf32>
    %172 = arith.divf %170, %171 : vector<8x1xf32>
    %cst_48 = arith.constant 9.99999997E-7 : f32
    %173 = vector.broadcast %cst_48 : f32 to vector<8x1xf32>
    %174 = arith.addf %172, %173 : vector<8x1xf32>
    %175 = math.rsqrt %174 : vector<8x1xf32>
    %176 = vector.broadcast %175 : vector<8x1xf32> to vector<8x32xf32>
    %177 = arith.mulf %167, %176 : vector<8x32xf32>
    %178 = vector.broadcast %5 : vector<1x32xf32> to vector<8x32xf32>
    %179 = arith.mulf %177, %178 : vector<8x32xf32>
    %180 = vector.extract_strided_slice %179 {offsets = [0, 16], sizes = [8, 16], strides = [1, 1]} : vector<8x32xf32> to vector<8x16xf32>
    %181 = vector.extract_strided_slice %179 {offsets = [0, 0], sizes = [8, 16], strides = [1, 1]} : vector<8x32xf32> to vector<8x16xf32>
    %182 = tpu.concatenate %180, %181 in 1 : vector<8x16xf32>, vector<8x16xf32> -> vector<8x32xf32>
    %183 = arith.mulf %179, %1 : vector<8x32xf32>
    %184 = arith.mulf %182, %2 : vector<8x32xf32>
    %185 = arith.addf %183, %184 : vector<8x32xf32>
    %186 = tpu.concatenate %165, %185 in 0 : vector<8x32xf32>, vector<8x32xf32> -> vector<16x32xf32>
    %187 = arith.truncf %186 : vector<16x32xf32> to vector<16x32xbf16>
    %cst_49 = arith.constant dense<0.000000e+00> : vector<16x8xf32>
    %188 = tpu.matmul %187, %144, %cst_49 {dimension_numbers = #tpu.dot_dimension_numbers<[1], [1], [0], [0], [0, 0, 1, 0], [], []>} : vector<16x32xbf16>, vector<8x32xbf16>, vector<16x8xf32> -> vector<16x8xf32>
    %cst_50 = arith.constant 0.176776692 : f32
    %189 = vector.broadcast %cst_50 : f32 to vector<16x8xf32>
    %190 = arith.mulf %188, %189 : vector<16x8xf32>
    %cst_51 = arith.constant -1.000000e+30 : f32
    %191 = vector.broadcast %cst_51 : f32 to vector<16x8xf32>
    %192 = arith.select %27, %190, %191 : vector<16x8xi1>, vector<16x8xf32>
    %cst_52 = arith.constant dense<0xFF800000> : vector<16xf32>
    %193 = vector.multi_reduction <maximumf>, %192, %cst_52 [1] : vector<16x8xf32> to vector<16xf32>
    %194 = vector.shape_cast %193 : vector<16xf32> to vector<16x1xf32>
    %195 = vector.broadcast %194 : vector<16x1xf32> to vector<16x8xf32>
    %196 = arith.subf %192, %195 : vector<16x8xf32>
    %197 = math.exp %196 : vector<16x8xf32>
    %cst_53 = arith.constant dense<0.000000e+00> : vector<16xf32>
    %198 = vector.multi_reduction <add>, %197, %cst_53 [1] : vector<16x8xf32> to vector<16xf32>
    %199 = vector.shape_cast %198 : vector<16xf32> to vector<16x1xf32>
    %200 = tpu.reciprocal %199 {approx = true} : vector<16x1xf32> -> vector<16x1xf32>
    %201 = vector.broadcast %200 : vector<16x1xf32> to vector<16x8xf32>
    %202 = arith.mulf %197, %201 : vector<16x8xf32>
    %203 = arith.truncf %202 : vector<16x8xf32> to vector<16x8xbf16>
    %cst_54 = arith.constant dense<0.000000e+00> : vector<16x32xf32>
    %204 = tpu.matmul %203, %145, %cst_54 {dimension_numbers = #tpu.dot_dimension_numbers<[1], [0], [0], [1], [0, 0, 1, 1], [], []>} : vector<16x8xbf16>, vector<8x32xbf16>, vector<16x32xf32> -> vector<16x32xf32>
    %205 = vector.extract_strided_slice %204 {offsets = [0, 0], sizes = [8, 32], strides = [1, 1]} : vector<16x32xf32> to vector<8x32xf32>
    %206 = arith.truncf %205 : vector<8x32xf32> to vector<8x32xbf16>
    %207 = vector.extract_strided_slice %31 {offsets = [64, 0], sizes = [32, 128], strides = [1, 1]} : vector<128x128xbf16> to vector<32x128xbf16>
    %cst_55 = arith.constant dense<0.000000e+00> : vector<8x128xf32>
    %208 = tpu.matmul %206, %207, %cst_55 {dimension_numbers = #tpu.dot_dimension_numbers<[1], [0], [0], [1], [0, 0, 1, 1], [], []>} : vector<8x32xbf16>, vector<32x128xbf16>, vector<8x128xf32> -> vector<8x128xf32>
    %209 = arith.addf %123, %208 : vector<8x128xf32>
    %210 = vector.extract_strided_slice %204 {offsets = [8, 0], sizes = [8, 32], strides = [1, 1]} : vector<16x32xf32> to vector<8x32xf32>
    %211 = arith.truncf %210 : vector<8x32xf32> to vector<8x32xbf16>
    %212 = vector.extract_strided_slice %31 {offsets = [96, 0], sizes = [32, 128], strides = [1, 1]} : vector<128x128xbf16> to vector<32x128xbf16>
    %cst_56 = arith.constant dense<0.000000e+00> : vector<8x128xf32>
    %213 = tpu.matmul %211, %212, %cst_56 {dimension_numbers = #tpu.dot_dimension_numbers<[1], [0], [0], [1], [0, 0, 1, 1], [], []>} : vector<8x32xbf16>, vector<32x128xbf16>, vector<8x128xf32> -> vector<8x128xf32>
    %214 = arith.addf %209, %213 : vector<8x128xf32>
    %215 = arith.truncf %214 : vector<8x128xf32> to vector<8x128xbf16>
    %c0_57 = arith.constant 0 : index
    %c0_58 = arith.constant 0 : index
    %216 = vector.load %arg11[%c0_57, %c0_58] : memref<8x128xbf16, #tpu.memory_space<vmem>>, vector<8x128xbf16>
    tpu.vector_store %arg11[%c0_57, %c0_58], %215 {strides = array<i32>} : memref<8x128xbf16, #tpu.memory_space<vmem>>, vector<8x128xbf16>,
    return
  }
  func.func @transform_0(%arg0: i32) -> (i32, i32) {
    %c0_i32 = arith.constant 0 : i32
    %c0_i32_0 = arith.constant 0 : i32
    return %arg0, %c0_i32 : i32, i32
  }
  func.func @transform_1(%arg0: i32) -> (i32, i32) {
    %c0_i32 = arith.constant 0 : i32
    %c0_i32_0 = arith.constant 0 : i32
    %c0_i32_1 = arith.constant 0 : i32
    return %c0_i32, %c0_i32_0 : i32, i32
  }
  func.func @transform_2(%arg0: i32) -> (i32, i32) {
    %c0_i32 = arith.constant 0 : i32
    %c0_i32_0 = arith.constant 0 : i32
    %c0_i32_1 = arith.constant 0 : i32
    return %c0_i32, %c0_i32_0 : i32, i32
  }
  func.func @transform_3(%arg0: i32) -> (i32, i32) {
    %c0_i32 = arith.constant 0 : i32
    %c0_i32_0 = arith.constant 0 : i32
    %c0_i32_1 = arith.constant 0 : i32
    return %c0_i32, %c0_i32_0 : i32, i32
  }
  func.func @transform_4(%arg0: i32) -> (i32, i32) {
    %c0_i32 = arith.constant 0 : i32
    %c0_i32_0 = arith.constant 0 : i32
    %c0_i32_1 = arith.constant 0 : i32
    return %c0_i32, %c0_i32_0 : i32, i32
  }
  func.func @transform_5(%arg0: i32) -> (i32, i32) {
    %c0_i32 = arith.constant 0 : i32
    %c0_i32_0 = arith.constant 0 : i32
    return %arg0, %c0_i32 : i32, i32
  }
  func.func @transform_6(%arg0: i32) -> (i32, i32) {
    %c0_i32 = arith.constant 0 : i32
    %c0_i32_0 = arith.constant 0 : i32
    return %arg0, %c0_i32 : i32, i32
  }
  func.func @transform_7(%arg0: i32) -> (i32, i32) {
    %c0_i32 = arith.constant 0 : i32
    %c0_i32_0 = arith.constant 0 : i32
    %c0_i32_1 = arith.constant 0 : i32
    return %c0_i32, %c0_i32_0 : i32, i32
  }
  func.func @transform_8(%arg0: i32) -> (i32, i32) {
    %c0_i32 = arith.constant 0 : i32
    %c0_i32_0 = arith.constant 0 : i32
    %c0_i32_1 = arith.constant 0 : i32
    return %c0_i32, %c0_i32_0 : i32, i32
  }
  func.func @transform_9(%arg0: i32) -> (i32, i32) {
    %c0_i32 = arith.constant 0 : i32
    %c0_i32_0 = arith.constant 0 : i32
    %c0_i32_1 = arith.constant 0 : i32
    return %c0_i32, %c0_i32_0 : i32, i32
  }
  func.func @transform_10(%arg0: i32) -> (i32, i32) {
    %c0_i32 = arith.constant 0 : i32
    %c0_i32_0 = arith.constant 0 : i32
    return %arg0, %c0_i32 : i32, i32
  }
}

module attributes {stable_mosaic.version = 11 : i64} {
  func.func @_mlp_kernel(%arg0: i32, %arg1: memref<8x128xbf16, #tpu.memory_space<vmem>>, %arg2: memref<128x512xbf16, #tpu.memory_space<vmem>>, %arg3: memref<256x128xbf16, #tpu.memory_space<vmem>>, %arg4: memref<8x128xbf16, #tpu.memory_space<vmem>>) attributes {dimension_semantics = [#tpu.dimension_semantics<parallel>], iteration_bounds = array<i64: 1>, scalar_prefetch = 0 : i64, scratch_operands = 0 : i64, tpu.core_type = #tpu.core_type<tc>, window_params = [{transform_indices = @transform_0, window_bounds = array<i64: 8, 128>}, {pipeline_mode = #tpu.pipeline_mode<synchronous>, transform_indices = @transform_1, window_bounds = array<i64: 128, 512>}, {pipeline_mode = #tpu.pipeline_mode<synchronous>, transform_indices = @transform_2, window_bounds = array<i64: 256, 128>}, {transform_indices = @transform_3, window_bounds = array<i64: 8, 128>}]} {
    %c0 = arith.constant 0 : index
    %c0_0 = arith.constant 0 : index
    %0 = vector.load %arg1[%c0, %c0_0] : memref<8x128xbf16, #tpu.memory_space<vmem>>, vector<8x128xbf16>
    %c0_1 = arith.constant 0 : index
    %c0_2 = arith.constant 0 : index
    %1 = vector.load %arg2[%c0_1, %c0_2] : memref<128x512xbf16, #tpu.memory_space<vmem>>, vector<128x512xbf16>
    %cst = arith.constant dense<0.000000e+00> : vector<8x512xf32>
    %2 = tpu.matmul %0, %1, %cst {dimension_numbers = #tpu.dot_dimension_numbers<[1], [0], [0], [1], [0, 0, 1, 1], [], []>} : vector<8x128xbf16>, vector<128x512xbf16>, vector<8x512xf32> -> vector<8x512xf32>
    %3 = vector.extract_strided_slice %2 {offsets = [0, 0], sizes = [8, 256], strides = [1, 1]} : vector<8x512xf32> to vector<8x256xf32>
    %4 = vector.extract_strided_slice %2 {offsets = [0, 256], sizes = [8, 256], strides = [1, 1]} : vector<8x512xf32> to vector<8x256xf32>
    %5 = arith.negf %3 : vector<8x256xf32>
    %6 = math.exp %5 : vector<8x256xf32>
    %cst_3 = arith.constant 1.000000e+00 : f32
    %7 = vector.broadcast %cst_3 : f32 to vector<8x256xf32>
    %8 = arith.addf %7, %6 : vector<8x256xf32>
    %9 = arith.divf %7, %8 : vector<8x256xf32>
    %10 = arith.mulf %3, %9 : vector<8x256xf32>
    %11 = arith.mulf %10, %4 : vector<8x256xf32>
    %12 = arith.truncf %11 : vector<8x256xf32> to vector<8x256xbf16>
    %c0_4 = arith.constant 0 : index
    %c0_5 = arith.constant 0 : index
    %13 = vector.load %arg3[%c0_4, %c0_5] : memref<256x128xbf16, #tpu.memory_space<vmem>>, vector<256x128xbf16>
    %cst_6 = arith.constant dense<0.000000e+00> : vector<8x128xf32>
    %14 = tpu.matmul %12, %13, %cst_6 {dimension_numbers = #tpu.dot_dimension_numbers<[1], [0], [0], [1], [0, 0, 1, 1], [], []>} : vector<8x256xbf16>, vector<256x128xbf16>, vector<8x128xf32> -> vector<8x128xf32>
    %15 = arith.truncf %14 : vector<8x128xf32> to vector<8x128xbf16>
    %c0_7 = arith.constant 0 : index
    %c0_8 = arith.constant 0 : index
    %16 = vector.load %arg4[%c0_7, %c0_8] : memref<8x128xbf16, #tpu.memory_space<vmem>>, vector<8x128xbf16>
    tpu.vector_store %arg4[%c0_7, %c0_8], %15 {strides = array<i32>} : memref<8x128xbf16, #tpu.memory_space<vmem>>, vector<8x128xbf16>,
    return
  }
  func.func @transform_0(%arg0: i32) -> (i32, i32) {
    %c0_i32 = arith.constant 0 : i32
    %c0_i32_0 = arith.constant 0 : i32
    return %arg0, %c0_i32 : i32, i32
  }
  func.func @transform_1(%arg0: i32) -> (i32, i32) {
    %c0_i32 = arith.constant 0 : i32
    %c0_i32_0 = arith.constant 0 : i32
    %c0_i32_1 = arith.constant 0 : i32
    return %c0_i32, %c0_i32_0 : i32, i32
  }
  func.func @transform_2(%arg0: i32) -> (i32, i32) {
    %c0_i32 = arith.constant 0 : i32
    %c0_i32_0 = arith.constant 0 : i32
    %c0_i32_1 = arith.constant 0 : i32
    return %c0_i32, %c0_i32_0 : i32, i32
  }
  func.func @transform_3(%arg0: i32) -> (i32, i32) {
    %c0_i32 = arith.constant 0 : i32
    %c0_i32_0 = arith.constant 0 : i32
    return %arg0, %c0_i32 : i32, i32
  }
}

module attributes {stable_mosaic.version = 11 : i64} {
  func.func @_linear_kernel(%arg0: i32, %arg1: i32, %arg2: i32, %arg3: memref<8x128xbf16, #tpu.memory_space<vmem>>, %arg4: memref<128x8xf32, #tpu.memory_space<vmem>>, %arg5: memref<8x8xf32, #tpu.memory_space<vmem>>, %arg6: memref<8x8xf32, #tpu.memory_space<vmem>>) attributes {dimension_semantics = [#tpu.dimension_semantics<parallel>, #tpu.dimension_semantics<parallel>, #tpu.dimension_semantics<arbitrary>], iteration_bounds = array<i64: 1, 1, 1>, scalar_prefetch = 0 : i64, scratch_operands = 1 : i64, tpu.core_type = #tpu.core_type<tc>, window_params = [{transform_indices = @transform_0, window_bounds = array<i64: 8, 128>}, {transform_indices = @transform_1, window_bounds = array<i64: 128, 8>}, {transform_indices = @transform_2, window_bounds = array<i64: 8, 8>}]} {
    %c0_i32 = arith.constant 0 : i32
    %0 = arith.cmpi eq, %arg2, %c0_i32 : i32
    %1 = arith.extui %0 : i1 to i32
    %c0_i32_0 = arith.constant 0 : i32
    %2 = arith.cmpi ne, %1, %c0_i32_0 : i32
    scf.if %2 {
      %cst_10 = arith.constant 0.000000e+00 : f32
      %12 = vector.broadcast %cst_10 : f32 to vector<8x8xf32>
      %c0_11 = arith.constant 0 : index
      %c0_12 = arith.constant 0 : index
      %13 = vector.load %arg6[%c0_11, %c0_12] : memref<8x8xf32, #tpu.memory_space<vmem>>, vector<8x8xf32>
      tpu.vector_store %arg6[%c0_11, %c0_12], %12 {strides = array<i32>} : memref<8x8xf32, #tpu.memory_space<vmem>>, vector<8x8xf32>,
    } else {
    }
    %c0 = arith.constant 0 : index
    %c0_1 = arith.constant 0 : index
    %3 = vector.load %arg6[%c0, %c0_1] : memref<8x8xf32, #tpu.memory_space<vmem>>, vector<8x8xf32>
    %c0_2 = arith.constant 0 : index
    %c0_3 = arith.constant 0 : index
    %4 = vector.load %arg3[%c0_2, %c0_3] : memref<8x128xbf16, #tpu.memory_space<vmem>>, vector<8x128xbf16>
    %c0_4 = arith.constant 0 : index
    %c0_5 = arith.constant 0 : index
    %5 = vector.load %arg4[%c0_4, %c0_5] : memref<128x8xf32, #tpu.memory_space<vmem>>, vector<128x8xf32>
    %cst = arith.constant dense<0.000000e+00> : vector<8x8xf32>
    %6 = tpu.matmul %4, %5, %cst {dimension_numbers = #tpu.dot_dimension_numbers<[1], [0], [0], [1], [0, 0, 1, 1], [], []>} : vector<8x128xbf16>, vector<128x8xf32>, vector<8x8xf32> -> vector<8x8xf32>
    %7 = arith.addf %3, %6 : vector<8x8xf32>
    %c0_6 = arith.constant 0 : index
    %c0_7 = arith.constant 0 : index
    %8 = vector.load %arg6[%c0_6, %c0_7] : memref<8x8xf32, #tpu.memory_space<vmem>>, vector<8x8xf32>
    tpu.vector_store %arg6[%c0_6, %c0_7], %7 {strides = array<i32>} : memref<8x8xf32, #tpu.memory_space<vmem>>, vector<8x8xf32>,
    %c0_i32_8 = arith.constant 0 : i32
    %9 = arith.cmpi eq, %arg2, %c0_i32_8 : i32
    %10 = arith.extui %9 : i1 to i32
    %c0_i32_9 = arith.constant 0 : i32
    %11 = arith.cmpi ne, %10, %c0_i32_9 : i32
    scf.if %11 {
      %c0_10 = arith.constant 0 : index
      %c0_11 = arith.constant 0 : index
      %12 = vector.load %arg6[%c0_10, %c0_11] : memref<8x8xf32, #tpu.memory_space<vmem>>, vector<8x8xf32>
      %c0_12 = arith.constant 0 : index
      %c0_13 = arith.constant 0 : index
      %13 = vector.load %arg5[%c0_12, %c0_13] : memref<8x8xf32, #tpu.memory_space<vmem>>, vector<8x8xf32>
      tpu.vector_store %arg5[%c0_12, %c0_13], %12 {strides = array<i32>} : memref<8x8xf32, #tpu.memory_space<vmem>>, vector<8x8xf32>,
    } else {
    }
    return
  }
  func.func @transform_0(%arg0: i32, %arg1: i32, %arg2: i32) -> (i32, i32) {
    %c0_i32 = arith.constant 0 : i32
    return %arg0, %arg2 : i32, i32
  }
  func.func @transform_1(%arg0: i32, %arg1: i32, %arg2: i32) -> (i32, i32) {
    %c0_i32 = arith.constant 0 : i32
    return %arg2, %arg1 : i32, i32
  }
  func.func @transform_2(%arg0: i32, %arg1: i32, %arg2: i32) -> (i32, i32) {
    %c0_i32 = arith.constant 0 : i32
    return %arg0, %arg1 : i32, i32
  }
}

module attributes {stable_mosaic.version = 11 : i64} {
  func.func @_mlp_kernel(%arg0: i32, %arg1: memref<8x128xbf16, #tpu.memory_space<vmem>>, %arg2: memref<128x256xbf16, #tpu.memory_space<vmem>>, %arg3: memref<128x128xbf16, #tpu.memory_space<vmem>>, %arg4: memref<8x128xbf16, #tpu.memory_space<vmem>>) attributes {dimension_semantics = [#tpu.dimension_semantics<parallel>], iteration_bounds = array<i64: 1>, scalar_prefetch = 0 : i64, scratch_operands = 0 : i64, tpu.core_type = #tpu.core_type<tc>, window_params = [{transform_indices = @transform_0, window_bounds = array<i64: 8, 128>}, {pipeline_mode = #tpu.pipeline_mode<synchronous>, transform_indices = @transform_1, window_bounds = array<i64: 128, 256>}, {pipeline_mode = #tpu.pipeline_mode<synchronous>, transform_indices = @transform_2, window_bounds = array<i64: 128, 128>}, {transform_indices = @transform_3, window_bounds = array<i64: 8, 128>}]} {
    %c0 = arith.constant 0 : index
    %c0_0 = arith.constant 0 : index
    %0 = vector.load %arg1[%c0, %c0_0] : memref<8x128xbf16, #tpu.memory_space<vmem>>, vector<8x128xbf16>
    %c0_1 = arith.constant 0 : index
    %c0_2 = arith.constant 0 : index
    %1 = vector.load %arg2[%c0_1, %c0_2] : memref<128x256xbf16, #tpu.memory_space<vmem>>, vector<128x256xbf16>
    %cst = arith.constant dense<0.000000e+00> : vector<8x256xf32>
    %2 = tpu.matmul %0, %1, %cst {dimension_numbers = #tpu.dot_dimension_numbers<[1], [0], [0], [1], [0, 0, 1, 1], [], []>} : vector<8x128xbf16>, vector<128x256xbf16>, vector<8x256xf32> -> vector<8x256xf32>
    %3 = vector.extract_strided_slice %2 {offsets = [0, 0], sizes = [8, 128], strides = [1, 1]} : vector<8x256xf32> to vector<8x128xf32>
    %4 = vector.extract_strided_slice %2 {offsets = [0, 128], sizes = [8, 128], strides = [1, 1]} : vector<8x256xf32> to vector<8x128xf32>
    %5 = arith.negf %3 : vector<8x128xf32>
    %6 = math.exp %5 : vector<8x128xf32>
    %cst_3 = arith.constant 1.000000e+00 : f32
    %7 = vector.broadcast %cst_3 : f32 to vector<8x128xf32>
    %8 = arith.addf %7, %6 : vector<8x128xf32>
    %9 = arith.divf %7, %8 : vector<8x128xf32>
    %10 = arith.mulf %3, %9 : vector<8x128xf32>
    %11 = arith.mulf %10, %4 : vector<8x128xf32>
    %12 = arith.truncf %11 : vector<8x128xf32> to vector<8x128xbf16>
    %c0_4 = arith.constant 0 : index
    %c0_5 = arith.constant 0 : index
    %13 = vector.load %arg3[%c0_4, %c0_5] : memref<128x128xbf16, #tpu.memory_space<vmem>>, vector<128x128xbf16>
    %cst_6 = arith.constant dense<0.000000e+00> : vector<8x128xf32>
    %14 = tpu.matmul %12, %13, %cst_6 {dimension_numbers = #tpu.dot_dimension_numbers<[1], [0], [0], [1], [0, 0, 1, 1], [], []>} : vector<8x128xbf16>, vector<128x128xbf16>, vector<8x128xf32> -> vector<8x128xf32>
    %15 = arith.truncf %14 : vector<8x128xf32> to vector<8x128xbf16>
    %c0_7 = arith.constant 0 : index
    %c0_8 = arith.constant 0 : index
    %16 = vector.load %arg4[%c0_7, %c0_8] : memref<8x128xbf16, #tpu.memory_space<vmem>>, vector<8x128xbf16>
    tpu.vector_store %arg4[%c0_7, %c0_8], %15 {strides = array<i32>} : memref<8x128xbf16, #tpu.memory_space<vmem>>, vector<8x128xbf16>,
    return
  }
  func.func @transform_0(%arg0: i32) -> (i32, i32) {
    %c0_i32 = arith.constant 0 : i32
    %c0_i32_0 = arith.constant 0 : i32
    return %arg0, %c0_i32 : i32, i32
  }
  func.func @transform_1(%arg0: i32) -> (i32, i32) {
    %c0_i32 = arith.constant 0 : i32
    %c0_i32_0 = arith.constant 0 : i32
    %c0_i32_1 = arith.constant 0 : i32
    return %c0_i32, %c0_i32_0 : i32, i32
  }
  func.func @transform_2(%arg0: i32) -> (i32, i32) {
    %c0_i32 = arith.constant 0 : i32
    %c0_i32_0 = arith.constant 0 : i32
    %c0_i32_1 = arith.constant 0 : i32
    return %c0_i32, %c0_i32_0 : i32, i32
  }
  func.func @transform_3(%arg0: i32) -> (i32, i32) {
    %c0_i32 = arith.constant 0 : i32
    %c0_i32_0 = arith.constant 0 : i32
    return %arg0, %c0_i32 : i32, i32
  }
}

module attributes {stable_mosaic.version = 11 : i64} {
  func.func @_add_rmsnorm_kernel(%arg0: i32, %arg1: memref<8x128xbf16, #tpu.memory_space<vmem>>, %arg2: memref<8x128xbf16, #tpu.memory_space<vmem>>, %arg3: memref<1x128xf32, #tpu.memory_space<vmem>>, %arg4: memref<8x128xbf16, #tpu.memory_space<vmem>>, %arg5: memref<8x128xbf16, #tpu.memory_space<vmem>>) attributes {dimension_semantics = [#tpu.dimension_semantics<parallel>], iteration_bounds = array<i64: 1>, scalar_prefetch = 0 : i64, scratch_operands = 0 : i64, tpu.core_type = #tpu.core_type<tc>, window_params = [{transform_indices = @transform_0, window_bounds = array<i64: 8, 128>}, {transform_indices = @transform_1, window_bounds = array<i64: 8, 128>}, {pipeline_mode = #tpu.pipeline_mode<synchronous>, transform_indices = @transform_2, window_bounds = array<i64: 1, 128>}, {transform_indices = @transform_3, window_bounds = array<i64: 8, 128>}, {transform_indices = @transform_4, window_bounds = array<i64: 8, 128>}]} {
    %c0 = arith.constant 0 : index
    %c0_0 = arith.constant 0 : index
    %0 = vector.load %arg1[%c0, %c0_0] : memref<8x128xbf16, #tpu.memory_space<vmem>>, vector<8x128xbf16>
    %1 = arith.extf %0 : vector<8x128xbf16> to vector<8x128xf32>
    %c0_1 = arith.constant 0 : index
    %c0_2 = arith.constant 0 : index
    %2 = vector.load %arg2[%c0_1, %c0_2] : memref<8x128xbf16, #tpu.memory_space<vmem>>, vector<8x128xbf16>
    %3 = arith.extf %2 : vector<8x128xbf16> to vector<8x128xf32>
    %4 = arith.addf %1, %3 : vector<8x128xf32>
    %5 = arith.truncf %4 : vector<8x128xf32> to vector<8x128xbf16>
    %c0_3 = arith.constant 0 : index
    %c0_4 = arith.constant 0 : index
    %6 = vector.load %arg5[%c0_3, %c0_4] : memref<8x128xbf16, #tpu.memory_space<vmem>>, vector<8x128xbf16>
    tpu.vector_store %arg5[%c0_3, %c0_4], %5 {strides = array<i32>} : memref<8x128xbf16, #tpu.memory_space<vmem>>, vector<8x128xbf16>,
    %7 = arith.mulf %4, %4 : vector<8x128xf32>
    %cst = arith.constant dense<0.000000e+00> : vector<8xf32>
    %8 = vector.multi_reduction <add>, %7, %cst [1] : vector<8x128xf32> to vector<8xf32>
    %9 = vector.shape_cast %8 : vector<8xf32> to vector<8x1xf32>
    %cst_5 = arith.constant 1.280000e+02 : f32
    %10 = vector.broadcast %cst_5 : f32 to vector<8x1xf32>
    %11 = arith.divf %9, %10 : vector<8x1xf32>
    %cst_6 = arith.constant 9.99999997E-7 : f32
    %12 = vector.broadcast %cst_6 : f32 to vector<8x1xf32>
    %13 = arith.addf %11, %12 : vector<8x1xf32>
    %14 = math.rsqrt %13 : vector<8x1xf32>
    %15 = vector.broadcast %14 : vector<8x1xf32> to vector<8x128xf32>
    %16 = arith.mulf %4, %15 : vector<8x128xf32>
    %c0_7 = arith.constant 0 : index
    %c0_8 = arith.constant 0 : index
    %17 = vector.load %arg3[%c0_7, %c0_8] : memref<1x128xf32, #tpu.memory_space<vmem>>, vector<1x128xf32>
    %18 = vector.broadcast %17 : vector<1x128xf32> to vector<8x128xf32>
    %19 = arith.mulf %16, %18 : vector<8x128xf32>
    %20 = arith.truncf %19 : vector<8x128xf32> to vector<8x128xbf16>
    %c0_9 = arith.constant 0 : index
    %c0_10 = arith.constant 0 : index
    %21 = vector.load %arg4[%c0_9, %c0_10] : memref<8x128xbf16, #tpu.memory_space<vmem>>, vector<8x128xbf16>
    tpu.vector_store %arg4[%c0_9, %c0_10], %20 {strides = array<i32>} : memref<8x128xbf16, #tpu.memory_space<vmem>>, vector<8x128xbf16>,
    return
  }
  func.func @transform_0(%arg0: i32) -> (i32, i32) {
    %c0_i32 = arith.constant 0 : i32
    %c0_i32_0 = arith.constant 0 : i32
    return %arg0, %c0_i32 : i32, i32
  }
  func.func @transform_1(%arg0: i32) -> (i32, i32) {
    %c0_i32 = arith.constant 0 : i32
    %c0_i32_0 = arith.constant 0 : i32
    return %arg0, %c0_i32 : i32, i32
  }
  func.func @transform_2(%arg0: i32) -> (i32, i32) {
    %c0_i32 = arith.constant 0 : i32
    %c0_i32_0 = arith.constant 0 : i32
    %c0_i32_1 = arith.constant 0 : i32
    return %c0_i32, %c0_i32_0 : i32, i32
  }
  func.func @transform_3(%arg0: i32) -> (i32, i32) {
    %c0_i32 = arith.constant 0 : i32
    %c0_i32_0 = arith.constant 0 : i32
    return %arg0, %c0_i32 : i32, i32
  }
  func.func @transform_4(%arg0: i32) -> (i32, i32) {
    %c0_i32 = arith.constant 0 : i32
    %c0_i32_0 = arith.constant 0 : i32
    return %arg0, %c0_i32 : i32, i32
  }
}

module attributes {stable_mosaic.version = 11 : i64} {
  func.func @_moe_kernel(%arg0: i32, %arg1: i32, %arg2: memref<8xi32, #tpu.memory_space<smem>>, %arg3: memref<8x128xbf16, #tpu.memory_space<vmem>>, %arg4: memref<8x128xbf16, #tpu.memory_space<vmem>>, %arg5: memref<1x128x256xbf16, #tpu.memory_space<vmem>>, %arg6: memref<1x128x128xbf16, #tpu.memory_space<vmem>>, %arg7: memref<1x8x1xf32, #tpu.memory_space<vmem>>, %arg8: memref<8x128xbf16, #tpu.memory_space<vmem>>, %arg9: memref<8x128xf32, #tpu.memory_space<vmem>>) attributes {dimension_semantics = [#tpu.dimension_semantics<parallel>, #tpu.dimension_semantics<arbitrary>], iteration_bounds = array<i64: 1, 8>, scalar_prefetch = 1 : i64, scratch_operands = 1 : i64, tpu.core_type = #tpu.core_type<tc>, window_params = [{transform_indices = @transform_0, window_bounds = array<i64: 8, 128>}, {transform_indices = @transform_1, window_bounds = array<i64: 8, 128>}, {transform_indices = @transform_2, window_bounds = array<i64: 1, 128, 256>}, {transform_indices = @transform_3, window_bounds = array<i64: 1, 128, 128>}, {transform_indices = @transform_4, window_bounds = array<i64: 1, 8, 1>}, {transform_indices = @transform_5, window_bounds = array<i64: 8, 128>}]} {
    %c0_i32 = arith.constant 0 : i32
    %0 = arith.cmpi eq, %arg1, %c0_i32 : i32
    %1 = arith.extui %0 : i1 to i32
    %c0_i32_0 = arith.constant 0 : i32
    %2 = arith.cmpi ne, %1, %c0_i32_0 : i32
    scf.if %2 {
      %c0 = arith.constant 0 : index
      %c0_4 = arith.constant 0 : index
      %11 = vector.load %arg4[%c0, %c0_4] : memref<8x128xbf16, #tpu.memory_space<vmem>>, vector<8x128xbf16>
      %12 = arith.extf %11 : vector<8x128xbf16> to vector<8x128xf32>
      %c0_5 = arith.constant 0 : index
      %c0_6 = arith.constant 0 : index
      %13 = vector.load %arg9[%c0_5, %c0_6] : memref<8x128xf32, #tpu.memory_space<vmem>>, vector<8x128xf32>
      tpu.vector_store %arg9[%c0_5, %c0_6], %12 {strides = array<i32>} : memref<8x128xf32, #tpu.memory_space<vmem>>, vector<8x128xf32>,
    } else {
    }
    %3 = arith.index_cast %arg1 : i32 to index
    %4 = memref.load %arg2[%3] : memref<8xi32, #tpu.memory_space<smem>>
    %c0_i32_1 = arith.constant 0 : i32
    %5 = arith.cmpi sgt, %4, %c0_i32_1 : i32
    %6 = arith.extui %5 : i1 to i32
    %c0_i32_2 = arith.constant 0 : i32
    %7 = arith.cmpi ne, %6, %c0_i32_2 : i32
    scf.if %7 {
      %c0 = arith.constant 0 : index
      %c0_4 = arith.constant 0 : index
      %11 = vector.load %arg3[%c0, %c0_4] : memref<8x128xbf16, #tpu.memory_space<vmem>>, vector<8x128xbf16>
      %c0_5 = arith.constant 0 : index
      %c0_6 = arith.constant 0 : index
      %c0_7 = arith.constant 0 : index
      %12 = vector.load %arg5[%c0_5, %c0_6, %c0_7] : memref<1x128x256xbf16, #tpu.memory_space<vmem>>, vector<1x128x256xbf16>
      %13 = vector.shape_cast %12 : vector<1x128x256xbf16> to vector<128x256xbf16>
      %cst = arith.constant dense<0.000000e+00> : vector<8x256xf32>
      %14 = tpu.matmul %11, %13, %cst {dimension_numbers = #tpu.dot_dimension_numbers<[1], [0], [0], [1], [0, 0, 1, 1], [], []>} : vector<8x128xbf16>, vector<128x256xbf16>, vector<8x256xf32> -> vector<8x256xf32>
      %15 = vector.extract_strided_slice %14 {offsets = [0, 0], sizes = [8, 128], strides = [1, 1]} : vector<8x256xf32> to vector<8x128xf32>
      %16 = vector.extract_strided_slice %14 {offsets = [0, 128], sizes = [8, 128], strides = [1, 1]} : vector<8x256xf32> to vector<8x128xf32>
      %17 = arith.negf %15 : vector<8x128xf32>
      %18 = math.exp %17 : vector<8x128xf32>
      %cst_8 = arith.constant 1.000000e+00 : f32
      %19 = vector.broadcast %cst_8 : f32 to vector<8x128xf32>
      %20 = arith.addf %19, %18 : vector<8x128xf32>
      %21 = arith.divf %19, %20 : vector<8x128xf32>
      %22 = arith.mulf %15, %21 : vector<8x128xf32>
      %23 = arith.mulf %22, %16 : vector<8x128xf32>
      %24 = arith.truncf %23 : vector<8x128xf32> to vector<8x128xbf16>
      %c0_9 = arith.constant 0 : index
      %c0_10 = arith.constant 0 : index
      %c0_11 = arith.constant 0 : index
      %25 = vector.load %arg6[%c0_9, %c0_10, %c0_11] : memref<1x128x128xbf16, #tpu.memory_space<vmem>>, vector<1x128x128xbf16>
      %26 = vector.shape_cast %25 : vector<1x128x128xbf16> to vector<128x128xbf16>
      %cst_12 = arith.constant dense<0.000000e+00> : vector<8x128xf32>
      %27 = tpu.matmul %24, %26, %cst_12 {dimension_numbers = #tpu.dot_dimension_numbers<[1], [0], [0], [1], [0, 0, 1, 1], [], []>} : vector<8x128xbf16>, vector<128x128xbf16>, vector<8x128xf32> -> vector<8x128xf32>
      %c0_13 = arith.constant 0 : index
      %c0_14 = arith.constant 0 : index
      %28 = vector.load %arg9[%c0_13, %c0_14] : memref<8x128xf32, #tpu.memory_space<vmem>>, vector<8x128xf32>
      %c0_15 = arith.constant 0 : index
      %c0_16 = arith.constant 0 : index
      %c0_17 = arith.constant 0 : index
      %29 = vector.load %arg7[%c0_15, %c0_16, %c0_17] : memref<1x8x1xf32, #tpu.memory_space<vmem>>, vector<1x8x1xf32>
      %30 = vector.shape_cast %29 : vector<1x8x1xf32> to vector<8x1xf32>
      %31 = vector.broadcast %30 : vector<8x1xf32> to vector<8x128xf32>
      %32 = arith.mulf %31, %27 : vector<8x128xf32>
      %33 = arith.addf %28, %32 : vector<8x128xf32>
      %c0_18 = arith.constant 0 : index
      %c0_19 = arith.constant 0 : index
      %34 = vector.load %arg9[%c0_18, %c0_19] : memref<8x128xf32, #tpu.memory_space<vmem>>, vector<8x128xf32>
      tpu.vector_store %arg9[%c0_18, %c0_19], %33 {strides = array<i32>} : memref<8x128xf32, #tpu.memory_space<vmem>>, vector<8x128xf32>,
    } else {
    }
    %c7_i32 = arith.constant 7 : i32
    %8 = arith.cmpi eq, %arg1, %c7_i32 : i32
    %9 = arith.extui %8 : i1 to i32
    %c0_i32_3 = arith.constant 0 : i32
    %10 = arith.cmpi ne, %9, %c0_i32_3 : i32
    scf.if %10 {
      %c0 = arith.constant 0 : index
      %c0_4 = arith.constant 0 : index
      %11 = vector.load %arg9[%c0, %c0_4] : memref<8x128xf32, #tpu.memory_space<vmem>>, vector<8x128xf32>
      %12 = arith.truncf %11 : vector<8x128xf32> to vector<8x128xbf16>
      %c0_5 = arith.constant 0 : index
      %c0_6 = arith.constant 0 : index
      %13 = vector.load %arg8[%c0_5, %c0_6] : memref<8x128xbf16, #tpu.memory_space<vmem>>, vector<8x128xbf16>
      tpu.vector_store %arg8[%c0_5, %c0_6], %12 {strides = array<i32>} : memref<8x128xbf16, #tpu.memory_space<vmem>>, vector<8x128xbf16>,
    } else {
    }
    return
  }
  func.func @transform_0(%arg0: i32, %arg1: i32, %arg2: memref<8xi32, #tpu.memory_space<smem>>) -> (i32, i32) {
    %c0_i32 = arith.constant 0 : i32
    %c0_i32_0 = arith.constant 0 : i32
    return %arg0, %c0_i32 : i32, i32
  }
  func.func @transform_1(%arg0: i32, %arg1: i32, %arg2: memref<8xi32, #tpu.memory_space<smem>>) -> (i32, i32) {
    %c0_i32 = arith.constant 0 : i32
    %c0_i32_0 = arith.constant 0 : i32
    return %arg0, %c0_i32 : i32, i32
  }
  func.func @transform_2(%arg0: i32, %arg1: i32, %arg2: memref<8xi32, #tpu.memory_space<smem>>) -> (i32, i32, i32) {
    %c0_i32 = arith.constant 0 : i32
    %c0_i32_0 = arith.constant 0 : i32
    %c0_i32_1 = arith.constant 0 : i32
    return %arg1, %c0_i32, %c0_i32_0 : i32, i32, i32
  }
  func.func @transform_3(%arg0: i32, %arg1: i32, %arg2: memref<8xi32, #tpu.memory_space<smem>>) -> (i32, i32, i32) {
    %c0_i32 = arith.constant 0 : i32
    %c0_i32_0 = arith.constant 0 : i32
    %c0_i32_1 = arith.constant 0 : i32
    return %arg1, %c0_i32, %c0_i32_0 : i32, i32, i32
  }
  func.func @transform_4(%arg0: i32, %arg1: i32, %arg2: memref<8xi32, #tpu.memory_space<smem>>) -> (i32, i32, i32) {
    %c0_i32 = arith.constant 0 : i32
    %c0_i32_0 = arith.constant 0 : i32
    return %arg1, %arg0, %c0_i32 : i32, i32, i32
  }
  func.func @transform_5(%arg0: i32, %arg1: i32, %arg2: memref<8xi32, #tpu.memory_space<smem>>) -> (i32, i32) {
    %c0_i32 = arith.constant 0 : i32
    %c0_i32_0 = arith.constant 0 : i32
    return %arg0, %c0_i32 : i32, i32
  }
}

</mosaic_0001>

<llo_original>
// kernel: dots1_forward.13
$region0: #{dots1_forward.13}
  #allocation0 [shape = 'u32[]', space=smem, size = 0x4, offset = 0x4, fixed_abs, tag = 'smem constant byte address 0x4 - core index']
  #allocation1 [shape = 'u32[72,128]{1,0:T(1,128)}', space=vmem, size = 0x9000, scoped, tag = 'internal scratch']
  %s0 = inlined_call_operand.vmem [shape: bf16[8,128], index: 0, kind: input, shape index: {}]
  %s1 = inlined_call_operand.vmem [shape: f32[1,128], index: 1, kind: input, shape index: {}]
  %s2 = inlined_call_operand.vmem [shape: bf16[8,128], index: 2, kind: output, shape index: {}]
  %s3 = sld [smem:[#allocation0]]
  $region18: #{dots1_forward.13} parent=0
    _
  %s5 = ssub.s32 1, %s3
  %s6 = scalar_select 0, %s5, %s3
  // Predicated region
  $region2: #{dots1_forward.13} parent=0 // pred_check
    _
  $region3: #{dots1_forward.13} parent=0 // pred_check_branch
    %8 = sbr.rel (0) target = $region5
  $region4: #{dots1_forward.13} parent=0 // pred_region
    _
  $region5: #{dots1_forward.13} parent=0 // pred_fallthru
    _
  // Predicated region
  $region6: #{dots1_forward.13} parent=0 // pred_check
    _
  $region7: #{dots1_forward.13} parent=0 // pred_check_branch
    %10 = sbr.rel (0) target = $region9
  $region8: #{dots1_forward.13} parent=0 // pred_region
    _
  $region9: #{dots1_forward.13} parent=0 // pred_fallthru
    _
  %v11 = vld [vmem:[%s0] sm:$0xf]
  %v12 = vunpack.c.l.bf16 %v11
  %v13 = vmul.f32 %v12, %v12
  %14 = vadd.xlane.f32.xlu0 %v13
  %v15 = vpop.xlane.xlu0 %14
  %v16 = vrcp.pop 128.0
  %v17 = vmul.f32 128.0, %v16
  %v18 = vsub.f32 1.0, %v17
  %v19 = vmul.f32 %v16, %v18
  %v20 = vadd.f32 %v16, %v19
  %vm21 = vweird.f32 %v16
  %v22 = vsel %vm21, %v16, %v20
  %v23 = vmul.f32 %v15, %v22
  %v24 = vadd.f32 %v23, 1e-06
  %v25 = vrsqrt.pop %v24
  %v26 = vmul.f32 %v25, %v24
  %v27 = vmul.f32 %v26, %v25
  %v28 = vmul.f32 0.5, %v27
  %v29 = vsub.f32 1.5, %v28
  %v30 = vmul.f32 %v25, %v29
  %vm31 = vweird.f32 %v24
  %vm32 = vweird.f32 %v25
  %vm33 = vmor %vm31, %vm32
  %v34 = vsel %vm33, %v25, %v30
  %v35 = vmul.f32 %v12, %v34
  %v36 = vld [vmem:[%s1] sm:$0x1]
  %v38 = vperm.slane %v36, 0
  %v40 = vmul.f32 %v35, %v38
  %v41 = vpack.c.bf16 %v40, %v40
  %42 = vst [vmem:[%s2] sm:$0xf] %v41
  // Predicated region
  $region10: #{dots1_forward.13} parent=0 // pred_check
    _
  $region11: #{dots1_forward.13} parent=0 // pred_check_branch
    %44 = sbr.rel (0) target = $region13
  $region12: #{dots1_forward.13} parent=0 // pred_region
    _
  $region13: #{dots1_forward.13} parent=0 // pred_fallthru
    _
  // Predicated region
  $region14: #{dots1_forward.13} parent=0 // pred_check
    _
  $region15: #{dots1_forward.13} parent=0 // pred_check_branch
    %46 = sbr.rel (0) target = $region17
  $region16: #{dots1_forward.13} parent=0 // pred_region
    _
  $region17: #{dots1_forward.13} parent=0 // pred_fallthru
    _

// kernel: dots1_forward.14
$region0: #{dots1_forward.14}
  #allocation0 [shape = 'u32[]', space=smem, size = 0x4, offset = 0x4, fixed_abs, tag = 'smem constant byte address 0x4 - core index']
  #allocation1 [shape = 'u32[72,128]{1,0:T(1,128)}', space=vmem, size = 0x9000, scoped, tag = 'internal scratch']
  #allocation2 [shape = 'f32[8,256]{1,0:T(8,128)}', space=vmem, size = 0x2000, scoped, tag = 'scratch operand']
  %s0 = inlined_call_operand.vmem [shape: bf16[8,128], index: 0, kind: input, shape index: {}]
  %s1 = inlined_call_operand.hbm [shape: bf16[128,256], index: 1, kind: input, shape index: {}]
  %s2 = inlined_call_operand.vmem [shape: bf16[8,256], index: 2, kind: output, shape index: {}]
  %s3 = sld [smem:[#allocation0]]
  $region30: #{dots1_forward.14} parent=0
    _
  %s5 = ssub.s32 1, %s3
  %s6 = scalar_select 0, %s5, %s3
  $region1: #{dots1_forward.14} parent=0
    #allocation3 [shape = 'u8[65536]{0}', space=vmem, size = 0x10000, scoped, tag = 'input window, operand 1, single buffered']
    #allocation4 [shape = 's32[1]{0}', space=sflag, size = 0x4, scoped, tag = 'scoped memory for dots1_forward.14']
    %7 = vsyncpa [#allocation4], 0
    // Predicated region
    $region2: #{dots1_forward.14} parent=1 // pred_check
      _
    $region3: #{dots1_forward.14} parent=1 // pred_check_branch
      %9 = sbr.rel (0) target = $region5
    $region4: #{dots1_forward.14} parent=1 // pred_region
      _
    $region5: #{dots1_forward.14} parent=1 // pred_fallthru
      _
    // Predicated region
    $region6: #{dots1_forward.14} parent=1 // pred_check
      _
    $region7: #{dots1_forward.14} parent=1 // pred_check_branch
      %11 = sbr.rel (0) target = $region9
    $region8: #{dots1_forward.14} parent=1 // pred_region
      %13 = vsyncadd [#allocation4], 0
      %s14 = sshll.u32 %s1, 4
      %s15 = int_to_ptr.hbm [resolvable:$true] %s14
      %s16 = sshll.u32 [#allocation3], 4
      %s17 = int_to_ptr.vmem [resolvable:$true] %s16
      %22 = dma.hbm_to_vmem [thread:$0]  %s15, 2048, %s17, [#allocation4], 128, 128, 8
    $region9: #{dots1_forward.14} parent=1 // pred_fallthru
      _
    // Predicated region
    $region10: #{dots1_forward.14} parent=1 // pred_check
      _
    $region11: #{dots1_forward.14} parent=1 // pred_check_branch
      %24 = sbr.rel (0) target = $region13
    $region12: #{dots1_forward.14} parent=1 // pred_region
      %26 = dma.done [#allocation4], 2048
    $region13: #{dots1_forward.14} parent=1 // pred_fallthru
      _
    %p27 = scmp.eq.s32.totalorder 0, 0
    // Predicated region
    $region14: #{dots1_forward.14} parent=1 // pred_check
      %p28 = pneg %p27
    $region15: #{dots1_forward.14} parent=1 // pred_check_branch
      %30 = sbr.rel (%p28) target = $region17
    $region16: #{dots1_forward.14} parent=1 // pred_region
      %31 = vst [vmem:[#allocation2] sm:$0xff] 0.0
      %32 = vst [vmem:[#allocation2 + $0x8] sm:$0xff] 0.0
    $region17: #{dots1_forward.14} parent=1 // pred_fallthru
      _
    %v33 = vld [vmem:[#allocation2] sm:$0xff]
    %v34 = vld [vmem:[#allocation2 + $0x8] sm:$0xff]
    %v35 = vld [vmem:[%s0] sm:$0xf]
    %v36 = vld [vmem:[#allocation3] sm:$0xff]
    %v37 = vld [vmem:[#allocation3 + $0x8] sm:$0xff]
    %v38 = vld [vmem:[#allocation3 + $0x10] sm:$0xff]
    %v39 = vld [vmem:[#allocation3 + $0x18] sm:$0xff]
    %v40 = vld [vmem:[#allocation3 + $0x20] sm:$0xff]
    %v41 = vld [vmem:[#allocation3 + $0x28] sm:$0xff]
    %v42 = vld [vmem:[#allocation3 + $0x30] sm:$0xff]
    %v43 = vld [vmem:[#allocation3 + $0x38] sm:$0xff]
    %v44 = vld [vmem:[#allocation3 + $0x40] sm:$0xff]
    %v45 = vld [vmem:[#allocation3 + $0x48] sm:$0xff]
    %v46 = vld [vmem:[#allocation3 + $0x50] sm:$0xff]
    %v47 = vld [vmem:[#allocation3 + $0x58] sm:$0xff]
    %v48 = vld [vmem:[#allocation3 + $0x60] sm:$0xff]
    %v49 = vld [vmem:[#allocation3 + $0x68] sm:$0xff]
    %v50 = vld [vmem:[#allocation3 + $0x70] sm:$0xff]
    %v51 = vld [vmem:[#allocation3 + $0x78] sm:$0xff]
    %v68 = vunpack.c.l.b16 %v36
    %v69 = vunpack.c.h.b16 %v36
    %v70 = vunpack.c.l.b16 %v37
    %v71 = vunpack.c.h.b16 %v37
    %v72 = vunpack.c.l.b16 %v38
    %v73 = vunpack.c.h.b16 %v38
    %v74 = vunpack.c.l.b16 %v39
    %v75 = vunpack.c.h.b16 %v39
    %v76 = vunpack.c.l.b16 %v40
    %v77 = vunpack.c.h.b16 %v40
    %v78 = vunpack.c.l.b16 %v41
    %v79 = vunpack.c.h.b16 %v41
    %v80 = vunpack.c.l.b16 %v42
    %v81 = vunpack.c.h.b16 %v42
    %v82 = vunpack.c.l.b16 %v43
    %v83 = vunpack.c.h.b16 %v43
    %v84 = vunpack.c.l.b16 %v44
    %v85 = vunpack.c.h.b16 %v44
    %v86 = vunpack.c.l.b16 %v45
    %v87 = vunpack.c.h.b16 %v45
    %v88 = vunpack.c.l.b16 %v46
    %v89 = vunpack.c.h.b16 %v46
    %v90 = vunpack.c.l.b16 %v47
    %v91 = vunpack.c.h.b16 %v47
    %v92 = vunpack.c.l.b16 %v48
    %v93 = vunpack.c.h.b16 %v48
    %v94 = vunpack.c.l.b16 %v49
    %v95 = vunpack.c.h.b16 %v49
    %v96 = vunpack.c.l.b16 %v50
    %v97 = vunpack.c.h.b16 %v50
    %v98 = vunpack.c.l.b16 %v51
    %v99 = vunpack.c.h.b16 %v51
    %v100 = vpack.c.b16 %v70, %v68
    %v101 = vpack.c.b16 %v71, %v69
    %v102 = vpack.c.b16 %v74, %v72
    %v103 = vpack.c.b16 %v75, %v73
    %v104 = vpack.c.b16 %v78, %v76
    %v105 = vpack.c.b16 %v79, %v77
    %v106 = vpack.c.b16 %v82, %v80
    %v107 = vpack.c.b16 %v83, %v81
    %v108 = vpack.c.b16 %v86, %v84
    %v109 = vpack.c.b16 %v87, %v85
    %v110 = vpack.c.b16 %v90, %v88
    %v111 = vpack.c.b16 %v91, %v89
    %v112 = vpack.c.b16 %v94, %v92
    %v113 = vpack.c.b16 %v95, %v93
    %v114 = vpack.c.b16 %v98, %v96
    %v115 = vpack.c.b16 %v99, %v97
    %132 = vmatpush.bf16.msra.mxu0 %v114
    %133 = vmatpush.bf16.msra.mxu0 %v112
    %134 = vmatpush.bf16.msra.mxu0 %v110
    %135 = vmatpush.bf16.msra.mxu0 %v108
    %136 = vmatpush.bf16.msra.mxu0 %v106
    %137 = vmatpush.bf16.msra.mxu0 %v104
    %138 = vmatpush.bf16.msra.mxu0 %v102
    %139 = vmatpush.bf16.msra.mxu0 %v100
    %140 = vmatmul.bf16.gmra.mxu0 %v35
    %v141 = vpop.f32.mrf.mxu0
    %v142 = vadd.f32 0.0, %v141
    %v143 = vpop.f32.mrf.mxu0
    %144 = vdwg.mxu0
    %145 = vmatpush.bf16.msra.mxu0 %v115
    %146 = vmatpush.bf16.msra.mxu0 %v113
    %147 = vmatpush.bf16.msra.mxu0 %v111
    %148 = vmatpush.bf16.msra.mxu0 %v109
    %149 = vmatpush.bf16.msra.mxu0 %v107
    %150 = vmatpush.bf16.msra.mxu0 %v105
    %151 = vmatpush.bf16.msra.mxu0 %v103
    %152 = vmatpush.bf16.msra.mxu0 %v101
    %153 = vmatmul.bf16.gmra.mxu0 %v35
    %v154 = vpop.f32.mrf.mxu0
    %v155 = vadd.f32 0.0, %v154
    %v156 = vpop.f32.mrf.mxu0
    %157 = vdwg.mxu0
    %v158 = vadd.f32 %v33, %v142
    %v159 = vadd.f32 %v34, %v155
    %160 = vst [vmem:[#allocation2] sm:$0xff] %v158
    %161 = vst [vmem:[#allocation2 + $0x8] sm:$0xff] %v159
    // Predicated region
    $region18: #{dots1_forward.14} parent=1 // pred_check
      %p162 = pneg %p27
    $region19: #{dots1_forward.14} parent=1 // pred_check_branch
      %164 = sbr.rel (%p162) target = $region21
    $region20: #{dots1_forward.14} parent=1 // pred_region
      %v165 = vld [vmem:[#allocation2] sm:$0xff]
      %v166 = vld [vmem:[#allocation2 + $0x8] sm:$0xff]
      %v167 = vpack.c.bf16 %v166, %v165
      %168 = vst [vmem:[%s2] sm:$0xff] %v167
    $region21: #{dots1_forward.14} parent=1 // pred_fallthru
      _
    // Predicated region
    $region22: #{dots1_forward.14} parent=1 // pred_check
      _
    $region23: #{dots1_forward.14} parent=1 // pred_check_branch
      %170 = sbr.rel (0) target = $region25
    $region24: #{dots1_forward.14} parent=1 // pred_region
      _
    $region25: #{dots1_forward.14} parent=1 // pred_fallthru
      _
    // Predicated region
    $region26: #{dots1_forward.14} parent=1 // pred_check
      _
    $region27: #{dots1_forward.14} parent=1 // pred_check_branch
      %172 = sbr.rel (0) target = $region29
    $region28: #{dots1_forward.14} parent=1 // pred_region
      _
    $region29: #{dots1_forward.14} parent=1 // pred_fallthru
      _
    %173 = vsyncpa [#allocation4], 1

// kernel: dots1_forward.16
$region0: #{dots1_forward.16}
  #allocation0 [shape = 'u32[]', space=smem, size = 0x4, offset = 0x4, fixed_abs, tag = 'smem constant byte address 0x4 - core index']
  #allocation1 [shape = 'u32[72,128]{1,0:T(1,128)}', space=vmem, size = 0x9000, scoped, tag = 'internal scratch']
  %s0 = inlined_call_operand.vmem [shape: bf16[8,128], index: 0, kind: input, shape index: {}]
  %s1 = inlined_call_operand.vmem [shape: bf16[8,128], index: 1, kind: input, shape index: {}, may-alias: {1,4}]
  %s2 = inlined_call_operand.vmem [shape: f32[1,128], index: 2, kind: input, shape index: {}]
  %s3 = inlined_call_operand.vmem [shape: bf16[8,128], index: 3, kind: output, shape index: {0}]
  %s4 = inlined_call_operand.vmem [shape: bf16[8,128], index: 4, kind: output, shape index: {1}, may-alias: {1,4}]
  %5 = xla_tuple %s3, %s4
  %s6 = sld [smem:[#allocation0]]
  $region30: #{dots1_forward.16} parent=0
    _
  %s8 = ssub.s32 1, %s6
  %s9 = scalar_select 0, %s8, %s6
  // Predicated region
  $region2: #{dots1_forward.16} parent=0 // pred_check
    _
  $region3: #{dots1_forward.16} parent=0 // pred_check_branch
    %11 = sbr.rel (0) target = $region5
  $region4: #{dots1_forward.16} parent=0 // pred_region
    _
  $region5: #{dots1_forward.16} parent=0 // pred_fallthru
    _
  // Predicated region
  $region6: #{dots1_forward.16} parent=0 // pred_check
    _
  $region7: #{dots1_forward.16} parent=0 // pred_check_branch
    %13 = sbr.rel (0) target = $region9
  $region8: #{dots1_forward.16} parent=0 // pred_region
    _
  $region9: #{dots1_forward.16} parent=0 // pred_fallthru
    _
  // Predicated region
  $region10: #{dots1_forward.16} parent=0 // pred_check
    _
  $region11: #{dots1_forward.16} parent=0 // pred_check_branch
    %15 = sbr.rel (0) target = $region13
  $region12: #{dots1_forward.16} parent=0 // pred_region
    _
  $region13: #{dots1_forward.16} parent=0 // pred_fallthru
    _
  %v16 = vld [vmem:[%s0] sm:$0xf]
  %v17 = vunpack.c.l.bf16 %v16
  %v18 = vld [vmem:[%s1] sm:$0xf]
  %v19 = vunpack.c.l.bf16 %v18
  %v20 = vadd.f32 %v17, %v19
  %v21 = vpack.c.bf16 %v20, %v20
  %22 = vst [vmem:[%s4] sm:$0xf] %v21
  %v23 = vmul.f32 %v20, %v20
  %24 = vadd.xlane.f32.xlu0 %v23
  %v25 = vpop.xlane.xlu0 %24
  %v26 = vrcp.pop 128.0
  %v27 = vmul.f32 128.0, %v26
  %v28 = vsub.f32 1.0, %v27
  %v29 = vmul.f32 %v26, %v28
  %v30 = vadd.f32 %v26, %v29
  %vm31 = vweird.f32 %v26
  %v32 = vsel %vm31, %v26, %v30
  %v33 = vmul.f32 %v25, %v32
  %v34 = vadd.f32 %v33, 1e-06
  %v35 = vrsqrt.pop %v34
  %v36 = vmul.f32 %v35, %v34
  %v37 = vmul.f32 %v36, %v35
  %v38 = vmul.f32 0.5, %v37
  %v39 = vsub.f32 1.5, %v38
  %v40 = vmul.f32 %v35, %v39
  %vm41 = vweird.f32 %v34
  %vm42 = vweird.f32 %v35
  %vm43 = vmor %vm41, %vm42
  %v44 = vsel %vm43, %v35, %v40
  %v45 = vmul.f32 %v20, %v44
  %v46 = vld [vmem:[%s2] sm:$0x1]
  %v48 = vperm.slane %v46, 0
  %v50 = vmul.f32 %v45, %v48
  %v51 = vpack.c.bf16 %v50, %v50
  %52 = vst [vmem:[%s3] sm:$0xf] %v51
  // Predicated region
  $region14: #{dots1_forward.16} parent=0 // pred_check
    _
  $region15: #{dots1_forward.16} parent=0 // pred_check_branch
    %54 = sbr.rel (0) target = $region17
  $region16: #{dots1_forward.16} parent=0 // pred_region
    _
  $region17: #{dots1_forward.16} parent=0 // pred_fallthru
    _
  // Predicated region
  $region18: #{dots1_forward.16} parent=0 // pred_check
    _
  $region19: #{dots1_forward.16} parent=0 // pred_check_branch
    %56 = sbr.rel (0) target = $region21
  $region20: #{dots1_forward.16} parent=0 // pred_region
    _
  $region21: #{dots1_forward.16} parent=0 // pred_fallthru
    _
  // Predicated region
  $region22: #{dots1_forward.16} parent=0 // pred_check
    _
  $region23: #{dots1_forward.16} parent=0 // pred_check_branch
    %58 = sbr.rel (0) target = $region25
  $region24: #{dots1_forward.16} parent=0 // pred_region
    _
  $region25: #{dots1_forward.16} parent=0 // pred_fallthru
    _
  // Predicated region
  $region26: #{dots1_forward.16} parent=0 // pred_check
    _
  $region27: #{dots1_forward.16} parent=0 // pred_check_branch
    %60 = sbr.rel (0) target = $region29
  $region28: #{dots1_forward.16} parent=0 // pred_region
    _
  $region29: #{dots1_forward.16} parent=0 // pred_fallthru
    _

// kernel: dots1_forward.15
$region0: #{dots1_forward.15}
  #allocation0 [shape = 'u32[]', space=smem, size = 0x4, offset = 0x4, fixed_abs, tag = 'smem constant byte address 0x4 - core index']
  #allocation1 [shape = 'u32[72,128]{1,0:T(1,128)}', space=vmem, size = 0x9000, scoped, tag = 'internal scratch']
  %s0 = inlined_call_operand.vmem [shape: bf16[8,128], index: 0, kind: input, shape index: {}]
  %s1 = inlined_call_operand.vmem [shape: bf16[8,64], index: 1, kind: input, shape index: {}]
  %s2 = inlined_call_operand.vmem [shape: bf16[8,64], index: 2, kind: input, shape index: {}]
  %s3 = inlined_call_operand.vmem [shape: f32[1,32], index: 3, kind: input, shape index: {}]
  %s4 = inlined_call_operand.vmem [shape: f32[1,32], index: 4, kind: input, shape index: {}]
  %s5 = inlined_call_operand.vmem [shape: f32[8,32], index: 5, kind: input, shape index: {}, may-alias: {5,7}]
  %s6 = inlined_call_operand.vmem [shape: f32[8,32], index: 6, kind: input, shape index: {}, may-alias: {6,8}]
  %s7 = inlined_call_operand.vmem [shape: f32[8,32], index: 7, kind: input, shape index: {}, may-alias: {5,7}]
  %s8 = inlined_call_operand.vmem [shape: f32[8,32], index: 8, kind: input, shape index: {}, may-alias: {6,8}]
  %s9 = inlined_call_operand.vmem [shape: bf16[128,128], index: 9, kind: input, shape index: {}]
  %s10 = inlined_call_operand.vmem [shape: bf16[8,128], index: 10, kind: output, shape index: {}]
  %s11 = sld [smem:[#allocation0]]
  $region50: #{dots1_forward.15} parent=0
    _
  %s13 = ssub.s32 1, %s11
  %s14 = scalar_select 0, %s13, %s11
  // Predicated region
  $region2: #{dots1_forward.15} parent=0 // pred_check
    _
  $region3: #{dots1_forward.15} parent=0 // pred_check_branch
    %16 = sbr.rel (0) target = $region5
  $region4: #{dots1_forward.15} parent=0 // pred_region
    _
  $region5: #{dots1_forward.15} parent=0 // pred_fallthru
    _
  // Predicated region
  $region6: #{dots1_forward.15} parent=0 // pred_check
    _
  $region7: #{dots1_forward.15} parent=0 // pred_check_branch
    %18 = sbr.rel (0) target = $region9
  $region8: #{dots1_forward.15} parent=0 // pred_region
    _
  $region9: #{dots1_forward.15} parent=0 // pred_fallthru
    _
  // Predicated region
  $region10: #{dots1_forward.15} parent=0 // pred_check
    _
  $region11: #{dots1_forward.15} parent=0 // pred_check_branch
    %20 = sbr.rel (0) target = $region13
  $region12: #{dots1_forward.15} parent=0 // pred_region
    _
  $region13: #{dots1_forward.15} parent=0 // pred_fallthru
    _
  // Predicated region
  $region14: #{dots1_forward.15} parent=0 // pred_check
    _
  $region15: #{dots1_forward.15} parent=0 // pred_check_branch
    %22 = sbr.rel (0) target = $region17
  $region16: #{dots1_forward.15} parent=0 // pred_region
    _
  $region17: #{dots1_forward.15} parent=0 // pred_fallthru
    _
  // Predicated region
  $region18: #{dots1_forward.15} parent=0 // pred_check
    _
  $region19: #{dots1_forward.15} parent=0 // pred_check_branch
    %24 = sbr.rel (0) target = $region21
  $region20: #{dots1_forward.15} parent=0 // pred_region
    _
  $region21: #{dots1_forward.15} parent=0 // pred_fallthru
    _
  // Predicated region
  $region22: #{dots1_forward.15} parent=0 // pred_check
    _
  $region23: #{dots1_forward.15} parent=0 // pred_check_branch
    %26 = sbr.rel (0) target = $region25
  $region24: #{dots1_forward.15} parent=0 // pred_region
    _
  $region25: #{dots1_forward.15} parent=0 // pred_fallthru
    _
  // Predicated region
  $region26: #{dots1_forward.15} parent=0 // pred_check
    _
  $region27: #{dots1_forward.15} parent=0 // pred_check_branch
    %28 = sbr.rel (0) target = $region29
  $region28: #{dots1_forward.15} parent=0 // pred_region
    _
  $region29: #{dots1_forward.15} parent=0 // pred_fallthru
    _
  // Predicated region
  $region30: #{dots1_forward.15} parent=0 // pred_check
    _
  $region31: #{dots1_forward.15} parent=0 // pred_check_branch
    %30 = sbr.rel (0) target = $region33
  $region32: #{dots1_forward.15} parent=0 // pred_region
    _
  $region33: #{dots1_forward.15} parent=0 // pred_fallthru
    _
  // Predicated region
  $region34: #{dots1_forward.15} parent=0 // pred_check
    _
  $region35: #{dots1_forward.15} parent=0 // pred_check_branch
    %32 = sbr.rel (0) target = $region37
  $region36: #{dots1_forward.15} parent=0 // pred_region
    _
  $region37: #{dots1_forward.15} parent=0 // pred_fallthru
    _
  // Predicated region
  $region38: #{dots1_forward.15} parent=0 // pred_check
    _
  $region39: #{dots1_forward.15} parent=0 // pred_check_branch
    %34 = sbr.rel (0) target = $region41
  $region40: #{dots1_forward.15} parent=0 // pred_region
    _
  $region41: #{dots1_forward.15} parent=0 // pred_fallthru
    _
  %s36 = smul.u32 0, 8
  %v37 = vld [vmem:[%s5] sm:$0xff]
  %v38 = vld [vmem:[%s6] sm:$0xff]
  %v39 = vld [vmem:[%s7] sm:$0xff]
  %v40 = vld [vmem:[%s8] sm:$0xff]
  %v41 = vld [vmem:[%s3] sm:$0x1]
  %v42 = vld [vmem:[%s4] sm:$0x1]
  %v43 = vlaneseq
  %v44 = vshrl.u32 %v43, 7
  %v45 = vadd.s32 %v44, 8
  %vm46 = vcmp.lt.s32.totalorder %v44, 0
  %v47 = vsub.s32 0, %v44
  %v48 = vsel %vm46, %v47, %v44
  %v49 = vshrl.u32 %v48, 3
  %v50 = vand.u32 %v48, 7
  %v51 = vsub.s32 0, %v50
  %v52 = vsel %vm46, %v51, %v50
  %vm53 = vcmp.lt.s32.totalorder %v45, 0
  %v54 = vsub.s32 0, %v45
  %v55 = vsel %vm53, %v54, %v45
  %v56 = vshrl.u32 %v55, 3
  %v57 = vand.u32 %v55, 7
  %v58 = vsub.s32 0, %v57
  %v59 = vsel %vm53, %v58, %v57
  %vm60 = vcmp.ne.s32.totalorder %v52, 0
  %vm61 = vcmp.ne.s32.totalorder %v59, 0
  %vm62 = vcmp.lt.s32.totalorder %v52, 0
  %vm63 = vcmp.lt.s32.totalorder %v59, 0
  %vm64 = vmand %vm62, %vm60
  %vm65 = vmand %vm63, %vm61
  %v66 = vadd.s32 %v52, 8
  %v67 = vadd.s32 %v59, 8
  %v68 = vsel %vm64, %v66, %v52
  %v69 = vsel %vm65, %v67, %v59
  %v70 = vstv %s36
  %v71 = vadd.s32 %v68, %v70
  %v72 = vadd.s32 %v69, %v70
  %v73 = vlaneseq
  %v74 = vand.u32 %v73, 127
  %vm75 = vcmp.le.s32.totalorder %v74, %v71
  %vm76 = vcmp.le.s32.totalorder %v74, %v72
  %v77 = vld [vmem:[%s0] sm:$0xf]
  %v78 = vld [vmem:[%s1] sm:$0xf]
  %v79 = vld [vmem:[%s2] sm:$0xf]
  %v80 = vld [vmem:[%s9] sm:$0xf]
  %v81 = vld [vmem:[%s9 + $0x4] sm:$0xf]
  %v82 = vld [vmem:[%s9 + $0x8] sm:$0xf]
  %v83 = vld [vmem:[%s9 + $0xc] sm:$0xf]
  %v84 = vld [vmem:[%s9 + $0x10] sm:$0xf]
  %v85 = vld [vmem:[%s9 + $0x14] sm:$0xf]
  %v86 = vld [vmem:[%s9 + $0x18] sm:$0xf]
  %v87 = vld [vmem:[%s9 + $0x1c] sm:$0xf]
  %v88 = vld [vmem:[%s9 + $0x20] sm:$0xf]
  %v89 = vld [vmem:[%s9 + $0x24] sm:$0xf]
  %v90 = vld [vmem:[%s9 + $0x28] sm:$0xf]
  %v91 = vld [vmem:[%s9 + $0x2c] sm:$0xf]
  %v92 = vld [vmem:[%s9 + $0x30] sm:$0xf]
  %v93 = vld [vmem:[%s9 + $0x34] sm:$0xf]
  %v94 = vld [vmem:[%s9 + $0x38] sm:$0xf]
  %v95 = vld [vmem:[%s9 + $0x3c] sm:$0xf]
  %v96 = vunpack.c.l.bf16 %v78
  %v97 = vmul.f32 %v96, %v96
  %vm98 = vcmask 261120
  %v99 = vsel %vm98, %v97, 0.0
  %100 = vadd.xlane.f32.xlu0 %v99
  %v101 = vpop.xlane.xlu0 %100
  %v102 = vrcp.pop 32.0
  %v103 = vmul.f32 32.0, %v102
  %v104 = vsub.f32 1.0, %v103
  %v105 = vmul.f32 %v102, %v104
  %v106 = vadd.f32 %v102, %v105
  %vm107 = vweird.f32 %v102
  %v108 = vsel %vm107, %v102, %v106
  %v109 = vmul.f32 %v101, %v108
  %v110 = vadd.f32 %v109, 1e-06
  %v111 = vrsqrt.pop %v110
  %v112 = vmul.f32 %v111, %v110
  %v113 = vmul.f32 %v112, %v111
  %v114 = vmul.f32 0.5, %v113
  %v115 = vsub.f32 1.5, %v114
  %v116 = vmul.f32 %v111, %v115
  %vm117 = vweird.f32 %v110
  %vm118 = vweird.f32 %v111
  %vm119 = vmor %vm117, %vm118
  %v120 = vsel %vm119, %v111, %v116
  %v121 = vmul.f32 %v96, %v120
  %v123 = vperm.slane %v42, 0
  %v125 = vmul.f32 %v121, %v123
  %127 = vrot.lane.b32.xlu0 %v125, 112
  %v128 = vpop.permute.xlu0 %127
  %130 = vrot.lane.b32.xlu0 %v125, 16
  %v131 = vpop.permute.xlu0 %130
  %vm133 = vcmask 130048
  %v134 = vsel %vm133, %v128, %v131
  %v135 = vmul.f32 %v125, %v39
  %v136 = vmul.f32 %v134, %v40
  %v137 = vadd.f32 %v135, %v136
  %v138 = vpack.c.bf16 %v137, %v137
  %v139 = vunpack.c.l.bf16 %v77
  %v140 = vmul.f32 %v139, %v139
  %v141 = vsel %vm98, %v140, 0.0
  %142 = vadd.xlane.f32.xlu0 %v141
  %v143 = vpop.xlane.xlu0 %142
  %v144 = vmul.f32 %v143, %v108
  %v145 = vadd.f32 %v144, 1e-06
  %v146 = vrsqrt.pop %v145
  %v147 = vmul.f32 %v146, %v145
  %v148 = vmul.f32 %v147, %v146
  %v149 = vmul.f32 0.5, %v148
  %v150 = vsub.f32 1.5, %v149
  %v151 = vmul.f32 %v146, %v150
  %vm152 = vweird.f32 %v145
  %vm153 = vweird.f32 %v146
  %vm154 = vmor %vm152, %vm153
  %v155 = vsel %vm154, %v146, %v151
  %v156 = vmul.f32 %v139, %v155
  %v158 = vperm.slane %v41, 0
  %v160 = vmul.f32 %v156, %v158
  %162 = vrot.lane.b32.xlu0 %v160, 112
  %v163 = vpop.permute.xlu0 %162
  %165 = vrot.lane.b32.xlu0 %v160, 16
  %v166 = vpop.permute.xlu0 %165
  %v168 = vsel %vm133, %v163, %v166
  %v169 = vmul.f32 %v160, %v37
  %v170 = vmul.f32 %v168, %v38
  %v171 = vadd.f32 %v169, %v170
  %173 = vrot.lane.b32.xlu0 %v140, 96
  %v174 = vpop.permute.xlu0 %173
  %v176 = vsel %vm98, %v174, 0.0
  %177 = vadd.xlane.f32.xlu0 %v176
  %v178 = vpop.xlane.xlu0 %177
  %v179 = vmul.f32 %v178, %v108
  %v180 = vadd.f32 %v179, 1e-06
  %v181 = vrsqrt.pop %v180
  %v182 = vmul.f32 %v181, %v180
  %v183 = vmul.f32 %v182, %v181
  %v184 = vmul.f32 0.5, %v183
  %v185 = vsub.f32 1.5, %v184
  %v186 = vmul.f32 %v181, %v185
  %vm187 = vweird.f32 %v180
  %vm188 = vweird.f32 %v181
  %vm189 = vmor %vm187, %vm188
  %v190 = vsel %vm189, %v181, %v186
  %v191 = vmul.f32 %v139, %v190
  %192 = vrot.lane.b32.xlu0 %v158, 32
  %v193 = vpop.permute.xlu0 %192
  %v195 = vmul.f32 %v191, %v193
  %197 = vrot.lane.b32.xlu0 %v195, 80
  %v198 = vpop.permute.xlu0 %197
  %200 = vrot.lane.b32.xlu0 %v195, 112
  %v201 = vpop.permute.xlu0 %200
  %v203 = vsel %vm133, %v198, %v201
  %205 = vrot.lane.b32.xlu0 %v37, 32
  %v206 = vpop.permute.xlu0 %205
  %v208 = vmul.f32 %v195, %v206
  %v209 = vmul.f32 %v203, %v38
  %211 = vrot.lane.b32.xlu0 %v209, 32
  %v212 = vpop.permute.xlu0 %211
  %v214 = vadd.f32 %v208, %v212
  %216 = vrot.lane.b32.xlu0 %v214, 96
  %v217 = vpop.permute.xlu0 %216
  %v219 = vpack.c.bf16 %v217, %v171
  %v221 = vsel %vm98, %v219, 0
  %v224 = vsel %vm98, %v138, 0
  %226 = vmatpush.bf16.xpose.msra.mxu0 0
  %227 = vmatpush.bf16.xpose.msra.mxu0 0
  %228 = vmatpush.bf16.xpose.msra.mxu0 0
  %229 = vmatpush.bf16.xpose.msra.mxu0 0
  %230 = vmatpush.bf16.xpose.msra.mxu0 0
  %231 = vmatpush.bf16.xpose.msra.mxu0 0
  %232 = vmatpush.bf16.xpose.msra.mxu0 0
  %233 = vmatpush.bf16.xpose.msra.mxu0 %v224
  %234 = vmatmul.bf16.gmra.mxu0 %v221
  %v235 = vpop.f32.mrf.mxu0
  %v236 = vadd.f32 0.0, %v235
  %v237 = vpop.f32.mrf.mxu0
  %v238 = vadd.f32 0.0, %v237
  %239 = vdwg.mxu0
  %v240 = vmul.f32 %v236, 0.17677669
  %v241 = vmul.f32 %v238, 0.17677669
  %v242 = vsel %vm75, %v240, -1e+30
  %v243 = vsel %vm76, %v241, -1e+30
  %vm244 = vcmask 64512
  %v245 = vsel %vm244, %v242, -inf
  %246 = vmax.xlane.f32.xlu0 %v245
  %v247 = vpop.xlane.xlu0 %246
  %v248 = vsel %vm244, %v243, -inf
  %249 = vmax.xlane.f32.xlu0 %v248
  %v250 = vpop.xlane.xlu0 %249
  %v251 = vsub.f32 %v242, %v247
  %v252 = vsub.f32 %v243, %v250
  %v253 = vmul.f32 %v251, 1.442695
  %v254 = vpow.pop %v253
  %v255 = vmul.f32 %v252, 1.442695
  %v256 = vpow.pop %v255
  %v257 = vsel %vm244, %v254, 0.0
  %258 = vadd.xlane.f32.xlu0 %v257
  %v259 = vpop.xlane.xlu0 %258
  %v260 = vsel %vm244, %v256, 0.0
  %261 = vadd.xlane.f32.xlu0 %v260
  %v262 = vpop.xlane.xlu0 %261
  %v263 = vrcp.pop %v259
  %v264 = vrcp.pop %v262
  %v265 = vmul.f32 %v254, %v263
  %v266 = vmul.f32 %v256, %v264
  %v267 = vpack.c.bf16 %v266, %v265
  %v269 = vsel %vm244, %v267, 0
  %vm271 = vcmask 1043456
  %v273 = vsel %vm271, %v79, 0
  %275 = vmatpush.bf16.msra.mxu0 0
  %276 = vmatpush.bf16.msra.mxu0 0
  %277 = vmatpush.bf16.msra.mxu0 0
  %278 = vmatpush.bf16.msra.mxu0 0
  %279 = vmatpush.bf16.msra.mxu0 0
  %280 = vmatpush.bf16.msra.mxu0 0
  %281 = vmatpush.bf16.msra.mxu0 0
  %282 = vmatpush.bf16.msra.mxu0 %v273
  %283 = vmatmul.bf16.gmra.mxu0 %v269
  %v284 = vpop.f32.mrf.mxu0
  %v285 = vadd.f32 0.0, %v284
  %v286 = vpop.f32.mrf.mxu0
  %v287 = vadd.f32 0.0, %v286
  %288 = vdwg.mxu0
  %v289 = vpack.c.bf16 %v285, %v285
  %v290 = vpack.c.bf16 %v287, %v287
  %v295 = vunpack.c.l.b16 %v84
  %v296 = vunpack.c.l.b16 %v85
  %v297 = vunpack.c.l.b16 %v86
  %v298 = vunpack.c.l.b16 %v87
  %v299 = vpack.c.b16 %v296, %v295
  %v300 = vpack.c.b16 %v298, %v297
  %v304 = vsel %vm98, %v290, 0
  %306 = vmatpush.bf16.msra.mxu0 0
  %307 = vmatpush.bf16.msra.mxu0 0
  %308 = vmatpush.bf16.msra.mxu0 0
  %309 = vmatpush.bf16.msra.mxu0 0
  %310 = vmatpush.bf16.msra.mxu0 0
  %311 = vmatpush.bf16.msra.mxu0 0
  %312 = vmatpush.bf16.msra.mxu0 %v300
  %313 = vmatpush.bf16.msra.mxu0 %v299
  %314 = vmatmul.bf16.gmra.mxu0 %v304
  %v315 = vpop.f32.mrf.mxu0
  %v316 = vadd.f32 0.0, %v315
  %v317 = vpop.f32.mrf.mxu0
  %318 = vdwg.mxu0
  %v323 = vunpack.c.l.b16 %v80
  %v324 = vunpack.c.l.b16 %v81
  %v325 = vunpack.c.l.b16 %v82
  %v326 = vunpack.c.l.b16 %v83
  %v327 = vpack.c.b16 %v324, %v323
  %v328 = vpack.c.b16 %v326, %v325
  %v332 = vsel %vm98, %v289, 0
  %334 = vmatpush.bf16.msra.mxu0 0
  %335 = vmatpush.bf16.msra.mxu0 0
  %336 = vmatpush.bf16.msra.mxu0 0
  %337 = vmatpush.bf16.msra.mxu0 0
  %338 = vmatpush.bf16.msra.mxu0 0
  %339 = vmatpush.bf16.msra.mxu0 0
  %340 = vmatpush.bf16.msra.mxu0 %v328
  %341 = vmatpush.bf16.msra.mxu0 %v327
  %342 = vmatmul.bf16.gmra.mxu0 %v332
  %v343 = vpop.f32.mrf.mxu0
  %v344 = vadd.f32 %v316, %v343
  %v345 = vpop.f32.mrf.mxu0
  %346 = vdwg.mxu0
  %348 = vrot.lane.b32.xlu0 %v97, 96
  %v349 = vpop.permute.xlu0 %348
  %v351 = vsel %vm98, %v349, 0.0
  %352 = vadd.xlane.f32.xlu0 %v351
  %v353 = vpop.xlane.xlu0 %352
  %v354 = vmul.f32 %v353, %v108
  %v355 = vadd.f32 %v354, 1e-06
  %v356 = vrsqrt.pop %v355
  %v357 = vmul.f32 %v356, %v355
  %v358 = vmul.f32 %v357, %v356
  %v359 = vmul.f32 0.5, %v358
  %v360 = vsub.f32 1.5, %v359
  %v361 = vmul.f32 %v356, %v360
  %vm362 = vweird.f32 %v355
  %vm363 = vweird.f32 %v356
  %vm364 = vmor %vm362, %vm363
  %v365 = vsel %vm364, %v356, %v361
  %v366 = vmul.f32 %v96, %v365
  %367 = vrot.lane.b32.xlu0 %v123, 32
  %v368 = vpop.permute.xlu0 %367
  %v370 = vmul.f32 %v366, %v368
  %372 = vrot.lane.b32.xlu0 %v370, 80
  %v373 = vpop.permute.xlu0 %372
  %375 = vrot.lane.b32.xlu0 %v370, 112
  %v376 = vpop.permute.xlu0 %375
  %v378 = vsel %vm133, %v373, %v376
  %380 = vrot.lane.b32.xlu0 %v39, 32
  %v381 = vpop.permute.xlu0 %380
  %v383 = vmul.f32 %v370, %v381
  %v384 = vmul.f32 %v378, %v40
  %386 = vrot.lane.b32.xlu0 %v384, 32
  %v387 = vpop.permute.xlu0 %386
  %v389 = vadd.f32 %v383, %v387
  %v390 = vpack.c.bf16 %v389, %v389
  %391 = vrot.lane.b32.xlu0 %v140, 64
  %v392 = vpop.permute.xlu0 %391
  %v394 = vsel %vm98, %v392, 0.0
  %395 = vadd.xlane.f32.xlu0 %v394
  %v396 = vpop.xlane.xlu0 %395
  %v397 = vmul.f32 %v396, %v108
  %v398 = vadd.f32 %v397, 1e-06
  %v399 = vrsqrt.pop %v398
  %v400 = vmul.f32 %v399, %v398
  %v401 = vmul.f32 %v400, %v399
  %v402 = vmul.f32 0.5, %v401
  %v403 = vsub.f32 1.5, %v402
  %v404 = vmul.f32 %v399, %v403
  %vm405 = vweird.f32 %v398
  %vm406 = vweird.f32 %v399
  %vm407 = vmor %vm405, %vm406
  %v408 = vsel %vm407, %v399, %v404
  %v409 = vmul.f32 %v139, %v408
  %410 = vrot.lane.b32.xlu0 %v158, 64
  %v411 = vpop.permute.xlu0 %410
  %v413 = vmul.f32 %v409, %v411
  %415 = vrot.lane.b32.xlu0 %v413, 48
  %v416 = vpop.permute.xlu0 %415
  %418 = vrot.lane.b32.xlu0 %v413, 80
  %v419 = vpop.permute.xlu0 %418
  %v421 = vsel %vm133, %v416, %v419
  %422 = vrot.lane.b32.xlu0 %v37, 64
  %v423 = vpop.permute.xlu0 %422
  %v425 = vmul.f32 %v413, %v423
  %v426 = vmul.f32 %v421, %v38
  %428 = vrot.lane.b32.xlu0 %v426, 64
  %v429 = vpop.permute.xlu0 %428
  %v431 = vadd.f32 %v425, %v429
  %432 = vrot.lane.b32.xlu0 %v140, 32
  %v433 = vpop.permute.xlu0 %432
  %v435 = vsel %vm98, %v433, 0.0
  %436 = vadd.xlane.f32.xlu0 %v435
  %v437 = vpop.xlane.xlu0 %436
  %v438 = vmul.f32 %v437, %v108
  %v439 = vadd.f32 %v438, 1e-06
  %v440 = vrsqrt.pop %v439
  %v441 = vmul.f32 %v440, %v439
  %v442 = vmul.f32 %v441, %v440
  %v443 = vmul.f32 0.5, %v442
  %v444 = vsub.f32 1.5, %v443
  %v445 = vmul.f32 %v440, %v444
  %vm446 = vweird.f32 %v439
  %vm447 = vweird.f32 %v440
  %vm448 = vmor %vm446, %vm447
  %v449 = vsel %vm448, %v440, %v445
  %v450 = vmul.f32 %v139, %v449
  %451 = vrot.lane.b32.xlu0 %v158, 96
  %v452 = vpop.permute.xlu0 %451
  %v454 = vmul.f32 %v450, %v452
  %456 = vrot.lane.b32.xlu0 %v454, 16
  %v457 = vpop.permute.xlu0 %456
  %459 = vrot.lane.b32.xlu0 %v454, 48
  %v460 = vpop.permute.xlu0 %459
  %v462 = vsel %vm133, %v457, %v460
  %463 = vrot.lane.b32.xlu0 %v37, 96
  %v464 = vpop.permute.xlu0 %463
  %v466 = vmul.f32 %v454, %v464
  %v467 = vmul.f32 %v462, %v38
  %469 = vrot.lane.b32.xlu0 %v467, 96
  %v470 = vpop.permute.xlu0 %469
  %v472 = vadd.f32 %v466, %v470
  %474 = vrot.lane.b32.xlu0 %v472, 96
  %v475 = vpop.permute.xlu0 %474
  %v477 = vpack.c.bf16 %v475, %v431
  %479 = vrot.lane.b32.xlu0 %v477, 64
  %v480 = vpop.permute.xlu0 %479
  %482 = vrot.lane.b32.xlu0 %v390, 96
  %v483 = vpop.permute.xlu0 %482
  %v485 = vsel %vm98, %v480, 0
  %v488 = vsel %vm98, %v483, 0
  %490 = vmatpush.bf16.xpose.msra.mxu0 0
  %491 = vmatpush.bf16.xpose.msra.mxu0 0
  %492 = vmatpush.bf16.xpose.msra.mxu0 0
  %493 = vmatpush.bf16.xpose.msra.mxu0 0
  %494 = vmatpush.bf16.xpose.msra.mxu0 0
  %495 = vmatpush.bf16.xpose.msra.mxu0 0
  %496 = vmatpush.bf16.xpose.msra.mxu0 0
  %497 = vmatpush.bf16.xpose.msra.mxu0 %v488
  %498 = vmatmul.bf16.gmra.mxu0 %v485
  %v499 = vpop.f32.mrf.mxu0
  %v500 = vadd.f32 0.0, %v499
  %v501 = vpop.f32.mrf.mxu0
  %v502 = vadd.f32 0.0, %v501
  %503 = vdwg.mxu0
  %v504 = vmul.f32 %v500, 0.17677669
  %v505 = vmul.f32 %v502, 0.17677669
  %v506 = vsel %vm75, %v504, -1e+30
  %v507 = vsel %vm76, %v505, -1e+30
  %v508 = vsel %vm244, %v506, -inf
  %509 = vmax.xlane.f32.xlu0 %v508
  %v510 = vpop.xlane.xlu0 %509
  %v511 = vsel %vm244, %v507, -inf
  %512 = vmax.xlane.f32.xlu0 %v511
  %v513 = vpop.xlane.xlu0 %512
  %v514 = vsub.f32 %v506, %v510
  %v515 = vsub.f32 %v507, %v513
  %v516 = vmul.f32 %v514, 1.442695
  %v517 = vpow.pop %v516
  %v518 = vmul.f32 %v515, 1.442695
  %v519 = vpow.pop %v518
  %v520 = vsel %vm244, %v517, 0.0
  %521 = vadd.xlane.f32.xlu0 %v520
  %v522 = vpop.xlane.xlu0 %521
  %v523 = vsel %vm244, %v519, 0.0
  %524 = vadd.xlane.f32.xlu0 %v523
  %v525 = vpop.xlane.xlu0 %524
  %v526 = vrcp.pop %v522
  %v527 = vrcp.pop %v525
  %v528 = vmul.f32 %v517, %v526
  %v529 = vmul.f32 %v519, %v527
  %v530 = vpack.c.bf16 %v529, %v528
  %v532 = vunpack.c.l.b16 %v79
  %v533 = vpack.c.b16 %v532, %v532
  %534 = vrot.lane.b32.xlu0 %v533, 96
  %v535 = vpop.permute.xlu0 %534
  %v537 = vsel %vm244, %v530, 0
  %v540 = vsel %vm271, %v535, 0
  %542 = vmatpush.bf16.msra.mxu0 0
  %543 = vmatpush.bf16.msra.mxu0 0
  %544 = vmatpush.bf16.msra.mxu0 0
  %545 = vmatpush.bf16.msra.mxu0 0
  %546 = vmatpush.bf16.msra.mxu0 0
  %547 = vmatpush.bf16.msra.mxu0 0
  %548 = vmatpush.bf16.msra.mxu0 0
  %549 = vmatpush.bf16.msra.mxu0 %v540
  %550 = vmatmul.bf16.gmra.mxu0 %v537
  %v551 = vpop.f32.mrf.mxu0
  %v552 = vadd.f32 0.0, %v551
  %v553 = vpop.f32.mrf.mxu0
  %v554 = vadd.f32 0.0, %v553
  %555 = vdwg.mxu0
  %v556 = vpack.c.bf16 %v552, %v552
  %v561 = vunpack.c.l.b16 %v88
  %v562 = vunpack.c.l.b16 %v89
  %v563 = vunpack.c.l.b16 %v90
  %v564 = vunpack.c.l.b16 %v91
  %v565 = vpack.c.b16 %v562, %v561
  %v566 = vpack.c.b16 %v564, %v563
  %v570 = vsel %vm98, %v556, 0
  %572 = vmatpush.bf16.msra.mxu0 0
  %573 = vmatpush.bf16.msra.mxu0 0
  %574 = vmatpush.bf16.msra.mxu0 0
  %575 = vmatpush.bf16.msra.mxu0 0
  %576 = vmatpush.bf16.msra.mxu0 0
  %577 = vmatpush.bf16.msra.mxu0 0
  %578 = vmatpush.bf16.msra.mxu0 %v566
  %579 = vmatpush.bf16.msra.mxu0 %v565
  %580 = vmatmul.bf16.gmra.mxu0 %v570
  %v581 = vpop.f32.mrf.mxu0
  %v582 = vadd.f32 0.0, %v581
  %v583 = vpop.f32.mrf.mxu0
  %584 = vdwg.mxu0
  %v585 = vadd.f32 %v344, %v582
  %v586 = vpack.c.bf16 %v554, %v554
  %v591 = vunpack.c.l.b16 %v92
  %v592 = vunpack.c.l.b16 %v93
  %v593 = vunpack.c.l.b16 %v94
  %v594 = vunpack.c.l.b16 %v95
  %v595 = vpack.c.b16 %v592, %v591
  %v596 = vpack.c.b16 %v594, %v593
  %v600 = vsel %vm98, %v586, 0
  %602 = vmatpush.bf16.msra.mxu0 0
  %603 = vmatpush.bf16.msra.mxu0 0
  %604 = vmatpush.bf16.msra.mxu0 0
  %605 = vmatpush.bf16.msra.mxu0 0
  %606 = vmatpush.bf16.msra.mxu0 0
  %607 = vmatpush.bf16.msra.mxu0 0
  %608 = vmatpush.bf16.msra.mxu0 %v596
  %609 = vmatpush.bf16.msra.mxu0 %v595
  %610 = vmatmul.bf16.gmra.mxu0 %v600
  %v611 = vpop.f32.mrf.mxu0
  %v612 = vadd.f32 0.0, %v611
  %v613 = vpop.f32.mrf.mxu0
  %614 = vdwg.mxu0
  %v615 = vadd.f32 %v585, %v612
  %v616 = vpack.c.bf16 %v615, %v615
  %617 = vst [vmem:[%s10] sm:$0xf] %v616
  // Predicated region
  $region42: #{dots1_forward.15} parent=0 // pred_check
    _
  $region43: #{dots1_forward.15} parent=0 // pred_check_branch
    %619 = sbr.rel (0) target = $region45
  $region44: #{dots1_forward.15} parent=0 // pred_region
    _
  $region45: #{dots1_forward.15} parent=0 // pred_fallthru
    _
  // Predicated region
  $region46: #{dots1_forward.15} parent=0 // pred_check
    _
  $region47: #{dots1_forward.15} parent=0 // pred_check_branch
    %621 = sbr.rel (0) target = $region49
  $region48: #{dots1_forward.15} parent=0 // pred_region
    _
  $region49: #{dots1_forward.15} parent=0 // pred_fallthru
    _

// kernel: dots1_forward.23
$region0: #{dots1_forward.23}
  #allocation0 [shape = 'u32[]', space=smem, size = 0x4, offset = 0x4, fixed_abs, tag = 'smem constant byte address 0x4 - core index']
  #allocation1 [shape = 'u32[72,128]{1,0:T(1,128)}', space=vmem, size = 0x9000, scoped, tag = 'internal scratch']
  #allocation2 [shape = 'f32[8,8]{1,0:T(8,128)}', space=vmem, size = 0x1000, scoped, tag = 'scratch operand']
  %s0 = inlined_call_operand.vmem [shape: bf16[8,128], index: 0, kind: input, shape index: {}]
  %s1 = inlined_call_operand.vmem [shape: f32[128,8], index: 1, kind: input, shape index: {}]
  %s2 = inlined_call_operand.vmem [shape: f32[8,8], index: 2, kind: output, shape index: {}]
  %s3 = sld [smem:[#allocation0]]
  $region26: #{dots1_forward.23} parent=0
    _
  %s5 = ssub.s32 1, %s3
  %s6 = scalar_select 0, %s5, %s3
  // Predicated region
  $region2: #{dots1_forward.23} parent=0 // pred_check
    _
  $region3: #{dots1_forward.23} parent=0 // pred_check_branch
    %8 = sbr.rel (0) target = $region5
  $region4: #{dots1_forward.23} parent=0 // pred_region
    _
  $region5: #{dots1_forward.23} parent=0 // pred_fallthru
    _
  // Predicated region
  $region6: #{dots1_forward.23} parent=0 // pred_check
    _
  $region7: #{dots1_forward.23} parent=0 // pred_check_branch
    %10 = sbr.rel (0) target = $region9
  $region8: #{dots1_forward.23} parent=0 // pred_region
    _
  $region9: #{dots1_forward.23} parent=0 // pred_fallthru
    _
  %p11 = scmp.eq.s32.totalorder 0, 0
  // Predicated region
  $region10: #{dots1_forward.23} parent=0 // pred_check
    %p12 = pneg %p11
  $region11: #{dots1_forward.23} parent=0 // pred_check_branch
    %14 = sbr.rel (%p12) target = $region13
  $region12: #{dots1_forward.23} parent=0 // pred_region
    %vm15 = vcmask 64512
    %16 = vst.msk [vmem:[#allocation2] sm:$0xff] %vm15, 0.0
  $region13: #{dots1_forward.23} parent=0 // pred_fallthru
    _
  %v17 = vld [vmem:[#allocation2] sm:$0xff]
  %v18 = vld [vmem:[%s0] sm:$0xf]
  %v19 = vld [vmem:[%s1] sm:$0xff]
  %v20 = vld [vmem:[%s1 + $0x8] sm:$0xff]
  %v21 = vld [vmem:[%s1 + $0x10] sm:$0xff]
  %v22 = vld [vmem:[%s1 + $0x18] sm:$0xff]
  %v23 = vld [vmem:[%s1 + $0x20] sm:$0xff]
  %v24 = vld [vmem:[%s1 + $0x28] sm:$0xff]
  %v25 = vld [vmem:[%s1 + $0x30] sm:$0xff]
  %v26 = vld [vmem:[%s1 + $0x38] sm:$0xff]
  %v27 = vld [vmem:[%s1 + $0x40] sm:$0xff]
  %v28 = vld [vmem:[%s1 + $0x48] sm:$0xff]
  %v29 = vld [vmem:[%s1 + $0x50] sm:$0xff]
  %v30 = vld [vmem:[%s1 + $0x58] sm:$0xff]
  %v31 = vld [vmem:[%s1 + $0x60] sm:$0xff]
  %v32 = vld [vmem:[%s1 + $0x68] sm:$0xff]
  %v33 = vld [vmem:[%s1 + $0x70] sm:$0xff]
  %v34 = vld [vmem:[%s1 + $0x78] sm:$0xff]
  %35 = vmatpush.msra.mxu0 %v34
  %36 = vmatpush.msra.mxu0 %v33
  %37 = vmatpush.msra.mxu0 %v32
  %38 = vmatpush.msra.mxu0 %v31
  %39 = vmatpush.msra.mxu0 %v30
  %40 = vmatpush.msra.mxu0 %v29
  %41 = vmatpush.msra.mxu0 %v28
  %42 = vmatpush.msra.mxu0 %v27
  %43 = vmatpush.msra.mxu0 %v26
  %44 = vmatpush.msra.mxu0 %v25
  %45 = vmatpush.msra.mxu0 %v24
  %46 = vmatpush.msra.mxu0 %v23
  %47 = vmatpush.msra.mxu0 %v22
  %48 = vmatpush.msra.mxu0 %v21
  %49 = vmatpush.msra.mxu0 %v20
  %50 = vmatpush.msra.mxu0 %v19
  %51 = vmatmul.bf16.gmra.mxu0 %v18
  %v52 = vpop.f32.mrf.mxu0
  %v53 = vadd.f32 0.0, %v52
  %v54 = vpop.f32.mrf.mxu0
  %55 = vdwg.mxu0
  %v56 = vadd.f32 %v17, %v53
  %vm57 = vcmask 64512
  %58 = vst.msk [vmem:[#allocation2] sm:$0xff] %vm57, %v56
  // Predicated region
  $region14: #{dots1_forward.23} parent=0 // pred_check
    %p59 = pneg %p11
  $region15: #{dots1_forward.23} parent=0 // pred_check_branch
    %61 = sbr.rel (%p59) target = $region17
  $region16: #{dots1_forward.23} parent=0 // pred_region
    %v62 = vld [vmem:[#allocation2] sm:$0xff]
    %63 = vst.msk [vmem:[%s2] sm:$0xff] %vm57, %v62
  $region17: #{dots1_forward.23} parent=0 // pred_fallthru
    _
  // Predicated region
  $region18: #{dots1_forward.23} parent=0 // pred_check
    _
  $region19: #{dots1_forward.23} parent=0 // pred_check_branch
    %65 = sbr.rel (0) target = $region21
  $region20: #{dots1_forward.23} parent=0 // pred_region
    _
  $region21: #{dots1_forward.23} parent=0 // pred_fallthru
    _
  // Predicated region
  $region22: #{dots1_forward.23} parent=0 // pred_check
    _
  $region23: #{dots1_forward.23} parent=0 // pred_check_branch
    %67 = sbr.rel (0) target = $region25
  $region24: #{dots1_forward.23} parent=0 // pred_region
    _
  $region25: #{dots1_forward.23} parent=0 // pred_fallthru
    _

// kernel: custom-call
$region0: #{custom-call}
  #allocation0 [shape = 'u32[8,128]{1,0}', space=vmem, size = 0x1000, scoped, tag = 'scratch']
  #allocation1 [shape = 'u32[8,128]{1,0}', space=vmem, size = 0x1000, scoped, tag = 'scratch']
  #allocation2 [shape = 'u32[8,128]{1,0}', space=vmem, size = 0x1000, scoped, tag = 'scratch']
  #allocation3 [shape = 'u32[8,128]{1,0}', space=vmem, size = 0x1000, scoped, tag = 'scratch']
  #allocation4 [shape = 'u32[8,128]{1,0}', space=vmem, size = 0x1000, scoped, tag = 'scratch']
  #allocation5 [shape = 'u32[8,128]{1,0}', space=vmem, size = 0x1000, scoped, tag = 'scratch']
  #allocation6 [shape = 'u32[8,128]{1,0}', space=vmem, size = 0x1000, scoped, tag = 'scratch']
  %s0 = inlined_call_operand.vmem [shape: f32[8,2], index: 0, kind: input, shape index: {}]
  %s1 = inlined_call_operand.hbm [shape: f32[8,1], index: 1, kind: output, shape index: {0}]
  %s2 = inlined_call_operand.vmem [shape: s32[8,1], index: 2, kind: output, shape index: {1}]
  %3 = xla_tuple %s1, %s2
  %4 = xla_tuple 2147483648, 2147483647
  $region1: #{custom-call} parent=0
    #allocation7 [shape = 'u8[4096]{0}', space=vmem, size = 0x1000, scoped, tag = 'operand span for operand 1']
    #allocation8 [shape = 'u8[512]{0}', space=vmem, size = 0x400, scoped, tag = 'packed  for operand 1']
    #allocation9 [shape = 's32[1]{0}', space=sflag, size = 0x4, scoped, tag = 'scoped memory for custom-call']
    #allocation10 [shape = 'u8[4096]{0}', space=vmem, size = 0x1000, scoped, tag = 'operand span for operand 2']
    #allocation11 [shape = 'u8[512]{0}', space=vmem, size = 0x400, scoped, tag = 'packed  for operand 2']
    #allocation12 [shape = 'f32[1,128]{1,0:T(8,128)}', space=vmem, size = 0x1000, scoped, tag = 'scoped memory for custom-call']
    #allocation13 [shape = 'f32[1,128]{1,0:T(8,128)}', space=vmem, size = 0x1000, scoped, tag = 'scoped memory for custom-call']
    #allocation14 [shape = 's32[1,128]{1,0:T(8,128)}', space=vmem, size = 0x1000, scoped, tag = 'scoped memory for custom-call']
    #allocation15 [shape = 's32[1,128]{1,0:T(8,128)}', space=vmem, size = 0x1000, scoped, tag = 'scoped memory for custom-call']
    %5 = vsyncpa [#allocation9], 0
    %6 = xla_tuple [#allocation7], [#allocation10]
    %7 = vst [vmem:[#allocation12] sm:$0xff] 2147483648
    %8 = vst [vmem:[#allocation14] sm:$0xff] 2147483647
    %9 = xla_tuple [#allocation12], [#allocation14]
    %10 = xla_tuple [#allocation13], [#allocation15]
    $region2: #{custom-call} parent=1
      #allocation16 [shape = 'u8[4096]{0}', space=vmem, size = 0x1000, scoped, tag = 'operand span for operand 0']
      #allocation17 [shape = 's32[1024]{0}', space=vmem, size = 0x1000, scoped, tag = 'scoped memory for custom-call']
      // Predicated region
      $region3: #{custom-call} parent=2 // pred_check
        _
      $region4: #{custom-call} parent=2 // pred_check_branch
        %12 = sbr.rel (0) target = $region6
      $region5: #{custom-call} parent=2 // pred_region
        // Predicated region
        $region7: #{custom-call} parent=5 // pred_check
          _
        $region8: #{custom-call} parent=5 // pred_check_branch
          %14 = sbr.rel (0) target = $region10
        $region9: #{custom-call} parent=5 // pred_region
          // Predicated region
          $region11: #{custom-call} parent=9 // pred_check
            _
          $region12: #{custom-call} parent=9 // pred_check_branch
            %16 = sbr.rel target = $region14
          $region13: #{custom-call} parent=9 // pred_region
            // Predicated region
            $region26: #{custom-call} parent=13 // pred_check
              _
            $region27: #{custom-call} parent=13 // pred_check_branch
              %32 = sbr.rel (0) target = $region29
            $region28: #{custom-call} parent=13 // pred_region
              %s34 = ssub.s32 4, 1
              loop: start=0, step=1, limit=1
              $region30: #{custom-call} parent=28 // loop_pre_header
                _
              $region31: #{custom-call} parent=28 // loop_header
                %s36 = sphi 0, %s40
                %p37 = scmp.ge.s32.totalorder %s36, 1
                %s41 = sphi %s0, %s0
                %s42 = sphi [#allocation16], [#allocation16]
              $region32: #{custom-call} parent=28 // loop_header_branch
                %39 = sbr.rel (%p37) target = $region36
              $region33: #{custom-call} parent=28 // loop_body
                %v43 = vld [vmem:[%s41] sm:%s34]
                %44 = vst [vmem:[%s42] sm:%s34] %v43
              $region34: #{custom-call} parent=28 // loop_footer
                %s40 = sadd.s32 1, %s36
              $region35: #{custom-call} parent=28 // loop_footer_branch
                %35 = sbr.rel target = $region31
              $region36: #{custom-call} parent=28 // loop_exit
                _
            $region29: #{custom-call} parent=13 // pred_fallthru
              _
          $region14: #{custom-call} parent=9 // pred_fallthru
            _
          // Predicated region
          $region15: #{custom-call} parent=9 // pred_check
            _
          $region16: #{custom-call} parent=9 // pred_check_branch
            %18 = sbr.rel (0) target = $region18
          $region17: #{custom-call} parent=9 // pred_region
            %s20 = ssub.s32 4, 1
            loop: start=0, step=1, limit=1
            $region19: #{custom-call} parent=17 // loop_pre_header
              _
            $region20: #{custom-call} parent=17 // loop_header
              %s22 = sphi 0, %s26
              %p23 = scmp.ge.s32.totalorder %s22, 1
              %s27 = sphi %s0, %s0
              %s28 = sphi [#allocation16], [#allocation16]
            $region21: #{custom-call} parent=17 // loop_header_branch
              %25 = sbr.rel (%p23) target = $region25
            $region22: #{custom-call} parent=17 // loop_body
              %v29 = vld [vmem:[%s27] sm:%s20]
              %30 = vst [vmem:[%s28] sm:%s20] %v29
            $region23: #{custom-call} parent=17 // loop_footer
              %s26 = sadd.s32 1, %s22
            $region24: #{custom-call} parent=17 // loop_footer_branch
              %21 = sbr.rel target = $region20
            $region25: #{custom-call} parent=17 // loop_exit
              _
          $region18: #{custom-call} parent=9 // pred_fallthru
            _
        $region10: #{custom-call} parent=5 // pred_fallthru
          _
        %45 = vnop
      $region6: #{custom-call} parent=2 // pred_fallthru
        _
      // Predicated region
      $region37: #{custom-call} parent=2 // pred_check
        _
      $region38: #{custom-call} parent=2 // pred_check_branch
        %47 = sbr.rel (0) target = $region40
      $region39: #{custom-call} parent=2 // pred_region
        _
      $region40: #{custom-call} parent=2 // pred_fallthru
        _
      %v48 = vlaneseq
      %v49 = vshrl.u32 %v48, 7
      %v51 = vld [vmem:[#allocation16] sm:$0xff]
      %vm52 = vcmp.lt.s32.totalorder %v51, 0
      %v53 = vsub.s32 2147483647, %v51
      %v54 = vsel %vm52, %v53, %v51
      %vm56 = vcmp.lt.s32.totalorder %v49, 2
      %v57 = vsel %vm56, %v54, 2147483648
      %58 = vst [vmem:[#allocation16] sm:$0xff] %v57
      %v59 = vlaneseq
      %v60 = vshrl.u32 %v59, 7
      %63 = vst [vmem:[#allocation17] sm:$0xff] %v60
      %64 = xla_tuple [#allocation16], [#allocation17]
      %65 = vst [vmem:[#allocation13] sm:$0xff] 2147483648
      %66 = vst [vmem:[#allocation15] sm:$0xff] 2147483647
      %67 = xla_tuple [#allocation13], [#allocation15]
      loop: start=0, step=1, limit=1
      $region41: #{custom-call} parent=2 // loop_pre_header
        _
      $region42: #{custom-call} parent=2 // loop_header
        %s69 = sphi 0, %s73
        %p70 = scmp.ge.s32.totalorder %s69, 1
      $region43: #{custom-call} parent=2 // loop_header_branch
        %72 = sbr.rel (%p70) target = $region47
      $region44: #{custom-call} parent=2 // loop_body
        %v74 = vld [vmem:[#allocation16] sm:$0xff]
        %v75 = vld [vmem:[#allocation17] sm:$0xff]
        %76 = xla_tuple %v74, %v75
        %v77 = vrot.slane %v74, 1
        %v78 = vrot.slane %v75, 1
        %79 = xla_tuple %v77, %v78
        %vm80 = vcmp.gt.s32.totalorder %v77, %v74
        %vm81 = vcmp.eq.s32.totalorder %v77, %v74
        %vm82 = vcmp.lt.s32.totalorder %v78, %v75
        %vm83 = vmand %vm81, %vm82
        %vm84 = vmor %vm80, %vm83
        %v85 = vsel %vm84, %v77, %v74
        %v86 = vsel %vm84, %v78, %v75
        %87 = xla_tuple %v85, %v86
        %v88 = vrot.slane %v85, 1
        %v89 = vrot.slane %v86, 1
        %90 = xla_tuple %v88, %v89
        %vm91 = vcmp.gt.s32.totalorder %v88, %v85
        %vm92 = vcmp.eq.s32.totalorder %v88, %v85
        %vm93 = vcmp.lt.s32.totalorder %v89, %v86
        %vm94 = vmand %vm92, %vm93
        %vm95 = vmor %vm91, %vm94
        %v96 = vsel %vm95, %v88, %v85
        %v97 = vsel %vm95, %v89, %v86
        %98 = xla_tuple %v96, %v97
        %v99 = vrot.slane %v96, 1
        %v100 = vrot.slane %v97, 1
        %101 = xla_tuple %v99, %v100
        %vm102 = vcmp.gt.s32.totalorder %v99, %v96
        %vm103 = vcmp.eq.s32.totalorder %v99, %v96
        %vm104 = vcmp.lt.s32.totalorder %v100, %v97
        %vm105 = vmand %vm103, %vm104
        %vm106 = vmor %vm102, %vm105
        %v107 = vsel %vm106, %v99, %v96
        %v108 = vsel %vm106, %v100, %v97
        %109 = xla_tuple %v107, %v108
        %v110 = vrot.slane %v107, 1
        %v111 = vrot.slane %v108, 1
        %112 = xla_tuple %v110, %v111
        %vm113 = vcmp.gt.s32.totalorder %v110, %v107
        %vm114 = vcmp.eq.s32.totalorder %v110, %v107
        %vm115 = vcmp.lt.s32.totalorder %v111, %v108
        %vm116 = vmand %vm114, %vm115
        %vm117 = vmor %vm113, %vm116
        %v118 = vsel %vm117, %v110, %v107
        %v119 = vsel %vm117, %v111, %v108
        %120 = xla_tuple %v118, %v119
        %v121 = vrot.slane %v118, 1
        %v122 = vrot.slane %v119, 1
        %123 = xla_tuple %v121, %v122
        %vm124 = vcmp.gt.s32.totalorder %v121, %v118
        %vm125 = vcmp.eq.s32.totalorder %v121, %v118
        %vm126 = vcmp.lt.s32.totalorder %v122, %v119
        %vm127 = vmand %vm125, %vm126
        %vm128 = vmor %vm124, %vm127
        %v129 = vsel %vm128, %v121, %v118
        %v130 = vsel %vm128, %v122, %v119
        %131 = xla_tuple %v129, %v130
        %v132 = vrot.slane %v129, 1
        %v133 = vrot.slane %v130, 1
        %134 = xla_tuple %v132, %v133
        %vm135 = vcmp.gt.s32.totalorder %v132, %v129
        %vm136 = vcmp.eq.s32.totalorder %v132, %v129
        %vm137 = vcmp.lt.s32.totalorder %v133, %v130
        %vm138 = vmand %vm136, %vm137
        %vm139 = vmor %vm135, %vm138
        %v140 = vsel %vm139, %v132, %v129
        %v141 = vsel %vm139, %v133, %v130
        %142 = xla_tuple %v140, %v141
        %v143 = vrot.slane %v140, 1
        %v144 = vrot.slane %v141, 1
        %145 = xla_tuple %v143, %v144
        %vm146 = vcmp.gt.s32.totalorder %v143, %v140
        %vm147 = vcmp.eq.s32.totalorder %v143, %v140
        %vm148 = vcmp.lt.s32.totalorder %v144, %v141
        %vm149 = vmand %vm147, %vm148
        %vm150 = vmor %vm146, %vm149
        %v151 = vsel %vm150, %v143, %v140
        %v152 = vsel %vm150, %v144, %v141
        %153 = xla_tuple %v151, %v152
        %s154 = scalar_lea.vmem [#allocation13], %s69
        %155 = vst [vmem:[%s154] sm:$0x1] %v151
        %s156 = scalar_lea.vmem [#allocation15], %s69
        %157 = vst [vmem:[%s156] sm:$0x1] %v152
        %158 = xla_tuple %155, %157
        %159 = vxpose.xlu0.b32.start [1/16] %v152, 128
        %160 = vxpose.xlu0.b32.cont [2/16] 0.0, 128
        %161 = vxpose.xlu0.b32.cont [3/16] 0.0, 128
        %162 = vxpose.xlu0.b32.cont [4/16] 0.0, 128
        %163 = vxpose.xlu0.b32.cont [5/16] 0.0, 128
        %164 = vxpose.xlu0.b32.cont [6/16] 0.0, 128
        %165 = vxpose.xlu0.b32.cont [7/16] 0.0, 128
        %166 = vxpose.xlu0.b32.cont [8/16] 0.0, 128
        %167 = vxpose.xlu0.b32.cont [9/16] 0.0, 128
        %168 = vxpose.xlu0.b32.cont [10/16] 0.0, 128
        %169 = vxpose.xlu0.b32.cont [11/16] 0.0, 128
        %170 = vxpose.xlu0.b32.cont [12/16] 0.0, 128
        %171 = vxpose.xlu0.b32.cont [13/16] 0.0, 128
        %172 = vxpose.xlu0.b32.cont [14/16] 0.0, 128
        %173 = vxpose.xlu0.b32.cont [15/16] 0.0, 128
        %174 = vxpose.xlu0.b32.end [16/16] 0.0, 128
        %v175 = vpop.trf.xlu0
        %v176 = vpop.trf.xlu0
        %v177 = vpop.trf.xlu0
        %v178 = vpop.trf.xlu0
        %v179 = vpop.trf.xlu0
        %v180 = vpop.trf.xlu0
        %v181 = vpop.trf.xlu0
        %v182 = vpop.trf.xlu0
        %v183 = vpop.trf.xlu0
        %v184 = vpop.trf.xlu0
        %v185 = vpop.trf.xlu0
        %v186 = vpop.trf.xlu0
        %v187 = vpop.trf.xlu0
        %v188 = vpop.trf.xlu0
        %v189 = vpop.trf.xlu0
        %v190 = vpop.trf.xlu0
        %s191 = vtos %v175
        %s192 = sshrl.u32 %s191, 3
        %p193 = scmp.lt.s32.totalorder %s191, 0
        %s194 = ssub.s32 0, %s191
        %s195 = scalar_select %p193, %s194, %s191
        %s196 = sand.u32 %s195, 7
        %s197 = ssub.s32 0, %s196
        %s198 = scalar_select %p193, %s197, %s196
        %v199 = vlaneseq
        %s200 = smul.u32 %s198, 128
        %v201 = vstv %s200
        %vm203 = vcmp.eq.s32.totalorder %v199, %v201
        %s204 = smul.addr %s192, 8
        %s205 = scalar_lea.vmem [#allocation16], %s204
        %206 = vst.msk [vmem:[%s205] sm:$0xff] %vm203, 2147483648
        %s207 = smul.addr %s192, 8
        %s208 = scalar_lea.vmem [#allocation17], %s207
        %209 = vst.msk [vmem:[%s208] sm:$0xff] %vm203, 2147483647
        %210 = xla_tuple %206, %209
        %v211 = vrot.slane %v175, 1
        %s212 = vtos %v211
        %s213 = sshrl.u32 %s212, 3
        %p214 = scmp.lt.s32.totalorder %s212, 0
        %s215 = ssub.s32 0, %s212
        %s216 = scalar_select %p214, %s215, %s212
        %s217 = sand.u32 %s216, 7
        %s218 = ssub.s32 0, %s217
        %s219 = scalar_select %p214, %s218, %s217
        %v220 = vlaneseq
        %s221 = smul.u32 %s219, 128
        %v222 = vstv %s221
        %v223 = vadd.s32 %v222, 1
        %vm224 = vcmp.eq.s32.totalorder %v220, %v223
        %s225 = smul.addr %s213, 8
        %s226 = scalar_lea.vmem [#allocation16], %s225
        %227 = vst.msk [vmem:[%s226] sm:$0xff] %vm224, 2147483648
        %s228 = smul.addr %s213, 8
        %s229 = scalar_lea.vmem [#allocation17], %s228
        %230 = vst.msk [vmem:[%s229] sm:$0xff] %vm224, 2147483647
        %231 = xla_tuple %227, %230
        %v232 = vrot.slane %v211, 1
        %s233 = vtos %v232
        %s234 = sshrl.u32 %s233, 3
        %p235 = scmp.lt.s32.totalorder %s233, 0
        %s236 = ssub.s32 0, %s233
        %s237 = scalar_select %p235, %s236, %s233
        %s238 = sand.u32 %s237, 7
        %s239 = ssub.s32 0, %s238
        %s240 = scalar_select %p235, %s239, %s238
        %v241 = vlaneseq
        %s242 = smul.u32 %s240, 128
        %v243 = vstv %s242
        %v244 = vadd.s32 %v243, 2
        %vm245 = vcmp.eq.s32.totalorder %v241, %v244
        %s246 = smul.addr %s234, 8
        %s247 = scalar_lea.vmem [#allocation16], %s246
        %248 = vst.msk [vmem:[%s247] sm:$0xff] %vm245, 2147483648
        %s249 = smul.addr %s234, 8
        %s250 = scalar_lea.vmem [#allocation17], %s249
        %251 = vst.msk [vmem:[%s250] sm:$0xff] %vm245, 2147483647
        %252 = xla_tuple %248, %251
        %v253 = vrot.slane %v232, 1
        %s254 = vtos %v253
        %s255 = sshrl.u32 %s254, 3
        %p256 = scmp.lt.s32.totalorder %s254, 0
        %s257 = ssub.s32 0, %s254
        %s258 = scalar_select %p256, %s257, %s254
        %s259 = sand.u32 %s258, 7
        %s260 = ssub.s32 0, %s259
        %s261 = scalar_select %p256, %s260, %s259
        %v262 = vlaneseq
        %s263 = smul.u32 %s261, 128
        %v264 = vstv %s263
        %v265 = vadd.s32 %v264, 3
        %vm266 = vcmp.eq.s32.totalorder %v262, %v265
        %s267 = smul.addr %s255, 8
        %s268 = scalar_lea.vmem [#allocation16], %s267
        %269 = vst.msk [vmem:[%s268] sm:$0xff] %vm266, 2147483648
        %s270 = smul.addr %s255, 8
        %s271 = scalar_lea.vmem [#allocation17], %s270
        %272 = vst.msk [vmem:[%s271] sm:$0xff] %vm266, 2147483647
        %273 = xla_tuple %269, %272
        %v274 = vrot.slane %v253, 1
        %s275 = vtos %v274
        %s276 = sshrl.u32 %s275, 3
        %p277 = scmp.lt.s32.totalorder %s275, 0
        %s278 = ssub.s32 0, %s275
        %s279 = scalar_select %p277, %s278, %s275
        %s280 = sand.u32 %s279, 7
        %s281 = ssub.s32 0, %s280
        %s282 = scalar_select %p277, %s281, %s280
        %v283 = vlaneseq
        %s284 = smul.u32 %s282, 128
        %v285 = vstv %s284
        %v286 = vadd.s32 %v285, 4
        %vm287 = vcmp.eq.s32.totalorder %v283, %v286
        %s288 = smul.addr %s276, 8
        %s289 = scalar_lea.vmem [#allocation16], %s288
        %290 = vst.msk [vmem:[%s289] sm:$0xff] %vm287, 2147483648
        %s291 = smul.addr %s276, 8
        %s292 = scalar_lea.vmem [#allocation17], %s291
        %293 = vst.msk [vmem:[%s292] sm:$0xff] %vm287, 2147483647
        %294 = xla_tuple %290, %293
        %v295 = vrot.slane %v274, 1
        %s296 = vtos %v295
        %s297 = sshrl.u32 %s296, 3
        %p298 = scmp.lt.s32.totalorder %s296, 0
        %s299 = ssub.s32 0, %s296
        %s300 = scalar_select %p298, %s299, %s296
        %s301 = sand.u32 %s300, 7
        %s302 = ssub.s32 0, %s301
        %s303 = scalar_select %p298, %s302, %s301
        %v304 = vlaneseq
        %s305 = smul.u32 %s303, 128
        %v306 = vstv %s305
        %v307 = vadd.s32 %v306, 5
        %vm308 = vcmp.eq.s32.totalorder %v304, %v307
        %s309 = smul.addr %s297, 8
        %s310 = scalar_lea.vmem [#allocation16], %s309
        %311 = vst.msk [vmem:[%s310] sm:$0xff] %vm308, 2147483648
        %s312 = smul.addr %s297, 8
        %s313 = scalar_lea.vmem [#allocation17], %s312
        %314 = vst.msk [vmem:[%s313] sm:$0xff] %vm308, 2147483647
        %315 = xla_tuple %311, %314
        %v316 = vrot.slane %v295, 1
        %s317 = vtos %v316
        %s318 = sshrl.u32 %s317, 3
        %p319 = scmp.lt.s32.totalorder %s317, 0
        %s320 = ssub.s32 0, %s317
        %s321 = scalar_select %p319, %s320, %s317
        %s322 = sand.u32 %s321, 7
        %s323 = ssub.s32 0, %s322
        %s324 = scalar_select %p319, %s323, %s322
        %v325 = vlaneseq
        %s326 = smul.u32 %s324, 128
        %v327 = vstv %s326
        %v328 = vadd.s32 %v327, 6
        %vm329 = vcmp.eq.s32.totalorder %v325, %v328
        %s330 = smul.addr %s318, 8
        %s331 = scalar_lea.vmem [#allocation16], %s330
        %332 = vst.msk [vmem:[%s331] sm:$0xff] %vm329, 2147483648
        %s333 = smul.addr %s318, 8
        %s334 = scalar_lea.vmem [#allocation17], %s333
        %335 = vst.msk [vmem:[%s334] sm:$0xff] %vm329, 2147483647
        %336 = xla_tuple %332, %335
        %v337 = vrot.slane %v316, 1
        %s338 = vtos %v337
        %s339 = sshrl.u32 %s338, 3
        %p340 = scmp.lt.s32.totalorder %s338, 0
        %s341 = ssub.s32 0, %s338
        %s342 = scalar_select %p340, %s341, %s338
        %s343 = sand.u32 %s342, 7
        %s344 = ssub.s32 0, %s343
        %s345 = scalar_select %p340, %s344, %s343
        %v346 = vlaneseq
        %s347 = smul.u32 %s345, 128
        %v348 = vstv %s347
        %v349 = vadd.s32 %v348, 7
        %vm350 = vcmp.eq.s32.totalorder %v346, %v349
        %s351 = smul.addr %s339, 8
        %s352 = scalar_lea.vmem [#allocation16], %s351
        %353 = vst.msk [vmem:[%s352] sm:$0xff] %vm350, 2147483648
        %s354 = smul.addr %s339, 8
        %s355 = scalar_lea.vmem [#allocation17], %s354
        %356 = vst.msk [vmem:[%s355] sm:$0xff] %vm350, 2147483647
        %357 = xla_tuple %353, %356
        %v358 = vrot.slane %v337, 1
        %s359 = vtos %v176
        %s360 = sshrl.u32 %s359, 3
        %p361 = scmp.lt.s32.totalorder %s359, 0
        %s362 = ssub.s32 0, %s359
        %s363 = scalar_select %p361, %s362, %s359
        %s364 = sand.u32 %s363, 7
        %s365 = ssub.s32 0, %s364
        %s366 = scalar_select %p361, %s365, %s364
        %v367 = vlaneseq
        %s368 = smul.u32 %s366, 128
        %v369 = vstv %s368
        %v370 = vadd.s32 %v369, 8
        %vm371 = vcmp.eq.s32.totalorder %v367, %v370
        %s372 = smul.addr %s360, 8
        %s373 = scalar_lea.vmem [#allocation16], %s372
        %374 = vst.msk [vmem:[%s373] sm:$0xff] %vm371, 2147483648
        %s375 = smul.addr %s360, 8
        %s376 = scalar_lea.vmem [#allocation17], %s375
        %377 = vst.msk [vmem:[%s376] sm:$0xff] %vm371, 2147483647
        %378 = xla_tuple %374, %377
        %v379 = vrot.slane %v176, 1
        %s380 = vtos %v379
        %s381 = sshrl.u32 %s380, 3
        %p382 = scmp.lt.s32.totalorder %s380, 0
        %s383 = ssub.s32 0, %s380
        %s384 = scalar_select %p382, %s383, %s380
        %s385 = sand.u32 %s384, 7
        %s386 = ssub.s32 0, %s385
        %s387 = scalar_select %p382, %s386, %s385
        %v388 = vlaneseq
        %s389 = smul.u32 %s387, 128
        %v390 = vstv %s389
        %v391 = vadd.s32 %v390, 9
        %vm392 = vcmp.eq.s32.totalorder %v388, %v391
        %s393 = smul.addr %s381, 8
        %s394 = scalar_lea.vmem [#allocation16], %s393
        %395 = vst.msk [vmem:[%s394] sm:$0xff] %vm392, 2147483648
        %s396 = smul.addr %s381, 8
        %s397 = scalar_lea.vmem [#allocation17], %s396
        %398 = vst.msk [vmem:[%s397] sm:$0xff] %vm392, 2147483647
        %399 = xla_tuple %395, %398
        %v400 = vrot.slane %v379, 1
        %s401 = vtos %v400
        %s402 = sshrl.u32 %s401, 3
        %p403 = scmp.lt.s32.totalorder %s401, 0
        %s404 = ssub.s32 0, %s401
        %s405 = scalar_select %p403, %s404, %s401
        %s406 = sand.u32 %s405, 7
        %s407 = ssub.s32 0, %s406
        %s408 = scalar_select %p403, %s407, %s406
        %v409 = vlaneseq
        %s410 = smul.u32 %s408, 128
        %v411 = vstv %s410
        %v412 = vadd.s32 %v411, 10
        %vm413 = vcmp.eq.s32.totalorder %v409, %v412
        %s414 = smul.addr %s402, 8
        %s415 = scalar_lea.vmem [#allocation16], %s414
        %416 = vst.msk [vmem:[%s415] sm:$0xff] %vm413, 2147483648
        %s417 = smul.addr %s402, 8
        %s418 = scalar_lea.vmem [#allocation17], %s417
        %419 = vst.msk [vmem:[%s418] sm:$0xff] %vm413, 2147483647
        %420 = xla_tuple %416, %419
        %v421 = vrot.slane %v400, 1
        %s422 = vtos %v421
        %s423 = sshrl.u32 %s422, 3
        %p424 = scmp.lt.s32.totalorder %s422, 0
        %s425 = ssub.s32 0, %s422
        %s426 = scalar_select %p424, %s425, %s422
        %s427 = sand.u32 %s426, 7
        %s428 = ssub.s32 0, %s427
        %s429 = scalar_select %p424, %s428, %s427
        %v430 = vlaneseq
        %s431 = smul.u32 %s429, 128
        %v432 = vstv %s431
        %v433 = vadd.s32 %v432, 11
        %vm434 = vcmp.eq.s32.totalorder %v430, %v433
        %s435 = smul.addr %s423, 8
        %s436 = scalar_lea.vmem [#allocation16], %s435
        %437 = vst.msk [vmem:[%s436] sm:$0xff] %vm434, 2147483648
        %s438 = smul.addr %s423, 8
        %s439 = scalar_lea.vmem [#allocation17], %s438
        %440 = vst.msk [vmem:[%s439] sm:$0xff] %vm434, 2147483647
        %441 = xla_tuple %437, %440
        %v442 = vrot.slane %v421, 1
        %s443 = vtos %v442
        %s444 = sshrl.u32 %s443, 3
        %p445 = scmp.lt.s32.totalorder %s443, 0
        %s446 = ssub.s32 0, %s443
        %s447 = scalar_select %p445, %s446, %s443
        %s448 = sand.u32 %s447, 7
        %s449 = ssub.s32 0, %s448
        %s450 = scalar_select %p445, %s449, %s448
        %v451 = vlaneseq
        %s452 = smul.u32 %s450, 128
        %v453 = vstv %s452
        %v454 = vadd.s32 %v453, 12
        %vm455 = vcmp.eq.s32.totalorder %v451, %v454
        %s456 = smul.addr %s444, 8
        %s457 = scalar_lea.vmem [#allocation16], %s456
        %458 = vst.msk [vmem:[%s457] sm:$0xff] %vm455, 2147483648
        %s459 = smul.addr %s444, 8
        %s460 = scalar_lea.vmem [#allocation17], %s459
        %461 = vst.msk [vmem:[%s460] sm:$0xff] %vm455, 2147483647
        %462 = xla_tuple %458, %461
        %v463 = vrot.slane %v442, 1
        %s464 = vtos %v463
        %s465 = sshrl.u32 %s464, 3
        %p466 = scmp.lt.s32.totalorder %s464, 0
        %s467 = ssub.s32 0, %s464
        %s468 = scalar_select %p466, %s467, %s464
        %s469 = sand.u32 %s468, 7
        %s470 = ssub.s32 0, %s469
        %s471 = scalar_select %p466, %s470, %s469
        %v472 = vlaneseq
        %s473 = smul.u32 %s471, 128
        %v474 = vstv %s473
        %v475 = vadd.s32 %v474, 13
        %vm476 = vcmp.eq.s32.totalorder %v472, %v475
        %s477 = smul.addr %s465, 8
        %s478 = scalar_lea.vmem [#allocation16], %s477
        %479 = vst.msk [vmem:[%s478] sm:$0xff] %vm476, 2147483648
        %s480 = smul.addr %s465, 8
        %s481 = scalar_lea.vmem [#allocation17], %s480
        %482 = vst.msk [vmem:[%s481] sm:$0xff] %vm476, 2147483647
        %483 = xla_tuple %479, %482
        %v484 = vrot.slane %v463, 1
        %s485 = vtos %v484
        %s486 = sshrl.u32 %s485, 3
        %p487 = scmp.lt.s32.totalorder %s485, 0
        %s488 = ssub.s32 0, %s485
        %s489 = scalar_select %p487, %s488, %s485
        %s490 = sand.u32 %s489, 7
        %s491 = ssub.s32 0, %s490
        %s492 = scalar_select %p487, %s491, %s490
        %v493 = vlaneseq
        %s494 = smul.u32 %s492, 128
        %v495 = vstv %s494
        %v496 = vadd.s32 %v495, 14
        %vm497 = vcmp.eq.s32.totalorder %v493, %v496
        %s498 = smul.addr %s486, 8
        %s499 = scalar_lea.vmem [#allocation16], %s498
        %500 = vst.msk [vmem:[%s499] sm:$0xff] %vm497, 2147483648
        %s501 = smul.addr %s486, 8
        %s502 = scalar_lea.vmem [#allocation17], %s501
        %503 = vst.msk [vmem:[%s502] sm:$0xff] %vm497, 2147483647
        %504 = xla_tuple %500, %503
        %v505 = vrot.slane %v484, 1
        %s506 = vtos %v505
        %s507 = sshrl.u32 %s506, 3
        %p508 = scmp.lt.s32.totalorder %s506, 0
        %s509 = ssub.s32 0, %s506
        %s510 = scalar_select %p508, %s509, %s506
        %s511 = sand.u32 %s510, 7
        %s512 = ssub.s32 0, %s511
        %s513 = scalar_select %p508, %s512, %s511
        %v514 = vlaneseq
        %s515 = smul.u32 %s513, 128
        %v516 = vstv %s515
        %v517 = vadd.s32 %v516, 15
        %vm518 = vcmp.eq.s32.totalorder %v514, %v517
        %s519 = smul.addr %s507, 8
        %s520 = scalar_lea.vmem [#allocation16], %s519
        %521 = vst.msk [vmem:[%s520] sm:$0xff] %vm518, 2147483648
        %s522 = smul.addr %s507, 8
        %s523 = scalar_lea.vmem [#allocation17], %s522
        %524 = vst.msk [vmem:[%s523] sm:$0xff] %vm518, 2147483647
        %525 = xla_tuple %521, %524
        %v526 = vrot.slane %v505, 1
        %s527 = vtos %v177
        %s528 = sshrl.u32 %s527, 3
        %p529 = scmp.lt.s32.totalorder %s527, 0
        %s530 = ssub.s32 0, %s527
        %s531 = scalar_select %p529, %s530, %s527
        %s532 = sand.u32 %s531, 7
        %s533 = ssub.s32 0, %s532
        %s534 = scalar_select %p529, %s533, %s532
        %v535 = vlaneseq
        %s536 = smul.u32 %s534, 128
        %v537 = vstv %s536
        %v538 = vadd.s32 %v537, 16
        %vm539 = vcmp.eq.s32.totalorder %v535, %v538
        %s540 = smul.addr %s528, 8
        %s541 = scalar_lea.vmem [#allocation16], %s540
        %542 = vst.msk [vmem:[%s541] sm:$0xff] %vm539, 2147483648
        %s543 = smul.addr %s528, 8
        %s544 = scalar_lea.vmem [#allocation17], %s543
        %545 = vst.msk [vmem:[%s544] sm:$0xff] %vm539, 2147483647
        %546 = xla_tuple %542, %545
        %v547 = vrot.slane %v177, 1
        %s548 = vtos %v547
        %s549 = sshrl.u32 %s548, 3
        %p550 = scmp.lt.s32.totalorder %s548, 0
        %s551 = ssub.s32 0, %s548
        %s552 = scalar_select %p550, %s551, %s548
        %s553 = sand.u32 %s552, 7
        %s554 = ssub.s32 0, %s553
        %s555 = scalar_select %p550, %s554, %s553
        %v556 = vlaneseq
        %s557 = smul.u32 %s555, 128
        %v558 = vstv %s557
        %v559 = vadd.s32 %v558, 17
        %vm560 = vcmp.eq.s32.totalorder %v556, %v559
        %s561 = smul.addr %s549, 8
        %s562 = scalar_lea.vmem [#allocation16], %s561
        %563 = vst.msk [vmem:[%s562] sm:$0xff] %vm560, 2147483648
        %s564 = smul.addr %s549, 8
        %s565 = scalar_lea.vmem [#allocation17], %s564
        %566 = vst.msk [vmem:[%s565] sm:$0xff] %vm560, 2147483647
        %567 = xla_tuple %563, %566
        %v568 = vrot.slane %v547, 1
        %s569 = vtos %v568
        %s570 = sshrl.u32 %s569, 3
        %p571 = scmp.lt.s32.totalorder %s569, 0
        %s572 = ssub.s32 0, %s569
        %s573 = scalar_select %p571, %s572, %s569
        %s574 = sand.u32 %s573, 7
        %s575 = ssub.s32 0, %s574
        %s576 = scalar_select %p571, %s575, %s574
        %v577 = vlaneseq
        %s578 = smul.u32 %s576, 128
        %v579 = vstv %s578
        %v580 = vadd.s32 %v579, 18
        %vm581 = vcmp.eq.s32.totalorder %v577, %v580
        %s582 = smul.addr %s570, 8
        %s583 = scalar_lea.vmem [#allocation16], %s582
        %584 = vst.msk [vmem:[%s583] sm:$0xff] %vm581, 2147483648
        %s585 = smul.addr %s570, 8
        %s586 = scalar_lea.vmem [#allocation17], %s585
        %587 = vst.msk [vmem:[%s586] sm:$0xff] %vm581, 2147483647
        %588 = xla_tuple %584, %587
        %v589 = vrot.slane %v568, 1
        %s590 = vtos %v589
        %s591 = sshrl.u32 %s590, 3
        %p592 = scmp.lt.s32.totalorder %s590, 0
        %s593 = ssub.s32 0, %s590
        %s594 = scalar_select %p592, %s593, %s590
        %s595 = sand.u32 %s594, 7
        %s596 = ssub.s32 0, %s595
        %s597 = scalar_select %p592, %s596, %s595
        %v598 = vlaneseq
        %s599 = smul.u32 %s597, 128
        %v600 = vstv %s599
        %v601 = vadd.s32 %v600, 19
        %vm602 = vcmp.eq.s32.totalorder %v598, %v601
        %s603 = smul.addr %s591, 8
        %s604 = scalar_lea.vmem [#allocation16], %s603
        %605 = vst.msk [vmem:[%s604] sm:$0xff] %vm602, 2147483648
        %s606 = smul.addr %s591, 8
        %s607 = scalar_lea.vmem [#allocation17], %s606
        %608 = vst.msk [vmem:[%s607] sm:$0xff] %vm602, 2147483647
        %609 = xla_tuple %605, %608
        %v610 = vrot.slane %v589, 1
        %s611 = vtos %v610
        %s612 = sshrl.u32 %s611, 3
        %p613 = scmp.lt.s32.totalorder %s611, 0
        %s614 = ssub.s32 0, %s611
        %s615 = scalar_select %p613, %s614, %s611
        %s616 = sand.u32 %s615, 7
        %s617 = ssub.s32 0, %s616
        %s618 = scalar_select %p613, %s617, %s616
        %v619 = vlaneseq
        %s620 = smul.u32 %s618, 128
        %v621 = vstv %s620
        %v622 = vadd.s32 %v621, 20
        %vm623 = vcmp.eq.s32.totalorder %v619, %v622
        %s624 = smul.addr %s612, 8
        %s625 = scalar_lea.vmem [#allocation16], %s624
        %626 = vst.msk [vmem:[%s625] sm:$0xff] %vm623, 2147483648
        %s627 = smul.addr %s612, 8
        %s628 = scalar_lea.vmem [#allocation17], %s627
        %629 = vst.msk [vmem:[%s628] sm:$0xff] %vm623, 2147483647
        %630 = xla_tuple %626, %629
        %v631 = vrot.slane %v610, 1
        %s632 = vtos %v631
        %s633 = sshrl.u32 %s632, 3
        %p634 = scmp.lt.s32.totalorder %s632, 0
        %s635 = ssub.s32 0, %s632
        %s636 = scalar_select %p634, %s635, %s632
        %s637 = sand.u32 %s636, 7
        %s638 = ssub.s32 0, %s637
        %s639 = scalar_select %p634, %s638, %s637
        %v640 = vlaneseq
        %s641 = smul.u32 %s639, 128
        %v642 = vstv %s641
        %v643 = vadd.s32 %v642, 21
        %vm644 = vcmp.eq.s32.totalorder %v640, %v643
        %s645 = smul.addr %s633, 8
        %s646 = scalar_lea.vmem [#allocation16], %s645
        %647 = vst.msk [vmem:[%s646] sm:$0xff] %vm644, 2147483648
        %s648 = smul.addr %s633, 8
        %s649 = scalar_lea.vmem [#allocation17], %s648
        %650 = vst.msk [vmem:[%s649] sm:$0xff] %vm644, 2147483647
        %651 = xla_tuple %647, %650
        %v652 = vrot.slane %v631, 1
        %s653 = vtos %v652
        %s654 = sshrl.u32 %s653, 3
        %p655 = scmp.lt.s32.totalorder %s653, 0
        %s656 = ssub.s32 0, %s653
        %s657 = scalar_select %p655, %s656, %s653
        %s658 = sand.u32 %s657, 7
        %s659 = ssub.s32 0, %s658
        %s660 = scalar_select %p655, %s659, %s658
        %v661 = vlaneseq
        %s662 = smul.u32 %s660, 128
        %v663 = vstv %s662
        %v664 = vadd.s32 %v663, 22
        %vm665 = vcmp.eq.s32.totalorder %v661, %v664
        %s666 = smul.addr %s654, 8
        %s667 = scalar_lea.vmem [#allocation16], %s666
        %668 = vst.msk [vmem:[%s667] sm:$0xff] %vm665, 2147483648
        %s669 = smul.addr %s654, 8
        %s670 = scalar_lea.vmem [#allocation17], %s669
        %671 = vst.msk [vmem:[%s670] sm:$0xff] %vm665, 2147483647
        %672 = xla_tuple %668, %671
        %v673 = vrot.slane %v652, 1
        %s674 = vtos %v673
        %s675 = sshrl.u32 %s674, 3
        %p676 = scmp.lt.s32.totalorder %s674, 0
        %s677 = ssub.s32 0, %s674
        %s678 = scalar_select %p676, %s677, %s674
        %s679 = sand.u32 %s678, 7
        %s680 = ssub.s32 0, %s679
        %s681 = scalar_select %p676, %s680, %s679
        %v682 = vlaneseq
        %s683 = smul.u32 %s681, 128
        %v684 = vstv %s683
        %v685 = vadd.s32 %v684, 23
        %vm686 = vcmp.eq.s32.totalorder %v682, %v685
        %s687 = smul.addr %s675, 8
        %s688 = scalar_lea.vmem [#allocation16], %s687
        %689 = vst.msk [vmem:[%s688] sm:$0xff] %vm686, 2147483648
        %s690 = smul.addr %s675, 8
        %s691 = scalar_lea.vmem [#allocation17], %s690
        %692 = vst.msk [vmem:[%s691] sm:$0xff] %vm686, 2147483647
        %693 = xla_tuple %689, %692
        %v694 = vrot.slane %v673, 1
        %s695 = vtos %v178
        %s696 = sshrl.u32 %s695, 3
        %p697 = scmp.lt.s32.totalorder %s695, 0
        %s698 = ssub.s32 0, %s695
        %s699 = scalar_select %p697, %s698, %s695
        %s700 = sand.u32 %s699, 7
        %s701 = ssub.s32 0, %s700
        %s702 = scalar_select %p697, %s701, %s700
        %v703 = vlaneseq
        %s704 = smul.u32 %s702, 128
        %v705 = vstv %s704
        %v706 = vadd.s32 %v705, 24
        %vm707 = vcmp.eq.s32.totalorder %v703, %v706
        %s708 = smul.addr %s696, 8
        %s709 = scalar_lea.vmem [#allocation16], %s708
        %710 = vst.msk [vmem:[%s709] sm:$0xff] %vm707, 2147483648
        %s711 = smul.addr %s696, 8
        %s712 = scalar_lea.vmem [#allocation17], %s711
        %713 = vst.msk [vmem:[%s712] sm:$0xff] %vm707, 2147483647
        %714 = xla_tuple %710, %713
        %v715 = vrot.slane %v178, 1
        %s716 = vtos %v715
        %s717 = sshrl.u32 %s716, 3
        %p718 = scmp.lt.s32.totalorder %s716, 0
        %s719 = ssub.s32 0, %s716
        %s720 = scalar_select %p718, %s719, %s716
        %s721 = sand.u32 %s720, 7
        %s722 = ssub.s32 0, %s721
        %s723 = scalar_select %p718, %s722, %s721
        %v724 = vlaneseq
        %s725 = smul.u32 %s723, 128
        %v726 = vstv %s725
        %v727 = vadd.s32 %v726, 25
        %vm728 = vcmp.eq.s32.totalorder %v724, %v727
        %s729 = smul.addr %s717, 8
        %s730 = scalar_lea.vmem [#allocation16], %s729
        %731 = vst.msk [vmem:[%s730] sm:$0xff] %vm728, 2147483648
        %s732 = smul.addr %s717, 8
        %s733 = scalar_lea.vmem [#allocation17], %s732
        %734 = vst.msk [vmem:[%s733] sm:$0xff] %vm728, 2147483647
        %735 = xla_tuple %731, %734
        %v736 = vrot.slane %v715, 1
        %s737 = vtos %v736
        %s738 = sshrl.u32 %s737, 3
        %p739 = scmp.lt.s32.totalorder %s737, 0
        %s740 = ssub.s32 0, %s737
        %s741 = scalar_select %p739, %s740, %s737
        %s742 = sand.u32 %s741, 7
        %s743 = ssub.s32 0, %s742
        %s744 = scalar_select %p739, %s743, %s742
        %v745 = vlaneseq
        %s746 = smul.u32 %s744, 128
        %v747 = vstv %s746
        %v748 = vadd.s32 %v747, 26
        %vm749 = vcmp.eq.s32.totalorder %v745, %v748
        %s750 = smul.addr %s738, 8
        %s751 = scalar_lea.vmem [#allocation16], %s750
        %752 = vst.msk [vmem:[%s751] sm:$0xff] %vm749, 2147483648
        %s753 = smul.addr %s738, 8
        %s754 = scalar_lea.vmem [#allocation17], %s753
        %755 = vst.msk [vmem:[%s754] sm:$0xff] %vm749, 2147483647
        %756 = xla_tuple %752, %755
        %v757 = vrot.slane %v736, 1
        %s758 = vtos %v757
        %s759 = sshrl.u32 %s758, 3
        %p760 = scmp.lt.s32.totalorder %s758, 0
        %s761 = ssub.s32 0, %s758
        %s762 = scalar_select %p760, %s761, %s758
        %s763 = sand.u32 %s762, 7
        %s764 = ssub.s32 0, %s763
        %s765 = scalar_select %p760, %s764, %s763
        %v766 = vlaneseq
        %s767 = smul.u32 %s765, 128
        %v768 = vstv %s767
        %v769 = vadd.s32 %v768, 27
        %vm770 = vcmp.eq.s32.totalorder %v766, %v769
        %s771 = smul.addr %s759, 8
        %s772 = scalar_lea.vmem [#allocation16], %s771
        %773 = vst.msk [vmem:[%s772] sm:$0xff] %vm770, 2147483648
        %s774 = smul.addr %s759, 8
        %s775 = scalar_lea.vmem [#allocation17], %s774
        %776 = vst.msk [vmem:[%s775] sm:$0xff] %vm770, 2147483647
        %777 = xla_tuple %773, %776
        %v778 = vrot.slane %v757, 1
        %s779 = vtos %v778
        %s780 = sshrl.u32 %s779, 3
        %p781 = scmp.lt.s32.totalorder %s779, 0
        %s782 = ssub.s32 0, %s779
        %s783 = scalar_select %p781, %s782, %s779
        %s784 = sand.u32 %s783, 7
        %s785 = ssub.s32 0, %s784
        %s786 = scalar_select %p781, %s785, %s784
        %v787 = vlaneseq
        %s788 = smul.u32 %s786, 128
        %v789 = vstv %s788
        %v790 = vadd.s32 %v789, 28
        %vm791 = vcmp.eq.s32.totalorder %v787, %v790
        %s792 = smul.addr %s780, 8
        %s793 = scalar_lea.vmem [#allocation16], %s792
        %794 = vst.msk [vmem:[%s793] sm:$0xff] %vm791, 2147483648
        %s795 = smul.addr %s780, 8
        %s796 = scalar_lea.vmem [#allocation17], %s795
        %797 = vst.msk [vmem:[%s796] sm:$0xff] %vm791, 2147483647
        %798 = xla_tuple %794, %797
        %v799 = vrot.slane %v778, 1
        %s800 = vtos %v799
        %s801 = sshrl.u32 %s800, 3
        %p802 = scmp.lt.s32.totalorder %s800, 0
        %s803 = ssub.s32 0, %s800
        %s804 = scalar_select %p802, %s803, %s800
        %s805 = sand.u32 %s804, 7
        %s806 = ssub.s32 0, %s805
        %s807 = scalar_select %p802, %s806, %s805
        %v808 = vlaneseq
        %s809 = smul.u32 %s807, 128
        %v810 = vstv %s809
        %v811 = vadd.s32 %v810, 29
        %vm812 = vcmp.eq.s32.totalorder %v808, %v811
        %s813 = smul.addr %s801, 8
        %s814 = scalar_lea.vmem [#allocation16], %s813
        %815 = vst.msk [vmem:[%s814] sm:$0xff] %vm812, 2147483648
        %s816 = smul.addr %s801, 8
        %s817 = scalar_lea.vmem [#allocation17], %s816
        %818 = vst.msk [vmem:[%s817] sm:$0xff] %vm812, 2147483647
        %819 = xla_tuple %815, %818
        %v820 = vrot.slane %v799, 1
        %s821 = vtos %v820
        %s822 = sshrl.u32 %s821, 3
        %p823 = scmp.lt.s32.totalorder %s821, 0
        %s824 = ssub.s32 0, %s821
        %s825 = scalar_select %p823, %s824, %s821
        %s826 = sand.u32 %s825, 7
        %s827 = ssub.s32 0, %s826
        %s828 = scalar_select %p823, %s827, %s826
        %v829 = vlaneseq
        %s830 = smul.u32 %s828, 128
        %v831 = vstv %s830
        %v832 = vadd.s32 %v831, 30
        %vm833 = vcmp.eq.s32.totalorder %v829, %v832
        %s834 = smul.addr %s822, 8
        %s835 = scalar_lea.vmem [#allocation16], %s834
        %836 = vst.msk [vmem:[%s835] sm:$0xff] %vm833, 2147483648
        %s837 = smul.addr %s822, 8
        %s838 = scalar_lea.vmem [#allocation17], %s837
        %839 = vst.msk [vmem:[%s838] sm:$0xff] %vm833, 2147483647
        %840 = xla_tuple %836, %839
        %v841 = vrot.slane %v820, 1
        %s842 = vtos %v841
        %s843 = sshrl.u32 %s842, 3
        %p844 = scmp.lt.s32.totalorder %s842, 0
        %s845 = ssub.s32 0, %s842
        %s846 = scalar_select %p844, %s845, %s842
        %s847 = sand.u32 %s846, 7
        %s848 = ssub.s32 0, %s847
        %s849 = scalar_select %p844, %s848, %s847
        %v850 = vlaneseq
        %s851 = smul.u32 %s849, 128
        %v852 = vstv %s851
        %v853 = vadd.s32 %v852, 31
        %vm854 = vcmp.eq.s32.totalorder %v850, %v853
        %s855 = smul.addr %s843, 8
        %s856 = scalar_lea.vmem [#allocation16], %s855
        %857 = vst.msk [vmem:[%s856] sm:$0xff] %vm854, 2147483648
        %s858 = smul.addr %s843, 8
        %s859 = scalar_lea.vmem [#allocation17], %s858
        %860 = vst.msk [vmem:[%s859] sm:$0xff] %vm854, 2147483647
        %861 = xla_tuple %857, %860
        %v862 = vrot.slane %v841, 1
        %s863 = vtos %v179
        %s864 = sshrl.u32 %s863, 3
        %p865 = scmp.lt.s32.totalorder %s863, 0
        %s866 = ssub.s32 0, %s863
        %s867 = scalar_select %p865, %s866, %s863
        %s868 = sand.u32 %s867, 7
        %s869 = ssub.s32 0, %s868
        %s870 = scalar_select %p865, %s869, %s868
        %v871 = vlaneseq
        %s872 = smul.u32 %s870, 128
        %v873 = vstv %s872
        %v874 = vadd.s32 %v873, 32
        %vm875 = vcmp.eq.s32.totalorder %v871, %v874
        %s876 = smul.addr %s864, 8
        %s877 = scalar_lea.vmem [#allocation16], %s876
        %878 = vst.msk [vmem:[%s877] sm:$0xff] %vm875, 2147483648
        %s879 = smul.addr %s864, 8
        %s880 = scalar_lea.vmem [#allocation17], %s879
        %881 = vst.msk [vmem:[%s880] sm:$0xff] %vm875, 2147483647
        %882 = xla_tuple %878, %881
        %v883 = vrot.slane %v179, 1
        %s884 = vtos %v883
        %s885 = sshrl.u32 %s884, 3
        %p886 = scmp.lt.s32.totalorder %s884, 0
        %s887 = ssub.s32 0, %s884
        %s888 = scalar_select %p886, %s887, %s884
        %s889 = sand.u32 %s888, 7
        %s890 = ssub.s32 0, %s889
        %s891 = scalar_select %p886, %s890, %s889
        %v892 = vlaneseq
        %s893 = smul.u32 %s891, 128
        %v894 = vstv %s893
        %v895 = vadd.s32 %v894, 33
        %vm896 = vcmp.eq.s32.totalorder %v892, %v895
        %s897 = smul.addr %s885, 8
        %s898 = scalar_lea.vmem [#allocation16], %s897
        %899 = vst.msk [vmem:[%s898] sm:$0xff] %vm896, 2147483648
        %s900 = smul.addr %s885, 8
        %s901 = scalar_lea.vmem [#allocation17], %s900
        %902 = vst.msk [vmem:[%s901] sm:$0xff] %vm896, 2147483647
        %903 = xla_tuple %899, %902
        %v904 = vrot.slane %v883, 1
        %s905 = vtos %v904
        %s906 = sshrl.u32 %s905, 3
        %p907 = scmp.lt.s32.totalorder %s905, 0
        %s908 = ssub.s32 0, %s905
        %s909 = scalar_select %p907, %s908, %s905
        %s910 = sand.u32 %s909, 7
        %s911 = ssub.s32 0, %s910
        %s912 = scalar_select %p907, %s911, %s910
        %v913 = vlaneseq
        %s914 = smul.u32 %s912, 128
        %v915 = vstv %s914
        %v916 = vadd.s32 %v915, 34
        %vm917 = vcmp.eq.s32.totalorder %v913, %v916
        %s918 = smul.addr %s906, 8
        %s919 = scalar_lea.vmem [#allocation16], %s918
        %920 = vst.msk [vmem:[%s919] sm:$0xff] %vm917, 2147483648
        %s921 = smul.addr %s906, 8
        %s922 = scalar_lea.vmem [#allocation17], %s921
        %923 = vst.msk [vmem:[%s922] sm:$0xff] %vm917, 2147483647
        %924 = xla_tuple %920, %923
        %v925 = vrot.slane %v904, 1
        %s926 = vtos %v925
        %s927 = sshrl.u32 %s926, 3
        %p928 = scmp.lt.s32.totalorder %s926, 0
        %s929 = ssub.s32 0, %s926
        %s930 = scalar_select %p928, %s929, %s926
        %s931 = sand.u32 %s930, 7
        %s932 = ssub.s32 0, %s931
        %s933 = scalar_select %p928, %s932, %s931
        %v934 = vlaneseq
        %s935 = smul.u32 %s933, 128
        %v936 = vstv %s935
        %v937 = vadd.s32 %v936, 35
        %vm938 = vcmp.eq.s32.totalorder %v934, %v937
        %s939 = smul.addr %s927, 8
        %s940 = scalar_lea.vmem [#allocation16], %s939
        %941 = vst.msk [vmem:[%s940] sm:$0xff] %vm938, 2147483648
        %s942 = smul.addr %s927, 8
        %s943 = scalar_lea.vmem [#allocation17], %s942
        %944 = vst.msk [vmem:[%s943] sm:$0xff] %vm938, 2147483647
        %945 = xla_tuple %941, %944
        %v946 = vrot.slane %v925, 1
        %s947 = vtos %v946
        %s948 = sshrl.u32 %s947, 3
        %p949 = scmp.lt.s32.totalorder %s947, 0
        %s950 = ssub.s32 0, %s947
        %s951 = scalar_select %p949, %s950, %s947
        %s952 = sand.u32 %s951, 7
        %s953 = ssub.s32 0, %s952
        %s954 = scalar_select %p949, %s953, %s952
        %v955 = vlaneseq
        %s956 = smul.u32 %s954, 128
        %v957 = vstv %s956
        %v958 = vadd.s32 %v957, 36
        %vm959 = vcmp.eq.s32.totalorder %v955, %v958
        %s960 = smul.addr %s948, 8
        %s961 = scalar_lea.vmem [#allocation16], %s960
        %962 = vst.msk [vmem:[%s961] sm:$0xff] %vm959, 2147483648
        %s963 = smul.addr %s948, 8
        %s964 = scalar_lea.vmem [#allocation17], %s963
        %965 = vst.msk [vmem:[%s964] sm:$0xff] %vm959, 2147483647
        %966 = xla_tuple %962, %965
        %v967 = vrot.slane %v946, 1
        %s968 = vtos %v967
        %s969 = sshrl.u32 %s968, 3
        %p970 = scmp.lt.s32.totalorder %s968, 0
        %s971 = ssub.s32 0, %s968
        %s972 = scalar_select %p970, %s971, %s968
        %s973 = sand.u32 %s972, 7
        %s974 = ssub.s32 0, %s973
        %s975 = scalar_select %p970, %s974, %s973
        %v976 = vlaneseq
        %s977 = smul.u32 %s975, 128
        %v978 = vstv %s977
        %v979 = vadd.s32 %v978, 37
        %vm980 = vcmp.eq.s32.totalorder %v976, %v979
        %s981 = smul.addr %s969, 8
        %s982 = scalar_lea.vmem [#allocation16], %s981
        %983 = vst.msk [vmem:[%s982] sm:$0xff] %vm980, 2147483648
        %s984 = smul.addr %s969, 8
        %s985 = scalar_lea.vmem [#allocation17], %s984
        %986 = vst.msk [vmem:[%s985] sm:$0xff] %vm980, 2147483647
        %987 = xla_tuple %983, %986
        %v988 = vrot.slane %v967, 1
        %s989 = vtos %v988
        %s990 = sshrl.u32 %s989, 3
        %p991 = scmp.lt.s32.totalorder %s989, 0
        %s992 = ssub.s32 0, %s989
        %s993 = scalar_select %p991, %s992, %s989
        %s994 = sand.u32 %s993, 7
        %s995 = ssub.s32 0, %s994
        %s996 = scalar_select %p991, %s995, %s994
        %v997 = vlaneseq
        %s998 = smul.u32 %s996, 128
        %v999 = vstv %s998
        %v1000 = vadd.s32 %v999, 38
        %vm1001 = vcmp.eq.s32.totalorder %v997, %v1000
        %s1002 = smul.addr %s990, 8
        %s1003 = scalar_lea.vmem [#allocation16], %s1002
        %1004 = vst.msk [vmem:[%s1003] sm:$0xff] %vm1001, 2147483648
        %s1005 = smul.addr %s990, 8
        %s1006 = scalar_lea.vmem [#allocation17], %s1005
        %1007 = vst.msk [vmem:[%s1006] sm:$0xff] %vm1001, 2147483647
        %1008 = xla_tuple %1004, %1007
        %v1009 = vrot.slane %v988, 1
        %s1010 = vtos %v1009
        %s1011 = sshrl.u32 %s1010, 3
        %p1012 = scmp.lt.s32.totalorder %s1010, 0
        %s1013 = ssub.s32 0, %s1010
        %s1014 = scalar_select %p1012, %s1013, %s1010
        %s1015 = sand.u32 %s1014, 7
        %s1016 = ssub.s32 0, %s1015
        %s1017 = scalar_select %p1012, %s1016, %s1015
        %v1018 = vlaneseq
        %s1019 = smul.u32 %s1017, 128
        %v1020 = vstv %s1019
        %v1021 = vadd.s32 %v1020, 39
        %vm1022 = vcmp.eq.s32.totalorder %v1018, %v1021
        %s1023 = smul.addr %s1011, 8
        %s1024 = scalar_lea.vmem [#allocation16], %s1023
        %1025 = vst.msk [vmem:[%s1024] sm:$0xff] %vm1022, 2147483648
        %s1026 = smul.addr %s1011, 8
        %s1027 = scalar_lea.vmem [#allocation17], %s1026
        %1028 = vst.msk [vmem:[%s1027] sm:$0xff] %vm1022, 2147483647
        %1029 = xla_tuple %1025, %1028
        %v1030 = vrot.slane %v1009, 1
        %s1031 = vtos %v180
        %s1032 = sshrl.u32 %s1031, 3
        %p1033 = scmp.lt.s32.totalorder %s1031, 0
        %s1034 = ssub.s32 0, %s1031
        %s1035 = scalar_select %p1033, %s1034, %s1031
        %s1036 = sand.u32 %s1035, 7
        %s1037 = ssub.s32 0, %s1036
        %s1038 = scalar_select %p1033, %s1037, %s1036
        %v1039 = vlaneseq
        %s1040 = smul.u32 %s1038, 128
        %v1041 = vstv %s1040
        %v1042 = vadd.s32 %v1041, 40
        %vm1043 = vcmp.eq.s32.totalorder %v1039, %v1042
        %s1044 = smul.addr %s1032, 8
        %s1045 = scalar_lea.vmem [#allocation16], %s1044
        %1046 = vst.msk [vmem:[%s1045] sm:$0xff] %vm1043, 2147483648
        %s1047 = smul.addr %s1032, 8
        %s1048 = scalar_lea.vmem [#allocation17], %s1047
        %1049 = vst.msk [vmem:[%s1048] sm:$0xff] %vm1043, 2147483647
        %1050 = xla_tuple %1046, %1049
        %v1051 = vrot.slane %v180, 1
        %s1052 = vtos %v1051
        %s1053 = sshrl.u32 %s1052, 3
        %p1054 = scmp.lt.s32.totalorder %s1052, 0
        %s1055 = ssub.s32 0, %s1052
        %s1056 = scalar_select %p1054, %s1055, %s1052
        %s1057 = sand.u32 %s1056, 7
        %s1058 = ssub.s32 0, %s1057
        %s1059 = scalar_select %p1054, %s1058, %s1057
        %v1060 = vlaneseq
        %s1061 = smul.u32 %s1059, 128
        %v1062 = vstv %s1061
        %v1063 = vadd.s32 %v1062, 41
        %vm1064 = vcmp.eq.s32.totalorder %v1060, %v1063
        %s1065 = smul.addr %s1053, 8
        %s1066 = scalar_lea.vmem [#allocation16], %s1065
        %1067 = vst.msk [vmem:[%s1066] sm:$0xff] %vm1064, 2147483648
        %s1068 = smul.addr %s1053, 8
        %s1069 = scalar_lea.vmem [#allocation17], %s1068
        %1070 = vst.msk [vmem:[%s1069] sm:$0xff] %vm1064, 2147483647
        %1071 = xla_tuple %1067, %1070
        %v1072 = vrot.slane %v1051, 1
        %s1073 = vtos %v1072
        %s1074 = sshrl.u32 %s1073, 3
        %p1075 = scmp.lt.s32.totalorder %s1073, 0
        %s1076 = ssub.s32 0, %s1073
        %s1077 = scalar_select %p1075, %s1076, %s1073
        %s1078 = sand.u32 %s1077, 7
        %s1079 = ssub.s32 0, %s1078
        %s1080 = scalar_select %p1075, %s1079, %s1078
        %v1081 = vlaneseq
        %s1082 = smul.u32 %s1080, 128
        %v1083 = vstv %s1082
        %v1084 = vadd.s32 %v1083, 42
        %vm1085 = vcmp.eq.s32.totalorder %v1081, %v1084
        %s1086 = smul.addr %s1074, 8
        %s1087 = scalar_lea.vmem [#allocation16], %s1086
        %1088 = vst.msk [vmem:[%s1087] sm:$0xff] %vm1085, 2147483648
        %s1089 = smul.addr %s1074, 8
        %s1090 = scalar_lea.vmem [#allocation17], %s1089
        %1091 = vst.msk [vmem:[%s1090] sm:$0xff] %vm1085, 2147483647
        %1092 = xla_tuple %1088, %1091
        %v1093 = vrot.slane %v1072, 1
        %s1094 = vtos %v1093
        %s1095 = sshrl.u32 %s1094, 3
        %p1096 = scmp.lt.s32.totalorder %s1094, 0
        %s1097 = ssub.s32 0, %s1094
        %s1098 = scalar_select %p1096, %s1097, %s1094
        %s1099 = sand.u32 %s1098, 7
        %s1100 = ssub.s32 0, %s1099
        %s1101 = scalar_select %p1096, %s1100, %s1099
        %v1102 = vlaneseq
        %s1103 = smul.u32 %s1101, 128
        %v1104 = vstv %s1103
        %v1105 = vadd.s32 %v1104, 43
        %vm1106 = vcmp.eq.s32.totalorder %v1102, %v1105
        %s1107 = smul.addr %s1095, 8
        %s1108 = scalar_lea.vmem [#allocation16], %s1107
        %1109 = vst.msk [vmem:[%s1108] sm:$0xff] %vm1106, 2147483648
        %s1110 = smul.addr %s1095, 8
        %s1111 = scalar_lea.vmem [#allocation17], %s1110
        %1112 = vst.msk [vmem:[%s1111] sm:$0xff] %vm1106, 2147483647
        %1113 = xla_tuple %1109, %1112
        %v1114 = vrot.slane %v1093, 1
        %s1115 = vtos %v1114
        %s1116 = sshrl.u32 %s1115, 3
        %p1117 = scmp.lt.s32.totalorder %s1115, 0
        %s1118 = ssub.s32 0, %s1115
        %s1119 = scalar_select %p1117, %s1118, %s1115
        %s1120 = sand.u32 %s1119, 7
        %s1121 = ssub.s32 0, %s1120
        %s1122 = scalar_select %p1117, %s1121, %s1120
        %v1123 = vlaneseq
        %s1124 = smul.u32 %s1122, 128
        %v1125 = vstv %s1124
        %v1126 = vadd.s32 %v1125, 44
        %vm1127 = vcmp.eq.s32.totalorder %v1123, %v1126
        %s1128 = smul.addr %s1116, 8
        %s1129 = scalar_lea.vmem [#allocation16], %s1128
        %1130 = vst.msk [vmem:[%s1129] sm:$0xff] %vm1127, 2147483648
        %s1131 = smul.addr %s1116, 8
        %s1132 = scalar_lea.vmem [#allocation17], %s1131
        %1133 = vst.msk [vmem:[%s1132] sm:$0xff] %vm1127, 2147483647
        %1134 = xla_tuple %1130, %1133
        %v1135 = vrot.slane %v1114, 1
        %s1136 = vtos %v1135
        %s1137 = sshrl.u32 %s1136, 3
        %p1138 = scmp.lt.s32.totalorder %s1136, 0
        %s1139 = ssub.s32 0, %s1136
        %s1140 = scalar_select %p1138, %s1139, %s1136
        %s1141 = sand.u32 %s1140, 7
        %s1142 = ssub.s32 0, %s1141
        %s1143 = scalar_select %p1138, %s1142, %s1141
        %v1144 = vlaneseq
        %s1145 = smul.u32 %s1143, 128
        %v1146 = vstv %s1145
        %v1147 = vadd.s32 %v1146, 45
        %vm1148 = vcmp.eq.s32.totalorder %v1144, %v1147
        %s1149 = smul.addr %s1137, 8
        %s1150 = scalar_lea.vmem [#allocation16], %s1149
        %1151 = vst.msk [vmem:[%s1150] sm:$0xff] %vm1148, 2147483648
        %s1152 = smul.addr %s1137, 8
        %s1153 = scalar_lea.vmem [#allocation17], %s1152
        %1154 = vst.msk [vmem:[%s1153] sm:$0xff] %vm1148, 2147483647
        %1155 = xla_tuple %1151, %1154
        %v1156 = vrot.slane %v1135, 1
        %s1157 = vtos %v1156
        %s1158 = sshrl.u32 %s1157, 3
        %p1159 = scmp.lt.s32.totalorder %s1157, 0
        %s1160 = ssub.s32 0, %s1157
        %s1161 = scalar_select %p1159, %s1160, %s1157
        %s1162 = sand.u32 %s1161, 7
        %s1163 = ssub.s32 0, %s1162
        %s1164 = scalar_select %p1159, %s1163, %s1162
        %v1165 = vlaneseq
        %s1166 = smul.u32 %s1164, 128
        %v1167 = vstv %s1166
        %v1168 = vadd.s32 %v1167, 46
        %vm1169 = vcmp.eq.s32.totalorder %v1165, %v1168
        %s1170 = smul.addr %s1158, 8
        %s1171 = scalar_lea.vmem [#allocation16], %s1170
        %1172 = vst.msk [vmem:[%s1171] sm:$0xff] %vm1169, 2147483648
        %s1173 = smul.addr %s1158, 8
        %s1174 = scalar_lea.vmem [#allocation17], %s1173
        %1175 = vst.msk [vmem:[%s1174] sm:$0xff] %vm1169, 2147483647
        %1176 = xla_tuple %1172, %1175
        %v1177 = vrot.slane %v1156, 1
        %s1178 = vtos %v1177
        %s1179 = sshrl.u32 %s1178, 3
        %p1180 = scmp.lt.s32.totalorder %s1178, 0
        %s1181 = ssub.s32 0, %s1178
        %s1182 = scalar_select %p1180, %s1181, %s1178
        %s1183 = sand.u32 %s1182, 7
        %s1184 = ssub.s32 0, %s1183
        %s1185 = scalar_select %p1180, %s1184, %s1183
        %v1186 = vlaneseq
        %s1187 = smul.u32 %s1185, 128
        %v1188 = vstv %s1187
        %v1189 = vadd.s32 %v1188, 47
        %vm1190 = vcmp.eq.s32.totalorder %v1186, %v1189
        %s1191 = smul.addr %s1179, 8
        %s1192 = scalar_lea.vmem [#allocation16], %s1191
        %1193 = vst.msk [vmem:[%s1192] sm:$0xff] %vm1190, 2147483648
        %s1194 = smul.addr %s1179, 8
        %s1195 = scalar_lea.vmem [#allocation17], %s1194
        %1196 = vst.msk [vmem:[%s1195] sm:$0xff] %vm1190, 2147483647
        %1197 = xla_tuple %1193, %1196
        %v1198 = vrot.slane %v1177, 1
        %s1199 = vtos %v181
        %s1200 = sshrl.u32 %s1199, 3
        %p1201 = scmp.lt.s32.totalorder %s1199, 0
        %s1202 = ssub.s32 0, %s1199
        %s1203 = scalar_select %p1201, %s1202, %s1199
        %s1204 = sand.u32 %s1203, 7
        %s1205 = ssub.s32 0, %s1204
        %s1206 = scalar_select %p1201, %s1205, %s1204
        %v1207 = vlaneseq
        %s1208 = smul.u32 %s1206, 128
        %v1209 = vstv %s1208
        %v1210 = vadd.s32 %v1209, 48
        %vm1211 = vcmp.eq.s32.totalorder %v1207, %v1210
        %s1212 = smul.addr %s1200, 8
        %s1213 = scalar_lea.vmem [#allocation16], %s1212
        %1214 = vst.msk [vmem:[%s1213] sm:$0xff] %vm1211, 2147483648
        %s1215 = smul.addr %s1200, 8
        %s1216 = scalar_lea.vmem [#allocation17], %s1215
        %1217 = vst.msk [vmem:[%s1216] sm:$0xff] %vm1211, 2147483647
        %1218 = xla_tuple %1214, %1217
        %v1219 = vrot.slane %v181, 1
        %s1220 = vtos %v1219
        %s1221 = sshrl.u32 %s1220, 3
        %p1222 = scmp.lt.s32.totalorder %s1220, 0
        %s1223 = ssub.s32 0, %s1220
        %s1224 = scalar_select %p1222, %s1223, %s1220
        %s1225 = sand.u32 %s1224, 7
        %s1226 = ssub.s32 0, %s1225
        %s1227 = scalar_select %p1222, %s1226, %s1225
        %v1228 = vlaneseq
        %s1229 = smul.u32 %s1227, 128
        %v1230 = vstv %s1229
        %v1231 = vadd.s32 %v1230, 49
        %vm1232 = vcmp.eq.s32.totalorder %v1228, %v1231
        %s1233 = smul.addr %s1221, 8
        %s1234 = scalar_lea.vmem [#allocation16], %s1233
        %1235 = vst.msk [vmem:[%s1234] sm:$0xff] %vm1232, 2147483648
        %s1236 = smul.addr %s1221, 8
        %s1237 = scalar_lea.vmem [#allocation17], %s1236
        %1238 = vst.msk [vmem:[%s1237] sm:$0xff] %vm1232, 2147483647
        %1239 = xla_tuple %1235, %1238
        %v1240 = vrot.slane %v1219, 1
        %s1241 = vtos %v1240
        %s1242 = sshrl.u32 %s1241, 3
        %p1243 = scmp.lt.s32.totalorder %s1241, 0
        %s1244 = ssub.s32 0, %s1241
        %s1245 = scalar_select %p1243, %s1244, %s1241
        %s1246 = sand.u32 %s1245, 7
        %s1247 = ssub.s32 0, %s1246
        %s1248 = scalar_select %p1243, %s1247, %s1246
        %v1249 = vlaneseq
        %s1250 = smul.u32 %s1248, 128
        %v1251 = vstv %s1250
        %v1252 = vadd.s32 %v1251, 50
        %vm1253 = vcmp.eq.s32.totalorder %v1249, %v1252
        %s1254 = smul.addr %s1242, 8
        %s1255 = scalar_lea.vmem [#allocation16], %s1254
        %1256 = vst.msk [vmem:[%s1255] sm:$0xff] %vm1253, 2147483648
        %s1257 = smul.addr %s1242, 8
        %s1258 = scalar_lea.vmem [#allocation17], %s1257
        %1259 = vst.msk [vmem:[%s1258] sm:$0xff] %vm1253, 2147483647
        %1260 = xla_tuple %1256, %1259
        %v1261 = vrot.slane %v1240, 1
        %s1262 = vtos %v1261
        %s1263 = sshrl.u32 %s1262, 3
        %p1264 = scmp.lt.s32.totalorder %s1262, 0
        %s1265 = ssub.s32 0, %s1262
        %s1266 = scalar_select %p1264, %s1265, %s1262
        %s1267 = sand.u32 %s1266, 7
        %s1268 = ssub.s32 0, %s1267
        %s1269 = scalar_select %p1264, %s1268, %s1267
        %v1270 = vlaneseq
        %s1271 = smul.u32 %s1269, 128
        %v1272 = vstv %s1271
        %v1273 = vadd.s32 %v1272, 51
        %vm1274 = vcmp.eq.s32.totalorder %v1270, %v1273
        %s1275 = smul.addr %s1263, 8
        %s1276 = scalar_lea.vmem [#allocation16], %s1275
        %1277 = vst.msk [vmem:[%s1276] sm:$0xff] %vm1274, 2147483648
        %s1278 = smul.addr %s1263, 8
        %s1279 = scalar_lea.vmem [#allocation17], %s1278
        %1280 = vst.msk [vmem:[%s1279] sm:$0xff] %vm1274, 2147483647
        %1281 = xla_tuple %1277, %1280
        %v1282 = vrot.slane %v1261, 1
        %s1283 = vtos %v1282
        %s1284 = sshrl.u32 %s1283, 3
        %p1285 = scmp.lt.s32.totalorder %s1283, 0
        %s1286 = ssub.s32 0, %s1283
        %s1287 = scalar_select %p1285, %s1286, %s1283
        %s1288 = sand.u32 %s1287, 7
        %s1289 = ssub.s32 0, %s1288
        %s1290 = scalar_select %p1285, %s1289, %s1288
        %v1291 = vlaneseq
        %s1292 = smul.u32 %s1290, 128
        %v1293 = vstv %s1292
        %v1294 = vadd.s32 %v1293, 52
        %vm1295 = vcmp.eq.s32.totalorder %v1291, %v1294
        %s1296 = smul.addr %s1284, 8
        %s1297 = scalar_lea.vmem [#allocation16], %s1296
        %1298 = vst.msk [vmem:[%s1297] sm:$0xff] %vm1295, 2147483648
        %s1299 = smul.addr %s1284, 8
        %s1300 = scalar_lea.vmem [#allocation17], %s1299
        %1301 = vst.msk [vmem:[%s1300] sm:$0xff] %vm1295, 2147483647
        %1302 = xla_tuple %1298, %1301
        %v1303 = vrot.slane %v1282, 1
        %s1304 = vtos %v1303
        %s1305 = sshrl.u32 %s1304, 3
        %p1306 = scmp.lt.s32.totalorder %s1304, 0
        %s1307 = ssub.s32 0, %s1304
        %s1308 = scalar_select %p1306, %s1307, %s1304
        %s1309 = sand.u32 %s1308, 7
        %s1310 = ssub.s32 0, %s1309
        %s1311 = scalar_select %p1306, %s1310, %s1309
        %v1312 = vlaneseq
        %s1313 = smul.u32 %s1311, 128
        %v1314 = vstv %s1313
        %v1315 = vadd.s32 %v1314, 53
        %vm1316 = vcmp.eq.s32.totalorder %v1312, %v1315
        %s1317 = smul.addr %s1305, 8
        %s1318 = scalar_lea.vmem [#allocation16], %s1317
        %1319 = vst.msk [vmem:[%s1318] sm:$0xff] %vm1316, 2147483648
        %s1320 = smul.addr %s1305, 8
        %s1321 = scalar_lea.vmem [#allocation17], %s1320
        %1322 = vst.msk [vmem:[%s1321] sm:$0xff] %vm1316, 2147483647
        %1323 = xla_tuple %1319, %1322
        %v1324 = vrot.slane %v1303, 1
        %s1325 = vtos %v1324
        %s1326 = sshrl.u32 %s1325, 3
        %p1327 = scmp.lt.s32.totalorder %s1325, 0
        %s1328 = ssub.s32 0, %s1325
        %s1329 = scalar_select %p1327, %s1328, %s1325
        %s1330 = sand.u32 %s1329, 7
        %s1331 = ssub.s32 0, %s1330
        %s1332 = scalar_select %p1327, %s1331, %s1330
        %v1333 = vlaneseq
        %s1334 = smul.u32 %s1332, 128
        %v1335 = vstv %s1334
        %v1336 = vadd.s32 %v1335, 54
        %vm1337 = vcmp.eq.s32.totalorder %v1333, %v1336
        %s1338 = smul.addr %s1326, 8
        %s1339 = scalar_lea.vmem [#allocation16], %s1338
        %1340 = vst.msk [vmem:[%s1339] sm:$0xff] %vm1337, 2147483648
        %s1341 = smul.addr %s1326, 8
        %s1342 = scalar_lea.vmem [#allocation17], %s1341
        %1343 = vst.msk [vmem:[%s1342] sm:$0xff] %vm1337, 2147483647
        %1344 = xla_tuple %1340, %1343
        %v1345 = vrot.slane %v1324, 1
        %s1346 = vtos %v1345
        %s1347 = sshrl.u32 %s1346, 3
        %p1348 = scmp.lt.s32.totalorder %s1346, 0
        %s1349 = ssub.s32 0, %s1346
        %s1350 = scalar_select %p1348, %s1349, %s1346
        %s1351 = sand.u32 %s1350, 7
        %s1352 = ssub.s32 0, %s1351
        %s1353 = scalar_select %p1348, %s1352, %s1351
        %v1354 = vlaneseq
        %s1355 = smul.u32 %s1353, 128
        %v1356 = vstv %s1355
        %v1357 = vadd.s32 %v1356, 55
        %vm1358 = vcmp.eq.s32.totalorder %v1354, %v1357
        %s1359 = smul.addr %s1347, 8
        %s1360 = scalar_lea.vmem [#allocation16], %s1359
        %1361 = vst.msk [vmem:[%s1360] sm:$0xff] %vm1358, 2147483648
        %s1362 = smul.addr %s1347, 8
        %s1363 = scalar_lea.vmem [#allocation17], %s1362
        %1364 = vst.msk [vmem:[%s1363] sm:$0xff] %vm1358, 2147483647
        %1365 = xla_tuple %1361, %1364
        %v1366 = vrot.slane %v1345, 1
        %s1367 = vtos %v182
        %s1368 = sshrl.u32 %s1367, 3
        %p1369 = scmp.lt.s32.totalorder %s1367, 0
        %s1370 = ssub.s32 0, %s1367
        %s1371 = scalar_select %p1369, %s1370, %s1367
        %s1372 = sand.u32 %s1371, 7
        %s1373 = ssub.s32 0, %s1372
        %s1374 = scalar_select %p1369, %s1373, %s1372
        %v1375 = vlaneseq
        %s1376 = smul.u32 %s1374, 128
        %v1377 = vstv %s1376
        %v1378 = vadd.s32 %v1377, 56
        %vm1379 = vcmp.eq.s32.totalorder %v1375, %v1378
        %s1380 = smul.addr %s1368, 8
        %s1381 = scalar_lea.vmem [#allocation16], %s1380
        %1382 = vst.msk [vmem:[%s1381] sm:$0xff] %vm1379, 2147483648
        %s1383 = smul.addr %s1368, 8
        %s1384 = scalar_lea.vmem [#allocation17], %s1383
        %1385 = vst.msk [vmem:[%s1384] sm:$0xff] %vm1379, 2147483647
        %1386 = xla_tuple %1382, %1385
        %v1387 = vrot.slane %v182, 1
        %s1388 = vtos %v1387
        %s1389 = sshrl.u32 %s1388, 3
        %p1390 = scmp.lt.s32.totalorder %s1388, 0
        %s1391 = ssub.s32 0, %s1388
        %s1392 = scalar_select %p1390, %s1391, %s1388
        %s1393 = sand.u32 %s1392, 7
        %s1394 = ssub.s32 0, %s1393
        %s1395 = scalar_select %p1390, %s1394, %s1393
        %v1396 = vlaneseq
        %s1397 = smul.u32 %s1395, 128
        %v1398 = vstv %s1397
        %v1399 = vadd.s32 %v1398, 57
        %vm1400 = vcmp.eq.s32.totalorder %v1396, %v1399
        %s1401 = smul.addr %s1389, 8
        %s1402 = scalar_lea.vmem [#allocation16], %s1401
        %1403 = vst.msk [vmem:[%s1402] sm:$0xff] %vm1400, 2147483648
        %s1404 = smul.addr %s1389, 8
        %s1405 = scalar_lea.vmem [#allocation17], %s1404
        %1406 = vst.msk [vmem:[%s1405] sm:$0xff] %vm1400, 2147483647
        %1407 = xla_tuple %1403, %1406
        %v1408 = vrot.slane %v1387, 1
        %s1409 = vtos %v1408
        %s1410 = sshrl.u32 %s1409, 3
        %p1411 = scmp.lt.s32.totalorder %s1409, 0
        %s1412 = ssub.s32 0, %s1409
        %s1413 = scalar_select %p1411, %s1412, %s1409
        %s1414 = sand.u32 %s1413, 7
        %s1415 = ssub.s32 0, %s1414
        %s1416 = scalar_select %p1411, %s1415, %s1414
        %v1417 = vlaneseq
        %s1418 = smul.u32 %s1416, 128
        %v1419 = vstv %s1418
        %v1420 = vadd.s32 %v1419, 58
        %vm1421 = vcmp.eq.s32.totalorder %v1417, %v1420
        %s1422 = smul.addr %s1410, 8
        %s1423 = scalar_lea.vmem [#allocation16], %s1422
        %1424 = vst.msk [vmem:[%s1423] sm:$0xff] %vm1421, 2147483648
        %s1425 = smul.addr %s1410, 8
        %s1426 = scalar_lea.vmem [#allocation17], %s1425
        %1427 = vst.msk [vmem:[%s1426] sm:$0xff] %vm1421, 2147483647
        %1428 = xla_tuple %1424, %1427
        %v1429 = vrot.slane %v1408, 1
        %s1430 = vtos %v1429
        %s1431 = sshrl.u32 %s1430, 3
        %p1432 = scmp.lt.s32.totalorder %s1430, 0
        %s1433 = ssub.s32 0, %s1430
        %s1434 = scalar_select %p1432, %s1433, %s1430
        %s1435 = sand.u32 %s1434, 7
        %s1436 = ssub.s32 0, %s1435
        %s1437 = scalar_select %p1432, %s1436, %s1435
        %v1438 = vlaneseq
        %s1439 = smul.u32 %s1437, 128
        %v1440 = vstv %s1439
        %v1441 = vadd.s32 %v1440, 59
        %vm1442 = vcmp.eq.s32.totalorder %v1438, %v1441
        %s1443 = smul.addr %s1431, 8
        %s1444 = scalar_lea.vmem [#allocation16], %s1443
        %1445 = vst.msk [vmem:[%s1444] sm:$0xff] %vm1442, 2147483648
        %s1446 = smul.addr %s1431, 8
        %s1447 = scalar_lea.vmem [#allocation17], %s1446
        %1448 = vst.msk [vmem:[%s1447] sm:$0xff] %vm1442, 2147483647
        %1449 = xla_tuple %1445, %1448
        %v1450 = vrot.slane %v1429, 1
        %s1451 = vtos %v1450
        %s1452 = sshrl.u32 %s1451, 3
        %p1453 = scmp.lt.s32.totalorder %s1451, 0
        %s1454 = ssub.s32 0, %s1451
        %s1455 = scalar_select %p1453, %s1454, %s1451
        %s1456 = sand.u32 %s1455, 7
        %s1457 = ssub.s32 0, %s1456
        %s1458 = scalar_select %p1453, %s1457, %s1456
        %v1459 = vlaneseq
        %s1460 = smul.u32 %s1458, 128
        %v1461 = vstv %s1460
        %v1462 = vadd.s32 %v1461, 60
        %vm1463 = vcmp.eq.s32.totalorder %v1459, %v1462
        %s1464 = smul.addr %s1452, 8
        %s1465 = scalar_lea.vmem [#allocation16], %s1464
        %1466 = vst.msk [vmem:[%s1465] sm:$0xff] %vm1463, 2147483648
        %s1467 = smul.addr %s1452, 8
        %s1468 = scalar_lea.vmem [#allocation17], %s1467
        %1469 = vst.msk [vmem:[%s1468] sm:$0xff] %vm1463, 2147483647
        %1470 = xla_tuple %1466, %1469
        %v1471 = vrot.slane %v1450, 1
        %s1472 = vtos %v1471
        %s1473 = sshrl.u32 %s1472, 3
        %p1474 = scmp.lt.s32.totalorder %s1472, 0
        %s1475 = ssub.s32 0, %s1472
        %s1476 = scalar_select %p1474, %s1475, %s1472
        %s1477 = sand.u32 %s1476, 7
        %s1478 = ssub.s32 0, %s1477
        %s1479 = scalar_select %p1474, %s1478, %s1477
        %v1480 = vlaneseq
        %s1481 = smul.u32 %s1479, 128
        %v1482 = vstv %s1481
        %v1483 = vadd.s32 %v1482, 61
        %vm1484 = vcmp.eq.s32.totalorder %v1480, %v1483
        %s1485 = smul.addr %s1473, 8
        %s1486 = scalar_lea.vmem [#allocation16], %s1485
        %1487 = vst.msk [vmem:[%s1486] sm:$0xff] %vm1484, 2147483648
        %s1488 = smul.addr %s1473, 8
        %s1489 = scalar_lea.vmem [#allocation17], %s1488
        %1490 = vst.msk [vmem:[%s1489] sm:$0xff] %vm1484, 2147483647
        %1491 = xla_tuple %1487, %1490
        %v1492 = vrot.slane %v1471, 1
        %s1493 = vtos %v1492
        %s1494 = sshrl.u32 %s1493, 3
        %p1495 = scmp.lt.s32.totalorder %s1493, 0
        %s1496 = ssub.s32 0, %s1493
        %s1497 = scalar_select %p1495, %s1496, %s1493
        %s1498 = sand.u32 %s1497, 7
        %s1499 = ssub.s32 0, %s1498
        %s1500 = scalar_select %p1495, %s1499, %s1498
        %v1501 = vlaneseq
        %s1502 = smul.u32 %s1500, 128
        %v1503 = vstv %s1502
        %v1504 = vadd.s32 %v1503, 62
        %vm1505 = vcmp.eq.s32.totalorder %v1501, %v1504
        %s1506 = smul.addr %s1494, 8
        %s1507 = scalar_lea.vmem [#allocation16], %s1506
        %1508 = vst.msk [vmem:[%s1507] sm:$0xff] %vm1505, 2147483648
        %s1509 = smul.addr %s1494, 8
        %s1510 = scalar_lea.vmem [#allocation17], %s1509
        %1511 = vst.msk [vmem:[%s1510] sm:$0xff] %vm1505, 2147483647
        %1512 = xla_tuple %1508, %1511
        %v1513 = vrot.slane %v1492, 1
        %s1514 = vtos %v1513
        %s1515 = sshrl.u32 %s1514, 3
        %p1516 = scmp.lt.s32.totalorder %s1514, 0
        %s1517 = ssub.s32 0, %s1514
        %s1518 = scalar_select %p1516, %s1517, %s1514
        %s1519 = sand.u32 %s1518, 7
        %s1520 = ssub.s32 0, %s1519
        %s1521 = scalar_select %p1516, %s1520, %s1519
        %v1522 = vlaneseq
        %s1523 = smul.u32 %s1521, 128
        %v1524 = vstv %s1523
        %v1525 = vadd.s32 %v1524, 63
        %vm1526 = vcmp.eq.s32.totalorder %v1522, %v1525
        %s1527 = smul.addr %s1515, 8
        %s1528 = scalar_lea.vmem [#allocation16], %s1527
        %1529 = vst.msk [vmem:[%s1528] sm:$0xff] %vm1526, 2147483648
        %s1530 = smul.addr %s1515, 8
        %s1531 = scalar_lea.vmem [#allocation17], %s1530
        %1532 = vst.msk [vmem:[%s1531] sm:$0xff] %vm1526, 2147483647
        %1533 = xla_tuple %1529, %1532
        %v1534 = vrot.slane %v1513, 1
        %s1535 = vtos %v183
        %s1536 = sshrl.u32 %s1535, 3
        %p1537 = scmp.lt.s32.totalorder %s1535, 0
        %s1538 = ssub.s32 0, %s1535
        %s1539 = scalar_select %p1537, %s1538, %s1535
        %s1540 = sand.u32 %s1539, 7
        %s1541 = ssub.s32 0, %s1540
        %s1542 = scalar_select %p1537, %s1541, %s1540
        %v1543 = vlaneseq
        %s1544 = smul.u32 %s1542, 128
        %v1545 = vstv %s1544
        %v1546 = vadd.s32 %v1545, 64
        %vm1547 = vcmp.eq.s32.totalorder %v1543, %v1546
        %s1548 = smul.addr %s1536, 8
        %s1549 = scalar_lea.vmem [#allocation16], %s1548
        %1550 = vst.msk [vmem:[%s1549] sm:$0xff] %vm1547, 2147483648
        %s1551 = smul.addr %s1536, 8
        %s1552 = scalar_lea.vmem [#allocation17], %s1551
        %1553 = vst.msk [vmem:[%s1552] sm:$0xff] %vm1547, 2147483647
        %1554 = xla_tuple %1550, %1553
        %v1555 = vrot.slane %v183, 1
        %s1556 = vtos %v1555
        %s1557 = sshrl.u32 %s1556, 3
        %p1558 = scmp.lt.s32.totalorder %s1556, 0
        %s1559 = ssub.s32 0, %s1556
        %s1560 = scalar_select %p1558, %s1559, %s1556
        %s1561 = sand.u32 %s1560, 7
        %s1562 = ssub.s32 0, %s1561
        %s1563 = scalar_select %p1558, %s1562, %s1561
        %v1564 = vlaneseq
        %s1565 = smul.u32 %s1563, 128
        %v1566 = vstv %s1565
        %v1567 = vadd.s32 %v1566, 65
        %vm1568 = vcmp.eq.s32.totalorder %v1564, %v1567
        %s1569 = smul.addr %s1557, 8
        %s1570 = scalar_lea.vmem [#allocation16], %s1569
        %1571 = vst.msk [vmem:[%s1570] sm:$0xff] %vm1568, 2147483648
        %s1572 = smul.addr %s1557, 8
        %s1573 = scalar_lea.vmem [#allocation17], %s1572
        %1574 = vst.msk [vmem:[%s1573] sm:$0xff] %vm1568, 2147483647
        %1575 = xla_tuple %1571, %1574
        %v1576 = vrot.slane %v1555, 1
        %s1577 = vtos %v1576
        %s1578 = sshrl.u32 %s1577, 3
        %p1579 = scmp.lt.s32.totalorder %s1577, 0
        %s1580 = ssub.s32 0, %s1577
        %s1581 = scalar_select %p1579, %s1580, %s1577
        %s1582 = sand.u32 %s1581, 7
        %s1583 = ssub.s32 0, %s1582
        %s1584 = scalar_select %p1579, %s1583, %s1582
        %v1585 = vlaneseq
        %s1586 = smul.u32 %s1584, 128
        %v1587 = vstv %s1586
        %v1588 = vadd.s32 %v1587, 66
        %vm1589 = vcmp.eq.s32.totalorder %v1585, %v1588
        %s1590 = smul.addr %s1578, 8
        %s1591 = scalar_lea.vmem [#allocation16], %s1590
        %1592 = vst.msk [vmem:[%s1591] sm:$0xff] %vm1589, 2147483648
        %s1593 = smul.addr %s1578, 8
        %s1594 = scalar_lea.vmem [#allocation17], %s1593
        %1595 = vst.msk [vmem:[%s1594] sm:$0xff] %vm1589, 2147483647
        %1596 = xla_tuple %1592, %1595
        %v1597 = vrot.slane %v1576, 1
        %s1598 = vtos %v1597
        %s1599 = sshrl.u32 %s1598, 3
        %p1600 = scmp.lt.s32.totalorder %s1598, 0
        %s1601 = ssub.s32 0, %s1598
        %s1602 = scalar_select %p1600, %s1601, %s1598
        %s1603 = sand.u32 %s1602, 7
        %s1604 = ssub.s32 0, %s1603
        %s1605 = scalar_select %p1600, %s1604, %s1603
        %v1606 = vlaneseq
        %s1607 = smul.u32 %s1605, 128
        %v1608 = vstv %s1607
        %v1609 = vadd.s32 %v1608, 67
        %vm1610 = vcmp.eq.s32.totalorder %v1606, %v1609
        %s1611 = smul.addr %s1599, 8
        %s1612 = scalar_lea.vmem [#allocation16], %s1611
        %1613 = vst.msk [vmem:[%s1612] sm:$0xff] %vm1610, 2147483648
        %s1614 = smul.addr %s1599, 8
        %s1615 = scalar_lea.vmem [#allocation17], %s1614
        %1616 = vst.msk [vmem:[%s1615] sm:$0xff] %vm1610, 2147483647
        %1617 = xla_tuple %1613, %1616
        %v1618 = vrot.slane %v1597, 1
        %s1619 = vtos %v1618
        %s1620 = sshrl.u32 %s1619, 3
        %p1621 = scmp.lt.s32.totalorder %s1619, 0
        %s1622 = ssub.s32 0, %s1619
        %s1623 = scalar_select %p1621, %s1622, %s1619
        %s1624 = sand.u32 %s1623, 7
        %s1625 = ssub.s32 0, %s1624
        %s1626 = scalar_select %p1621, %s1625, %s1624
        %v1627 = vlaneseq
        %s1628 = smul.u32 %s1626, 128
        %v1629 = vstv %s1628
        %v1630 = vadd.s32 %v1629, 68
        %vm1631 = vcmp.eq.s32.totalorder %v1627, %v1630
        %s1632 = smul.addr %s1620, 8
        %s1633 = scalar_lea.vmem [#allocation16], %s1632
        %1634 = vst.msk [vmem:[%s1633] sm:$0xff] %vm1631, 2147483648
        %s1635 = smul.addr %s1620, 8
        %s1636 = scalar_lea.vmem [#allocation17], %s1635
        %1637 = vst.msk [vmem:[%s1636] sm:$0xff] %vm1631, 2147483647
        %1638 = xla_tuple %1634, %1637
        %v1639 = vrot.slane %v1618, 1
        %s1640 = vtos %v1639
        %s1641 = sshrl.u32 %s1640, 3
        %p1642 = scmp.lt.s32.totalorder %s1640, 0
        %s1643 = ssub.s32 0, %s1640
        %s1644 = scalar_select %p1642, %s1643, %s1640
        %s1645 = sand.u32 %s1644, 7
        %s1646 = ssub.s32 0, %s1645
        %s1647 = scalar_select %p1642, %s1646, %s1645
        %v1648 = vlaneseq
        %s1649 = smul.u32 %s1647, 128
        %v1650 = vstv %s1649
        %v1651 = vadd.s32 %v1650, 69
        %vm1652 = vcmp.eq.s32.totalorder %v1648, %v1651
        %s1653 = smul.addr %s1641, 8
        %s1654 = scalar_lea.vmem [#allocation16], %s1653
        %1655 = vst.msk [vmem:[%s1654] sm:$0xff] %vm1652, 2147483648
        %s1656 = smul.addr %s1641, 8
        %s1657 = scalar_lea.vmem [#allocation17], %s1656
        %1658 = vst.msk [vmem:[%s1657] sm:$0xff] %vm1652, 2147483647
        %1659 = xla_tuple %1655, %1658
        %v1660 = vrot.slane %v1639, 1
        %s1661 = vtos %v1660
        %s1662 = sshrl.u32 %s1661, 3
        %p1663 = scmp.lt.s32.totalorder %s1661, 0
        %s1664 = ssub.s32 0, %s1661
        %s1665 = scalar_select %p1663, %s1664, %s1661
        %s1666 = sand.u32 %s1665, 7
        %s1667 = ssub.s32 0, %s1666
        %s1668 = scalar_select %p1663, %s1667, %s1666
        %v1669 = vlaneseq
        %s1670 = smul.u32 %s1668, 128
        %v1671 = vstv %s1670
        %v1672 = vadd.s32 %v1671, 70
        %vm1673 = vcmp.eq.s32.totalorder %v1669, %v1672
        %s1674 = smul.addr %s1662, 8
        %s1675 = scalar_lea.vmem [#allocation16], %s1674
        %1676 = vst.msk [vmem:[%s1675] sm:$0xff] %vm1673, 2147483648
        %s1677 = smul.addr %s1662, 8
        %s1678 = scalar_lea.vmem [#allocation17], %s1677
        %1679 = vst.msk [vmem:[%s1678] sm:$0xff] %vm1673, 2147483647
        %1680 = xla_tuple %1676, %1679
        %v1681 = vrot.slane %v1660, 1
        %s1682 = vtos %v1681
        %s1683 = sshrl.u32 %s1682, 3
        %p1684 = scmp.lt.s32.totalorder %s1682, 0
        %s1685 = ssub.s32 0, %s1682
        %s1686 = scalar_select %p1684, %s1685, %s1682
        %s1687 = sand.u32 %s1686, 7
        %s1688 = ssub.s32 0, %s1687
        %s1689 = scalar_select %p1684, %s1688, %s1687
        %v1690 = vlaneseq
        %s1691 = smul.u32 %s1689, 128
        %v1692 = vstv %s1691
        %v1693 = vadd.s32 %v1692, 71
        %vm1694 = vcmp.eq.s32.totalorder %v1690, %v1693
        %s1695 = smul.addr %s1683, 8
        %s1696 = scalar_lea.vmem [#allocation16], %s1695
        %1697 = vst.msk [vmem:[%s1696] sm:$0xff] %vm1694, 2147483648
        %s1698 = smul.addr %s1683, 8
        %s1699 = scalar_lea.vmem [#allocation17], %s1698
        %1700 = vst.msk [vmem:[%s1699] sm:$0xff] %vm1694, 2147483647
        %1701 = xla_tuple %1697, %1700
        %v1702 = vrot.slane %v1681, 1
        %s1703 = vtos %v184
        %s1704 = sshrl.u32 %s1703, 3
        %p1705 = scmp.lt.s32.totalorder %s1703, 0
        %s1706 = ssub.s32 0, %s1703
        %s1707 = scalar_select %p1705, %s1706, %s1703
        %s1708 = sand.u32 %s1707, 7
        %s1709 = ssub.s32 0, %s1708
        %s1710 = scalar_select %p1705, %s1709, %s1708
        %v1711 = vlaneseq
        %s1712 = smul.u32 %s1710, 128
        %v1713 = vstv %s1712
        %v1714 = vadd.s32 %v1713, 72
        %vm1715 = vcmp.eq.s32.totalorder %v1711, %v1714
        %s1716 = smul.addr %s1704, 8
        %s1717 = scalar_lea.vmem [#allocation16], %s1716
        %1718 = vst.msk [vmem:[%s1717] sm:$0xff] %vm1715, 2147483648
        %s1719 = smul.addr %s1704, 8
        %s1720 = scalar_lea.vmem [#allocation17], %s1719
        %1721 = vst.msk [vmem:[%s1720] sm:$0xff] %vm1715, 2147483647
        %1722 = xla_tuple %1718, %1721
        %v1723 = vrot.slane %v184, 1
        %s1724 = vtos %v1723
        %s1725 = sshrl.u32 %s1724, 3
        %p1726 = scmp.lt.s32.totalorder %s1724, 0
        %s1727 = ssub.s32 0, %s1724
        %s1728 = scalar_select %p1726, %s1727, %s1724
        %s1729 = sand.u32 %s1728, 7
        %s1730 = ssub.s32 0, %s1729
        %s1731 = scalar_select %p1726, %s1730, %s1729
        %v1732 = vlaneseq
        %s1733 = smul.u32 %s1731, 128
        %v1734 = vstv %s1733
        %v1735 = vadd.s32 %v1734, 73
        %vm1736 = vcmp.eq.s32.totalorder %v1732, %v1735
        %s1737 = smul.addr %s1725, 8
        %s1738 = scalar_lea.vmem [#allocation16], %s1737
        %1739 = vst.msk [vmem:[%s1738] sm:$0xff] %vm1736, 2147483648
        %s1740 = smul.addr %s1725, 8
        %s1741 = scalar_lea.vmem [#allocation17], %s1740
        %1742 = vst.msk [vmem:[%s1741] sm:$0xff] %vm1736, 2147483647
        %1743 = xla_tuple %1739, %1742
        %v1744 = vrot.slane %v1723, 1
        %s1745 = vtos %v1744
        %s1746 = sshrl.u32 %s1745, 3
        %p1747 = scmp.lt.s32.totalorder %s1745, 0
        %s1748 = ssub.s32 0, %s1745
        %s1749 = scalar_select %p1747, %s1748, %s1745
        %s1750 = sand.u32 %s1749, 7
        %s1751 = ssub.s32 0, %s1750
        %s1752 = scalar_select %p1747, %s1751, %s1750
        %v1753 = vlaneseq
        %s1754 = smul.u32 %s1752, 128
        %v1755 = vstv %s1754
        %v1756 = vadd.s32 %v1755, 74
        %vm1757 = vcmp.eq.s32.totalorder %v1753, %v1756
        %s1758 = smul.addr %s1746, 8
        %s1759 = scalar_lea.vmem [#allocation16], %s1758
        %1760 = vst.msk [vmem:[%s1759] sm:$0xff] %vm1757, 2147483648
        %s1761 = smul.addr %s1746, 8
        %s1762 = scalar_lea.vmem [#allocation17], %s1761
        %1763 = vst.msk [vmem:[%s1762] sm:$0xff] %vm1757, 2147483647
        %1764 = xla_tuple %1760, %1763
        %v1765 = vrot.slane %v1744, 1
        %s1766 = vtos %v1765
        %s1767 = sshrl.u32 %s1766, 3
        %p1768 = scmp.lt.s32.totalorder %s1766, 0
        %s1769 = ssub.s32 0, %s1766
        %s1770 = scalar_select %p1768, %s1769, %s1766
        %s1771 = sand.u32 %s1770, 7
        %s1772 = ssub.s32 0, %s1771
        %s1773 = scalar_select %p1768, %s1772, %s1771
        %v1774 = vlaneseq
        %s1775 = smul.u32 %s1773, 128
        %v1776 = vstv %s1775
        %v1777 = vadd.s32 %v1776, 75
        %vm1778 = vcmp.eq.s32.totalorder %v1774, %v1777
        %s1779 = smul.addr %s1767, 8
        %s1780 = scalar_lea.vmem [#allocation16], %s1779
        %1781 = vst.msk [vmem:[%s1780] sm:$0xff] %vm1778, 2147483648
        %s1782 = smul.addr %s1767, 8
        %s1783 = scalar_lea.vmem [#allocation17], %s1782
        %1784 = vst.msk [vmem:[%s1783] sm:$0xff] %vm1778, 2147483647
        %1785 = xla_tuple %1781, %1784
        %v1786 = vrot.slane %v1765, 1
        %s1787 = vtos %v1786
        %s1788 = sshrl.u32 %s1787, 3
        %p1789 = scmp.lt.s32.totalorder %s1787, 0
        %s1790 = ssub.s32 0, %s1787
        %s1791 = scalar_select %p1789, %s1790, %s1787
        %s1792 = sand.u32 %s1791, 7
        %s1793 = ssub.s32 0, %s1792
        %s1794 = scalar_select %p1789, %s1793, %s1792
        %v1795 = vlaneseq
        %s1796 = smul.u32 %s1794, 128
        %v1797 = vstv %s1796
        %v1798 = vadd.s32 %v1797, 76
        %vm1799 = vcmp.eq.s32.totalorder %v1795, %v1798
        %s1800 = smul.addr %s1788, 8
        %s1801 = scalar_lea.vmem [#allocation16], %s1800
        %1802 = vst.msk [vmem:[%s1801] sm:$0xff] %vm1799, 2147483648
        %s1803 = smul.addr %s1788, 8
        %s1804 = scalar_lea.vmem [#allocation17], %s1803
        %1805 = vst.msk [vmem:[%s1804] sm:$0xff] %vm1799, 2147483647
        %1806 = xla_tuple %1802, %1805
        %v1807 = vrot.slane %v1786, 1
        %s1808 = vtos %v1807
        %s1809 = sshrl.u32 %s1808, 3
        %p1810 = scmp.lt.s32.totalorder %s1808, 0
        %s1811 = ssub.s32 0, %s1808
        %s1812 = scalar_select %p1810, %s1811, %s1808
        %s1813 = sand.u32 %s1812, 7
        %s1814 = ssub.s32 0, %s1813
        %s1815 = scalar_select %p1810, %s1814, %s1813
        %v1816 = vlaneseq
        %s1817 = smul.u32 %s1815, 128
        %v1818 = vstv %s1817
        %v1819 = vadd.s32 %v1818, 77
        %vm1820 = vcmp.eq.s32.totalorder %v1816, %v1819
        %s1821 = smul.addr %s1809, 8
        %s1822 = scalar_lea.vmem [#allocation16], %s1821
        %1823 = vst.msk [vmem:[%s1822] sm:$0xff] %vm1820, 2147483648
        %s1824 = smul.addr %s1809, 8
        %s1825 = scalar_lea.vmem [#allocation17], %s1824
        %1826 = vst.msk [vmem:[%s1825] sm:$0xff] %vm1820, 2147483647
        %1827 = xla_tuple %1823, %1826
        %v1828 = vrot.slane %v1807, 1
        %s1829 = vtos %v1828
        %s1830 = sshrl.u32 %s1829, 3
        %p1831 = scmp.lt.s32.totalorder %s1829, 0
        %s1832 = ssub.s32 0, %s1829
        %s1833 = scalar_select %p1831, %s1832, %s1829
        %s1834 = sand.u32 %s1833, 7
        %s1835 = ssub.s32 0, %s1834
        %s1836 = scalar_select %p1831, %s1835, %s1834
        %v1837 = vlaneseq
        %s1838 = smul.u32 %s1836, 128
        %v1839 = vstv %s1838
        %v1840 = vadd.s32 %v1839, 78
        %vm1841 = vcmp.eq.s32.totalorder %v1837, %v1840
        %s1842 = smul.addr %s1830, 8
        %s1843 = scalar_lea.vmem [#allocation16], %s1842
        %1844 = vst.msk [vmem:[%s1843] sm:$0xff] %vm1841, 2147483648
        %s1845 = smul.addr %s1830, 8
        %s1846 = scalar_lea.vmem [#allocation17], %s1845
        %1847 = vst.msk [vmem:[%s1846] sm:$0xff] %vm1841, 2147483647
        %1848 = xla_tuple %1844, %1847
        %v1849 = vrot.slane %v1828, 1
        %s1850 = vtos %v1849
        %s1851 = sshrl.u32 %s1850, 3
        %p1852 = scmp.lt.s32.totalorder %s1850, 0
        %s1853 = ssub.s32 0, %s1850
        %s1854 = scalar_select %p1852, %s1853, %s1850
        %s1855 = sand.u32 %s1854, 7
        %s1856 = ssub.s32 0, %s1855
        %s1857 = scalar_select %p1852, %s1856, %s1855
        %v1858 = vlaneseq
        %s1859 = smul.u32 %s1857, 128
        %v1860 = vstv %s1859
        %v1861 = vadd.s32 %v1860, 79
        %vm1862 = vcmp.eq.s32.totalorder %v1858, %v1861
        %s1863 = smul.addr %s1851, 8
        %s1864 = scalar_lea.vmem [#allocation16], %s1863
        %1865 = vst.msk [vmem:[%s1864] sm:$0xff] %vm1862, 2147483648
        %s1866 = smul.addr %s1851, 8
        %s1867 = scalar_lea.vmem [#allocation17], %s1866
        %1868 = vst.msk [vmem:[%s1867] sm:$0xff] %vm1862, 2147483647
        %1869 = xla_tuple %1865, %1868
        %v1870 = vrot.slane %v1849, 1
        %s1871 = vtos %v185
        %s1872 = sshrl.u32 %s1871, 3
        %p1873 = scmp.lt.s32.totalorder %s1871, 0
        %s1874 = ssub.s32 0, %s1871
        %s1875 = scalar_select %p1873, %s1874, %s1871
        %s1876 = sand.u32 %s1875, 7
        %s1877 = ssub.s32 0, %s1876
        %s1878 = scalar_select %p1873, %s1877, %s1876
        %v1879 = vlaneseq
        %s1880 = smul.u32 %s1878, 128
        %v1881 = vstv %s1880
        %v1882 = vadd.s32 %v1881, 80
        %vm1883 = vcmp.eq.s32.totalorder %v1879, %v1882
        %s1884 = smul.addr %s1872, 8
        %s1885 = scalar_lea.vmem [#allocation16], %s1884
        %1886 = vst.msk [vmem:[%s1885] sm:$0xff] %vm1883, 2147483648
        %s1887 = smul.addr %s1872, 8
        %s1888 = scalar_lea.vmem [#allocation17], %s1887
        %1889 = vst.msk [vmem:[%s1888] sm:$0xff] %vm1883, 2147483647
        %1890 = xla_tuple %1886, %1889
        %v1891 = vrot.slane %v185, 1
        %s1892 = vtos %v1891
        %s1893 = sshrl.u32 %s1892, 3
        %p1894 = scmp.lt.s32.totalorder %s1892, 0
        %s1895 = ssub.s32 0, %s1892
        %s1896 = scalar_select %p1894, %s1895, %s1892
        %s1897 = sand.u32 %s1896, 7
        %s1898 = ssub.s32 0, %s1897
        %s1899 = scalar_select %p1894, %s1898, %s1897
        %v1900 = vlaneseq
        %s1901 = smul.u32 %s1899, 128
        %v1902 = vstv %s1901
        %v1903 = vadd.s32 %v1902, 81
        %vm1904 = vcmp.eq.s32.totalorder %v1900, %v1903
        %s1905 = smul.addr %s1893, 8
        %s1906 = scalar_lea.vmem [#allocation16], %s1905
        %1907 = vst.msk [vmem:[%s1906] sm:$0xff] %vm1904, 2147483648
        %s1908 = smul.addr %s1893, 8
        %s1909 = scalar_lea.vmem [#allocation17], %s1908
        %1910 = vst.msk [vmem:[%s1909] sm:$0xff] %vm1904, 2147483647
        %1911 = xla_tuple %1907, %1910
        %v1912 = vrot.slane %v1891, 1
        %s1913 = vtos %v1912
        %s1914 = sshrl.u32 %s1913, 3
        %p1915 = scmp.lt.s32.totalorder %s1913, 0
        %s1916 = ssub.s32 0, %s1913
        %s1917 = scalar_select %p1915, %s1916, %s1913
        %s1918 = sand.u32 %s1917, 7
        %s1919 = ssub.s32 0, %s1918
        %s1920 = scalar_select %p1915, %s1919, %s1918
        %v1921 = vlaneseq
        %s1922 = smul.u32 %s1920, 128
        %v1923 = vstv %s1922
        %v1924 = vadd.s32 %v1923, 82
        %vm1925 = vcmp.eq.s32.totalorder %v1921, %v1924
        %s1926 = smul.addr %s1914, 8
        %s1927 = scalar_lea.vmem [#allocation16], %s1926
        %1928 = vst.msk [vmem:[%s1927] sm:$0xff] %vm1925, 2147483648
        %s1929 = smul.addr %s1914, 8
        %s1930 = scalar_lea.vmem [#allocation17], %s1929
        %1931 = vst.msk [vmem:[%s1930] sm:$0xff] %vm1925, 2147483647
        %1932 = xla_tuple %1928, %1931
        %v1933 = vrot.slane %v1912, 1
        %s1934 = vtos %v1933
        %s1935 = sshrl.u32 %s1934, 3
        %p1936 = scmp.lt.s32.totalorder %s1934, 0
        %s1937 = ssub.s32 0, %s1934
        %s1938 = scalar_select %p1936, %s1937, %s1934
        %s1939 = sand.u32 %s1938, 7
        %s1940 = ssub.s32 0, %s1939
        %s1941 = scalar_select %p1936, %s1940, %s1939
        %v1942 = vlaneseq
        %s1943 = smul.u32 %s1941, 128
        %v1944 = vstv %s1943
        %v1945 = vadd.s32 %v1944, 83
        %vm1946 = vcmp.eq.s32.totalorder %v1942, %v1945
        %s1947 = smul.addr %s1935, 8
        %s1948 = scalar_lea.vmem [#allocation16], %s1947
        %1949 = vst.msk [vmem:[%s1948] sm:$0xff] %vm1946, 2147483648
        %s1950 = smul.addr %s1935, 8
        %s1951 = scalar_lea.vmem [#allocation17], %s1950
        %1952 = vst.msk [vmem:[%s1951] sm:$0xff] %vm1946, 2147483647
        %1953 = xla_tuple %1949, %1952
        %v1954 = vrot.slane %v1933, 1
        %s1955 = vtos %v1954
        %s1956 = sshrl.u32 %s1955, 3
        %p1957 = scmp.lt.s32.totalorder %s1955, 0
        %s1958 = ssub.s32 0, %s1955
        %s1959 = scalar_select %p1957, %s1958, %s1955
        %s1960 = sand.u32 %s1959, 7
        %s1961 = ssub.s32 0, %s1960
        %s1962 = scalar_select %p1957, %s1961, %s1960
        %v1963 = vlaneseq
        %s1964 = smul.u32 %s1962, 128
        %v1965 = vstv %s1964
        %v1966 = vadd.s32 %v1965, 84
        %vm1967 = vcmp.eq.s32.totalorder %v1963, %v1966
        %s1968 = smul.addr %s1956, 8
        %s1969 = scalar_lea.vmem [#allocation16], %s1968
        %1970 = vst.msk [vmem:[%s1969] sm:$0xff] %vm1967, 2147483648
        %s1971 = smul.addr %s1956, 8
        %s1972 = scalar_lea.vmem [#allocation17], %s1971
        %1973 = vst.msk [vmem:[%s1972] sm:$0xff] %vm1967, 2147483647
        %1974 = xla_tuple %1970, %1973
        %v1975 = vrot.slane %v1954, 1
        %s1976 = vtos %v1975
        %s1977 = sshrl.u32 %s1976, 3
        %p1978 = scmp.lt.s32.totalorder %s1976, 0
        %s1979 = ssub.s32 0, %s1976
        %s1980 = scalar_select %p1978, %s1979, %s1976
        %s1981 = sand.u32 %s1980, 7
        %s1982 = ssub.s32 0, %s1981
        %s1983 = scalar_select %p1978, %s1982, %s1981
        %v1984 = vlaneseq
        %s1985 = smul.u32 %s1983, 128
        %v1986 = vstv %s1985
        %v1987 = vadd.s32 %v1986, 85
        %vm1988 = vcmp.eq.s32.totalorder %v1984, %v1987
        %s1989 = smul.addr %s1977, 8
        %s1990 = scalar_lea.vmem [#allocation16], %s1989
        %1991 = vst.msk [vmem:[%s1990] sm:$0xff] %vm1988, 2147483648
        %s1992 = smul.addr %s1977, 8
        %s1993 = scalar_lea.vmem [#allocation17], %s1992
        %1994 = vst.msk [vmem:[%s1993] sm:$0xff] %vm1988, 2147483647
        %1995 = xla_tuple %1991, %1994
        %v1996 = vrot.slane %v1975, 1
        %s1997 = vtos %v1996
        %s1998 = sshrl.u32 %s1997, 3
        %p1999 = scmp.lt.s32.totalorder %s1997, 0
        %s2000 = ssub.s32 0, %s1997
        %s2001 = scalar_select %p1999, %s2000, %s1997
        %s2002 = sand.u32 %s2001, 7
        %s2003 = ssub.s32 0, %s2002
        %s2004 = scalar_select %p1999, %s2003, %s2002
        %v2005 = vlaneseq
        %s2006 = smul.u32 %s2004, 128
        %v2007 = vstv %s2006
        %v2008 = vadd.s32 %v2007, 86
        %vm2009 = vcmp.eq.s32.totalorder %v2005, %v2008
        %s2010 = smul.addr %s1998, 8
        %s2011 = scalar_lea.vmem [#allocation16], %s2010
        %2012 = vst.msk [vmem:[%s2011] sm:$0xff] %vm2009, 2147483648
        %s2013 = smul.addr %s1998, 8
        %s2014 = scalar_lea.vmem [#allocation17], %s2013
        %2015 = vst.msk [vmem:[%s2014] sm:$0xff] %vm2009, 2147483647
        %2016 = xla_tuple %2012, %2015
        %v2017 = vrot.slane %v1996, 1
        %s2018 = vtos %v2017
        %s2019 = sshrl.u32 %s2018, 3
        %p2020 = scmp.lt.s32.totalorder %s2018, 0
        %s2021 = ssub.s32 0, %s2018
        %s2022 = scalar_select %p2020, %s2021, %s2018
        %s2023 = sand.u32 %s2022, 7
        %s2024 = ssub.s32 0, %s2023
        %s2025 = scalar_select %p2020, %s2024, %s2023
        %v2026 = vlaneseq
        %s2027 = smul.u32 %s2025, 128
        %v2028 = vstv %s2027
        %v2029 = vadd.s32 %v2028, 87
        %vm2030 = vcmp.eq.s32.totalorder %v2026, %v2029
        %s2031 = smul.addr %s2019, 8
        %s2032 = scalar_lea.vmem [#allocation16], %s2031
        %2033 = vst.msk [vmem:[%s2032] sm:$0xff] %vm2030, 2147483648
        %s2034 = smul.addr %s2019, 8
        %s2035 = scalar_lea.vmem [#allocation17], %s2034
        %2036 = vst.msk [vmem:[%s2035] sm:$0xff] %vm2030, 2147483647
        %2037 = xla_tuple %2033, %2036
        %v2038 = vrot.slane %v2017, 1
        %s2039 = vtos %v186
        %s2040 = sshrl.u32 %s2039, 3
        %p2041 = scmp.lt.s32.totalorder %s2039, 0
        %s2042 = ssub.s32 0, %s2039
        %s2043 = scalar_select %p2041, %s2042, %s2039
        %s2044 = sand.u32 %s2043, 7
        %s2045 = ssub.s32 0, %s2044
        %s2046 = scalar_select %p2041, %s2045, %s2044
        %v2047 = vlaneseq
        %s2048 = smul.u32 %s2046, 128
        %v2049 = vstv %s2048
        %v2050 = vadd.s32 %v2049, 88
        %vm2051 = vcmp.eq.s32.totalorder %v2047, %v2050
        %s2052 = smul.addr %s2040, 8
        %s2053 = scalar_lea.vmem [#allocation16], %s2052
        %2054 = vst.msk [vmem:[%s2053] sm:$0xff] %vm2051, 2147483648
        %s2055 = smul.addr %s2040, 8
        %s2056 = scalar_lea.vmem [#allocation17], %s2055
        %2057 = vst.msk [vmem:[%s2056] sm:$0xff] %vm2051, 2147483647
        %2058 = xla_tuple %2054, %2057
        %v2059 = vrot.slane %v186, 1
        %s2060 = vtos %v2059
        %s2061 = sshrl.u32 %s2060, 3
        %p2062 = scmp.lt.s32.totalorder %s2060, 0
        %s2063 = ssub.s32 0, %s2060
        %s2064 = scalar_select %p2062, %s2063, %s2060
        %s2065 = sand.u32 %s2064, 7
        %s2066 = ssub.s32 0, %s2065
        %s2067 = scalar_select %p2062, %s2066, %s2065
        %v2068 = vlaneseq
        %s2069 = smul.u32 %s2067, 128
        %v2070 = vstv %s2069
        %v2071 = vadd.s32 %v2070, 89
        %vm2072 = vcmp.eq.s32.totalorder %v2068, %v2071
        %s2073 = smul.addr %s2061, 8
        %s2074 = scalar_lea.vmem [#allocation16], %s2073
        %2075 = vst.msk [vmem:[%s2074] sm:$0xff] %vm2072, 2147483648
        %s2076 = smul.addr %s2061, 8
        %s2077 = scalar_lea.vmem [#allocation17], %s2076
        %2078 = vst.msk [vmem:[%s2077] sm:$0xff] %vm2072, 2147483647
        %2079 = xla_tuple %2075, %2078
        %v2080 = vrot.slane %v2059, 1
        %s2081 = vtos %v2080
        %s2082 = sshrl.u32 %s2081, 3
        %p2083 = scmp.lt.s32.totalorder %s2081, 0
        %s2084 = ssub.s32 0, %s2081
        %s2085 = scalar_select %p2083, %s2084, %s2081
        %s2086 = sand.u32 %s2085, 7
        %s2087 = ssub.s32 0, %s2086
        %s2088 = scalar_select %p2083, %s2087, %s2086
        %v2089 = vlaneseq
        %s2090 = smul.u32 %s2088, 128
        %v2091 = vstv %s2090
        %v2092 = vadd.s32 %v2091, 90
        %vm2093 = vcmp.eq.s32.totalorder %v2089, %v2092
        %s2094 = smul.addr %s2082, 8
        %s2095 = scalar_lea.vmem [#allocation16], %s2094
        %2096 = vst.msk [vmem:[%s2095] sm:$0xff] %vm2093, 2147483648
        %s2097 = smul.addr %s2082, 8
        %s2098 = scalar_lea.vmem [#allocation17], %s2097
        %2099 = vst.msk [vmem:[%s2098] sm:$0xff] %vm2093, 2147483647
        %2100 = xla_tuple %2096, %2099
        %v2101 = vrot.slane %v2080, 1
        %s2102 = vtos %v2101
        %s2103 = sshrl.u32 %s2102, 3
        %p2104 = scmp.lt.s32.totalorder %s2102, 0
        %s2105 = ssub.s32 0, %s2102
        %s2106 = scalar_select %p2104, %s2105, %s2102
        %s2107 = sand.u32 %s2106, 7
        %s2108 = ssub.s32 0, %s2107
        %s2109 = scalar_select %p2104, %s2108, %s2107
        %v2110 = vlaneseq
        %s2111 = smul.u32 %s2109, 128
        %v2112 = vstv %s2111
        %v2113 = vadd.s32 %v2112, 91
        %vm2114 = vcmp.eq.s32.totalorder %v2110, %v2113
        %s2115 = smul.addr %s2103, 8
        %s2116 = scalar_lea.vmem [#allocation16], %s2115
        %2117 = vst.msk [vmem:[%s2116] sm:$0xff] %vm2114, 2147483648
        %s2118 = smul.addr %s2103, 8
        %s2119 = scalar_lea.vmem [#allocation17], %s2118
        %2120 = vst.msk [vmem:[%s2119] sm:$0xff] %vm2114, 2147483647
        %2121 = xla_tuple %2117, %2120
        %v2122 = vrot.slane %v2101, 1
        %s2123 = vtos %v2122
        %s2124 = sshrl.u32 %s2123, 3
        %p2125 = scmp.lt.s32.totalorder %s2123, 0
        %s2126 = ssub.s32 0, %s2123
        %s2127 = scalar_select %p2125, %s2126, %s2123
        %s2128 = sand.u32 %s2127, 7
        %s2129 = ssub.s32 0, %s2128
        %s2130 = scalar_select %p2125, %s2129, %s2128
        %v2131 = vlaneseq
        %s2132 = smul.u32 %s2130, 128
        %v2133 = vstv %s2132
        %v2134 = vadd.s32 %v2133, 92
        %vm2135 = vcmp.eq.s32.totalorder %v2131, %v2134
        %s2136 = smul.addr %s2124, 8
        %s2137 = scalar_lea.vmem [#allocation16], %s2136
        %2138 = vst.msk [vmem:[%s2137] sm:$0xff] %vm2135, 2147483648
        %s2139 = smul.addr %s2124, 8
        %s2140 = scalar_lea.vmem [#allocation17], %s2139
        %2141 = vst.msk [vmem:[%s2140] sm:$0xff] %vm2135, 2147483647
        %2142 = xla_tuple %2138, %2141
        %v2143 = vrot.slane %v2122, 1
        %s2144 = vtos %v2143
        %s2145 = sshrl.u32 %s2144, 3
        %p2146 = scmp.lt.s32.totalorder %s2144, 0
        %s2147 = ssub.s32 0, %s2144
        %s2148 = scalar_select %p2146, %s2147, %s2144
        %s2149 = sand.u32 %s2148, 7
        %s2150 = ssub.s32 0, %s2149
        %s2151 = scalar_select %p2146, %s2150, %s2149
        %v2152 = vlaneseq
        %s2153 = smul.u32 %s2151, 128
        %v2154 = vstv %s2153
        %v2155 = vadd.s32 %v2154, 93
        %vm2156 = vcmp.eq.s32.totalorder %v2152, %v2155
        %s2157 = smul.addr %s2145, 8
        %s2158 = scalar_lea.vmem [#allocation16], %s2157
        %2159 = vst.msk [vmem:[%s2158] sm:$0xff] %vm2156, 2147483648
        %s2160 = smul.addr %s2145, 8
        %s2161 = scalar_lea.vmem [#allocation17], %s2160
        %2162 = vst.msk [vmem:[%s2161] sm:$0xff] %vm2156, 2147483647
        %2163 = xla_tuple %2159, %2162
        %v2164 = vrot.slane %v2143, 1
        %s2165 = vtos %v2164
        %s2166 = sshrl.u32 %s2165, 3
        %p2167 = scmp.lt.s32.totalorder %s2165, 0
        %s2168 = ssub.s32 0, %s2165
        %s2169 = scalar_select %p2167, %s2168, %s2165
        %s2170 = sand.u32 %s2169, 7
        %s2171 = ssub.s32 0, %s2170
        %s2172 = scalar_select %p2167, %s2171, %s2170
        %v2173 = vlaneseq
        %s2174 = smul.u32 %s2172, 128
        %v2175 = vstv %s2174
        %v2176 = vadd.s32 %v2175, 94
        %vm2177 = vcmp.eq.s32.totalorder %v2173, %v2176
        %s2178 = smul.addr %s2166, 8
        %s2179 = scalar_lea.vmem [#allocation16], %s2178
        %2180 = vst.msk [vmem:[%s2179] sm:$0xff] %vm2177, 2147483648
        %s2181 = smul.addr %s2166, 8
        %s2182 = scalar_lea.vmem [#allocation17], %s2181
        %2183 = vst.msk [vmem:[%s2182] sm:$0xff] %vm2177, 2147483647
        %2184 = xla_tuple %2180, %2183
        %v2185 = vrot.slane %v2164, 1
        %s2186 = vtos %v2185
        %s2187 = sshrl.u32 %s2186, 3
        %p2188 = scmp.lt.s32.totalorder %s2186, 0
        %s2189 = ssub.s32 0, %s2186
        %s2190 = scalar_select %p2188, %s2189, %s2186
        %s2191 = sand.u32 %s2190, 7
        %s2192 = ssub.s32 0, %s2191
        %s2193 = scalar_select %p2188, %s2192, %s2191
        %v2194 = vlaneseq
        %s2195 = smul.u32 %s2193, 128
        %v2196 = vstv %s2195
        %v2197 = vadd.s32 %v2196, 95
        %vm2198 = vcmp.eq.s32.totalorder %v2194, %v2197
        %s2199 = smul.addr %s2187, 8
        %s2200 = scalar_lea.vmem [#allocation16], %s2199
        %2201 = vst.msk [vmem:[%s2200] sm:$0xff] %vm2198, 2147483648
        %s2202 = smul.addr %s2187, 8
        %s2203 = scalar_lea.vmem [#allocation17], %s2202
        %2204 = vst.msk [vmem:[%s2203] sm:$0xff] %vm2198, 2147483647
        %2205 = xla_tuple %2201, %2204
        %v2206 = vrot.slane %v2185, 1
        %s2207 = vtos %v187
        %s2208 = sshrl.u32 %s2207, 3
        %p2209 = scmp.lt.s32.totalorder %s2207, 0
        %s2210 = ssub.s32 0, %s2207
        %s2211 = scalar_select %p2209, %s2210, %s2207
        %s2212 = sand.u32 %s2211, 7
        %s2213 = ssub.s32 0, %s2212
        %s2214 = scalar_select %p2209, %s2213, %s2212
        %v2215 = vlaneseq
        %s2216 = smul.u32 %s2214, 128
        %v2217 = vstv %s2216
        %v2218 = vadd.s32 %v2217, 96
        %vm2219 = vcmp.eq.s32.totalorder %v2215, %v2218
        %s2220 = smul.addr %s2208, 8
        %s2221 = scalar_lea.vmem [#allocation16], %s2220
        %2222 = vst.msk [vmem:[%s2221] sm:$0xff] %vm2219, 2147483648
        %s2223 = smul.addr %s2208, 8
        %s2224 = scalar_lea.vmem [#allocation17], %s2223
        %2225 = vst.msk [vmem:[%s2224] sm:$0xff] %vm2219, 2147483647
        %2226 = xla_tuple %2222, %2225
        %v2227 = vrot.slane %v187, 1
        %s2228 = vtos %v2227
        %s2229 = sshrl.u32 %s2228, 3
        %p2230 = scmp.lt.s32.totalorder %s2228, 0
        %s2231 = ssub.s32 0, %s2228
        %s2232 = scalar_select %p2230, %s2231, %s2228
        %s2233 = sand.u32 %s2232, 7
        %s2234 = ssub.s32 0, %s2233
        %s2235 = scalar_select %p2230, %s2234, %s2233
        %v2236 = vlaneseq
        %s2237 = smul.u32 %s2235, 128
        %v2238 = vstv %s2237
        %v2239 = vadd.s32 %v2238, 97
        %vm2240 = vcmp.eq.s32.totalorder %v2236, %v2239
        %s2241 = smul.addr %s2229, 8
        %s2242 = scalar_lea.vmem [#allocation16], %s2241
        %2243 = vst.msk [vmem:[%s2242] sm:$0xff] %vm2240, 2147483648
        %s2244 = smul.addr %s2229, 8
        %s2245 = scalar_lea.vmem [#allocation17], %s2244
        %2246 = vst.msk [vmem:[%s2245] sm:$0xff] %vm2240, 2147483647
        %2247 = xla_tuple %2243, %2246
        %v2248 = vrot.slane %v2227, 1
        %s2249 = vtos %v2248
        %s2250 = sshrl.u32 %s2249, 3
        %p2251 = scmp.lt.s32.totalorder %s2249, 0
        %s2252 = ssub.s32 0, %s2249
        %s2253 = scalar_select %p2251, %s2252, %s2249
        %s2254 = sand.u32 %s2253, 7
        %s2255 = ssub.s32 0, %s2254
        %s2256 = scalar_select %p2251, %s2255, %s2254
        %v2257 = vlaneseq
        %s2258 = smul.u32 %s2256, 128
        %v2259 = vstv %s2258
        %v2260 = vadd.s32 %v2259, 98
        %vm2261 = vcmp.eq.s32.totalorder %v2257, %v2260
        %s2262 = smul.addr %s2250, 8
        %s2263 = scalar_lea.vmem [#allocation16], %s2262
        %2264 = vst.msk [vmem:[%s2263] sm:$0xff] %vm2261, 2147483648
        %s2265 = smul.addr %s2250, 8
        %s2266 = scalar_lea.vmem [#allocation17], %s2265
        %2267 = vst.msk [vmem:[%s2266] sm:$0xff] %vm2261, 2147483647
        %2268 = xla_tuple %2264, %2267
        %v2269 = vrot.slane %v2248, 1
        %s2270 = vtos %v2269
        %s2271 = sshrl.u32 %s2270, 3
        %p2272 = scmp.lt.s32.totalorder %s2270, 0
        %s2273 = ssub.s32 0, %s2270
        %s2274 = scalar_select %p2272, %s2273, %s2270
        %s2275 = sand.u32 %s2274, 7
        %s2276 = ssub.s32 0, %s2275
        %s2277 = scalar_select %p2272, %s2276, %s2275
        %v2278 = vlaneseq
        %s2279 = smul.u32 %s2277, 128
        %v2280 = vstv %s2279
        %v2281 = vadd.s32 %v2280, 99
        %vm2282 = vcmp.eq.s32.totalorder %v2278, %v2281
        %s2283 = smul.addr %s2271, 8
        %s2284 = scalar_lea.vmem [#allocation16], %s2283
        %2285 = vst.msk [vmem:[%s2284] sm:$0xff] %vm2282, 2147483648
        %s2286 = smul.addr %s2271, 8
        %s2287 = scalar_lea.vmem [#allocation17], %s2286
        %2288 = vst.msk [vmem:[%s2287] sm:$0xff] %vm2282, 2147483647
        %2289 = xla_tuple %2285, %2288
        %v2290 = vrot.slane %v2269, 1
        %s2291 = vtos %v2290
        %s2292 = sshrl.u32 %s2291, 3
        %p2293 = scmp.lt.s32.totalorder %s2291, 0
        %s2294 = ssub.s32 0, %s2291
        %s2295 = scalar_select %p2293, %s2294, %s2291
        %s2296 = sand.u32 %s2295, 7
        %s2297 = ssub.s32 0, %s2296
        %s2298 = scalar_select %p2293, %s2297, %s2296
        %v2299 = vlaneseq
        %s2300 = smul.u32 %s2298, 128
        %v2301 = vstv %s2300
        %v2302 = vadd.s32 %v2301, 100
        %vm2303 = vcmp.eq.s32.totalorder %v2299, %v2302
        %s2304 = smul.addr %s2292, 8
        %s2305 = scalar_lea.vmem [#allocation16], %s2304
        %2306 = vst.msk [vmem:[%s2305] sm:$0xff] %vm2303, 2147483648
        %s2307 = smul.addr %s2292, 8
        %s2308 = scalar_lea.vmem [#allocation17], %s2307
        %2309 = vst.msk [vmem:[%s2308] sm:$0xff] %vm2303, 2147483647
        %2310 = xla_tuple %2306, %2309
        %v2311 = vrot.slane %v2290, 1
        %s2312 = vtos %v2311
        %s2313 = sshrl.u32 %s2312, 3
        %p2314 = scmp.lt.s32.totalorder %s2312, 0
        %s2315 = ssub.s32 0, %s2312
        %s2316 = scalar_select %p2314, %s2315, %s2312
        %s2317 = sand.u32 %s2316, 7
        %s2318 = ssub.s32 0, %s2317
        %s2319 = scalar_select %p2314, %s2318, %s2317
        %v2320 = vlaneseq
        %s2321 = smul.u32 %s2319, 128
        %v2322 = vstv %s2321
        %v2323 = vadd.s32 %v2322, 101
        %vm2324 = vcmp.eq.s32.totalorder %v2320, %v2323
        %s2325 = smul.addr %s2313, 8
        %s2326 = scalar_lea.vmem [#allocation16], %s2325
        %2327 = vst.msk [vmem:[%s2326] sm:$0xff] %vm2324, 2147483648
        %s2328 = smul.addr %s2313, 8
        %s2329 = scalar_lea.vmem [#allocation17], %s2328
        %2330 = vst.msk [vmem:[%s2329] sm:$0xff] %vm2324, 2147483647
        %2331 = xla_tuple %2327, %2330
        %v2332 = vrot.slane %v2311, 1
        %s2333 = vtos %v2332
        %s2334 = sshrl.u32 %s2333, 3
        %p2335 = scmp.lt.s32.totalorder %s2333, 0
        %s2336 = ssub.s32 0, %s2333
        %s2337 = scalar_select %p2335, %s2336, %s2333
        %s2338 = sand.u32 %s2337, 7
        %s2339 = ssub.s32 0, %s2338
        %s2340 = scalar_select %p2335, %s2339, %s2338
        %v2341 = vlaneseq
        %s2342 = smul.u32 %s2340, 128
        %v2343 = vstv %s2342
        %v2344 = vadd.s32 %v2343, 102
        %vm2345 = vcmp.eq.s32.totalorder %v2341, %v2344
        %s2346 = smul.addr %s2334, 8
        %s2347 = scalar_lea.vmem [#allocation16], %s2346
        %2348 = vst.msk [vmem:[%s2347] sm:$0xff] %vm2345, 2147483648
        %s2349 = smul.addr %s2334, 8
        %s2350 = scalar_lea.vmem [#allocation17], %s2349
        %2351 = vst.msk [vmem:[%s2350] sm:$0xff] %vm2345, 2147483647
        %2352 = xla_tuple %2348, %2351
        %v2353 = vrot.slane %v2332, 1
        %s2354 = vtos %v2353
        %s2355 = sshrl.u32 %s2354, 3
        %p2356 = scmp.lt.s32.totalorder %s2354, 0
        %s2357 = ssub.s32 0, %s2354
        %s2358 = scalar_select %p2356, %s2357, %s2354
        %s2359 = sand.u32 %s2358, 7
        %s2360 = ssub.s32 0, %s2359
        %s2361 = scalar_select %p2356, %s2360, %s2359
        %v2362 = vlaneseq
        %s2363 = smul.u32 %s2361, 128
        %v2364 = vstv %s2363
        %v2365 = vadd.s32 %v2364, 103
        %vm2366 = vcmp.eq.s32.totalorder %v2362, %v2365
        %s2367 = smul.addr %s2355, 8
        %s2368 = scalar_lea.vmem [#allocation16], %s2367
        %2369 = vst.msk [vmem:[%s2368] sm:$0xff] %vm2366, 2147483648
        %s2370 = smul.addr %s2355, 8
        %s2371 = scalar_lea.vmem [#allocation17], %s2370
        %2372 = vst.msk [vmem:[%s2371] sm:$0xff] %vm2366, 2147483647
        %2373 = xla_tuple %2369, %2372
        %v2374 = vrot.slane %v2353, 1
        %s2375 = vtos %v188
        %s2376 = sshrl.u32 %s2375, 3
        %p2377 = scmp.lt.s32.totalorder %s2375, 0
        %s2378 = ssub.s32 0, %s2375
        %s2379 = scalar_select %p2377, %s2378, %s2375
        %s2380 = sand.u32 %s2379, 7
        %s2381 = ssub.s32 0, %s2380
        %s2382 = scalar_select %p2377, %s2381, %s2380
        %v2383 = vlaneseq
        %s2384 = smul.u32 %s2382, 128
        %v2385 = vstv %s2384
        %v2386 = vadd.s32 %v2385, 104
        %vm2387 = vcmp.eq.s32.totalorder %v2383, %v2386
        %s2388 = smul.addr %s2376, 8
        %s2389 = scalar_lea.vmem [#allocation16], %s2388
        %2390 = vst.msk [vmem:[%s2389] sm:$0xff] %vm2387, 2147483648
        %s2391 = smul.addr %s2376, 8
        %s2392 = scalar_lea.vmem [#allocation17], %s2391
        %2393 = vst.msk [vmem:[%s2392] sm:$0xff] %vm2387, 2147483647
        %2394 = xla_tuple %2390, %2393
        %v2395 = vrot.slane %v188, 1
        %s2396 = vtos %v2395
        %s2397 = sshrl.u32 %s2396, 3
        %p2398 = scmp.lt.s32.totalorder %s2396, 0
        %s2399 = ssub.s32 0, %s2396
        %s2400 = scalar_select %p2398, %s2399, %s2396
        %s2401 = sand.u32 %s2400, 7
        %s2402 = ssub.s32 0, %s2401
        %s2403 = scalar_select %p2398, %s2402, %s2401
        %v2404 = vlaneseq
        %s2405 = smul.u32 %s2403, 128
        %v2406 = vstv %s2405
        %v2407 = vadd.s32 %v2406, 105
        %vm2408 = vcmp.eq.s32.totalorder %v2404, %v2407
        %s2409 = smul.addr %s2397, 8
        %s2410 = scalar_lea.vmem [#allocation16], %s2409
        %2411 = vst.msk [vmem:[%s2410] sm:$0xff] %vm2408, 2147483648
        %s2412 = smul.addr %s2397, 8
        %s2413 = scalar_lea.vmem [#allocation17], %s2412
        %2414 = vst.msk [vmem:[%s2413] sm:$0xff] %vm2408, 2147483647
        %2415 = xla_tuple %2411, %2414
        %v2416 = vrot.slane %v2395, 1
        %s2417 = vtos %v2416
        %s2418 = sshrl.u32 %s2417, 3
        %p2419 = scmp.lt.s32.totalorder %s2417, 0
        %s2420 = ssub.s32 0, %s2417
        %s2421 = scalar_select %p2419, %s2420, %s2417
        %s2422 = sand.u32 %s2421, 7
        %s2423 = ssub.s32 0, %s2422
        %s2424 = scalar_select %p2419, %s2423, %s2422
        %v2425 = vlaneseq
        %s2426 = smul.u32 %s2424, 128
        %v2427 = vstv %s2426
        %v2428 = vadd.s32 %v2427, 106
        %vm2429 = vcmp.eq.s32.totalorder %v2425, %v2428
        %s2430 = smul.addr %s2418, 8
        %s2431 = scalar_lea.vmem [#allocation16], %s2430
        %2432 = vst.msk [vmem:[%s2431] sm:$0xff] %vm2429, 2147483648
        %s2433 = smul.addr %s2418, 8
        %s2434 = scalar_lea.vmem [#allocation17], %s2433
        %2435 = vst.msk [vmem:[%s2434] sm:$0xff] %vm2429, 2147483647
        %2436 = xla_tuple %2432, %2435
        %v2437 = vrot.slane %v2416, 1
        %s2438 = vtos %v2437
        %s2439 = sshrl.u32 %s2438, 3
        %p2440 = scmp.lt.s32.totalorder %s2438, 0
        %s2441 = ssub.s32 0, %s2438
        %s2442 = scalar_select %p2440, %s2441, %s2438
        %s2443 = sand.u32 %s2442, 7
        %s2444 = ssub.s32 0, %s2443
        %s2445 = scalar_select %p2440, %s2444, %s2443
        %v2446 = vlaneseq
        %s2447 = smul.u32 %s2445, 128
        %v2448 = vstv %s2447
        %v2449 = vadd.s32 %v2448, 107
        %vm2450 = vcmp.eq.s32.totalorder %v2446, %v2449
        %s2451 = smul.addr %s2439, 8
        %s2452 = scalar_lea.vmem [#allocation16], %s2451
        %2453 = vst.msk [vmem:[%s2452] sm:$0xff] %vm2450, 2147483648
        %s2454 = smul.addr %s2439, 8
        %s2455 = scalar_lea.vmem [#allocation17], %s2454
        %2456 = vst.msk [vmem:[%s2455] sm:$0xff] %vm2450, 2147483647
        %2457 = xla_tuple %2453, %2456
        %v2458 = vrot.slane %v2437, 1
        %s2459 = vtos %v2458
        %s2460 = sshrl.u32 %s2459, 3
        %p2461 = scmp.lt.s32.totalorder %s2459, 0
        %s2462 = ssub.s32 0, %s2459
        %s2463 = scalar_select %p2461, %s2462, %s2459
        %s2464 = sand.u32 %s2463, 7
        %s2465 = ssub.s32 0, %s2464
        %s2466 = scalar_select %p2461, %s2465, %s2464
        %v2467 = vlaneseq
        %s2468 = smul.u32 %s2466, 128
        %v2469 = vstv %s2468
        %v2470 = vadd.s32 %v2469, 108
        %vm2471 = vcmp.eq.s32.totalorder %v2467, %v2470
        %s2472 = smul.addr %s2460, 8
        %s2473 = scalar_lea.vmem [#allocation16], %s2472
        %2474 = vst.msk [vmem:[%s2473] sm:$0xff] %vm2471, 2147483648
        %s2475 = smul.addr %s2460, 8
        %s2476 = scalar_lea.vmem [#allocation17], %s2475
        %2477 = vst.msk [vmem:[%s2476] sm:$0xff] %vm2471, 2147483647
        %2478 = xla_tuple %2474, %2477
        %v2479 = vrot.slane %v2458, 1
        %s2480 = vtos %v2479
        %s2481 = sshrl.u32 %s2480, 3
        %p2482 = scmp.lt.s32.totalorder %s2480, 0
        %s2483 = ssub.s32 0, %s2480
        %s2484 = scalar_select %p2482, %s2483, %s2480
        %s2485 = sand.u32 %s2484, 7
        %s2486 = ssub.s32 0, %s2485
        %s2487 = scalar_select %p2482, %s2486, %s2485
        %v2488 = vlaneseq
        %s2489 = smul.u32 %s2487, 128
        %v2490 = vstv %s2489
        %v2491 = vadd.s32 %v2490, 109
        %vm2492 = vcmp.eq.s32.totalorder %v2488, %v2491
        %s2493 = smul.addr %s2481, 8
        %s2494 = scalar_lea.vmem [#allocation16], %s2493
        %2495 = vst.msk [vmem:[%s2494] sm:$0xff] %vm2492, 2147483648
        %s2496 = smul.addr %s2481, 8
        %s2497 = scalar_lea.vmem [#allocation17], %s2496
        %2498 = vst.msk [vmem:[%s2497] sm:$0xff] %vm2492, 2147483647
        %2499 = xla_tuple %2495, %2498
        %v2500 = vrot.slane %v2479, 1
        %s2501 = vtos %v2500
        %s2502 = sshrl.u32 %s2501, 3
        %p2503 = scmp.lt.s32.totalorder %s2501, 0
        %s2504 = ssub.s32 0, %s2501
        %s2505 = scalar_select %p2503, %s2504, %s2501
        %s2506 = sand.u32 %s2505, 7
        %s2507 = ssub.s32 0, %s2506
        %s2508 = scalar_select %p2503, %s2507, %s2506
        %v2509 = vlaneseq
        %s2510 = smul.u32 %s2508, 128
        %v2511 = vstv %s2510
        %v2512 = vadd.s32 %v2511, 110
        %vm2513 = vcmp.eq.s32.totalorder %v2509, %v2512
        %s2514 = smul.addr %s2502, 8
        %s2515 = scalar_lea.vmem [#allocation16], %s2514
        %2516 = vst.msk [vmem:[%s2515] sm:$0xff] %vm2513, 2147483648
        %s2517 = smul.addr %s2502, 8
        %s2518 = scalar_lea.vmem [#allocation17], %s2517
        %2519 = vst.msk [vmem:[%s2518] sm:$0xff] %vm2513, 2147483647
        %2520 = xla_tuple %2516, %2519
        %v2521 = vrot.slane %v2500, 1
        %s2522 = vtos %v2521
        %s2523 = sshrl.u32 %s2522, 3
        %p2524 = scmp.lt.s32.totalorder %s2522, 0
        %s2525 = ssub.s32 0, %s2522
        %s2526 = scalar_select %p2524, %s2525, %s2522
        %s2527 = sand.u32 %s2526, 7
        %s2528 = ssub.s32 0, %s2527
        %s2529 = scalar_select %p2524, %s2528, %s2527
        %v2530 = vlaneseq
        %s2531 = smul.u32 %s2529, 128
        %v2532 = vstv %s2531
        %v2533 = vadd.s32 %v2532, 111
        %vm2534 = vcmp.eq.s32.totalorder %v2530, %v2533
        %s2535 = smul.addr %s2523, 8
        %s2536 = scalar_lea.vmem [#allocation16], %s2535
        %2537 = vst.msk [vmem:[%s2536] sm:$0xff] %vm2534, 2147483648
        %s2538 = smul.addr %s2523, 8
        %s2539 = scalar_lea.vmem [#allocation17], %s2538
        %2540 = vst.msk [vmem:[%s2539] sm:$0xff] %vm2534, 2147483647
        %2541 = xla_tuple %2537, %2540
        %v2542 = vrot.slane %v2521, 1
        %s2543 = vtos %v189
        %s2544 = sshrl.u32 %s2543, 3
        %p2545 = scmp.lt.s32.totalorder %s2543, 0
        %s2546 = ssub.s32 0, %s2543
        %s2547 = scalar_select %p2545, %s2546, %s2543
        %s2548 = sand.u32 %s2547, 7
        %s2549 = ssub.s32 0, %s2548
        %s2550 = scalar_select %p2545, %s2549, %s2548
        %v2551 = vlaneseq
        %s2552 = smul.u32 %s2550, 128
        %v2553 = vstv %s2552
        %v2554 = vadd.s32 %v2553, 112
        %vm2555 = vcmp.eq.s32.totalorder %v2551, %v2554
        %s2556 = smul.addr %s2544, 8
        %s2557 = scalar_lea.vmem [#allocation16], %s2556
        %2558 = vst.msk [vmem:[%s2557] sm:$0xff] %vm2555, 2147483648
        %s2559 = smul.addr %s2544, 8
        %s2560 = scalar_lea.vmem [#allocation17], %s2559
        %2561 = vst.msk [vmem:[%s2560] sm:$0xff] %vm2555, 2147483647
        %2562 = xla_tuple %2558, %2561
        %v2563 = vrot.slane %v189, 1
        %s2564 = vtos %v2563
        %s2565 = sshrl.u32 %s2564, 3
        %p2566 = scmp.lt.s32.totalorder %s2564, 0
        %s2567 = ssub.s32 0, %s2564
        %s2568 = scalar_select %p2566, %s2567, %s2564
        %s2569 = sand.u32 %s2568, 7
        %s2570 = ssub.s32 0, %s2569
        %s2571 = scalar_select %p2566, %s2570, %s2569
        %v2572 = vlaneseq
        %s2573 = smul.u32 %s2571, 128
        %v2574 = vstv %s2573
        %v2575 = vadd.s32 %v2574, 113
        %vm2576 = vcmp.eq.s32.totalorder %v2572, %v2575
        %s2577 = smul.addr %s2565, 8
        %s2578 = scalar_lea.vmem [#allocation16], %s2577
        %2579 = vst.msk [vmem:[%s2578] sm:$0xff] %vm2576, 2147483648
        %s2580 = smul.addr %s2565, 8
        %s2581 = scalar_lea.vmem [#allocation17], %s2580
        %2582 = vst.msk [vmem:[%s2581] sm:$0xff] %vm2576, 2147483647
        %2583 = xla_tuple %2579, %2582
        %v2584 = vrot.slane %v2563, 1
        %s2585 = vtos %v2584
        %s2586 = sshrl.u32 %s2585, 3
        %p2587 = scmp.lt.s32.totalorder %s2585, 0
        %s2588 = ssub.s32 0, %s2585
        %s2589 = scalar_select %p2587, %s2588, %s2585
        %s2590 = sand.u32 %s2589, 7
        %s2591 = ssub.s32 0, %s2590
        %s2592 = scalar_select %p2587, %s2591, %s2590
        %v2593 = vlaneseq
        %s2594 = smul.u32 %s2592, 128
        %v2595 = vstv %s2594
        %v2596 = vadd.s32 %v2595, 114
        %vm2597 = vcmp.eq.s32.totalorder %v2593, %v2596
        %s2598 = smul.addr %s2586, 8
        %s2599 = scalar_lea.vmem [#allocation16], %s2598
        %2600 = vst.msk [vmem:[%s2599] sm:$0xff] %vm2597, 2147483648
        %s2601 = smul.addr %s2586, 8
        %s2602 = scalar_lea.vmem [#allocation17], %s2601
        %2603 = vst.msk [vmem:[%s2602] sm:$0xff] %vm2597, 2147483647
        %2604 = xla_tuple %2600, %2603
        %v2605 = vrot.slane %v2584, 1
        %s2606 = vtos %v2605
        %s2607 = sshrl.u32 %s2606, 3
        %p2608 = scmp.lt.s32.totalorder %s2606, 0
        %s2609 = ssub.s32 0, %s2606
        %s2610 = scalar_select %p2608, %s2609, %s2606
        %s2611 = sand.u32 %s2610, 7
        %s2612 = ssub.s32 0, %s2611
        %s2613 = scalar_select %p2608, %s2612, %s2611
        %v2614 = vlaneseq
        %s2615 = smul.u32 %s2613, 128
        %v2616 = vstv %s2615
        %v2617 = vadd.s32 %v2616, 115
        %vm2618 = vcmp.eq.s32.totalorder %v2614, %v2617
        %s2619 = smul.addr %s2607, 8
        %s2620 = scalar_lea.vmem [#allocation16], %s2619
        %2621 = vst.msk [vmem:[%s2620] sm:$0xff] %vm2618, 2147483648
        %s2622 = smul.addr %s2607, 8
        %s2623 = scalar_lea.vmem [#allocation17], %s2622
        %2624 = vst.msk [vmem:[%s2623] sm:$0xff] %vm2618, 2147483647
        %2625 = xla_tuple %2621, %2624
        %v2626 = vrot.slane %v2605, 1
        %s2627 = vtos %v2626
        %s2628 = sshrl.u32 %s2627, 3
        %p2629 = scmp.lt.s32.totalorder %s2627, 0
        %s2630 = ssub.s32 0, %s2627
        %s2631 = scalar_select %p2629, %s2630, %s2627
        %s2632 = sand.u32 %s2631, 7
        %s2633 = ssub.s32 0, %s2632
        %s2634 = scalar_select %p2629, %s2633, %s2632
        %v2635 = vlaneseq
        %s2636 = smul.u32 %s2634, 128
        %v2637 = vstv %s2636
        %v2638 = vadd.s32 %v2637, 116
        %vm2639 = vcmp.eq.s32.totalorder %v2635, %v2638
        %s2640 = smul.addr %s2628, 8
        %s2641 = scalar_lea.vmem [#allocation16], %s2640
        %2642 = vst.msk [vmem:[%s2641] sm:$0xff] %vm2639, 2147483648
        %s2643 = smul.addr %s2628, 8
        %s2644 = scalar_lea.vmem [#allocation17], %s2643
        %2645 = vst.msk [vmem:[%s2644] sm:$0xff] %vm2639, 2147483647
        %2646 = xla_tuple %2642, %2645
        %v2647 = vrot.slane %v2626, 1
        %s2648 = vtos %v2647
        %s2649 = sshrl.u32 %s2648, 3
        %p2650 = scmp.lt.s32.totalorder %s2648, 0
        %s2651 = ssub.s32 0, %s2648
        %s2652 = scalar_select %p2650, %s2651, %s2648
        %s2653 = sand.u32 %s2652, 7
        %s2654 = ssub.s32 0, %s2653
        %s2655 = scalar_select %p2650, %s2654, %s2653
        %v2656 = vlaneseq
        %s2657 = smul.u32 %s2655, 128
        %v2658 = vstv %s2657
        %v2659 = vadd.s32 %v2658, 117
        %vm2660 = vcmp.eq.s32.totalorder %v2656, %v2659
        %s2661 = smul.addr %s2649, 8
        %s2662 = scalar_lea.vmem [#allocation16], %s2661
        %2663 = vst.msk [vmem:[%s2662] sm:$0xff] %vm2660, 2147483648
        %s2664 = smul.addr %s2649, 8
        %s2665 = scalar_lea.vmem [#allocation17], %s2664
        %2666 = vst.msk [vmem:[%s2665] sm:$0xff] %vm2660, 2147483647
        %2667 = xla_tuple %2663, %2666
        %v2668 = vrot.slane %v2647, 1
        %s2669 = vtos %v2668
        %s2670 = sshrl.u32 %s2669, 3
        %p2671 = scmp.lt.s32.totalorder %s2669, 0
        %s2672 = ssub.s32 0, %s2669
        %s2673 = scalar_select %p2671, %s2672, %s2669
        %s2674 = sand.u32 %s2673, 7
        %s2675 = ssub.s32 0, %s2674
        %s2676 = scalar_select %p2671, %s2675, %s2674
        %v2677 = vlaneseq
        %s2678 = smul.u32 %s2676, 128
        %v2679 = vstv %s2678
        %v2680 = vadd.s32 %v2679, 118
        %vm2681 = vcmp.eq.s32.totalorder %v2677, %v2680
        %s2682 = smul.addr %s2670, 8
        %s2683 = scalar_lea.vmem [#allocation16], %s2682
        %2684 = vst.msk [vmem:[%s2683] sm:$0xff] %vm2681, 2147483648
        %s2685 = smul.addr %s2670, 8
        %s2686 = scalar_lea.vmem [#allocation17], %s2685
        %2687 = vst.msk [vmem:[%s2686] sm:$0xff] %vm2681, 2147483647
        %2688 = xla_tuple %2684, %2687
        %v2689 = vrot.slane %v2668, 1
        %s2690 = vtos %v2689
        %s2691 = sshrl.u32 %s2690, 3
        %p2692 = scmp.lt.s32.totalorder %s2690, 0
        %s2693 = ssub.s32 0, %s2690
        %s2694 = scalar_select %p2692, %s2693, %s2690
        %s2695 = sand.u32 %s2694, 7
        %s2696 = ssub.s32 0, %s2695
        %s2697 = scalar_select %p2692, %s2696, %s2695
        %v2698 = vlaneseq
        %s2699 = smul.u32 %s2697, 128
        %v2700 = vstv %s2699
        %v2701 = vadd.s32 %v2700, 119
        %vm2702 = vcmp.eq.s32.totalorder %v2698, %v2701
        %s2703 = smul.addr %s2691, 8
        %s2704 = scalar_lea.vmem [#allocation16], %s2703
        %2705 = vst.msk [vmem:[%s2704] sm:$0xff] %vm2702, 2147483648
        %s2706 = smul.addr %s2691, 8
        %s2707 = scalar_lea.vmem [#allocation17], %s2706
        %2708 = vst.msk [vmem:[%s2707] sm:$0xff] %vm2702, 2147483647
        %2709 = xla_tuple %2705, %2708
        %v2710 = vrot.slane %v2689, 1
        %s2711 = vtos %v190
        %s2712 = sshrl.u32 %s2711, 3
        %p2713 = scmp.lt.s32.totalorder %s2711, 0
        %s2714 = ssub.s32 0, %s2711
        %s2715 = scalar_select %p2713, %s2714, %s2711
        %s2716 = sand.u32 %s2715, 7
        %s2717 = ssub.s32 0, %s2716
        %s2718 = scalar_select %p2713, %s2717, %s2716
        %v2719 = vlaneseq
        %s2720 = smul.u32 %s2718, 128
        %v2721 = vstv %s2720
        %v2722 = vadd.s32 %v2721, 120
        %vm2723 = vcmp.eq.s32.totalorder %v2719, %v2722
        %s2724 = smul.addr %s2712, 8
        %s2725 = scalar_lea.vmem [#allocation16], %s2724
        %2726 = vst.msk [vmem:[%s2725] sm:$0xff] %vm2723, 2147483648
        %s2727 = smul.addr %s2712, 8
        %s2728 = scalar_lea.vmem [#allocation17], %s2727
        %2729 = vst.msk [vmem:[%s2728] sm:$0xff] %vm2723, 2147483647
        %2730 = xla_tuple %2726, %2729
        %v2731 = vrot.slane %v190, 1
        %s2732 = vtos %v2731
        %s2733 = sshrl.u32 %s2732, 3
        %p2734 = scmp.lt.s32.totalorder %s2732, 0
        %s2735 = ssub.s32 0, %s2732
        %s2736 = scalar_select %p2734, %s2735, %s2732
        %s2737 = sand.u32 %s2736, 7
        %s2738 = ssub.s32 0, %s2737
        %s2739 = scalar_select %p2734, %s2738, %s2737
        %v2740 = vlaneseq
        %s2741 = smul.u32 %s2739, 128
        %v2742 = vstv %s2741
        %v2743 = vadd.s32 %v2742, 121
        %vm2744 = vcmp.eq.s32.totalorder %v2740, %v2743
        %s2745 = smul.addr %s2733, 8
        %s2746 = scalar_lea.vmem [#allocation16], %s2745
        %2747 = vst.msk [vmem:[%s2746] sm:$0xff] %vm2744, 2147483648
        %s2748 = smul.addr %s2733, 8
        %s2749 = scalar_lea.vmem [#allocation17], %s2748
        %2750 = vst.msk [vmem:[%s2749] sm:$0xff] %vm2744, 2147483647
        %2751 = xla_tuple %2747, %2750
        %v2752 = vrot.slane %v2731, 1
        %s2753 = vtos %v2752
        %s2754 = sshrl.u32 %s2753, 3
        %p2755 = scmp.lt.s32.totalorder %s2753, 0
        %s2756 = ssub.s32 0, %s2753
        %s2757 = scalar_select %p2755, %s2756, %s2753
        %s2758 = sand.u32 %s2757, 7
        %s2759 = ssub.s32 0, %s2758
        %s2760 = scalar_select %p2755, %s2759, %s2758
        %v2761 = vlaneseq
        %s2762 = smul.u32 %s2760, 128
        %v2763 = vstv %s2762
        %v2764 = vadd.s32 %v2763, 122
        %vm2765 = vcmp.eq.s32.totalorder %v2761, %v2764
        %s2766 = smul.addr %s2754, 8
        %s2767 = scalar_lea.vmem [#allocation16], %s2766
        %2768 = vst.msk [vmem:[%s2767] sm:$0xff] %vm2765, 2147483648
        %s2769 = smul.addr %s2754, 8
        %s2770 = scalar_lea.vmem [#allocation17], %s2769
        %2771 = vst.msk [vmem:[%s2770] sm:$0xff] %vm2765, 2147483647
        %2772 = xla_tuple %2768, %2771
        %v2773 = vrot.slane %v2752, 1
        %s2774 = vtos %v2773
        %s2775 = sshrl.u32 %s2774, 3
        %p2776 = scmp.lt.s32.totalorder %s2774, 0
        %s2777 = ssub.s32 0, %s2774
        %s2778 = scalar_select %p2776, %s2777, %s2774
        %s2779 = sand.u32 %s2778, 7
        %s2780 = ssub.s32 0, %s2779
        %s2781 = scalar_select %p2776, %s2780, %s2779
        %v2782 = vlaneseq
        %s2783 = smul.u32 %s2781, 128
        %v2784 = vstv %s2783
        %v2785 = vadd.s32 %v2784, 123
        %vm2786 = vcmp.eq.s32.totalorder %v2782, %v2785
        %s2787 = smul.addr %s2775, 8
        %s2788 = scalar_lea.vmem [#allocation16], %s2787
        %2789 = vst.msk [vmem:[%s2788] sm:$0xff] %vm2786, 2147483648
        %s2790 = smul.addr %s2775, 8
        %s2791 = scalar_lea.vmem [#allocation17], %s2790
        %2792 = vst.msk [vmem:[%s2791] sm:$0xff] %vm2786, 2147483647
        %2793 = xla_tuple %2789, %2792
        %v2794 = vrot.slane %v2773, 1
        %s2795 = vtos %v2794
        %s2796 = sshrl.u32 %s2795, 3
        %p2797 = scmp.lt.s32.totalorder %s2795, 0
        %s2798 = ssub.s32 0, %s2795
        %s2799 = scalar_select %p2797, %s2798, %s2795
        %s2800 = sand.u32 %s2799, 7
        %s2801 = ssub.s32 0, %s2800
        %s2802 = scalar_select %p2797, %s2801, %s2800
        %v2803 = vlaneseq
        %s2804 = smul.u32 %s2802, 128
        %v2805 = vstv %s2804
        %v2806 = vadd.s32 %v2805, 124
        %vm2807 = vcmp.eq.s32.totalorder %v2803, %v2806
        %s2808 = smul.addr %s2796, 8
        %s2809 = scalar_lea.vmem [#allocation16], %s2808
        %2810 = vst.msk [vmem:[%s2809] sm:$0xff] %vm2807, 2147483648
        %s2811 = smul.addr %s2796, 8
        %s2812 = scalar_lea.vmem [#allocation17], %s2811
        %2813 = vst.msk [vmem:[%s2812] sm:$0xff] %vm2807, 2147483647
        %2814 = xla_tuple %2810, %2813
        %v2815 = vrot.slane %v2794, 1
        %s2816 = vtos %v2815
        %s2817 = sshrl.u32 %s2816, 3
        %p2818 = scmp.lt.s32.totalorder %s2816, 0
        %s2819 = ssub.s32 0, %s2816
        %s2820 = scalar_select %p2818, %s2819, %s2816
        %s2821 = sand.u32 %s2820, 7
        %s2822 = ssub.s32 0, %s2821
        %s2823 = scalar_select %p2818, %s2822, %s2821
        %v2824 = vlaneseq
        %s2825 = smul.u32 %s2823, 128
        %v2826 = vstv %s2825
        %v2827 = vadd.s32 %v2826, 125
        %vm2828 = vcmp.eq.s32.totalorder %v2824, %v2827
        %s2829 = smul.addr %s2817, 8
        %s2830 = scalar_lea.vmem [#allocation16], %s2829
        %2831 = vst.msk [vmem:[%s2830] sm:$0xff] %vm2828, 2147483648
        %s2832 = smul.addr %s2817, 8
        %s2833 = scalar_lea.vmem [#allocation17], %s2832
        %2834 = vst.msk [vmem:[%s2833] sm:$0xff] %vm2828, 2147483647
        %2835 = xla_tuple %2831, %2834
        %v2836 = vrot.slane %v2815, 1
        %s2837 = vtos %v2836
        %s2838 = sshrl.u32 %s2837, 3
        %p2839 = scmp.lt.s32.totalorder %s2837, 0
        %s2840 = ssub.s32 0, %s2837
        %s2841 = scalar_select %p2839, %s2840, %s2837
        %s2842 = sand.u32 %s2841, 7
        %s2843 = ssub.s32 0, %s2842
        %s2844 = scalar_select %p2839, %s2843, %s2842
        %v2845 = vlaneseq
        %s2846 = smul.u32 %s2844, 128
        %v2847 = vstv %s2846
        %v2848 = vadd.s32 %v2847, 126
        %vm2849 = vcmp.eq.s32.totalorder %v2845, %v2848
        %s2850 = smul.addr %s2838, 8
        %s2851 = scalar_lea.vmem [#allocation16], %s2850
        %2852 = vst.msk [vmem:[%s2851] sm:$0xff] %vm2849, 2147483648
        %s2853 = smul.addr %s2838, 8
        %s2854 = scalar_lea.vmem [#allocation17], %s2853
        %2855 = vst.msk [vmem:[%s2854] sm:$0xff] %vm2849, 2147483647
        %2856 = xla_tuple %2852, %2855
        %v2857 = vrot.slane %v2836, 1
        %s2858 = vtos %v2857
        %s2859 = sshrl.u32 %s2858, 3
        %p2860 = scmp.lt.s32.totalorder %s2858, 0
        %s2861 = ssub.s32 0, %s2858
        %s2862 = scalar_select %p2860, %s2861, %s2858
        %s2863 = sand.u32 %s2862, 7
        %s2864 = ssub.s32 0, %s2863
        %s2865 = scalar_select %p2860, %s2864, %s2863
        %v2866 = vlaneseq
        %s2867 = smul.u32 %s2865, 128
        %v2868 = vstv %s2867
        %v2869 = vadd.s32 %v2868, 127
        %vm2870 = vcmp.eq.s32.totalorder %v2866, %v2869
        %s2871 = smul.addr %s2859, 8
        %s2872 = scalar_lea.vmem [#allocation16], %s2871
        %2873 = vst.msk [vmem:[%s2872] sm:$0xff] %vm2870, 2147483648
        %s2874 = smul.addr %s2859, 8
        %s2875 = scalar_lea.vmem [#allocation17], %s2874
        %2876 = vst.msk [vmem:[%s2875] sm:$0xff] %vm2870, 2147483647
        %2877 = xla_tuple %2873, %2876
        %v2878 = vrot.slane %v2857, 1
      $region45: #{custom-call} parent=2 // loop_footer
        %s73 = sadd.s32 1, %s69
      $region46: #{custom-call} parent=2 // loop_footer_branch
        %68 = sbr.rel target = $region42
      $region47: #{custom-call} parent=2 // loop_exit
        _
      %s2879 = scalar_lea.vmem [#allocation13], 7
      %v2880 = vld [vmem:[%s2879] ss:$-1 sm:$0xff]
      %s2881 = scalar_lea.vmem [#allocation13], 7
      %v2882 = vld [vmem:[%s2881] ss:$-1 sm:$0xff]
      %2883 = vst [vmem:[#allocation13] sm:$0xff] %v2882
      %2884 = vst [vmem:[#allocation13] sm:$0xff] %v2880
      %s2885 = scalar_lea.vmem [#allocation15], 7
      %v2886 = vld [vmem:[%s2885] ss:$-1 sm:$0xff]
      %s2887 = scalar_lea.vmem [#allocation15], 7
      %v2888 = vld [vmem:[%s2887] ss:$-1 sm:$0xff]
      %2889 = vst [vmem:[#allocation15] sm:$0xff] %v2888
      %2890 = vst [vmem:[#allocation15] sm:$0xff] %v2886
      %2891 = xla_tuple %2884, %2890
      %v2892 = vld [vmem:[#allocation12] sm:$0xff]
      %v2893 = vld [vmem:[#allocation14] sm:$0xff]
      %2894 = xla_tuple %v2892, %v2893
      %v2895 = vld [vmem:[#allocation13] sm:$0xff]
      %v2896 = vld [vmem:[#allocation15] sm:$0xff]
      %2897 = xla_tuple %v2895, %v2896
      %vm2898 = vcmp.gt.s32.totalorder %v2892, %v2895
      %vm2899 = vcmp.eq.s32.totalorder %v2892, %v2895
      %vm2900 = vcmp.lt.s32.totalorder %v2893, %v2896
      %vm2901 = vmand %vm2899, %vm2900
      %vm2902 = vmor %vm2898, %vm2901
      %v2903 = vsel %vm2902, %v2892, %v2895
      %2904 = vst [vmem:[#allocation12] sm:$0xff] %v2903
      %v2905 = vsel %vm2902, %v2895, %v2892
      %2906 = vst [vmem:[#allocation13] sm:$0xff] %v2905
      %v2907 = vsel %vm2902, %v2893, %v2896
      %2908 = vst [vmem:[#allocation14] sm:$0xff] %v2907
      %v2909 = vsel %vm2902, %v2896, %v2893
      %2910 = vst [vmem:[#allocation15] sm:$0xff] %v2909
      %2911 = xla_tuple %2906, %2910
      %2912 = xla_tuple [#allocation12], [#allocation14]
      %v2913 = vld [vmem:[#allocation12] sm:$0xff]
      %v2914 = vld [vmem:[#allocation14] sm:$0xff]
      %2915 = xla_tuple %v2913, %v2914
      %v2917 = vunpack.c.l.s4 839939668
      %v2918 = vunpack.c.0.s8 %v2917
      %v2919 = vperm.slane %v2913, %v2918
      %v2921 = vunpack.c.l.s4 839939668
      %v2922 = vunpack.c.0.s8 %v2921
      %v2923 = vperm.slane %v2914, %v2922
      %2924 = xla_tuple %v2919, %v2923
      %vm2925 = vcmp.gt.s32.totalorder %v2913, %v2919
      %vm2926 = vcmp.eq.s32.totalorder %v2913, %v2919
      %vm2927 = vcmp.lt.s32.totalorder %v2914, %v2923
      %vm2928 = vmand %vm2926, %vm2927
      %vm2929 = vmor %vm2925, %vm2928
      %v2930 = vlaneseq
      %v2931 = vshrl.u32 %v2930, 7
      %v2932 = vand.u32 %v2931, 4
      %vm2933 = vcmp.ne.s32.totalorder %v2932, 0
      %vm2934 = vmxor %vm2929, %vm2933
      %v2935 = vsel %vm2934, %v2913, %v2919
      %v2936 = vsel %vm2934, %v2914, %v2923
      %2937 = xla_tuple %v2935, %v2936
      %v2939 = vunpack.c.l.s4 1417023538
      %v2940 = vunpack.c.0.s8 %v2939
      %v2941 = vperm.slane %v2935, %v2940
      %v2943 = vunpack.c.l.s4 1417023538
      %v2944 = vunpack.c.0.s8 %v2943
      %v2945 = vperm.slane %v2936, %v2944
      %2946 = xla_tuple %v2941, %v2945
      %vm2947 = vcmp.gt.s32.totalorder %v2935, %v2941
      %vm2948 = vcmp.eq.s32.totalorder %v2935, %v2941
      %vm2949 = vcmp.lt.s32.totalorder %v2936, %v2945
      %vm2950 = vmand %vm2948, %vm2949
      %vm2951 = vmor %vm2947, %vm2950
      %v2952 = vlaneseq
      %v2953 = vshrl.u32 %v2952, 7
      %v2954 = vand.u32 %v2953, 2
      %vm2955 = vcmp.ne.s32.totalorder %v2954, 0
      %vm2956 = vmxor %vm2951, %vm2955
      %v2957 = vsel %vm2956, %v2935, %v2941
      %v2958 = vsel %vm2956, %v2936, %v2945
      %2959 = xla_tuple %v2957, %v2958
      %v2961 = vunpack.c.l.s4 1732584193
      %v2962 = vunpack.c.0.s8 %v2961
      %v2963 = vperm.slane %v2957, %v2962
      %v2965 = vunpack.c.l.s4 1732584193
      %v2966 = vunpack.c.0.s8 %v2965
      %v2967 = vperm.slane %v2958, %v2966
      %2968 = xla_tuple %v2963, %v2967
      %vm2969 = vcmp.gt.s32.totalorder %v2957, %v2963
      %vm2970 = vcmp.eq.s32.totalorder %v2957, %v2963
      %vm2971 = vcmp.lt.s32.totalorder %v2958, %v2967
      %vm2972 = vmand %vm2970, %vm2971
      %vm2973 = vmor %vm2969, %vm2972
      %v2974 = vlaneseq
      %v2975 = vshrl.u32 %v2974, 7
      %v2976 = vand.u32 %v2975, 1
      %vm2977 = vcmp.ne.s32.totalorder %v2976, 0
      %vm2978 = vmxor %vm2973, %vm2977
      %v2979 = vsel %vm2978, %v2957, %v2963
      %v2980 = vsel %vm2978, %v2958, %v2967
      %2981 = xla_tuple %v2979, %v2980
      %2982 = vst [vmem:[#allocation12] sm:$0xff] %v2979
      %2983 = vst [vmem:[#allocation14] sm:$0xff] %v2980
      %2984 = xla_tuple %2982, %2983
      %v2985 = vld [vmem:[#allocation12] sm:$0xff]
      %v2986 = vld [vmem:[#allocation14] sm:$0xff]
      %2987 = xla_tuple %v2985, %v2986
      %v2989 = vunpack.c.l.s4 839939668
      %v2990 = vunpack.c.0.s8 %v2989
      %v2991 = vperm.slane %v2985, %v2990
      %v2993 = vunpack.c.l.s4 839939668
      %v2994 = vunpack.c.0.s8 %v2993
      %v2995 = vperm.slane %v2986, %v2994
      %2996 = xla_tuple %v2991, %v2995
      %vm2997 = vcmp.gt.s32.totalorder %v2985, %v2991
      %vm2998 = vcmp.eq.s32.totalorder %v2985, %v2991
      %vm2999 = vcmp.lt.s32.totalorder %v2986, %v2995
      %vm3000 = vmand %vm2998, %vm2999
      %vm3001 = vmor %vm2997, %vm3000
      %v3002 = vlaneseq
      %v3003 = vshrl.u32 %v3002, 7
      %v3004 = vand.u32 %v3003, 4
      %vm3005 = vcmp.ne.s32.totalorder %v3004, 0
      %vm3006 = vmxor %vm3001, %vm3005
      %v3007 = vsel %vm3006, %v2985, %v2991
      %v3008 = vsel %vm3006, %v2986, %v2995
      %3009 = xla_tuple %v3007, %v3008
      %v3011 = vunpack.c.l.s4 1417023538
      %v3012 = vunpack.c.0.s8 %v3011
      %v3013 = vperm.slane %v3007, %v3012
      %v3015 = vunpack.c.l.s4 1417023538
      %v3016 = vunpack.c.0.s8 %v3015
      %v3017 = vperm.slane %v3008, %v3016
      %3018 = xla_tuple %v3013, %v3017
      %vm3019 = vcmp.gt.s32.totalorder %v3007, %v3013
      %vm3020 = vcmp.eq.s32.totalorder %v3007, %v3013
      %vm3021 = vcmp.lt.s32.totalorder %v3008, %v3017
      %vm3022 = vmand %vm3020, %vm3021
      %vm3023 = vmor %vm3019, %vm3022
      %v3024 = vlaneseq
      %v3025 = vshrl.u32 %v3024, 7
      %v3026 = vand.u32 %v3025, 2
      %vm3027 = vcmp.ne.s32.totalorder %v3026, 0
      %vm3028 = vmxor %vm3023, %vm3027
      %v3029 = vsel %vm3028, %v3007, %v3013
      %v3030 = vsel %vm3028, %v3008, %v3017
      %3031 = xla_tuple %v3029, %v3030
      %v3033 = vunpack.c.l.s4 1732584193
      %v3034 = vunpack.c.0.s8 %v3033
      %v3035 = vperm.slane %v3029, %v3034
      %v3037 = vunpack.c.l.s4 1732584193
      %v3038 = vunpack.c.0.s8 %v3037
      %v3039 = vperm.slane %v3030, %v3038
      %3040 = xla_tuple %v3035, %v3039
      %vm3041 = vcmp.gt.s32.totalorder %v3029, %v3035
      %vm3042 = vcmp.eq.s32.totalorder %v3029, %v3035
      %vm3043 = vcmp.lt.s32.totalorder %v3030, %v3039
      %vm3044 = vmand %vm3042, %vm3043
      %vm3045 = vmor %vm3041, %vm3044
      %v3046 = vlaneseq
      %v3047 = vshrl.u32 %v3046, 7
      %v3048 = vand.u32 %v3047, 1
      %vm3049 = vcmp.ne.s32.totalorder %v3048, 0
      %vm3050 = vmxor %vm3045, %vm3049
      %v3051 = vsel %vm3050, %v3029, %v3035
      %v3052 = vsel %vm3050, %v3030, %v3039
      %3053 = xla_tuple %v3051, %v3052
      %3054 = vst [vmem:[#allocation12] sm:$0xff] %v3051
      %3055 = vst [vmem:[#allocation14] sm:$0xff] %v3052
      %3056 = xla_tuple %3054, %3055
      %3057 = xla_tuple [#allocation13], [#allocation15]
      %v3058 = vld [vmem:[#allocation13] sm:$0xff]
      %v3059 = vld [vmem:[#allocation15] sm:$0xff]
      %3060 = xla_tuple %v3058, %v3059
      %v3062 = vunpack.c.l.s4 839939668
      %v3063 = vunpack.c.0.s8 %v3062
      %v3064 = vperm.slane %v3058, %v3063
      %v3066 = vunpack.c.l.s4 839939668
      %v3067 = vunpack.c.0.s8 %v3066
      %v3068 = vperm.slane %v3059, %v3067
      %3069 = xla_tuple %v3064, %v3068
      %vm3070 = vcmp.gt.s32.totalorder %v3058, %v3064
      %vm3071 = vcmp.eq.s32.totalorder %v3058, %v3064
      %vm3072 = vcmp.lt.s32.totalorder %v3059, %v3068
      %vm3073 = vmand %vm3071, %vm3072
      %vm3074 = vmor %vm3070, %vm3073
      %v3075 = vlaneseq
      %v3076 = vshrl.u32 %v3075, 7
      %v3077 = vand.u32 %v3076, 4
      %vm3078 = vcmp.ne.s32.totalorder %v3077, 0
      %vm3079 = vmxor %vm3074, %vm3078
      %v3080 = vsel %vm3079, %v3058, %v3064
      %v3081 = vsel %vm3079, %v3059, %v3068
      %3082 = xla_tuple %v3080, %v3081
      %v3084 = vunpack.c.l.s4 1417023538
      %v3085 = vunpack.c.0.s8 %v3084
      %v3086 = vperm.slane %v3080, %v3085
      %v3088 = vunpack.c.l.s4 1417023538
      %v3089 = vunpack.c.0.s8 %v3088
      %v3090 = vperm.slane %v3081, %v3089
      %3091 = xla_tuple %v3086, %v3090
      %vm3092 = vcmp.gt.s32.totalorder %v3080, %v3086
      %vm3093 = vcmp.eq.s32.totalorder %v3080, %v3086
      %vm3094 = vcmp.lt.s32.totalorder %v3081, %v3090
      %vm3095 = vmand %vm3093, %vm3094
      %vm3096 = vmor %vm3092, %vm3095
      %v3097 = vlaneseq
      %v3098 = vshrl.u32 %v3097, 7
      %v3099 = vand.u32 %v3098, 2
      %vm3100 = vcmp.ne.s32.totalorder %v3099, 0
      %vm3101 = vmxor %vm3096, %vm3100
      %v3102 = vsel %vm3101, %v3080, %v3086
      %v3103 = vsel %vm3101, %v3081, %v3090
      %3104 = xla_tuple %v3102, %v3103
      %v3106 = vunpack.c.l.s4 1732584193
      %v3107 = vunpack.c.0.s8 %v3106
      %v3108 = vperm.slane %v3102, %v3107
      %v3110 = vunpack.c.l.s4 1732584193
      %v3111 = vunpack.c.0.s8 %v3110
      %v3112 = vperm.slane %v3103, %v3111
      %3113 = xla_tuple %v3108, %v3112
      %vm3114 = vcmp.gt.s32.totalorder %v3102, %v3108
      %vm3115 = vcmp.eq.s32.totalorder %v3102, %v3108
      %vm3116 = vcmp.lt.s32.totalorder %v3103, %v3112
      %vm3117 = vmand %vm3115, %vm3116
      %vm3118 = vmor %vm3114, %vm3117
      %v3119 = vlaneseq
      %v3120 = vshrl.u32 %v3119, 7
      %v3121 = vand.u32 %v3120, 1
      %vm3122 = vcmp.ne.s32.totalorder %v3121, 0
      %vm3123 = vmxor %vm3118, %vm3122
      %v3124 = vsel %vm3123, %v3102, %v3108
      %v3125 = vsel %vm3123, %v3103, %v3112
      %3126 = xla_tuple %v3124, %v3125
      %3127 = vst [vmem:[#allocation13] sm:$0xff] %v3124
      %3128 = vst [vmem:[#allocation15] sm:$0xff] %v3125
      %3129 = xla_tuple %3127, %3128
      %v3130 = vld [vmem:[#allocation13] sm:$0xff]
      %v3131 = vld [vmem:[#allocation15] sm:$0xff]
      %3132 = xla_tuple %v3130, %v3131
      %v3134 = vunpack.c.l.s4 839939668
      %v3135 = vunpack.c.0.s8 %v3134
      %v3136 = vperm.slane %v3130, %v3135
      %v3138 = vunpack.c.l.s4 839939668
      %v3139 = vunpack.c.0.s8 %v3138
      %v3140 = vperm.slane %v3131, %v3139
      %3141 = xla_tuple %v3136, %v3140
      %vm3142 = vcmp.gt.s32.totalorder %v3130, %v3136
      %vm3143 = vcmp.eq.s32.totalorder %v3130, %v3136
      %vm3144 = vcmp.lt.s32.totalorder %v3131, %v3140
      %vm3145 = vmand %vm3143, %vm3144
      %vm3146 = vmor %vm3142, %vm3145
      %v3147 = vlaneseq
      %v3148 = vshrl.u32 %v3147, 7
      %v3149 = vand.u32 %v3148, 4
      %vm3150 = vcmp.ne.s32.totalorder %v3149, 0
      %vm3151 = vmxor %vm3146, %vm3150
      %v3152 = vsel %vm3151, %v3130, %v3136
      %v3153 = vsel %vm3151, %v3131, %v3140
      %3154 = xla_tuple %v3152, %v3153
      %v3156 = vunpack.c.l.s4 1417023538
      %v3157 = vunpack.c.0.s8 %v3156
      %v3158 = vperm.slane %v3152, %v3157
      %v3160 = vunpack.c.l.s4 1417023538
      %v3161 = vunpack.c.0.s8 %v3160
      %v3162 = vperm.slane %v3153, %v3161
      %3163 = xla_tuple %v3158, %v3162
      %vm3164 = vcmp.gt.s32.totalorder %v3152, %v3158
      %vm3165 = vcmp.eq.s32.totalorder %v3152, %v3158
      %vm3166 = vcmp.lt.s32.totalorder %v3153, %v3162
      %vm3167 = vmand %vm3165, %vm3166
      %vm3168 = vmor %vm3164, %vm3167
      %v3169 = vlaneseq
      %v3170 = vshrl.u32 %v3169, 7
      %v3171 = vand.u32 %v3170, 2
      %vm3172 = vcmp.ne.s32.totalorder %v3171, 0
      %vm3173 = vmxor %vm3168, %vm3172
      %v3174 = vsel %vm3173, %v3152, %v3158
      %v3175 = vsel %vm3173, %v3153, %v3162
      %3176 = xla_tuple %v3174, %v3175
      %v3178 = vunpack.c.l.s4 1732584193
      %v3179 = vunpack.c.0.s8 %v3178
      %v3180 = vperm.slane %v3174, %v3179
      %v3182 = vunpack.c.l.s4 1732584193
      %v3183 = vunpack.c.0.s8 %v3182
      %v3184 = vperm.slane %v3175, %v3183
      %3185 = xla_tuple %v3180, %v3184
      %vm3186 = vcmp.gt.s32.totalorder %v3174, %v3180
      %vm3187 = vcmp.eq.s32.totalorder %v3174, %v3180
      %vm3188 = vcmp.lt.s32.totalorder %v3175, %v3184
      %vm3189 = vmand %vm3187, %vm3188
      %vm3190 = vmor %vm3186, %vm3189
      %v3191 = vlaneseq
      %v3192 = vshrl.u32 %v3191, 7
      %v3193 = vand.u32 %v3192, 1
      %vm3194 = vcmp.ne.s32.totalorder %v3193, 0
      %vm3195 = vmxor %vm3190, %vm3194
      %v3196 = vsel %vm3195, %v3174, %v3180
      %v3197 = vsel %vm3195, %v3175, %v3184
      %3198 = xla_tuple %v3196, %v3197
      %3199 = vst [vmem:[#allocation13] sm:$0xff] %v3196
      %3200 = vst [vmem:[#allocation15] sm:$0xff] %v3197
      %3201 = xla_tuple %3199, %3200
    %v3202 = vld [vmem:[#allocation12] sm:$0xff]
    %vm3203 = vcmp.lt.s32.totalorder %v3202, 0
    %v3204 = vsub.s32 2147483647, %v3202
    %v3205 = vsel %vm3203, %v3204, %v3202
    %3206 = vst [vmem:[#allocation12] sm:$0xff] %v3205
    %v3207 = vld [vmem:[#allocation12] sm:$0xff]
    %3208 = vst [vmem:[#allocation7] sm:$0xff] %v3207
    %v3209 = vld [vmem:[#allocation14] sm:$0xff]
    %3210 = vst [vmem:[#allocation10] sm:$0xff] %v3209
    %s3212 = ssub.s32 2, 1
    %v3213 = vld [vmem:[#allocation7] sm:%s3212]
    %s3215 = ssub.s32 2, 1
    %3216 = vst [vmem:[#allocation8] sm:%s3215] %v3213
    %s3218 = ssub.s32 2, 1
    %v3219 = vld [vmem:[#allocation10] sm:%s3218]
    %s3221 = ssub.s32 2, 1
    %3222 = vst [vmem:[#allocation11] sm:%s3221] %v3219
    %3224 = vsyncadd [#allocation9], 0
    %s3226 = sshll.u32 [#allocation8], 4
    %s3227 = int_to_ptr.vmem [resolvable:$true] %s3226
    %s3228 = sshll.u32 %s1, 4
    %s3229 = int_to_ptr.hbm [resolvable:$true] %s3228
    %3231 = dma.vmem_to_hbm [thread:$0]  %s3227, 16, %s3229, [#allocation9]
    // Predicated region
    $region48: #{custom-call} parent=1 // pred_check
      _
    $region49: #{custom-call} parent=1 // pred_check_branch
      %3233 = sbr.rel (0) target = $region51
    $region50: #{custom-call} parent=1 // pred_region
      // Predicated region
      $region52: #{custom-call} parent=50 // pred_check
        _
      $region53: #{custom-call} parent=50 // pred_check_branch
        %3235 = sbr.rel target = $region55
      $region54: #{custom-call} parent=50 // pred_region
        // Predicated region
        $region67: #{custom-call} parent=54 // pred_check
          _
        $region68: #{custom-call} parent=54 // pred_check_branch
          %3251 = sbr.rel (0) target = $region70
        $region69: #{custom-call} parent=54 // pred_region
          %s3253 = ssub.s32 2, 1
          loop: start=0, step=1, limit=1
          $region71: #{custom-call} parent=69 // loop_pre_header
            _
          $region72: #{custom-call} parent=69 // loop_header
            %s3255 = sphi 0, %s3259
            %p3256 = scmp.ge.s32.totalorder %s3255, 1
            %s3260 = sphi [#allocation11], [#allocation11]
            %s3261 = sphi %s2, %s2
          $region73: #{custom-call} parent=69 // loop_header_branch
            %3258 = sbr.rel (%p3256) target = $region77
          $region74: #{custom-call} parent=69 // loop_body
            %v3262 = vld [vmem:[%s3260] sm:%s3253]
            %3263 = vst [vmem:[%s3261] sm:%s3253] %v3262
          $region75: #{custom-call} parent=69 // loop_footer
            %s3259 = sadd.s32 1, %s3255
          $region76: #{custom-call} parent=69 // loop_footer_branch
            %3254 = sbr.rel target = $region72
          $region77: #{custom-call} parent=69 // loop_exit
            _
        $region70: #{custom-call} parent=54 // pred_fallthru
          _
      $region55: #{custom-call} parent=50 // pred_fallthru
        _
      // Predicated region
      $region56: #{custom-call} parent=50 // pred_check
        _
      $region57: #{custom-call} parent=50 // pred_check_branch
        %3237 = sbr.rel (0) target = $region59
      $region58: #{custom-call} parent=50 // pred_region
        %s3239 = ssub.s32 2, 1
        loop: start=0, step=1, limit=1
        $region60: #{custom-call} parent=58 // loop_pre_header
          _
        $region61: #{custom-call} parent=58 // loop_header
          %s3241 = sphi 0, %s3245
          %p3242 = scmp.ge.s32.totalorder %s3241, 1
          %s3246 = sphi [#allocation11], [#allocation11]
          %s3247 = sphi %s2, %s2
        $region62: #{custom-call} parent=58 // loop_header_branch
          %3244 = sbr.rel (%p3242) target = $region66
        $region63: #{custom-call} parent=58 // loop_body
          %v3248 = vld [vmem:[%s3246] sm:%s3239]
          %3249 = vst [vmem:[%s3247] sm:%s3239] %v3248
        $region64: #{custom-call} parent=58 // loop_footer
          %s3245 = sadd.s32 1, %s3241
        $region65: #{custom-call} parent=58 // loop_footer_branch
          %3240 = sbr.rel target = $region61
        $region66: #{custom-call} parent=58 // loop_exit
          _
      $region59: #{custom-call} parent=50 // pred_fallthru
        _
    $region51: #{custom-call} parent=1 // pred_fallthru
      _
    %3264 = vnop
    %3266 = dma.done [#allocation9], 16
    %3267 = vsyncpa [#allocation9], 1

// kernel: dots1_forward.17
$region0: #{dots1_forward.17}
  #allocation0 [shape = 'u32[]', space=smem, size = 0x4, offset = 0x4, fixed_abs, tag = 'smem constant byte address 0x4 - core index']
  #allocation1 [shape = 'u32[72,128]{1,0:T(1,128)}', space=vmem, size = 0x9000, scoped, tag = 'internal scratch']
  %s0 = inlined_call_operand.vmem [shape: bf16[8,128], index: 0, kind: input, shape index: {}]
  %s1 = inlined_call_operand.hbm [shape: bf16[128,512], index: 1, kind: input, shape index: {}]
  %s2 = inlined_call_operand.hbm [shape: bf16[256,128], index: 2, kind: input, shape index: {}]
  %s3 = inlined_call_operand.vmem [shape: bf16[8,128], index: 3, kind: output, shape index: {}]
  %s4 = sld [smem:[#allocation0]]
  $region30: #{dots1_forward.17} parent=0
    _
  %s6 = ssub.s32 1, %s4
  %s7 = scalar_select 0, %s6, %s4
  $region1: #{dots1_forward.17} parent=0
    #allocation2 [shape = 'u8[131072]{0}', space=vmem, size = 0x20000, scoped, tag = 'input window, operand 1, single buffered']
    #allocation3 [shape = 's32[1]{0}', space=sflag, size = 0x4, scoped, tag = 'scoped memory for dots1_forward.17']
    #allocation4 [shape = 'u8[65536]{0}', space=vmem, size = 0x10000, scoped, tag = 'input window, operand 2, single buffered']
    #allocation5 [shape = 's32[1]{0}', space=sflag, size = 0x4, scoped, tag = 'scoped memory for dots1_forward.17']
    %8 = vsyncpa [#allocation3], 0
    %9 = vsyncpa [#allocation5], 0
    // Predicated region
    $region2: #{dots1_forward.17} parent=1 // pred_check
      _
    $region3: #{dots1_forward.17} parent=1 // pred_check_branch
      %11 = sbr.rel (0) target = $region5
    $region4: #{dots1_forward.17} parent=1 // pred_region
      _
    $region5: #{dots1_forward.17} parent=1 // pred_fallthru
      _
    // Predicated region
    $region6: #{dots1_forward.17} parent=1 // pred_check
      _
    $region7: #{dots1_forward.17} parent=1 // pred_check_branch
      %13 = sbr.rel (0) target = $region9
    $region8: #{dots1_forward.17} parent=1 // pred_region
      %15 = vsyncadd [#allocation3], 0
      %s16 = sshll.u32 %s1, 4
      %s17 = int_to_ptr.hbm [resolvable:$true] %s16
      %s18 = sshll.u32 [#allocation2], 4
      %s19 = int_to_ptr.vmem [resolvable:$true] %s18
      %24 = dma.hbm_to_vmem [thread:$0]  %s17, 4096, %s19, [#allocation3], 256, 256, 16
    $region9: #{dots1_forward.17} parent=1 // pred_fallthru
      _
    // Predicated region
    $region10: #{dots1_forward.17} parent=1 // pred_check
      _
    $region11: #{dots1_forward.17} parent=1 // pred_check_branch
      %26 = sbr.rel (0) target = $region13
    $region12: #{dots1_forward.17} parent=1 // pred_region
      %28 = vsyncadd [#allocation5], 0
      %s29 = sshll.u32 %s2, 4
      %s30 = int_to_ptr.hbm [resolvable:$true] %s29
      %s31 = sshll.u32 [#allocation4], 4
      %s32 = int_to_ptr.vmem [resolvable:$true] %s31
      %37 = dma.hbm_to_vmem [thread:$0]  %s30, 2048, %s32, [#allocation5], 64, 64, 4
    $region13: #{dots1_forward.17} parent=1 // pred_fallthru
      _
    // Predicated region
    $region14: #{dots1_forward.17} parent=1 // pred_check
      _
    $region15: #{dots1_forward.17} parent=1 // pred_check_branch
      %39 = sbr.rel (0) target = $region17
    $region16: #{dots1_forward.17} parent=1 // pred_region
      %41 = dma.done [#allocation3], 4096
    $region17: #{dots1_forward.17} parent=1 // pred_fallthru
      _
    // Predicated region
    $region18: #{dots1_forward.17} parent=1 // pred_check
      _
    $region19: #{dots1_forward.17} parent=1 // pred_check_branch
      %43 = sbr.rel (0) target = $region21
    $region20: #{dots1_forward.17} parent=1 // pred_region
      %45 = dma.done [#allocation5], 2048
    $region21: #{dots1_forward.17} parent=1 // pred_fallthru
      _
    %v46 = vld [vmem:[%s0] sm:$0xf]
    %v47 = vld [vmem:[#allocation2] sm:$0xff]
    %v48 = vld [vmem:[#allocation2 + $0x8] sm:$0xff]
    %v49 = vld [vmem:[#allocation2 + $0x10] sm:$0xff]
    %v50 = vld [vmem:[#allocation2 + $0x18] sm:$0xff]
    %v51 = vld [vmem:[#allocation2 + $0x20] sm:$0xff]
    %v52 = vld [vmem:[#allocation2 + $0x28] sm:$0xff]
    %v53 = vld [vmem:[#allocation2 + $0x30] sm:$0xff]
    %v54 = vld [vmem:[#allocation2 + $0x38] sm:$0xff]
    %v55 = vld [vmem:[#allocation2 + $0x40] sm:$0xff]
    %v56 = vld [vmem:[#allocation2 + $0x48] sm:$0xff]
    %v57 = vld [vmem:[#allocation2 + $0x50] sm:$0xff]
    %v58 = vld [vmem:[#allocation2 + $0x58] sm:$0xff]
    %v59 = vld [vmem:[#allocation2 + $0x60] sm:$0xff]
    %v60 = vld [vmem:[#allocation2 + $0x68] sm:$0xff]
    %v61 = vld [vmem:[#allocation2 + $0x70] sm:$0xff]
    %v62 = vld [vmem:[#allocation2 + $0x78] sm:$0xff]
    %v63 = vld [vmem:[#allocation2 + $0x80] sm:$0xff]
    %v64 = vld [vmem:[#allocation2 + $0x88] sm:$0xff]
    %v65 = vld [vmem:[#allocation2 + $0x90] sm:$0xff]
    %v66 = vld [vmem:[#allocation2 + $0x98] sm:$0xff]
    %v67 = vld [vmem:[#allocation2 + $0xa0] sm:$0xff]
    %v68 = vld [vmem:[#allocation2 + $0xa8] sm:$0xff]
    %v69 = vld [vmem:[#allocation2 + $0xb0] sm:$0xff]
    %v70 = vld [vmem:[#allocation2 + $0xb8] sm:$0xff]
    %v71 = vld [vmem:[#allocation2 + $0xc0] sm:$0xff]
    %v72 = vld [vmem:[#allocation2 + $0xc8] sm:$0xff]
    %v73 = vld [vmem:[#allocation2 + $0xd0] sm:$0xff]
    %v74 = vld [vmem:[#allocation2 + $0xd8] sm:$0xff]
    %v75 = vld [vmem:[#allocation2 + $0xe0] sm:$0xff]
    %v76 = vld [vmem:[#allocation2 + $0xe8] sm:$0xff]
    %v77 = vld [vmem:[#allocation2 + $0xf0] sm:$0xff]
    %v78 = vld [vmem:[#allocation2 + $0xf8] sm:$0xff]
    %v111 = vunpack.c.l.b16 %v47
    %v112 = vunpack.c.h.b16 %v47
    %v113 = vunpack.c.l.b16 %v48
    %v114 = vunpack.c.h.b16 %v48
    %v115 = vunpack.c.l.b16 %v49
    %v116 = vunpack.c.h.b16 %v49
    %v117 = vunpack.c.l.b16 %v50
    %v118 = vunpack.c.h.b16 %v50
    %v119 = vunpack.c.l.b16 %v51
    %v120 = vunpack.c.h.b16 %v51
    %v121 = vunpack.c.l.b16 %v52
    %v122 = vunpack.c.h.b16 %v52
    %v123 = vunpack.c.l.b16 %v53
    %v124 = vunpack.c.h.b16 %v53
    %v125 = vunpack.c.l.b16 %v54
    %v126 = vunpack.c.h.b16 %v54
    %v127 = vunpack.c.l.b16 %v55
    %v128 = vunpack.c.h.b16 %v55
    %v129 = vunpack.c.l.b16 %v56
    %v130 = vunpack.c.h.b16 %v56
    %v131 = vunpack.c.l.b16 %v57
    %v132 = vunpack.c.h.b16 %v57
    %v133 = vunpack.c.l.b16 %v58
    %v134 = vunpack.c.h.b16 %v58
    %v135 = vunpack.c.l.b16 %v59
    %v136 = vunpack.c.h.b16 %v59
    %v137 = vunpack.c.l.b16 %v60
    %v138 = vunpack.c.h.b16 %v60
    %v139 = vunpack.c.l.b16 %v61
    %v140 = vunpack.c.h.b16 %v61
    %v141 = vunpack.c.l.b16 %v62
    %v142 = vunpack.c.h.b16 %v62
    %v143 = vunpack.c.l.b16 %v63
    %v144 = vunpack.c.h.b16 %v63
    %v145 = vunpack.c.l.b16 %v64
    %v146 = vunpack.c.h.b16 %v64
    %v147 = vunpack.c.l.b16 %v65
    %v148 = vunpack.c.h.b16 %v65
    %v149 = vunpack.c.l.b16 %v66
    %v150 = vunpack.c.h.b16 %v66
    %v151 = vunpack.c.l.b16 %v67
    %v152 = vunpack.c.h.b16 %v67
    %v153 = vunpack.c.l.b16 %v68
    %v154 = vunpack.c.h.b16 %v68
    %v155 = vunpack.c.l.b16 %v69
    %v156 = vunpack.c.h.b16 %v69
    %v157 = vunpack.c.l.b16 %v70
    %v158 = vunpack.c.h.b16 %v70
    %v159 = vunpack.c.l.b16 %v71
    %v160 = vunpack.c.h.b16 %v71
    %v161 = vunpack.c.l.b16 %v72
    %v162 = vunpack.c.h.b16 %v72
    %v163 = vunpack.c.l.b16 %v73
    %v164 = vunpack.c.h.b16 %v73
    %v165 = vunpack.c.l.b16 %v74
    %v166 = vunpack.c.h.b16 %v74
    %v167 = vunpack.c.l.b16 %v75
    %v168 = vunpack.c.h.b16 %v75
    %v169 = vunpack.c.l.b16 %v76
    %v170 = vunpack.c.h.b16 %v76
    %v171 = vunpack.c.l.b16 %v77
    %v172 = vunpack.c.h.b16 %v77
    %v173 = vunpack.c.l.b16 %v78
    %v174 = vunpack.c.h.b16 %v78
    %v175 = vpack.c.b16 %v115, %v111
    %v176 = vpack.c.b16 %v116, %v112
    %v177 = vpack.c.b16 %v117, %v113
    %v178 = vpack.c.b16 %v118, %v114
    %v179 = vpack.c.b16 %v123, %v119
    %v180 = vpack.c.b16 %v124, %v120
    %v181 = vpack.c.b16 %v125, %v121
    %v182 = vpack.c.b16 %v126, %v122
    %v183 = vpack.c.b16 %v131, %v127
    %v184 = vpack.c.b16 %v132, %v128
    %v185 = vpack.c.b16 %v133, %v129
    %v186 = vpack.c.b16 %v134, %v130
    %v187 = vpack.c.b16 %v139, %v135
    %v188 = vpack.c.b16 %v140, %v136
    %v189 = vpack.c.b16 %v141, %v137
    %v190 = vpack.c.b16 %v142, %v138
    %v191 = vpack.c.b16 %v147, %v143
    %v192 = vpack.c.b16 %v148, %v144
    %v193 = vpack.c.b16 %v149, %v145
    %v194 = vpack.c.b16 %v150, %v146
    %v195 = vpack.c.b16 %v155, %v151
    %v196 = vpack.c.b16 %v156, %v152
    %v197 = vpack.c.b16 %v157, %v153
    %v198 = vpack.c.b16 %v158, %v154
    %v199 = vpack.c.b16 %v163, %v159
    %v200 = vpack.c.b16 %v164, %v160
    %v201 = vpack.c.b16 %v165, %v161
    %v202 = vpack.c.b16 %v166, %v162
    %v203 = vpack.c.b16 %v171, %v167
    %v204 = vpack.c.b16 %v172, %v168
    %v205 = vpack.c.b16 %v173, %v169
    %v206 = vpack.c.b16 %v174, %v170
    %239 = vmatpush.bf16.msra.mxu0 %v203
    %240 = vmatpush.bf16.msra.mxu0 %v199
    %241 = vmatpush.bf16.msra.mxu0 %v195
    %242 = vmatpush.bf16.msra.mxu0 %v191
    %243 = vmatpush.bf16.msra.mxu0 %v187
    %244 = vmatpush.bf16.msra.mxu0 %v183
    %245 = vmatpush.bf16.msra.mxu0 %v179
    %246 = vmatpush.bf16.msra.mxu0 %v175
    %247 = vmatmul.bf16.gmra.mxu0 %v46
    %v248 = vpop.f32.mrf.mxu0
    %v249 = vadd.f32 0.0, %v248
    %v250 = vpop.f32.mrf.mxu0
    %251 = vdwg.mxu0
    %252 = vmatpush.bf16.msra.mxu0 %v204
    %253 = vmatpush.bf16.msra.mxu0 %v200
    %254 = vmatpush.bf16.msra.mxu0 %v196
    %255 = vmatpush.bf16.msra.mxu0 %v192
    %256 = vmatpush.bf16.msra.mxu0 %v188
    %257 = vmatpush.bf16.msra.mxu0 %v184
    %258 = vmatpush.bf16.msra.mxu0 %v180
    %259 = vmatpush.bf16.msra.mxu0 %v176
    %260 = vmatmul.bf16.gmra.mxu0 %v46
    %v261 = vpop.f32.mrf.mxu0
    %v262 = vadd.f32 0.0, %v261
    %v263 = vpop.f32.mrf.mxu0
    %264 = vdwg.mxu0
    %265 = vmatpush.bf16.msra.mxu0 %v205
    %266 = vmatpush.bf16.msra.mxu0 %v201
    %267 = vmatpush.bf16.msra.mxu0 %v197
    %268 = vmatpush.bf16.msra.mxu0 %v193
    %269 = vmatpush.bf16.msra.mxu0 %v189
    %270 = vmatpush.bf16.msra.mxu0 %v185
    %271 = vmatpush.bf16.msra.mxu0 %v181
    %272 = vmatpush.bf16.msra.mxu0 %v177
    %273 = vmatmul.bf16.gmra.mxu0 %v46
    %v274 = vpop.f32.mrf.mxu0
    %v275 = vadd.f32 0.0, %v274
    %v276 = vpop.f32.mrf.mxu0
    %277 = vdwg.mxu0
    %278 = vmatpush.bf16.msra.mxu0 %v206
    %279 = vmatpush.bf16.msra.mxu0 %v202
    %280 = vmatpush.bf16.msra.mxu0 %v198
    %281 = vmatpush.bf16.msra.mxu0 %v194
    %282 = vmatpush.bf16.msra.mxu0 %v190
    %283 = vmatpush.bf16.msra.mxu0 %v186
    %284 = vmatpush.bf16.msra.mxu0 %v182
    %285 = vmatpush.bf16.msra.mxu0 %v178
    %286 = vmatmul.bf16.gmra.mxu0 %v46
    %v287 = vpop.f32.mrf.mxu0
    %v288 = vadd.f32 0.0, %v287
    %v289 = vpop.f32.mrf.mxu0
    %290 = vdwg.mxu0
    %v291 = vxor.u32 %v249, 2147483648
    %v292 = vxor.u32 %v262, 2147483648
    %v293 = vmul.f32 %v291, 1.442695
    %v294 = vpow.pop %v293
    %v295 = vmul.f32 %v292, 1.442695
    %v296 = vpow.pop %v295
    %v297 = vadd.f32 %v294, 1.0
    %v298 = vadd.f32 %v296, 1.0
    %v299 = vrcp.pop %v297
    %v300 = vmul.f32 %v297, %v299
    %v301 = vsub.f32 1.0, %v300
    %v302 = vmul.f32 %v299, %v301
    %v303 = vadd.f32 %v299, %v302
    %vm304 = vweird.f32 %v297
    %vm305 = vweird.f32 %v299
    %vm306 = vmor %vm304, %vm305
    %v307 = vsel %vm306, %v299, %v303
    %v308 = vand.u32 2147483647, %v297
    %vm309 = vcmp.eq.f32.partialorder %v308, 8.507059e+37
    %v310 = vand.u32 %v297, 2147483648
    %v311 = vor.u32 1.1754944e-38, %v310
    %v312 = vsel %vm309, %v311, %v307
    %v313 = vmul.f32 1.0, %v312
    %v314 = vrcp.pop %v298
    %v315 = vmul.f32 %v298, %v314
    %v316 = vsub.f32 1.0, %v315
    %v317 = vmul.f32 %v314, %v316
    %v318 = vadd.f32 %v314, %v317
    %vm319 = vweird.f32 %v298
    %vm320 = vweird.f32 %v314
    %vm321 = vmor %vm319, %vm320
    %v322 = vsel %vm321, %v314, %v318
    %v323 = vand.u32 2147483647, %v298
    %vm324 = vcmp.eq.f32.partialorder %v323, 8.507059e+37
    %v325 = vand.u32 %v298, 2147483648
    %v326 = vor.u32 1.1754944e-38, %v325
    %v327 = vsel %vm324, %v326, %v322
    %v328 = vmul.f32 1.0, %v327
    %v329 = vmul.f32 %v249, %v313
    %v330 = vmul.f32 %v262, %v328
    %v331 = vmul.f32 %v329, %v275
    %v332 = vmul.f32 %v330, %v288
    %v333 = vpack.c.bf16 %v331, %v331
    %v334 = vpack.c.bf16 %v332, %v332
    %v335 = vld [vmem:[#allocation4] sm:$0xf]
    %v336 = vld [vmem:[#allocation4 + $0x4] sm:$0xf]
    %v337 = vld [vmem:[#allocation4 + $0x8] sm:$0xf]
    %v338 = vld [vmem:[#allocation4 + $0xc] sm:$0xf]
    %v339 = vld [vmem:[#allocation4 + $0x10] sm:$0xf]
    %v340 = vld [vmem:[#allocation4 + $0x14] sm:$0xf]
    %v341 = vld [vmem:[#allocation4 + $0x18] sm:$0xf]
    %v342 = vld [vmem:[#allocation4 + $0x1c] sm:$0xf]
    %v343 = vld [vmem:[#allocation4 + $0x20] sm:$0xf]
    %v344 = vld [vmem:[#allocation4 + $0x24] sm:$0xf]
    %v345 = vld [vmem:[#allocation4 + $0x28] sm:$0xf]
    %v346 = vld [vmem:[#allocation4 + $0x2c] sm:$0xf]
    %v347 = vld [vmem:[#allocation4 + $0x30] sm:$0xf]
    %v348 = vld [vmem:[#allocation4 + $0x34] sm:$0xf]
    %v349 = vld [vmem:[#allocation4 + $0x38] sm:$0xf]
    %v350 = vld [vmem:[#allocation4 + $0x3c] sm:$0xf]
    %v351 = vld [vmem:[#allocation4 + $0x40] sm:$0xf]
    %v352 = vld [vmem:[#allocation4 + $0x44] sm:$0xf]
    %v353 = vld [vmem:[#allocation4 + $0x48] sm:$0xf]
    %v354 = vld [vmem:[#allocation4 + $0x4c] sm:$0xf]
    %v355 = vld [vmem:[#allocation4 + $0x50] sm:$0xf]
    %v356 = vld [vmem:[#allocation4 + $0x54] sm:$0xf]
    %v357 = vld [vmem:[#allocation4 + $0x58] sm:$0xf]
    %v358 = vld [vmem:[#allocation4 + $0x5c] sm:$0xf]
    %v359 = vld [vmem:[#allocation4 + $0x60] sm:$0xf]
    %v360 = vld [vmem:[#allocation4 + $0x64] sm:$0xf]
    %v361 = vld [vmem:[#allocation4 + $0x68] sm:$0xf]
    %v362 = vld [vmem:[#allocation4 + $0x6c] sm:$0xf]
    %v363 = vld [vmem:[#allocation4 + $0x70] sm:$0xf]
    %v364 = vld [vmem:[#allocation4 + $0x74] sm:$0xf]
    %v365 = vld [vmem:[#allocation4 + $0x78] sm:$0xf]
    %v366 = vld [vmem:[#allocation4 + $0x7c] sm:$0xf]
    %v399 = vunpack.c.l.b16 %v335
    %v400 = vunpack.c.l.b16 %v336
    %v401 = vunpack.c.l.b16 %v337
    %v402 = vunpack.c.l.b16 %v338
    %v403 = vunpack.c.l.b16 %v339
    %v404 = vunpack.c.l.b16 %v340
    %v405 = vunpack.c.l.b16 %v341
    %v406 = vunpack.c.l.b16 %v342
    %v407 = vunpack.c.l.b16 %v343
    %v408 = vunpack.c.l.b16 %v344
    %v409 = vunpack.c.l.b16 %v345
    %v410 = vunpack.c.l.b16 %v346
    %v411 = vunpack.c.l.b16 %v347
    %v412 = vunpack.c.l.b16 %v348
    %v413 = vunpack.c.l.b16 %v349
    %v414 = vunpack.c.l.b16 %v350
    %v415 = vunpack.c.l.b16 %v351
    %v416 = vunpack.c.l.b16 %v352
    %v417 = vunpack.c.l.b16 %v353
    %v418 = vunpack.c.l.b16 %v354
    %v419 = vunpack.c.l.b16 %v355
    %v420 = vunpack.c.l.b16 %v356
    %v421 = vunpack.c.l.b16 %v357
    %v422 = vunpack.c.l.b16 %v358
    %v423 = vunpack.c.l.b16 %v359
    %v424 = vunpack.c.l.b16 %v360
    %v425 = vunpack.c.l.b16 %v361
    %v426 = vunpack.c.l.b16 %v362
    %v427 = vunpack.c.l.b16 %v363
    %v428 = vunpack.c.l.b16 %v364
    %v429 = vunpack.c.l.b16 %v365
    %v430 = vunpack.c.l.b16 %v366
    %v431 = vpack.c.b16 %v400, %v399
    %v432 = vpack.c.b16 %v402, %v401
    %v433 = vpack.c.b16 %v404, %v403
    %v434 = vpack.c.b16 %v406, %v405
    %v435 = vpack.c.b16 %v408, %v407
    %v436 = vpack.c.b16 %v410, %v409
    %v437 = vpack.c.b16 %v412, %v411
    %v438 = vpack.c.b16 %v414, %v413
    %v439 = vpack.c.b16 %v416, %v415
    %v440 = vpack.c.b16 %v418, %v417
    %v441 = vpack.c.b16 %v420, %v419
    %v442 = vpack.c.b16 %v422, %v421
    %v443 = vpack.c.b16 %v424, %v423
    %v444 = vpack.c.b16 %v426, %v425
    %v445 = vpack.c.b16 %v428, %v427
    %v446 = vpack.c.b16 %v430, %v429
    %463 = vmatpush.bf16.msra.mxu0 %v438
    %464 = vmatpush.bf16.msra.mxu0 %v437
    %465 = vmatpush.bf16.msra.mxu0 %v436
    %466 = vmatpush.bf16.msra.mxu0 %v435
    %467 = vmatpush.bf16.msra.mxu0 %v434
    %468 = vmatpush.bf16.msra.mxu0 %v433
    %469 = vmatpush.bf16.msra.mxu0 %v432
    %470 = vmatpush.bf16.msra.mxu0 %v431
    %471 = vmatmul.bf16.gmra.mxu0 %v333
    %v472 = vpop.f32.mrf.mxu0
    %v473 = vadd.f32 0.0, %v472
    %v474 = vpop.f32.mrf.mxu0
    %475 = vdwg.mxu0
    %476 = vmatpush.bf16.msra.mxu0 %v446
    %477 = vmatpush.bf16.msra.mxu0 %v445
    %478 = vmatpush.bf16.msra.mxu0 %v444
    %479 = vmatpush.bf16.msra.mxu0 %v443
    %480 = vmatpush.bf16.msra.mxu0 %v442
    %481 = vmatpush.bf16.msra.mxu0 %v441
    %482 = vmatpush.bf16.msra.mxu0 %v440
    %483 = vmatpush.bf16.msra.mxu0 %v439
    %484 = vmatmul.bf16.gmra.mxu0 %v334
    %v485 = vpop.f32.mrf.mxu0
    %v486 = vadd.f32 %v473, %v485
    %v487 = vpop.f32.mrf.mxu0
    %488 = vdwg.mxu0
    %v489 = vpack.c.bf16 %v486, %v486
    %490 = vst [vmem:[%s3] sm:$0xf] %v489
    // Predicated region
    $region22: #{dots1_forward.17} parent=1 // pred_check
      _
    $region23: #{dots1_forward.17} parent=1 // pred_check_branch
      %492 = sbr.rel (0) target = $region25
    $region24: #{dots1_forward.17} parent=1 // pred_region
      _
    $region25: #{dots1_forward.17} parent=1 // pred_fallthru
      _
    // Predicated region
    $region26: #{dots1_forward.17} parent=1 // pred_check
      _
    $region27: #{dots1_forward.17} parent=1 // pred_check_branch
      %494 = sbr.rel (0) target = $region29
    $region28: #{dots1_forward.17} parent=1 // pred_region
      _
    $region29: #{dots1_forward.17} parent=1 // pred_fallthru
      _
    %495 = vsyncpa [#allocation3], 1
    %496 = vsyncpa [#allocation5], 1

// kernel: dots1_forward.22
$region0: #{dots1_forward.22}
  #allocation0 [shape = 'u32[]', space=smem, size = 0x4, offset = 0x4, fixed_abs, tag = 'smem constant byte address 0x4 - core index']
  #allocation1 [shape = 'u32[72,128]{1,0:T(1,128)}', space=vmem, size = 0x9000, scoped, tag = 'internal scratch']
  %s0 = inlined_call_operand.vmem [shape: bf16[8,128], index: 0, kind: input, shape index: {}]
  %s1 = inlined_call_operand.vmem [shape: bf16[128,256], index: 1, kind: input, shape index: {}]
  %s2 = inlined_call_operand.vmem [shape: bf16[128,128], index: 2, kind: input, shape index: {}]
  %s3 = inlined_call_operand.vmem [shape: bf16[8,128], index: 3, kind: output, shape index: {}]
  %s4 = sld [smem:[#allocation0]]
  $region22: #{dots1_forward.22} parent=0
    _
  %s6 = ssub.s32 1, %s4
  %s7 = scalar_select 0, %s6, %s4
  // Predicated region
  $region2: #{dots1_forward.22} parent=0 // pred_check
    _
  $region3: #{dots1_forward.22} parent=0 // pred_check_branch
    %9 = sbr.rel (0) target = $region5
  $region4: #{dots1_forward.22} parent=0 // pred_region
    _
  $region5: #{dots1_forward.22} parent=0 // pred_fallthru
    _
  // Predicated region
  $region6: #{dots1_forward.22} parent=0 // pred_check
    _
  $region7: #{dots1_forward.22} parent=0 // pred_check_branch
    %11 = sbr.rel (0) target = $region9
  $region8: #{dots1_forward.22} parent=0 // pred_region
    _
  $region9: #{dots1_forward.22} parent=0 // pred_fallthru
    _
  // Predicated region
  $region10: #{dots1_forward.22} parent=0 // pred_check
    _
  $region11: #{dots1_forward.22} parent=0 // pred_check_branch
    %13 = sbr.rel (0) target = $region13
  $region12: #{dots1_forward.22} parent=0 // pred_region
    _
  $region13: #{dots1_forward.22} parent=0 // pred_fallthru
    _
  %v14 = vld [vmem:[%s0] sm:$0xf]
  %v15 = vld [vmem:[%s1] sm:$0xff]
  %v16 = vld [vmem:[%s1 + $0x8] sm:$0xff]
  %v17 = vld [vmem:[%s1 + $0x10] sm:$0xff]
  %v18 = vld [vmem:[%s1 + $0x18] sm:$0xff]
  %v19 = vld [vmem:[%s1 + $0x20] sm:$0xff]
  %v20 = vld [vmem:[%s1 + $0x28] sm:$0xff]
  %v21 = vld [vmem:[%s1 + $0x30] sm:$0xff]
  %v22 = vld [vmem:[%s1 + $0x38] sm:$0xff]
  %v23 = vld [vmem:[%s1 + $0x40] sm:$0xff]
  %v24 = vld [vmem:[%s1 + $0x48] sm:$0xff]
  %v25 = vld [vmem:[%s1 + $0x50] sm:$0xff]
  %v26 = vld [vmem:[%s1 + $0x58] sm:$0xff]
  %v27 = vld [vmem:[%s1 + $0x60] sm:$0xff]
  %v28 = vld [vmem:[%s1 + $0x68] sm:$0xff]
  %v29 = vld [vmem:[%s1 + $0x70] sm:$0xff]
  %v30 = vld [vmem:[%s1 + $0x78] sm:$0xff]
  %v47 = vunpack.c.l.b16 %v15
  %v48 = vunpack.c.h.b16 %v15
  %v49 = vunpack.c.l.b16 %v16
  %v50 = vunpack.c.h.b16 %v16
  %v51 = vunpack.c.l.b16 %v17
  %v52 = vunpack.c.h.b16 %v17
  %v53 = vunpack.c.l.b16 %v18
  %v54 = vunpack.c.h.b16 %v18
  %v55 = vunpack.c.l.b16 %v19
  %v56 = vunpack.c.h.b16 %v19
  %v57 = vunpack.c.l.b16 %v20
  %v58 = vunpack.c.h.b16 %v20
  %v59 = vunpack.c.l.b16 %v21
  %v60 = vunpack.c.h.b16 %v21
  %v61 = vunpack.c.l.b16 %v22
  %v62 = vunpack.c.h.b16 %v22
  %v63 = vunpack.c.l.b16 %v23
  %v64 = vunpack.c.h.b16 %v23
  %v65 = vunpack.c.l.b16 %v24
  %v66 = vunpack.c.h.b16 %v24
  %v67 = vunpack.c.l.b16 %v25
  %v68 = vunpack.c.h.b16 %v25
  %v69 = vunpack.c.l.b16 %v26
  %v70 = vunpack.c.h.b16 %v26
  %v71 = vunpack.c.l.b16 %v27
  %v72 = vunpack.c.h.b16 %v27
  %v73 = vunpack.c.l.b16 %v28
  %v74 = vunpack.c.h.b16 %v28
  %v75 = vunpack.c.l.b16 %v29
  %v76 = vunpack.c.h.b16 %v29
  %v77 = vunpack.c.l.b16 %v30
  %v78 = vunpack.c.h.b16 %v30
  %v79 = vpack.c.b16 %v49, %v47
  %v80 = vpack.c.b16 %v50, %v48
  %v81 = vpack.c.b16 %v53, %v51
  %v82 = vpack.c.b16 %v54, %v52
  %v83 = vpack.c.b16 %v57, %v55
  %v84 = vpack.c.b16 %v58, %v56
  %v85 = vpack.c.b16 %v61, %v59
  %v86 = vpack.c.b16 %v62, %v60
  %v87 = vpack.c.b16 %v65, %v63
  %v88 = vpack.c.b16 %v66, %v64
  %v89 = vpack.c.b16 %v69, %v67
  %v90 = vpack.c.b16 %v70, %v68
  %v91 = vpack.c.b16 %v73, %v71
  %v92 = vpack.c.b16 %v74, %v72
  %v93 = vpack.c.b16 %v77, %v75
  %v94 = vpack.c.b16 %v78, %v76
  %111 = vmatpush.bf16.msra.mxu0 %v93
  %112 = vmatpush.bf16.msra.mxu0 %v91
  %113 = vmatpush.bf16.msra.mxu0 %v89
  %114 = vmatpush.bf16.msra.mxu0 %v87
  %115 = vmatpush.bf16.msra.mxu0 %v85
  %116 = vmatpush.bf16.msra.mxu0 %v83
  %117 = vmatpush.bf16.msra.mxu0 %v81
  %118 = vmatpush.bf16.msra.mxu0 %v79
  %119 = vmatmul.bf16.gmra.mxu0 %v14
  %v120 = vpop.f32.mrf.mxu0
  %v121 = vadd.f32 0.0, %v120
  %v122 = vpop.f32.mrf.mxu0
  %123 = vdwg.mxu0
  %124 = vmatpush.bf16.msra.mxu0 %v94
  %125 = vmatpush.bf16.msra.mxu0 %v92
  %126 = vmatpush.bf16.msra.mxu0 %v90
  %127 = vmatpush.bf16.msra.mxu0 %v88
  %128 = vmatpush.bf16.msra.mxu0 %v86
  %129 = vmatpush.bf16.msra.mxu0 %v84
  %130 = vmatpush.bf16.msra.mxu0 %v82
  %131 = vmatpush.bf16.msra.mxu0 %v80
  %132 = vmatmul.bf16.gmra.mxu0 %v14
  %v133 = vpop.f32.mrf.mxu0
  %v134 = vadd.f32 0.0, %v133
  %v135 = vpop.f32.mrf.mxu0
  %136 = vdwg.mxu0
  %v137 = vxor.u32 %v121, 2147483648
  %v138 = vmul.f32 %v137, 1.442695
  %v139 = vpow.pop %v138
  %v140 = vadd.f32 %v139, 1.0
  %v141 = vrcp.pop %v140
  %v142 = vmul.f32 %v140, %v141
  %v143 = vsub.f32 1.0, %v142
  %v144 = vmul.f32 %v141, %v143
  %v145 = vadd.f32 %v141, %v144
  %vm146 = vweird.f32 %v140
  %vm147 = vweird.f32 %v141
  %vm148 = vmor %vm146, %vm147
  %v149 = vsel %vm148, %v141, %v145
  %v150 = vand.u32 2147483647, %v140
  %vm151 = vcmp.eq.f32.partialorder %v150, 8.507059e+37
  %v152 = vand.u32 %v140, 2147483648
  %v153 = vor.u32 1.1754944e-38, %v152
  %v154 = vsel %vm151, %v153, %v149
  %v155 = vmul.f32 1.0, %v154
  %v156 = vmul.f32 %v121, %v155
  %v157 = vmul.f32 %v156, %v134
  %v158 = vpack.c.bf16 %v157, %v157
  %v159 = vld [vmem:[%s2] sm:$0xf]
  %v160 = vld [vmem:[%s2 + $0x4] sm:$0xf]
  %v161 = vld [vmem:[%s2 + $0x8] sm:$0xf]
  %v162 = vld [vmem:[%s2 + $0xc] sm:$0xf]
  %v163 = vld [vmem:[%s2 + $0x10] sm:$0xf]
  %v164 = vld [vmem:[%s2 + $0x14] sm:$0xf]
  %v165 = vld [vmem:[%s2 + $0x18] sm:$0xf]
  %v166 = vld [vmem:[%s2 + $0x1c] sm:$0xf]
  %v167 = vld [vmem:[%s2 + $0x20] sm:$0xf]
  %v168 = vld [vmem:[%s2 + $0x24] sm:$0xf]
  %v169 = vld [vmem:[%s2 + $0x28] sm:$0xf]
  %v170 = vld [vmem:[%s2 + $0x2c] sm:$0xf]
  %v171 = vld [vmem:[%s2 + $0x30] sm:$0xf]
  %v172 = vld [vmem:[%s2 + $0x34] sm:$0xf]
  %v173 = vld [vmem:[%s2 + $0x38] sm:$0xf]
  %v174 = vld [vmem:[%s2 + $0x3c] sm:$0xf]
  %v191 = vunpack.c.l.b16 %v159
  %v192 = vunpack.c.l.b16 %v160
  %v193 = vunpack.c.l.b16 %v161
  %v194 = vunpack.c.l.b16 %v162
  %v195 = vunpack.c.l.b16 %v163
  %v196 = vunpack.c.l.b16 %v164
  %v197 = vunpack.c.l.b16 %v165
  %v198 = vunpack.c.l.b16 %v166
  %v199 = vunpack.c.l.b16 %v167
  %v200 = vunpack.c.l.b16 %v168
  %v201 = vunpack.c.l.b16 %v169
  %v202 = vunpack.c.l.b16 %v170
  %v203 = vunpack.c.l.b16 %v171
  %v204 = vunpack.c.l.b16 %v172
  %v205 = vunpack.c.l.b16 %v173
  %v206 = vunpack.c.l.b16 %v174
  %v207 = vpack.c.b16 %v192, %v191
  %v208 = vpack.c.b16 %v194, %v193
  %v209 = vpack.c.b16 %v196, %v195
  %v210 = vpack.c.b16 %v198, %v197
  %v211 = vpack.c.b16 %v200, %v199
  %v212 = vpack.c.b16 %v202, %v201
  %v213 = vpack.c.b16 %v204, %v203
  %v214 = vpack.c.b16 %v206, %v205
  %223 = vmatpush.bf16.msra.mxu0 %v214
  %224 = vmatpush.bf16.msra.mxu0 %v213
  %225 = vmatpush.bf16.msra.mxu0 %v212
  %226 = vmatpush.bf16.msra.mxu0 %v211
  %227 = vmatpush.bf16.msra.mxu0 %v210
  %228 = vmatpush.bf16.msra.mxu0 %v209
  %229 = vmatpush.bf16.msra.mxu0 %v208
  %230 = vmatpush.bf16.msra.mxu0 %v207
  %231 = vmatmul.bf16.gmra.mxu0 %v158
  %v232 = vpop.f32.mrf.mxu0
  %v233 = vadd.f32 0.0, %v232
  %v234 = vpop.f32.mrf.mxu0
  %235 = vdwg.mxu0
  %v236 = vpack.c.bf16 %v233, %v233
  %237 = vst [vmem:[%s3] sm:$0xf] %v236
  // Predicated region
  $region14: #{dots1_forward.22} parent=0 // pred_check
    _
  $region15: #{dots1_forward.22} parent=0 // pred_check_branch
    %239 = sbr.rel (0) target = $region17
  $region16: #{dots1_forward.22} parent=0 // pred_region
    _
  $region17: #{dots1_forward.22} parent=0 // pred_fallthru
    _
  // Predicated region
  $region18: #{dots1_forward.22} parent=0 // pred_check
    _
  $region19: #{dots1_forward.22} parent=0 // pred_check_branch
    %241 = sbr.rel (0) target = $region21
  $region20: #{dots1_forward.22} parent=0 // pred_region
    _
  $region21: #{dots1_forward.22} parent=0 // pred_fallthru
    _

// kernel: dots1_forward.25
$region0: #{dots1_forward.25}
  #allocation0 [shape = 'u32[]', space=smem, size = 0x4, offset = 0x4, fixed_abs, tag = 'smem constant byte address 0x4 - core index']
  #allocation1 [shape = 'u32[72,128]{1,0:T(1,128)}', space=vmem, size = 0x9000, scoped, tag = 'internal scratch']
  %s0 = inlined_call_operand.vmem [shape: bf16[8,128], index: 0, kind: input, shape index: {}]
  %s1 = inlined_call_operand.vmem [shape: bf16[8,128], index: 1, kind: input, shape index: {}, may-alias: {1,4}]
  %s2 = inlined_call_operand.vmem [shape: f32[1,128], index: 2, kind: input, shape index: {}]
  %s3 = inlined_call_operand.hbm [shape: bf16[8,128], index: 3, kind: output, shape index: {0}]
  %s4 = inlined_call_operand.vmem [shape: bf16[8,128], index: 4, kind: output, shape index: {1}, may-alias: {1,4}]
  %5 = xla_tuple %s3, %s4
  %s6 = sld [smem:[#allocation0]]
  $region30: #{dots1_forward.25} parent=0
    _
  %s8 = ssub.s32 1, %s6
  %s9 = scalar_select 0, %s8, %s6
  $region1: #{dots1_forward.25} parent=0
    #allocation2 [shape = 'u8[2048]{0}', space=vmem, size = 0x800, scoped, tag = 'output window, operand 0, single buffered']
    #allocation3 [shape = 's32[1]{0}', space=sflag, size = 0x4, scoped, tag = 'scoped memory for dots1_forward.25']
    %10 = vsyncpa [#allocation3], 0
    // Predicated region
    $region2: #{dots1_forward.25} parent=1 // pred_check
      _
    $region3: #{dots1_forward.25} parent=1 // pred_check_branch
      %12 = sbr.rel (0) target = $region5
    $region4: #{dots1_forward.25} parent=1 // pred_region
      _
    $region5: #{dots1_forward.25} parent=1 // pred_fallthru
      _
    // Predicated region
    $region6: #{dots1_forward.25} parent=1 // pred_check
      _
    $region7: #{dots1_forward.25} parent=1 // pred_check_branch
      %14 = sbr.rel (0) target = $region9
    $region8: #{dots1_forward.25} parent=1 // pred_region
      _
    $region9: #{dots1_forward.25} parent=1 // pred_fallthru
      _
    // Predicated region
    $region10: #{dots1_forward.25} parent=1 // pred_check
      _
    $region11: #{dots1_forward.25} parent=1 // pred_check_branch
      %16 = sbr.rel (0) target = $region13
    $region12: #{dots1_forward.25} parent=1 // pred_region
      _
    $region13: #{dots1_forward.25} parent=1 // pred_fallthru
      _
    %v17 = vld [vmem:[%s0] sm:$0xf]
    %v18 = vunpack.c.l.bf16 %v17
    %v19 = vld [vmem:[%s1] sm:$0xf]
    %v20 = vunpack.c.l.bf16 %v19
    %v21 = vadd.f32 %v18, %v20
    %v22 = vpack.c.bf16 %v21, %v21
    %23 = vst [vmem:[%s4] sm:$0xf] %v22
    %v24 = vmul.f32 %v21, %v21
    %25 = vadd.xlane.f32.xlu0 %v24
    %v26 = vpop.xlane.xlu0 %25
    %v27 = vrcp.pop 128.0
    %v28 = vmul.f32 128.0, %v27
    %v29 = vsub.f32 1.0, %v28
    %v30 = vmul.f32 %v27, %v29
    %v31 = vadd.f32 %v27, %v30
    %vm32 = vweird.f32 %v27
    %v33 = vsel %vm32, %v27, %v31
    %v34 = vmul.f32 %v26, %v33
    %v35 = vadd.f32 %v34, 1e-06
    %v36 = vrsqrt.pop %v35
    %v37 = vmul.f32 %v36, %v35
    %v38 = vmul.f32 %v37, %v36
    %v39 = vmul.f32 0.5, %v38
    %v40 = vsub.f32 1.5, %v39
    %v41 = vmul.f32 %v36, %v40
    %vm42 = vweird.f32 %v35
    %vm43 = vweird.f32 %v36
    %vm44 = vmor %vm42, %vm43
    %v45 = vsel %vm44, %v36, %v41
    %v46 = vmul.f32 %v21, %v45
    %v47 = vld [vmem:[%s2] sm:$0x1]
    %v49 = vperm.slane %v47, 0
    %v51 = vmul.f32 %v46, %v49
    %v52 = vpack.c.bf16 %v51, %v51
    %53 = vst [vmem:[#allocation2] sm:$0xf] %v52
    // Predicated region
    $region14: #{dots1_forward.25} parent=1 // pred_check
      _
    $region15: #{dots1_forward.25} parent=1 // pred_check_branch
      %55 = sbr.rel (0) target = $region17
    $region16: #{dots1_forward.25} parent=1 // pred_region
      %57 = vsyncadd [#allocation3], 0
      %s59 = sshll.u32 [#allocation2], 4
      %s60 = int_to_ptr.vmem [resolvable:$true] %s59
      %s61 = sshll.u32 %s3, 4
      %s62 = int_to_ptr.hbm [resolvable:$true] %s61
      %64 = dma.vmem_to_hbm [thread:$0]  %s60, 64, %s62, [#allocation3]
    $region17: #{dots1_forward.25} parent=1 // pred_fallthru
      _
    // Predicated region
    $region18: #{dots1_forward.25} parent=1 // pred_check
      _
    $region19: #{dots1_forward.25} parent=1 // pred_check_branch
      %66 = sbr.rel (0) target = $region21
    $region20: #{dots1_forward.25} parent=1 // pred_region
      _
    $region21: #{dots1_forward.25} parent=1 // pred_fallthru
      _
    // Predicated region
    $region22: #{dots1_forward.25} parent=1 // pred_check
      _
    $region23: #{dots1_forward.25} parent=1 // pred_check_branch
      %68 = sbr.rel (0) target = $region25
    $region24: #{dots1_forward.25} parent=1 // pred_region
      %70 = dma.done [#allocation3], 64
    $region25: #{dots1_forward.25} parent=1 // pred_fallthru
      _
    // Predicated region
    $region26: #{dots1_forward.25} parent=1 // pred_check
      _
    $region27: #{dots1_forward.25} parent=1 // pred_check_branch
      %72 = sbr.rel (0) target = $region29
    $region28: #{dots1_forward.25} parent=1 // pred_region
      _
    $region29: #{dots1_forward.25} parent=1 // pred_fallthru
      _
    %73 = vsyncpa [#allocation3], 1

// kernel: dots1_forward.24
$region0: #{dots1_forward.24}
  #allocation0 [shape = 'u32[]', space=smem, size = 0x4, offset = 0x4, fixed_abs, tag = 'smem constant byte address 0x4 - core index']
  #allocation1 [shape = 'u32[72,128]{1,0:T(1,128)}', space=vmem, size = 0x9000, scoped, tag = 'internal scratch']
  #allocation2 [shape = 'f32[8,128]{1,0:T(8,128)}', space=vmem, size = 0x1000, scoped, tag = 'scratch operand']
  #allocation3 [shape = 's32[1]{0}', space=sflag, size = 0x4, scoped, tag = 'scoped memory for dots1_forward.24']
  #allocation4 [shape = 'u8[512]{0}', space=smem, size = 0x200, scoped, tag = 'prefetched SMEM operand 0']
  %s0 = inlined_call_operand.vmem [shape: s32[8], index: 0, kind: input, shape index: {}]
  %s1 = inlined_call_operand.vmem [shape: bf16[8,128], index: 1, kind: input, shape index: {}]
  %s2 = inlined_call_operand.vmem [shape: bf16[8,128], index: 2, kind: input, shape index: {}]
  %s3 = inlined_call_operand.vmem [shape: bf16[8,128,256], index: 3, kind: input, shape index: {}]
  %s4 = inlined_call_operand.vmem [shape: bf16[8,128,128], index: 4, kind: input, shape index: {}]
  %s5 = inlined_call_operand.vmem [shape: f32[8,8,1], index: 5, kind: input, shape index: {}]
  %s6 = inlined_call_operand.vmem [shape: bf16[8,128], index: 6, kind: output, shape index: {}]
  %s7 = sld [smem:[#allocation0]]
  $region65: #{dots1_forward.24} parent=0
    _
  %s9 = ssub.s32 1, %s7
  %s10 = scalar_select 0, %s9, %s7
  %s12 = sshll.u32 %s0, 4
  %s13 = int_to_ptr.vmem [resolvable:$true] %s12
  %15 = dma.vmem_to_smem %s13, 16, [#allocation4], [#allocation3]
  %17 = dma.done [#allocation3], 16
  %18 = sfence
  loop: start=0, step=1, limit=10
  $region2: #{dots1_forward.24} parent=0 // loop_pre_header
    _
  $region3: #{dots1_forward.24} parent=0 // loop_header
    %s20 = sphi 0, %s24
    %p21 = scmp.ge.s32.totalorder %s20, 10
    %s27 = sphi 0, %s39
    %s28 = sphi 0, %s35
    %s29 = sphi 0, %s27
    %s30 = sphi 0, %s28
    %s31 = sphi 0, %s29
    %s32 = sphi 0, %s30
    %s42 = sphi 0, %s44
    %s45 = sphi 0, %s42
    %s46 = sphi 0, %s45
    %s62 = sphi 0, %s46
    %s68 = sphi 0, %s70
    %s71 = sphi 0, %s68
    %s72 = sphi 0, %s71
    %s88 = sphi 0, %s72
    %s94 = sphi 0, %s96
    %s97 = sphi 0, %s94
    %s98 = sphi 0, %s97
    %s114 = sphi 0, %s98
    %s120 = sphi 0, %s122
    %s123 = sphi 0, %s120
    %s124 = sphi 0, %s123
    %s140 = sphi 0, %s124
    %s148 = sphi 0, %s150
    %s151 = sphi 0, %s148
    %s152 = sphi 0, %s151
    %s168 = sphi 0, %s152
    %s174 = sphi 0, %s176
    %s177 = sphi 0, %s174
    %s178 = sphi 0, %s177
    %s194 = sphi 0, %s178
  $region4: #{dots1_forward.24} parent=0 // loop_header_branch
    %23 = sbr.rel (%p21) target = $region8
  $region5: #{dots1_forward.24} parent=0 // loop_body
    %s25 = ssub.s32 %s20, 1
    %s26 = ssub.s32 %s20, 2
    %s33 = sadd.s32 1, %s28
    %p34 = scmp.ge.s32.totalorder %s33, 8
    %s35 = scalar_select %p34, 0, %s33
    %s36 = sadd.s32 1, %s27
    %s37 = scalar_select %p34, %s36, %s27
    %p38 = scmp.ge.s32.totalorder %s37, 1
    %s39 = scalar_select %p38, 0, %s37
    %s40 = ssub.s32 %s27, %s39
    %p41 = scmp.eq.s32.totalorder %s40, 0
    %s43 = sadd.s32 %s42, 1
    %s44 = scalar_select %p41, %s42, %s43
    %p47 = pneg %p41
    %p48 = scmp.eq.s32.totalorder %s20, 7
    %p49 = por %p47, %p48
    %p50 = scmp.ne.s32.totalorder %s42, %s45
    %p51 = scmp.eq.s32.totalorder %s20, 0
    %p52 = por %p50, %p51
    %p53 = scmp.ne.s32.totalorder %s42, %s45
    %p54 = scmp.eq.s32.totalorder %s25, 7
    %p55 = por %p53, %p54
    %p56 = scmp.ne.s32.totalorder %s45, %s46
    %p57 = scmp.eq.s32.totalorder %s25, 0
    %p58 = por %p56, %p57
    %p59 = scmp.ne.s32.totalorder %s45, %s46
    %p60 = scmp.eq.s32.totalorder %s26, 7
    %p61 = por %p59, %p60
    %p63 = scmp.ne.s32.totalorder %s46, %s62
    %p64 = scmp.eq.s32.totalorder %s26, 0
    %p65 = por %p63, %p64
    %s66 = ssub.s32 %s27, %s39
    %p67 = scmp.eq.s32.totalorder %s66, 0
    %s69 = sadd.s32 %s68, 1
    %s70 = scalar_select %p67, %s68, %s69
    %p73 = pneg %p67
    %p74 = scmp.eq.s32.totalorder %s20, 7
    %p75 = por %p73, %p74
    %p76 = scmp.ne.s32.totalorder %s68, %s71
    %p77 = scmp.eq.s32.totalorder %s20, 0
    %p78 = por %p76, %p77
    %p79 = scmp.ne.s32.totalorder %s68, %s71
    %p80 = scmp.eq.s32.totalorder %s25, 7
    %p81 = por %p79, %p80
    %p82 = scmp.ne.s32.totalorder %s71, %s72
    %p83 = scmp.eq.s32.totalorder %s25, 0
    %p84 = por %p82, %p83
    %p85 = scmp.ne.s32.totalorder %s71, %s72
    %p86 = scmp.eq.s32.totalorder %s26, 7
    %p87 = por %p85, %p86
    %p89 = scmp.ne.s32.totalorder %s72, %s88
    %p90 = scmp.eq.s32.totalorder %s26, 0
    %p91 = por %p89, %p90
    %s92 = ssub.s32 %s28, %s35
    %p93 = scmp.eq.s32.totalorder %s92, 0
    %s95 = sadd.s32 %s94, 1
    %s96 = scalar_select %p93, %s94, %s95
    %p99 = pneg %p93
    %p100 = scmp.eq.s32.totalorder %s20, 7
    %p101 = por %p99, %p100
    %p102 = scmp.ne.s32.totalorder %s94, %s97
    %p103 = scmp.eq.s32.totalorder %s20, 0
    %p104 = por %p102, %p103
    %p105 = scmp.ne.s32.totalorder %s94, %s97
    %p106 = scmp.eq.s32.totalorder %s25, 7
    %p107 = por %p105, %p106
    %p108 = scmp.ne.s32.totalorder %s97, %s98
    %p109 = scmp.eq.s32.totalorder %s25, 0
    %p110 = por %p108, %p109
    %p111 = scmp.ne.s32.totalorder %s97, %s98
    %p112 = scmp.eq.s32.totalorder %s26, 7
    %p113 = por %p111, %p112
    %p115 = scmp.ne.s32.totalorder %s98, %s114
    %p116 = scmp.eq.s32.totalorder %s26, 0
    %p117 = por %p115, %p116
    %s118 = ssub.s32 %s28, %s35
    %p119 = scmp.eq.s32.totalorder %s118, 0
    %s121 = sadd.s32 %s120, 1
    %s122 = scalar_select %p119, %s120, %s121
    %p125 = pneg %p119
    %p126 = scmp.eq.s32.totalorder %s20, 7
    %p127 = por %p125, %p126
    %p128 = scmp.ne.s32.totalorder %s120, %s123
    %p129 = scmp.eq.s32.totalorder %s20, 0
    %p130 = por %p128, %p129
    %p131 = scmp.ne.s32.totalorder %s120, %s123
    %p132 = scmp.eq.s32.totalorder %s25, 7
    %p133 = por %p131, %p132
    %p134 = scmp.ne.s32.totalorder %s123, %s124
    %p135 = scmp.eq.s32.totalorder %s25, 0
    %p136 = por %p134, %p135
    %p137 = scmp.ne.s32.totalorder %s123, %s124
    %p138 = scmp.eq.s32.totalorder %s26, 7
    %p139 = por %p137, %p138
    %p141 = scmp.ne.s32.totalorder %s124, %s140
    %p142 = scmp.eq.s32.totalorder %s26, 0
    %p143 = por %p141, %p142
    %s144 = ssub.s32 %s28, %s35
    %s145 = ssub.s32 %s27, %s39
    %s146 = sor.u32 %s144, %s145
    %p147 = scmp.eq.s32.totalorder %s146, 0
    %s149 = sadd.s32 %s148, 1
    %s150 = scalar_select %p147, %s148, %s149
    %p153 = pneg %p147
    %p154 = scmp.eq.s32.totalorder %s20, 7
    %p155 = por %p153, %p154
    %p156 = scmp.ne.s32.totalorder %s148, %s151
    %p157 = scmp.eq.s32.totalorder %s20, 0
    %p158 = por %p156, %p157
    %p159 = scmp.ne.s32.totalorder %s148, %s151
    %p160 = scmp.eq.s32.totalorder %s25, 7
    %p161 = por %p159, %p160
    %p162 = scmp.ne.s32.totalorder %s151, %s152
    %p163 = scmp.eq.s32.totalorder %s25, 0
    %p164 = por %p162, %p163
    %p165 = scmp.ne.s32.totalorder %s151, %s152
    %p166 = scmp.eq.s32.totalorder %s26, 7
    %p167 = por %p165, %p166
    %p169 = scmp.ne.s32.totalorder %s152, %s168
    %p170 = scmp.eq.s32.totalorder %s26, 0
    %p171 = por %p169, %p170
    %s172 = ssub.s32 %s27, %s39
    %p173 = scmp.eq.s32.totalorder %s172, 0
    %s175 = sadd.s32 %s174, 1
    %s176 = scalar_select %p173, %s174, %s175
    %p179 = pneg %p173
    %p180 = scmp.eq.s32.totalorder %s20, 7
    %p181 = por %p179, %p180
    %p182 = scmp.ne.s32.totalorder %s174, %s177
    %p183 = scmp.eq.s32.totalorder %s20, 0
    %p184 = por %p182, %p183
    %p185 = scmp.ne.s32.totalorder %s174, %s177
    %p186 = scmp.eq.s32.totalorder %s25, 7
    %p187 = por %p185, %p186
    %p188 = scmp.ne.s32.totalorder %s177, %s178
    %p189 = scmp.eq.s32.totalorder %s25, 0
    %p190 = por %p188, %p189
    %p191 = scmp.ne.s32.totalorder %s177, %s178
    %p192 = scmp.eq.s32.totalorder %s26, 7
    %p193 = por %p191, %p192
    %p195 = scmp.ne.s32.totalorder %s178, %s194
    %p196 = scmp.eq.s32.totalorder %s26, 0
    %p197 = por %p195, %p196
    %p198 = scmp.le.s32.totalorder 1, %s20
    %p199 = scmp.lt.s32.totalorder %s20, 9
    %p200 = pnand %p198, %p199
    %p201 = pneg %p200
    // Predicated region
    $region9: #{dots1_forward.24} parent=5 // pred_check
      _
    $region10: #{dots1_forward.24} parent=5 // pred_check_branch
      %203 = sbr.rel (%p200) target = $region12
    $region11: #{dots1_forward.24} parent=5 // pred_region
      %s204 = ssub.s32 %s20, 1
      // Predicated region
      $region13: #{dots1_forward.24} parent=11 // pred_check
        %p205 = pneg %p58
      $region14: #{dots1_forward.24} parent=11 // pred_check_branch
        %207 = sbr.rel (%p205) target = $region16
      $region15: #{dots1_forward.24} parent=11 // pred_region
        %p208 = scmp.lt.s32.totalorder %s29, 0
        %s209 = scalar_select %p208, %s29, 0
        %s210 = smul.addr %s209, 4
        %s211 = scalar_lea.vmem %s1, %s210
      $region16: #{dots1_forward.24} parent=11 // pred_fallthru
        _
      // Predicated region
      $region17: #{dots1_forward.24} parent=11 // pred_check
        %p212 = pneg %p84
      $region18: #{dots1_forward.24} parent=11 // pred_check_branch
        %214 = sbr.rel (%p212) target = $region20
      $region19: #{dots1_forward.24} parent=11 // pred_region
        %p215 = scmp.lt.s32.totalorder %s29, 0
        %s216 = scalar_select %p215, %s29, 0
        %s217 = smul.addr %s216, 4
        %s218 = scalar_lea.vmem %s2, %s217
      $region20: #{dots1_forward.24} parent=11 // pred_fallthru
        _
    $region12: #{dots1_forward.24} parent=5 // pred_fallthru
      _
    %p219 = scmp.lt.s32.totalorder %s20, 8
    // Predicated region
    $region21: #{dots1_forward.24} parent=5 // pred_check
      %p220 = pneg %p219
    $region22: #{dots1_forward.24} parent=5 // pred_check_branch
      %222 = sbr.rel (%p220) target = $region24
    $region23: #{dots1_forward.24} parent=5 // pred_region
      // Predicated region
      $region25: #{dots1_forward.24} parent=23 // pred_check
        %p223 = pneg %p104
      $region26: #{dots1_forward.24} parent=23 // pred_check_branch
        %225 = sbr.rel (%p223) target = $region28
      $region27: #{dots1_forward.24} parent=23 // pred_region
        %p226 = scmp.lt.s32.totalorder %s28, 7
        %s227 = scalar_select %p226, %s28, 7
        %s228 = smul.addr %s227, 32
        %s229 = smul.addr %s228, 4
        %s230 = scalar_lea.vmem %s3, %s229
      $region28: #{dots1_forward.24} parent=23 // pred_fallthru
        _
      // Predicated region
      $region29: #{dots1_forward.24} parent=23 // pred_check
        %p231 = pneg %p130
      $region30: #{dots1_forward.24} parent=23 // pred_check_branch
        %233 = sbr.rel (%p231) target = $region32
      $region31: #{dots1_forward.24} parent=23 // pred_region
        %p234 = scmp.lt.s32.totalorder %s28, 7
        %s235 = scalar_select %p234, %s28, 7
        %s236 = smul.addr %s235, 16
        %s237 = smul.addr %s236, 4
        %s238 = scalar_lea.vmem %s4, %s237
      $region32: #{dots1_forward.24} parent=23 // pred_fallthru
        _
      // Predicated region
      $region33: #{dots1_forward.24} parent=23 // pred_check
        %p239 = pneg %p158
      $region34: #{dots1_forward.24} parent=23 // pred_check_branch
        %241 = sbr.rel (%p239) target = $region36
      $region35: #{dots1_forward.24} parent=23 // pred_region
        %p242 = scmp.lt.s32.totalorder %s28, 7
        %s243 = scalar_select %p242, %s28, 7
        %p244 = scmp.lt.s32.totalorder %s27, 0
        %s245 = scalar_select %p244, %s27, 0
        %s246 = sadd.s32 %s245, %s243
        %s247 = smul.addr %s246, 8
        %s248 = scalar_lea.vmem %s5, %s247
      $region36: #{dots1_forward.24} parent=23 // pred_fallthru
        _
    $region24: #{dots1_forward.24} parent=5 // pred_fallthru
      _
    %p249 = scmp.le.s32.totalorder 1, %s20
    %p250 = scmp.lt.s32.totalorder %s20, 9
    %p251 = pnand %p249, %p250
    %p252 = pneg %p251
    // Predicated region
    $region37: #{dots1_forward.24} parent=5 // pred_check
      _
    $region38: #{dots1_forward.24} parent=5 // pred_check_branch
      %254 = sbr.rel (%p251) target = $region40
    $region39: #{dots1_forward.24} parent=5 // pred_region
      %s255 = ssub.s32 %s20, 1
      %p256 = scmp.lt.s32.totalorder %s29, 0
      %s257 = scalar_select %p256, %s29, 0
      %s258 = smul.addr %s257, 4
      %s259 = scalar_lea.vmem %s1, %s258
      %p260 = pneg %p58
      %p261 = pneg %p55
      %p262 = scmp.lt.s32.totalorder %s29, 0
      %s263 = scalar_select %p262, %s29, 0
      %s264 = smul.addr %s263, 4
      %s265 = scalar_lea.vmem %s2, %s264
      %p266 = pneg %p84
      %p267 = pneg %p81
      %p268 = scmp.lt.s32.totalorder %s30, 7
      %s269 = scalar_select %p268, %s30, 7
      %s270 = smul.addr %s269, 32
      %s271 = smul.addr %s270, 4
      %s272 = scalar_lea.vmem %s3, %s271
      %p273 = pneg %p110
      %p274 = pneg %p107
      %p275 = scmp.lt.s32.totalorder %s30, 7
      %s276 = scalar_select %p275, %s30, 7
      %s277 = smul.addr %s276, 16
      %s278 = smul.addr %s277, 4
      %s279 = scalar_lea.vmem %s4, %s278
      %p280 = pneg %p136
      %p281 = pneg %p133
      %p282 = scmp.lt.s32.totalorder %s30, 7
      %s283 = scalar_select %p282, %s30, 7
      %p284 = scmp.lt.s32.totalorder %s29, 0
      %s285 = scalar_select %p284, %s29, 0
      %s286 = sadd.s32 %s285, %s283
      %s287 = smul.addr %s286, 8
      %s288 = scalar_lea.vmem %s5, %s287
      %p289 = pneg %p164
      %p290 = pneg %p161
      %p291 = pneg %p190
      %p292 = pneg %p187
      %p293 = scmp.lt.s32.totalorder %s29, 0
      %s294 = scalar_select %p293, %s29, 0
      %s295 = smul.addr %s294, 4
      %s296 = scalar_lea.vmem %s6, %s295
      %p297 = scmp.lt.s32.totalorder %s29, 0
      %s298 = scalar_select %p297, %s29, 0
      %s299 = smul.addr %s298, 4
      %s300 = scalar_lea.vmem %s1, %s299
      %p301 = scmp.lt.s32.totalorder %s29, 0
      %s302 = scalar_select %p301, %s29, 0
      %s303 = smul.addr %s302, 4
      %s304 = scalar_lea.vmem %s2, %s303
      %p305 = scmp.lt.s32.totalorder %s30, 7
      %s306 = scalar_select %p305, %s30, 7
      %s307 = smul.addr %s306, 32
      %s308 = smul.addr %s307, 4
      %s309 = scalar_lea.vmem %s3, %s308
      %p310 = scmp.lt.s32.totalorder %s30, 7
      %s311 = scalar_select %p310, %s30, 7
      %s312 = smul.addr %s311, 16
      %s313 = smul.addr %s312, 4
      %s314 = scalar_lea.vmem %s4, %s313
      %p315 = scmp.lt.s32.totalorder %s30, 7
      %s316 = scalar_select %p315, %s30, 7
      %p317 = scmp.lt.s32.totalorder %s29, 0
      %s318 = scalar_select %p317, %s29, 0
      %s319 = sadd.s32 %s318, %s316
      %s320 = smul.addr %s319, 8
      %s321 = scalar_lea.vmem %s5, %s320
      %p322 = scmp.lt.s32.totalorder %s29, 0
      %s323 = scalar_select %p322, %s29, 0
      %s324 = smul.addr %s323, 4
      %s325 = scalar_lea.vmem %s6, %s324
      %p326 = scmp.eq.s32.totalorder %s30, 0
      // Predicated region
      $region41: #{dots1_forward.24} parent=39 // pred_check
        %p327 = pneg %p326
      $region42: #{dots1_forward.24} parent=39 // pred_check_branch
        %329 = sbr.rel (%p327) target = $region44
      $region43: #{dots1_forward.24} parent=39 // pred_region
        %v330 = vld [vmem:[%s304] sm:$0xf]
        %v331 = vunpack.c.l.bf16 %v330
        %332 = vst [vmem:[#allocation2] sm:$0xff] %v331
      $region44: #{dots1_forward.24} parent=39 // pred_fallthru
        _
      %s333 = sld [smem:[#allocation4 + %s30]]
      %p334 = scmp.gt.s32.totalorder %s333, 0
      // Predicated region
      $region45: #{dots1_forward.24} parent=39 // pred_check
        %p335 = pneg %p334
      $region46: #{dots1_forward.24} parent=39 // pred_check_branch
        %337 = sbr.rel (%p335) target = $region48
      $region47: #{dots1_forward.24} parent=39 // pred_region
        %v338 = vld [vmem:[%s300] sm:$0xf]
        %v339 = vld [vmem:[%s309] sm:$0xff]
        %v340 = vld [vmem:[%s309 + $0x8] sm:$0xff]
        %v341 = vld [vmem:[%s309 + $0x10] sm:$0xff]
        %v342 = vld [vmem:[%s309 + $0x18] sm:$0xff]
        %v343 = vld [vmem:[%s309 + $0x20] sm:$0xff]
        %v344 = vld [vmem:[%s309 + $0x28] sm:$0xff]
        %v345 = vld [vmem:[%s309 + $0x30] sm:$0xff]
        %v346 = vld [vmem:[%s309 + $0x38] sm:$0xff]
        %v347 = vld [vmem:[%s309 + $0x40] sm:$0xff]
        %v348 = vld [vmem:[%s309 + $0x48] sm:$0xff]
        %v349 = vld [vmem:[%s309 + $0x50] sm:$0xff]
        %v350 = vld [vmem:[%s309 + $0x58] sm:$0xff]
        %v351 = vld [vmem:[%s309 + $0x60] sm:$0xff]
        %v352 = vld [vmem:[%s309 + $0x68] sm:$0xff]
        %v353 = vld [vmem:[%s309 + $0x70] sm:$0xff]
        %v354 = vld [vmem:[%s309 + $0x78] sm:$0xff]
        %v371 = vunpack.c.l.b16 %v339
        %v372 = vunpack.c.h.b16 %v339
        %v373 = vunpack.c.l.b16 %v340
        %v374 = vunpack.c.h.b16 %v340
        %v375 = vunpack.c.l.b16 %v341
        %v376 = vunpack.c.h.b16 %v341
        %v377 = vunpack.c.l.b16 %v342
        %v378 = vunpack.c.h.b16 %v342
        %v379 = vunpack.c.l.b16 %v343
        %v380 = vunpack.c.h.b16 %v343
        %v381 = vunpack.c.l.b16 %v344
        %v382 = vunpack.c.h.b16 %v344
        %v383 = vunpack.c.l.b16 %v345
        %v384 = vunpack.c.h.b16 %v345
        %v385 = vunpack.c.l.b16 %v346
        %v386 = vunpack.c.h.b16 %v346
        %v387 = vunpack.c.l.b16 %v347
        %v388 = vunpack.c.h.b16 %v347
        %v389 = vunpack.c.l.b16 %v348
        %v390 = vunpack.c.h.b16 %v348
        %v391 = vunpack.c.l.b16 %v349
        %v392 = vunpack.c.h.b16 %v349
        %v393 = vunpack.c.l.b16 %v350
        %v394 = vunpack.c.h.b16 %v350
        %v395 = vunpack.c.l.b16 %v351
        %v396 = vunpack.c.h.b16 %v351
        %v397 = vunpack.c.l.b16 %v352
        %v398 = vunpack.c.h.b16 %v352
        %v399 = vunpack.c.l.b16 %v353
        %v400 = vunpack.c.h.b16 %v353
        %v401 = vunpack.c.l.b16 %v354
        %v402 = vunpack.c.h.b16 %v354
        %v403 = vpack.c.b16 %v373, %v371
        %v404 = vpack.c.b16 %v374, %v372
        %v405 = vpack.c.b16 %v377, %v375
        %v406 = vpack.c.b16 %v378, %v376
        %v407 = vpack.c.b16 %v381, %v379
        %v408 = vpack.c.b16 %v382, %v380
        %v409 = vpack.c.b16 %v385, %v383
        %v410 = vpack.c.b16 %v386, %v384
        %v411 = vpack.c.b16 %v389, %v387
        %v412 = vpack.c.b16 %v390, %v388
        %v413 = vpack.c.b16 %v393, %v391
        %v414 = vpack.c.b16 %v394, %v392
        %v415 = vpack.c.b16 %v397, %v395
        %v416 = vpack.c.b16 %v398, %v396
        %v417 = vpack.c.b16 %v401, %v399
        %v418 = vpack.c.b16 %v402, %v400
        %435 = vmatpush.bf16.msra.mxu0 %v417
        %436 = vmatpush.bf16.msra.mxu0 %v415
        %437 = vmatpush.bf16.msra.mxu0 %v413
        %438 = vmatpush.bf16.msra.mxu0 %v411
        %439 = vmatpush.bf16.msra.mxu0 %v409
        %440 = vmatpush.bf16.msra.mxu0 %v407
        %441 = vmatpush.bf16.msra.mxu0 %v405
        %442 = vmatpush.bf16.msra.mxu0 %v403
        %443 = vmatmul.bf16.gmra.mxu0 %v338
        %v444 = vpop.f32.mrf.mxu0
        %v445 = vadd.f32 0.0, %v444
        %v446 = vpop.f32.mrf.mxu0
        %447 = vdwg.mxu0
        %448 = vmatpush.bf16.msra.mxu0 %v418
        %449 = vmatpush.bf16.msra.mxu0 %v416
        %450 = vmatpush.bf16.msra.mxu0 %v414
        %451 = vmatpush.bf16.msra.mxu0 %v412
        %452 = vmatpush.bf16.msra.mxu0 %v410
        %453 = vmatpush.bf16.msra.mxu0 %v408
        %454 = vmatpush.bf16.msra.mxu0 %v406
        %455 = vmatpush.bf16.msra.mxu0 %v404
        %456 = vmatmul.bf16.gmra.mxu0 %v338
        %v457 = vpop.f32.mrf.mxu0
        %v458 = vadd.f32 0.0, %v457
        %v459 = vpop.f32.mrf.mxu0
        %460 = vdwg.mxu0
        %v461 = vxor.u32 %v445, 2147483648
        %v462 = vmul.f32 %v461, 1.442695
        %v463 = vpow.pop %v462
        %v464 = vadd.f32 %v463, 1.0
        %v465 = vrcp.pop %v464
        %v466 = vmul.f32 %v464, %v465
        %v467 = vsub.f32 1.0, %v466
        %v468 = vmul.f32 %v465, %v467
        %v469 = vadd.f32 %v465, %v468
        %vm470 = vweird.f32 %v464
        %vm471 = vweird.f32 %v465
        %vm472 = vmor %vm470, %vm471
        %v473 = vsel %vm472, %v465, %v469
        %v474 = vand.u32 2147483647, %v464
        %vm475 = vcmp.eq.f32.partialorder %v474, 8.507059e+37
        %v476 = vand.u32 %v464, 2147483648
        %v477 = vor.u32 1.1754944e-38, %v476
        %v478 = vsel %vm475, %v477, %v473
        %v479 = vmul.f32 1.0, %v478
        %v480 = vmul.f32 %v445, %v479
        %v481 = vmul.f32 %v480, %v458
        %v482 = vpack.c.bf16 %v481, %v481
        %v483 = vld [vmem:[%s314] sm:$0xf]
        %v484 = vld [vmem:[%s314 + $0x4] sm:$0xf]
        %v485 = vld [vmem:[%s314 + $0x8] sm:$0xf]
        %v486 = vld [vmem:[%s314 + $0xc] sm:$0xf]
        %v487 = vld [vmem:[%s314 + $0x10] sm:$0xf]
        %v488 = vld [vmem:[%s314 + $0x14] sm:$0xf]
        %v489 = vld [vmem:[%s314 + $0x18] sm:$0xf]
        %v490 = vld [vmem:[%s314 + $0x1c] sm:$0xf]
        %v491 = vld [vmem:[%s314 + $0x20] sm:$0xf]
        %v492 = vld [vmem:[%s314 + $0x24] sm:$0xf]
        %v493 = vld [vmem:[%s314 + $0x28] sm:$0xf]
        %v494 = vld [vmem:[%s314 + $0x2c] sm:$0xf]
        %v495 = vld [vmem:[%s314 + $0x30] sm:$0xf]
        %v496 = vld [vmem:[%s314 + $0x34] sm:$0xf]
        %v497 = vld [vmem:[%s314 + $0x38] sm:$0xf]
        %v498 = vld [vmem:[%s314 + $0x3c] sm:$0xf]
        %v515 = vunpack.c.l.b16 %v483
        %v516 = vunpack.c.l.b16 %v484
        %v517 = vunpack.c.l.b16 %v485
        %v518 = vunpack.c.l.b16 %v486
        %v519 = vunpack.c.l.b16 %v487
        %v520 = vunpack.c.l.b16 %v488
        %v521 = vunpack.c.l.b16 %v489
        %v522 = vunpack.c.l.b16 %v490
        %v523 = vunpack.c.l.b16 %v491
        %v524 = vunpack.c.l.b16 %v492
        %v525 = vunpack.c.l.b16 %v493
        %v526 = vunpack.c.l.b16 %v494
        %v527 = vunpack.c.l.b16 %v495
        %v528 = vunpack.c.l.b16 %v496
        %v529 = vunpack.c.l.b16 %v497
        %v530 = vunpack.c.l.b16 %v498
        %v531 = vpack.c.b16 %v516, %v515
        %v532 = vpack.c.b16 %v518, %v517
        %v533 = vpack.c.b16 %v520, %v519
        %v534 = vpack.c.b16 %v522, %v521
        %v535 = vpack.c.b16 %v524, %v523
        %v536 = vpack.c.b16 %v526, %v525
        %v537 = vpack.c.b16 %v528, %v527
        %v538 = vpack.c.b16 %v530, %v529
        %547 = vmatpush.bf16.msra.mxu0 %v538
        %548 = vmatpush.bf16.msra.mxu0 %v537
        %549 = vmatpush.bf16.msra.mxu0 %v536
        %550 = vmatpush.bf16.msra.mxu0 %v535
        %551 = vmatpush.bf16.msra.mxu0 %v534
        %552 = vmatpush.bf16.msra.mxu0 %v533
        %553 = vmatpush.bf16.msra.mxu0 %v532
        %554 = vmatpush.bf16.msra.mxu0 %v531
        %555 = vmatmul.bf16.gmra.mxu0 %v482
        %v556 = vpop.f32.mrf.mxu0
        %v557 = vadd.f32 0.0, %v556
        %v558 = vpop.f32.mrf.mxu0
        %559 = vdwg.mxu0
        %v560 = vld [vmem:[#allocation2] sm:$0xff]
        %v561 = vld [vmem:[%s321] sm:$0xff]
        %563 = vset.pattern.permute.xlu0 0
        %564 = vperm.xlu0 %563, %v561
        %v565 = vpop.permute.xlu0 %564
        %v567 = vmul.f32 %v565, %v557
        %v568 = vadd.f32 %v560, %v567
        %569 = vst [vmem:[#allocation2] sm:$0xff] %v568
      $region48: #{dots1_forward.24} parent=39 // pred_fallthru
        _
      %p570 = scmp.eq.s32.totalorder %s30, 7
      // Predicated region
      $region49: #{dots1_forward.24} parent=39 // pred_check
        %p571 = pneg %p570
      $region50: #{dots1_forward.24} parent=39 // pred_check_branch
        %573 = sbr.rel (%p571) target = $region52
      $region51: #{dots1_forward.24} parent=39 // pred_region
        %v574 = vld [vmem:[#allocation2] sm:$0xff]
        %v575 = vpack.c.bf16 %v574, %v574
        %576 = vst [vmem:[%s325] sm:$0xf] %v575
      $region52: #{dots1_forward.24} parent=39 // pred_fallthru
        _
      %p577 = scmp.lt.s32.totalorder %s29, 0
      %s578 = scalar_select %p577, %s29, 0
      %s579 = smul.addr %s578, 4
      %s580 = scalar_lea.vmem %s6, %s579
      // Predicated region
      $region53: #{dots1_forward.24} parent=39 // pred_check
        %p581 = pneg %p187
      $region54: #{dots1_forward.24} parent=39 // pred_check_branch
        %583 = sbr.rel (%p581) target = $region56
      $region55: #{dots1_forward.24} parent=39 // pred_region
        _
      $region56: #{dots1_forward.24} parent=39 // pred_fallthru
        _
      // Predicated region
      $region57: #{dots1_forward.24} parent=39 // pred_check
        %p584 = pneg %p187
      $region58: #{dots1_forward.24} parent=39 // pred_check_branch
        %586 = sbr.rel (%p584) target = $region60
      $region59: #{dots1_forward.24} parent=39 // pred_region
        %p587 = scmp.lt.s32.totalorder %s29, 0
        %s588 = scalar_select %p587, %s29, 0
        %s589 = smul.addr %s588, 4
        %s590 = scalar_lea.vmem %s6, %s589
      $region60: #{dots1_forward.24} parent=39 // pred_fallthru
        _
    $region40: #{dots1_forward.24} parent=5 // pred_fallthru
      _
    %p591 = scmp.le.s32.totalorder 2, %s20
    // Predicated region
    $region61: #{dots1_forward.24} parent=5 // pred_check
      %p592 = pneg %p591
    $region62: #{dots1_forward.24} parent=5 // pred_check_branch
      %594 = sbr.rel (%p592) target = $region64
    $region63: #{dots1_forward.24} parent=5 // pred_region
      %s595 = ssub.s32 %s20, 2
    $region64: #{dots1_forward.24} parent=5 // pred_fallthru
      _
  $region6: #{dots1_forward.24} parent=0 // loop_footer
    %s24 = sadd.s32 1, %s20
  $region7: #{dots1_forward.24} parent=0 // loop_footer_branch
    %19 = sbr.rel target = $region3
  $region8: #{dots1_forward.24} parent=0 // loop_exit
    _

</llo_original>
